<compile_context>
chip_gen: v5e
topology: v5e:2x2
jax: 0.10.0
libtpu: 0.0.40
codegen_flags: <defaults>
</compile_context>

<pallas_src>
import functools

import jax
import jax.numpy as jnp
from jax.experimental import pallas as pl
from jax.experimental.pallas import tpu as pltpu

_EPS = 1e-5
_LEAKY_SLOPE = 0.2
_VMEM_LIMIT = 32 * 1024 * 1024          # modest; safe on v5e/v6e/v7x
_WHOLE_K_BUDGET = 6 * 1024 * 1024       # A+B (double-buffered, bf16) budget


# ----------------------------- Pallas kernels -------------------------------

def _gemm_act_kernel(a_ref, b_ref, o_ref, acc_ref, *, act):
    """K-tiled matmul: acc += A@B; optional LeakyReLU epilogue at last K."""
    @pl.when(pl.program_id(1) == 0)
    def _():
        acc_ref[...] = jnp.zeros_like(acc_ref)

    acc_ref[...] += jnp.dot(a_ref[...], b_ref[...],
                            preferred_element_type=jnp.float32)

    @pl.when(pl.program_id(1) == pl.num_programs(1) - 1)
    def _():
        y = acc_ref[...]
        if act == "leaky_relu":
            y = jnp.where(y > 0, y, _LEAKY_SLOPE * y)
        o_ref[...] = y.astype(o_ref.dtype)


def _gemm_stats_kernel(a_ref, b_ref, o_ref, sum_ref, ssq_ref, acc_ref,
                       *, valid_rows, tm):
    """K-tiled matmul with fused per-channel partial BN stats in the epilogue.

    The stats are computed from the f32 accumulator (full precision) even
    though the conv output itself is stored as bf16.  Each M block writes its
    partial sum / sum-of-squares into row 0 of an (8, Npad) output block.
    """
    @pl.when(pl.program_id(1) == 0)
    def _():
        acc_ref[...] = jnp.zeros_like(acc_ref)

    acc_ref[...] += jnp.dot(a_ref[...], b_ref[...],
                            preferred_element_type=jnp.float32)

    @pl.when(pl.program_id(1) == pl.num_programs(1) - 1)
    def _():
        y = acc_ref[...]
        o_ref[...] = y.astype(o_ref.dtype)

        ys = y
        if valid_rows % tm != 0:
            # Mask rows past M; statically elided when M % tm == 0 (the common
            # case) and only ever evaluated once per M block, in the epilogue.
            rows = (pl.program_id(0) * tm
                    + jax.lax.broadcasted_iota(jnp.int32, y.shape, 0))
            ys = jnp.where(rows < valid_rows, y, 0.0)

        s = jnp.sum(ys, axis=0, keepdims=True)           # (1, Npad)
        ss = jnp.sum(ys * ys, axis=0, keepdims=True)
        row = jax.lax.broadcasted_iota(jnp.int32, sum_ref.shape, 0)
        sum_ref[...] = jnp.where(row == 0, s, 0.0)       # row 0 = partial sum
        ssq_ref[...] = jnp.where(row == 0, ss, 0.0)


def _affine_lrelu_kernel(x_ref, scale_ref, shift_ref, o_ref):
    """y = LeakyReLU(x * scale + shift) (per-channel), f32 math, tiled over M."""
    y = x_ref[...].astype(jnp.float32) * scale_ref[...] + shift_ref[...]
    o_ref[...] = jnp.where(y > 0, y, _LEAKY_SLOPE * y).astype(o_ref.dtype)


# ----------------------------- tiling heuristics ------------------------------

def _m_tile(M):
    # >=2 'parallel' M blocks when M is large enough (v7x has 2 TensorCores);
    # otherwise one full-M tile (block second-to-last dim must be a multiple of
    # 8 or equal the full dim -- full dim always satisfies that).
    return 256 if M >= 512 else M


def _k_tile(K, tm, Npad, *, tk_cap=2048):
    """Pick the K tile: whole K if the double-buffered bf16 A/B working set is
    small (-> single-step GEMM, no accumulator revisits), else the largest
    divisor of K that is a multiple of 128 and <= tk_cap."""
    whole_k_bytes = 2 * (tm * K + K * Npad) * 2     # 2 buffers x bf16
    if whole_k_bytes <= _WHOLE_K_BUDGET or K <= tk_cap:
        return K
    for t in range(tk_cap, 127, -128):
        if K % t == 0:
            return t
    return K                                        # no nice divisor: whole K


# ----------------------------- Pallas wrappers -------------------------------

def matmul_act(a, b, *, act=None, out_dtype=jnp.bfloat16):
    """(M, K) @ (K, Npad) -> (M, Npad), Npad % 128 == 0 (lane-dense output).

    bf16 MXU inputs, f32 accumulation in VMEM scratch, optional fused
    LeakyReLU epilogue.  K tiled 'arbitrary', M tiled 'parallel'.
    """
    M, K = a.shape
    K2, Npad = b.shape
    assert K == K2 and Npad % 128 == 0
    tm = _m_tile(M)
    tk = _k_tile(K, tm, Npad)
    assert K % tk == 0
    grid = (pl.cdiv(M, tm), K // tk)

    kernel = functools.partial(_gemm_act_kernel, act=act)
    return pl.pallas_call(
        kernel,
        out_shape=jax.ShapeDtypeStruct((M, Npad), out_dtype),
        grid=grid,
        in_specs=[
            pl.BlockSpec((tm, tk), lambda i, k: (i, k)),
            pl.BlockSpec((tk, Npad), lambda i, k: (k, 0)),
        ],
        out_specs=pl.BlockSpec((tm, Npad), lambda i, k: (i, 0)),
        scratch_shapes=[pltpu.VMEM((tm, Npad), jnp.float32)],
        compiler_params=pltpu.CompilerParams(
            dimension_semantics=("parallel", "arbitrary"),
            vmem_limit_bytes=_VMEM_LIMIT),
    )(a.astype(jnp.bfloat16), b.astype(jnp.bfloat16))


def matmul_with_stats(a, b):
    """Conv GEMM with fused BN partial statistics.

    Returns:
      out:  (M, Npad) bf16  -- raw conv output
      psum: (num_m_blocks*8, Npad) f32 -- per-M-block partial channel sums
            (only row 0 of each 8-row group is non-zero)
      pssq: same, for sum of squares
    """
    M, K = a.shape
    K2, Npad = b.shape
    assert K == K2 and Npad % 128 == 0
    tm = _m_tile(M)
    tk = _k_tile(K, tm, Npad)
    assert K % tk == 0
    gm = pl.cdiv(M, tm)
    grid = (gm, K // tk)

    kernel = functools.partial(_gemm_stats_kernel, valid_rows=M, tm=tm)
    return pl.pallas_call(
        kernel,
        out_shape=(jax.ShapeDtypeStruct((M, Npad), jnp.bfloat16),
                   jax.ShapeDtypeStruct((gm * 8, Npad), jnp.float32),
                   jax.ShapeDtypeStruct((gm * 8, Npad), jnp.float32)),
        grid=grid,
        in_specs=[
            pl.BlockSpec((tm, tk), lambda i, k: (i, k)),
            pl.BlockSpec((tk, Npad), lambda i, k: (k, 0)),
        ],
        out_specs=(pl.BlockSpec((tm, Npad), lambda i, k: (i, 0)),
                   pl.BlockSpec((8, Npad), lambda i, k: (i, 0)),
                   pl.BlockSpec((8, Npad), lambda i, k: (i, 0))),
        scratch_shapes=[pltpu.VMEM((tm, Npad), jnp.float32)],
        compiler_params=pltpu.CompilerParams(
            dimension_semantics=("parallel", "arbitrary"),
            vmem_limit_bytes=_VMEM_LIMIT),
    )(a.astype(jnp.bfloat16), b.astype(jnp.bfloat16))


def affine_leaky_relu(x, scale, shift, *, out_dtype=jnp.bfloat16):
    """Tiled per-channel affine + LeakyReLU on a (M, C) lane-dense slab.

    When the in/out dtypes match the input buffer is aliased to the output.
    """
    M, C = x.shape
    tm = _m_tile(M)
    aliases = {0: 0} if x.dtype == out_dtype else {}
    return pl.pallas_call(
        _affine_lrelu_kernel,
        out_shape=jax.ShapeDtypeStruct((M, C), out_dtype),
        grid=(pl.cdiv(M, tm),),
        in_specs=[pl.BlockSpec((tm, C), lambda i: (i, 0)),
                  pl.BlockSpec((1, C), lambda i: (0, 0)),
                  pl.BlockSpec((1, C), lambda i: (0, 0))],
        out_specs=pl.BlockSpec((tm, C), lambda i: (i, 0)),
        input_output_aliases=aliases,
        compiler_params=pltpu.CompilerParams(
            dimension_semantics=("parallel",),
            vmem_limit_bytes=_VMEM_LIMIT),
    )(x, scale.astype(jnp.float32), shift.astype(jnp.float32))


# ------------------------ Conv2d glue (im2col, NHWC) -------------------------

def _conv_gemm_inputs(x_nhwc, w, stride, padding):
    """x_nhwc: (N, H, W, Cin) with the TRUE channel count (no zero carry).
       w: (Cout, Cin, k, k) PyTorch Conv2d layout.
    Returns A (M, K), B (K, Npad), output spatial, Npad (multiple of 128)."""
    N, H, W, Cx = x_nhwc.shape
    Cout, Cin, kh, kw = w.shape
    assert Cx == Cin, (Cx, Cin)

    # Patches feature ordering is (c, kh, kw)  ("c" + rhs spatial of "OIHW").
    patches = jax.lax.conv_general_dilated_patches(
        x_nhwc, (kh, kw), (stride, stride),
        padding=[(padding, padding), (padding, padding)],
        dimension_numbers=("NHWC", "OIHW", "NHWC"))
    _, Ho, Wo, K = patches.shape
    A = patches.reshape(N * Ho * Wo, K)

    Npad = max(128, ((Cout + 127) // 128) * 128)   # lane-dense output channels
    B = jnp.transpose(w, (1, 2, 3, 0)).reshape(Cin * kh * kw, Cout)
    if Npad > Cout:
        B = jnp.pad(B, ((0, 0), (0, Npad - Cout)))
    return A, B, (N, Ho, Wo), Npad


# ------------------------------ Discriminator --------------------------------

def init_discriminator_params(key, dim_input, dim_model_d, size_decision,
                              depth):
    """weights_init: Conv ~ N(0, 0.02); BatchNorm weight ~ N(1, 0.02), bias 0."""
    ks = iter(jax.random.split(key, 2 * depth + 2))
    p = {}
    curr = dim_model_d
    p['conv0_w'] = 0.02 * jax.random.normal(
        next(ks), (curr, dim_input, 4, 4), jnp.float32)
    p['blocks'] = []
    for _ in range(depth):
        nxt = curr * 2
        w = 0.02 * jax.random.normal(next(ks), (nxt, curr, 4, 4), jnp.float32)
        g = 1.0 + 0.02 * jax.random.normal(next(ks), (nxt,), jnp.float32)
        b = jnp.zeros((nxt,), jnp.float32)
        p['blocks'].append((w, g, b))
        curr = nxt
    p['decision_w'] = 0.02 * jax.random.normal(
        next(ks), (size_decision, curr, 4, 4), jnp.float32)
    return p


def discriminator_forward(params, x_nchw):
    """forward(input) with getFeature=False: returns (N, sizeDecisionLayer)."""
    # Single NCHW->NHWC transpose at the boundary; NHWC afterwards.
    x = jnp.transpose(x_nchw, (0, 2, 3, 1)).astype(jnp.bfloat16)

    # Layer 0: Conv(dimInput -> dimModelD, 4, 2, 1) with fused LeakyReLU.
    w0 = params['conv0_w']
    cout = w0.shape[0]
    A, B, (N, Ho, Wo), Npad = _conv_gemm_inputs(x, w0, 2, 1)
    y = matmul_act(A, B, act="leaky_relu", out_dtype=jnp.bfloat16)
    x = y.reshape(N, Ho, Wo, Npad)
    if cout < Npad:                       # drop zero-padded output channels
        x = x[..., :cout]

    # Middle layers: Conv(4,2,1) + BatchNorm (batch stats) + LeakyReLU.
    # The conv GEMM fuses the BN partial statistics into its epilogue; only
    # the (few-row) partial sums are reduced in XLA.
    for w, gamma, beta in params['blocks']:
        cout = w.shape[0]
        A, B, (N, Ho, Wo), Npad = _conv_gemm_inputs(x, w, 2, 1)
        conv, psum, pssq = matmul_with_stats(A, B)          # conv is bf16
        M = conv.shape[0]
        s = jnp.sum(psum, axis=0)                           # (Npad,)
        ss = jnp.sum(pssq, axis=0)
        mean = s / M
        var = jnp.maximum(ss / M - mean * mean, 0.0)        # biased variance
        inv = jax.lax.rsqrt(var + _EPS)
        gamma_p = jnp.pad(gamma, (0, Npad - cout))
        beta_p = jnp.pad(beta, (0, Npad - cout))
        scale = (gamma_p * inv).reshape(1, Npad)            # padded lanes -> 0
        shift = (beta_p - mean * gamma_p * inv).reshape(1, Npad)
        y = affine_leaky_relu(conv, scale, shift, out_dtype=jnp.bfloat16)
        x = y.reshape(N, Ho, Wo, Npad)
        if cout < Npad:
            x = x[..., :cout]

    # decisionLayer: Conv(dimFeatureMap -> sizeDecisionLayer, 4, 1, 0).
    wd = params['decision_w']
    size_dec = wd.shape[0]
    A, B, (N, Ho, Wo), Npad = _conv_gemm_inputs(x, wd, 1, 0)
    out = matmul_act(A, B, act=None, out_dtype=jnp.float32)
    # output spatial is 1x1 by construction -> view(-1, sizeDecisionLayer)
    return out[:, :size_dec]


# ----------------------------- Plain-JAX reference ---------------------------

def reference_forward(params, x_nchw):
    def conv(x, w, stride, pad):
        return jax.lax.conv_general_dilated(
            x, w, (stride, stride), [(pad, pad), (pad, pad)],
            dimension_numbers=("NCHW", "OIHW", "NCHW"))

    def lrelu(x):
        return jnp.where(x > 0, x, _LEAKY_SLOPE * x)

    x = lrelu(conv(x_nchw, params['conv0_w'], 2, 1))
    for w, g, b in params['blocks']:
        x = conv(x, w, 2, 1)
        mean = jnp.mean(x, axis=(0, 2, 3), keepdims=True)
        var = jnp.mean((x - mean) ** 2, axis=(0, 2, 3), keepdims=True)
        x = (x - mean) * jax.lax.rsqrt(var + _EPS)
        x = x * g.reshape(1, -1, 1, 1) + b.reshape(1, -1, 1, 1)
        x = lrelu(x)
    x = conv(x, params['decision_w'], 1, 0)
    return x.reshape(x.shape[0], -1)


# --------------------------------- main ---------------------------------------

if __name__ == "__main__":
    # Small config: dimInput(channels)=3, dimModelD=64, sizeDecisionLayer=3,
    # depthModel=2. Channel path 64 -> 128 -> 256 (dimFeatureMap=256).
    # Input spatial 4*2^(depth+1)=32 so the decision conv sees a 4x4 map.
    dim_input, dim_model_d, size_decision, depth = 3, 64, 3, 2
    batch = 2
    spatial = 4 * 2 ** (depth + 1)   # 32

    key = jax.random.PRNGKey(0)
    pkey, xkey = jax.random.split(key)
    params = init_discriminator_params(pkey, dim_input, dim_model_d,
                                       size_decision, depth)
    x = jax.random.normal(xkey, (batch, dim_input, spatial, spatial),
                          jnp.float32)

    fwd = jax.jit(discriminator_forward)
    out = jax.block_until_ready(fwd(params, x))

    assert out.shape == (batch, size_decision), out.shape
    assert bool(jnp.all(jnp.isfinite(out)))

    ref = reference_forward(params, x)
    max_err = float(jnp.max(jnp.abs(out - ref)))
    assert bool(jnp.allclose(out, ref, rtol=0.1, atol=0.05)), max_err
    print("KERNEL_OK")
</pallas_src>

<mosaic_0001>
module attributes {stable_mosaic.version = 11 : i64} {
  func.func @_gemm_act_kernel(%arg0: i32, %arg1: i32, %arg2: memref<256x48xbf16, #tpu.memory_space<vmem>>, %arg3: memref<48x128xbf16, #tpu.memory_space<vmem>>, %arg4: memref<256x128xbf16, #tpu.memory_space<vmem>>, %arg5: memref<256x128xf32, #tpu.memory_space<vmem>>) attributes {dimension_semantics = [#tpu.dimension_semantics<parallel>, #tpu.dimension_semantics<arbitrary>], iteration_bounds = array<i64: 2, 1>, scalar_prefetch = 0 : i64, scratch_operands = 1 : i64, tpu.core_type = #tpu.core_type<tc>, window_params = [{transform_indices = @transform_0, window_bounds = array<i64: 256, 48>}, {transform_indices = @transform_1, window_bounds = array<i64: 48, 128>}, {transform_indices = @transform_2, window_bounds = array<i64: 256, 128>}]} {
    %c0_i32 = arith.constant 0 : i32
    %0 = arith.cmpi eq, %arg1, %c0_i32 : i32
    %1 = arith.extui %0 : i1 to i32
    %c0_i32_0 = arith.constant 0 : i32
    %2 = arith.cmpi ne, %1, %c0_i32_0 : i32
    scf.if %2 {
      %cst_10 = arith.constant 0.000000e+00 : f32
      %12 = vector.broadcast %cst_10 : f32 to vector<256x128xf32>
      %c0_11 = arith.constant 0 : index
      %c0_12 = arith.constant 0 : index
      %13 = vector.load %arg5[%c0_11, %c0_12] : memref<256x128xf32, #tpu.memory_space<vmem>>, vector<256x128xf32>
      tpu.vector_store %arg5[%c0_11, %c0_12], %12 {strides = array<i32>} : memref<256x128xf32, #tpu.memory_space<vmem>>, vector<256x128xf32>,
    } else {
    }
    %c0 = arith.constant 0 : index
    %c0_1 = arith.constant 0 : index
    %3 = vector.load %arg5[%c0, %c0_1] : memref<256x128xf32, #tpu.memory_space<vmem>>, vector<256x128xf32>
    %c0_2 = arith.constant 0 : index
    %c0_3 = arith.constant 0 : index
    %4 = vector.load %arg2[%c0_2, %c0_3] : memref<256x48xbf16, #tpu.memory_space<vmem>>, vector<256x48xbf16>
    %c0_4 = arith.constant 0 : index
    %c0_5 = arith.constant 0 : index
    %5 = vector.load %arg3[%c0_4, %c0_5] : memref<48x128xbf16, #tpu.memory_space<vmem>>, vector<48x128xbf16>
    %cst = arith.constant dense<0.000000e+00> : vector<256x128xf32>
    %6 = tpu.matmul %4, %5, %cst {dimension_numbers = #tpu.dot_dimension_numbers<[1], [0], [0], [1], [0, 0, 1, 1], [], []>} : vector<256x48xbf16>, vector<48x128xbf16>, vector<256x128xf32> -> vector<256x128xf32>
    %7 = arith.addf %3, %6 : vector<256x128xf32>
    %c0_6 = arith.constant 0 : index
    %c0_7 = arith.constant 0 : index
    %8 = vector.load %arg5[%c0_6, %c0_7] : memref<256x128xf32, #tpu.memory_space<vmem>>, vector<256x128xf32>
    tpu.vector_store %arg5[%c0_6, %c0_7], %7 {strides = array<i32>} : memref<256x128xf32, #tpu.memory_space<vmem>>, vector<256x128xf32>,
    %c0_i32_8 = arith.constant 0 : i32
    %9 = arith.cmpi eq, %arg1, %c0_i32_8 : i32
    %10 = arith.extui %9 : i1 to i32
    %c0_i32_9 = arith.constant 0 : i32
    %11 = arith.cmpi ne, %10, %c0_i32_9 : i32
    scf.if %11 {
      %c0_10 = arith.constant 0 : index
      %c0_11 = arith.constant 0 : index
      %12 = vector.load %arg5[%c0_10, %c0_11] : memref<256x128xf32, #tpu.memory_space<vmem>>, vector<256x128xf32>
      %cst_12 = arith.constant 0.000000e+00 : f32
      %13 = vector.broadcast %cst_12 : f32 to vector<256x128xf32>
      %14 = arith.cmpf ogt, %12, %13 : vector<256x128xf32>
      %cst_13 = arith.constant 2.000000e-01 : f32
      %15 = vector.broadcast %cst_13 : f32 to vector<256x128xf32>
      %16 = arith.mulf %15, %12 : vector<256x128xf32>
      %17 = arith.select %14, %12, %16 : vector<256x128xi1>, vector<256x128xf32>
      %18 = arith.truncf %17 : vector<256x128xf32> to vector<256x128xbf16>
      %c0_14 = arith.constant 0 : index
      %c0_15 = arith.constant 0 : index
      %19 = vector.load %arg4[%c0_14, %c0_15] : memref<256x128xbf16, #tpu.memory_space<vmem>>, vector<256x128xbf16>
      tpu.vector_store %arg4[%c0_14, %c0_15], %18 {strides = array<i32>} : memref<256x128xbf16, #tpu.memory_space<vmem>>, vector<256x128xbf16>,
    } else {
    }
    return
  }
  func.func @transform_0(%arg0: i32, %arg1: i32) -> (i32, i32) {
    %c0_i32 = arith.constant 0 : i32
    return %arg0, %arg1 : i32, i32
  }
  func.func @transform_1(%arg0: i32, %arg1: i32) -> (i32, i32) {
    %c0_i32 = arith.constant 0 : i32
    %c0_i32_0 = arith.constant 0 : i32
    return %arg1, %c0_i32 : i32, i32
  }
  func.func @transform_2(%arg0: i32, %arg1: i32) -> (i32, i32) {
    %c0_i32 = arith.constant 0 : i32
    %c0_i32_0 = arith.constant 0 : i32
    return %arg0, %c0_i32 : i32, i32
  }
}

module attributes {stable_mosaic.version = 11 : i64} {
  func.func @_gemm_stats_kernel(%arg0: i32, %arg1: i32, %arg2: memref<128x1024xbf16, #tpu.memory_space<vmem>>, %arg3: memref<1024x128xbf16, #tpu.memory_space<vmem>>, %arg4: memref<128x128xbf16, #tpu.memory_space<vmem>>, %arg5: memref<8x128xf32, #tpu.memory_space<vmem>>, %arg6: memref<8x128xf32, #tpu.memory_space<vmem>>, %arg7: memref<128x128xf32, #tpu.memory_space<vmem>>) attributes {dimension_semantics = [#tpu.dimension_semantics<parallel>, #tpu.dimension_semantics<arbitrary>], iteration_bounds = array<i64: 1, 1>, scalar_prefetch = 0 : i64, scratch_operands = 1 : i64, tpu.core_type = #tpu.core_type<tc>, window_params = [{transform_indices = @transform_0, window_bounds = array<i64: 128, 1024>}, {transform_indices = @transform_1, window_bounds = array<i64: 1024, 128>}, {transform_indices = @transform_2, window_bounds = array<i64: 128, 128>}, {transform_indices = @transform_3, window_bounds = array<i64: 8, 128>}, {transform_indices = @transform_4, window_bounds = array<i64: 8, 128>}]} {
    %c0_i32 = arith.constant 0 : i32
    %0 = arith.cmpi eq, %arg1, %c0_i32 : i32
    %1 = arith.extui %0 : i1 to i32
    %c0_i32_0 = arith.constant 0 : i32
    %2 = arith.cmpi ne, %1, %c0_i32_0 : i32
    scf.if %2 {
      %cst_10 = arith.constant 0.000000e+00 : f32
      %12 = vector.broadcast %cst_10 : f32 to vector<128x128xf32>
      %c0_11 = arith.constant 0 : index
      %c0_12 = arith.constant 0 : index
      %13 = vector.load %arg7[%c0_11, %c0_12] : memref<128x128xf32, #tpu.memory_space<vmem>>, vector<128x128xf32>
      tpu.vector_store %arg7[%c0_11, %c0_12], %12 {strides = array<i32>} : memref<128x128xf32, #tpu.memory_space<vmem>>, vector<128x128xf32>,
    } else {
    }
    %c0 = arith.constant 0 : index
    %c0_1 = arith.constant 0 : index
    %3 = vector.load %arg7[%c0, %c0_1] : memref<128x128xf32, #tpu.memory_space<vmem>>, vector<128x128xf32>
    %c0_2 = arith.constant 0 : index
    %c0_3 = arith.constant 0 : index
    %4 = vector.load %arg2[%c0_2, %c0_3] : memref<128x1024xbf16, #tpu.memory_space<vmem>>, vector<128x1024xbf16>
    %c0_4 = arith.constant 0 : index
    %c0_5 = arith.constant 0 : index
    %5 = vector.load %arg3[%c0_4, %c0_5] : memref<1024x128xbf16, #tpu.memory_space<vmem>>, vector<1024x128xbf16>
    %cst = arith.constant dense<0.000000e+00> : vector<128x128xf32>
    %6 = tpu.matmul %4, %5, %cst {dimension_numbers = #tpu.dot_dimension_numbers<[1], [0], [0], [1], [0, 0, 1, 1], [], []>} : vector<128x1024xbf16>, vector<1024x128xbf16>, vector<128x128xf32> -> vector<128x128xf32>
    %7 = arith.addf %3, %6 : vector<128x128xf32>
    %c0_6 = arith.constant 0 : index
    %c0_7 = arith.constant 0 : index
    %8 = vector.load %arg7[%c0_6, %c0_7] : memref<128x128xf32, #tpu.memory_space<vmem>>, vector<128x128xf32>
    tpu.vector_store %arg7[%c0_6, %c0_7], %7 {strides = array<i32>} : memref<128x128xf32, #tpu.memory_space<vmem>>, vector<128x128xf32>,
    %c0_i32_8 = arith.constant 0 : i32
    %9 = arith.cmpi eq, %arg1, %c0_i32_8 : i32
    %10 = arith.extui %9 : i1 to i32
    %c0_i32_9 = arith.constant 0 : i32
    %11 = arith.cmpi ne, %10, %c0_i32_9 : i32
    scf.if %11 {
      %c0_10 = arith.constant 0 : index
      %c0_11 = arith.constant 0 : index
      %12 = vector.load %arg7[%c0_10, %c0_11] : memref<128x128xf32, #tpu.memory_space<vmem>>, vector<128x128xf32>
      %13 = arith.truncf %12 : vector<128x128xf32> to vector<128x128xbf16>
      %c0_12 = arith.constant 0 : index
      %c0_13 = arith.constant 0 : index
      %14 = vector.load %arg4[%c0_12, %c0_13] : memref<128x128xbf16, #tpu.memory_space<vmem>>, vector<128x128xbf16>
      tpu.vector_store %arg4[%c0_12, %c0_13], %13 {strides = array<i32>} : memref<128x128xbf16, #tpu.memory_space<vmem>>, vector<128x128xbf16>,
      %cst_14 = arith.constant dense<0.000000e+00> : vector<128xf32>
      %15 = vector.multi_reduction <add>, %12, %cst_14 [0] : vector<128x128xf32> to vector<128xf32>
      %16 = vector.shape_cast %15 : vector<128xf32> to vector<1x128xf32>
      %17 = arith.mulf %12, %12 : vector<128x128xf32>
      %cst_15 = arith.constant dense<0.000000e+00> : vector<128xf32>
      %18 = vector.multi_reduction <add>, %17, %cst_15 [0] : vector<128x128xf32> to vector<128xf32>
      %19 = vector.shape_cast %18 : vector<128xf32> to vector<1x128xf32>
      %20 = tpu.iota {dimensions = array<i32: 0>} : vector<8x128xi32>
      %c0_i32_16 = arith.constant 0 : i32
      %21 = vector.broadcast %c0_i32_16 : i32 to vector<8x128xi32>
      %22 = arith.cmpi eq, %20, %21 : vector<8x128xi32>
      %cst_17 = arith.constant 0.000000e+00 : f32
      %23 = vector.shape_cast %16 : vector<1x128xf32> to vector<1x128xf32>
      %24 = vector.broadcast %23 : vector<1x128xf32> to vector<8x128xf32>
      %25 = vector.broadcast %cst_17 : f32 to vector<8x128xf32>
      %26 = arith.select %22, %24, %25 : vector<8x128xi1>, vector<8x128xf32>
      %c0_18 = arith.constant 0 : index
      %c0_19 = arith.constant 0 : index
      %27 = vector.load %arg5[%c0_18, %c0_19] : memref<8x128xf32, #tpu.memory_space<vmem>>, vector<8x128xf32>
      tpu.vector_store %arg5[%c0_18, %c0_19], %26 {strides = array<i32>} : memref<8x128xf32, #tpu.memory_space<vmem>>, vector<8x128xf32>,
      %c0_i32_20 = arith.constant 0 : i32
      %28 = vector.broadcast %c0_i32_20 : i32 to vector<8x128xi32>
      %29 = arith.cmpi eq, %20, %28 : vector<8x128xi32>
      %cst_21 = arith.constant 0.000000e+00 : f32
      %30 = vector.shape_cast %19 : vector<1x128xf32> to vector<1x128xf32>
      %31 = vector.broadcast %30 : vector<1x128xf32> to vector<8x128xf32>
      %32 = vector.broadcast %cst_21 : f32 to vector<8x128xf32>
      %33 = arith.select %29, %31, %32 : vector<8x128xi1>, vector<8x128xf32>
      %c0_22 = arith.constant 0 : index
      %c0_23 = arith.constant 0 : index
      %34 = vector.load %arg6[%c0_22, %c0_23] : memref<8x128xf32, #tpu.memory_space<vmem>>, vector<8x128xf32>
      tpu.vector_store %arg6[%c0_22, %c0_23], %33 {strides = array<i32>} : memref<8x128xf32, #tpu.memory_space<vmem>>, vector<8x128xf32>,
    } else {
    }
    return
  }
  func.func @transform_0(%arg0: i32, %arg1: i32) -> (i32, i32) {
    %c0_i32 = arith.constant 0 : i32
    return %arg0, %arg1 : i32, i32
  }
  func.func @transform_1(%arg0: i32, %arg1: i32) -> (i32, i32) {
    %c0_i32 = arith.constant 0 : i32
    %c0_i32_0 = arith.constant 0 : i32
    return %arg1, %c0_i32 : i32, i32
  }
  func.func @transform_2(%arg0: i32, %arg1: i32) -> (i32, i32) {
    %c0_i32 = arith.constant 0 : i32
    %c0_i32_0 = arith.constant 0 : i32
    return %arg0, %c0_i32 : i32, i32
  }
  func.func @transform_3(%arg0: i32, %arg1: i32) -> (i32, i32) {
    %c0_i32 = arith.constant 0 : i32
    %c0_i32_0 = arith.constant 0 : i32
    return %arg0, %c0_i32 : i32, i32
  }
  func.func @transform_4(%arg0: i32, %arg1: i32) -> (i32, i32) {
    %c0_i32 = arith.constant 0 : i32
    %c0_i32_0 = arith.constant 0 : i32
    return %arg0, %c0_i32 : i32, i32
  }
}

module attributes {stable_mosaic.version = 11 : i64} {
  func.func @_affine_lrelu_kernel(%arg0: i32, %arg1: memref<128x128xbf16, #tpu.memory_space<vmem>>, %arg2: memref<1x128xf32, #tpu.memory_space<vmem>>, %arg3: memref<1x128xf32, #tpu.memory_space<vmem>>, %arg4: memref<128x128xbf16, #tpu.memory_space<vmem>>) attributes {dimension_semantics = [#tpu.dimension_semantics<parallel>], iteration_bounds = array<i64: 1>, scalar_prefetch = 0 : i64, scratch_operands = 0 : i64, tpu.core_type = #tpu.core_type<tc>, window_params = [{transform_indices = @transform_0, window_bounds = array<i64: 128, 128>}, {pipeline_mode = #tpu.pipeline_mode<synchronous>, transform_indices = @transform_1, window_bounds = array<i64: 1, 128>}, {pipeline_mode = #tpu.pipeline_mode<synchronous>, transform_indices = @transform_2, window_bounds = array<i64: 1, 128>}, {transform_indices = @transform_3, window_bounds = array<i64: 128, 128>}]} {
    %c0 = arith.constant 0 : index
    %c0_0 = arith.constant 0 : index
    %0 = vector.load %arg1[%c0, %c0_0] : memref<128x128xbf16, #tpu.memory_space<vmem>>, vector<128x128xbf16>
    %1 = arith.extf %0 : vector<128x128xbf16> to vector<128x128xf32>
    %c0_1 = arith.constant 0 : index
    %c0_2 = arith.constant 0 : index
    %2 = vector.load %arg2[%c0_1, %c0_2] : memref<1x128xf32, #tpu.memory_space<vmem>>, vector<1x128xf32>
    %3 = vector.broadcast %2 : vector<1x128xf32> to vector<128x128xf32>
    %4 = arith.mulf %1, %3 : vector<128x128xf32>
    %c0_3 = arith.constant 0 : index
    %c0_4 = arith.constant 0 : index
    %5 = vector.load %arg3[%c0_3, %c0_4] : memref<1x128xf32, #tpu.memory_space<vmem>>, vector<1x128xf32>
    %6 = vector.broadcast %5 : vector<1x128xf32> to vector<128x128xf32>
    %7 = arith.addf %4, %6 : vector<128x128xf32>
    %cst = arith.constant 0.000000e+00 : f32
    %8 = vector.broadcast %cst : f32 to vector<128x128xf32>
    %9 = arith.cmpf ogt, %7, %8 : vector<128x128xf32>
    %cst_5 = arith.constant 2.000000e-01 : f32
    %10 = vector.broadcast %cst_5 : f32 to vector<128x128xf32>
    %11 = arith.mulf %10, %7 : vector<128x128xf32>
    %12 = arith.select %9, %7, %11 : vector<128x128xi1>, vector<128x128xf32>
    %13 = arith.truncf %12 : vector<128x128xf32> to vector<128x128xbf16>
    %c0_6 = arith.constant 0 : index
    %c0_7 = arith.constant 0 : index
    %14 = vector.load %arg4[%c0_6, %c0_7] : memref<128x128xbf16, #tpu.memory_space<vmem>>, vector<128x128xbf16>
    tpu.vector_store %arg4[%c0_6, %c0_7], %13 {strides = array<i32>} : memref<128x128xbf16, #tpu.memory_space<vmem>>, vector<128x128xbf16>,
    return
  }
  func.func @transform_0(%arg0: i32) -> (i32, i32) {
    %c0_i32 = arith.constant 0 : i32
    %c0_i32_0 = arith.constant 0 : i32
    return %arg0, %c0_i32 : i32, i32
  }
  func.func @transform_1(%arg0: i32) -> (i32, i32) {
    %c0_i32 = arith.constant 0 : i32
    %c0_i32_0 = arith.constant 0 : i32
    %c0_i32_1 = arith.constant 0 : i32
    return %c0_i32, %c0_i32_0 : i32, i32
  }
  func.func @transform_2(%arg0: i32) -> (i32, i32) {
    %c0_i32 = arith.constant 0 : i32
    %c0_i32_0 = arith.constant 0 : i32
    %c0_i32_1 = arith.constant 0 : i32
    return %c0_i32, %c0_i32_0 : i32, i32
  }
  func.func @transform_3(%arg0: i32) -> (i32, i32) {
    %c0_i32 = arith.constant 0 : i32
    %c0_i32_0 = arith.constant 0 : i32
    return %arg0, %c0_i32 : i32, i32
  }
}

module attributes {stable_mosaic.version = 11 : i64} {
  func.func @_gemm_stats_kernel(%arg0: i32, %arg1: i32, %arg2: memref<32x2048xbf16, #tpu.memory_space<vmem>>, %arg3: memref<2048x256xbf16, #tpu.memory_space<vmem>>, %arg4: memref<32x256xbf16, #tpu.memory_space<vmem>>, %arg5: memref<8x256xf32, #tpu.memory_space<vmem>>, %arg6: memref<8x256xf32, #tpu.memory_space<vmem>>, %arg7: memref<32x256xf32, #tpu.memory_space<vmem>>) attributes {dimension_semantics = [#tpu.dimension_semantics<parallel>, #tpu.dimension_semantics<arbitrary>], iteration_bounds = array<i64: 1, 1>, scalar_prefetch = 0 : i64, scratch_operands = 1 : i64, tpu.core_type = #tpu.core_type<tc>, window_params = [{transform_indices = @transform_0, window_bounds = array<i64: 32, 2048>}, {transform_indices = @transform_1, window_bounds = array<i64: 2048, 256>}, {transform_indices = @transform_2, window_bounds = array<i64: 32, 256>}, {transform_indices = @transform_3, window_bounds = array<i64: 8, 256>}, {transform_indices = @transform_4, window_bounds = array<i64: 8, 256>}]} {
    %c0_i32 = arith.constant 0 : i32
    %0 = arith.cmpi eq, %arg1, %c0_i32 : i32
    %1 = arith.extui %0 : i1 to i32
    %c0_i32_0 = arith.constant 0 : i32
    %2 = arith.cmpi ne, %1, %c0_i32_0 : i32
    scf.if %2 {
      %cst_10 = arith.constant 0.000000e+00 : f32
      %12 = vector.broadcast %cst_10 : f32 to vector<32x256xf32>
      %c0_11 = arith.constant 0 : index
      %c0_12 = arith.constant 0 : index
      %13 = vector.load %arg7[%c0_11, %c0_12] : memref<32x256xf32, #tpu.memory_space<vmem>>, vector<32x256xf32>
      tpu.vector_store %arg7[%c0_11, %c0_12], %12 {strides = array<i32>} : memref<32x256xf32, #tpu.memory_space<vmem>>, vector<32x256xf32>,
    } else {
    }
    %c0 = arith.constant 0 : index
    %c0_1 = arith.constant 0 : index
    %3 = vector.load %arg7[%c0, %c0_1] : memref<32x256xf32, #tpu.memory_space<vmem>>, vector<32x256xf32>
    %c0_2 = arith.constant 0 : index
    %c0_3 = arith.constant 0 : index
    %4 = vector.load %arg2[%c0_2, %c0_3] : memref<32x2048xbf16, #tpu.memory_space<vmem>>, vector<32x2048xbf16>
    %c0_4 = arith.constant 0 : index
    %c0_5 = arith.constant 0 : index
    %5 = vector.load %arg3[%c0_4, %c0_5] : memref<2048x256xbf16, #tpu.memory_space<vmem>>, vector<2048x256xbf16>
    %cst = arith.constant dense<0.000000e+00> : vector<32x256xf32>
    %6 = tpu.matmul %4, %5, %cst {dimension_numbers = #tpu.dot_dimension_numbers<[1], [0], [0], [1], [0, 0, 1, 1], [], []>} : vector<32x2048xbf16>, vector<2048x256xbf16>, vector<32x256xf32> -> vector<32x256xf32>
    %7 = arith.addf %3, %6 : vector<32x256xf32>
    %c0_6 = arith.constant 0 : index
    %c0_7 = arith.constant 0 : index
    %8 = vector.load %arg7[%c0_6, %c0_7] : memref<32x256xf32, #tpu.memory_space<vmem>>, vector<32x256xf32>
    tpu.vector_store %arg7[%c0_6, %c0_7], %7 {strides = array<i32>} : memref<32x256xf32, #tpu.memory_space<vmem>>, vector<32x256xf32>,
    %c0_i32_8 = arith.constant 0 : i32
    %9 = arith.cmpi eq, %arg1, %c0_i32_8 : i32
    %10 = arith.extui %9 : i1 to i32
    %c0_i32_9 = arith.constant 0 : i32
    %11 = arith.cmpi ne, %10, %c0_i32_9 : i32
    scf.if %11 {
      %c0_10 = arith.constant 0 : index
      %c0_11 = arith.constant 0 : index
      %12 = vector.load %arg7[%c0_10, %c0_11] : memref<32x256xf32, #tpu.memory_space<vmem>>, vector<32x256xf32>
      %13 = arith.truncf %12 : vector<32x256xf32> to vector<32x256xbf16>
      %c0_12 = arith.constant 0 : index
      %c0_13 = arith.constant 0 : index
      %14 = vector.load %arg4[%c0_12, %c0_13] : memref<32x256xbf16, #tpu.memory_space<vmem>>, vector<32x256xbf16>
      tpu.vector_store %arg4[%c0_12, %c0_13], %13 {strides = array<i32>} : memref<32x256xbf16, #tpu.memory_space<vmem>>, vector<32x256xbf16>,
      %cst_14 = arith.constant dense<0.000000e+00> : vector<256xf32>
      %15 = vector.multi_reduction <add>, %12, %cst_14 [0] : vector<32x256xf32> to vector<256xf32>
      %16 = vector.shape_cast %15 : vector<256xf32> to vector<1x256xf32>
      %17 = arith.mulf %12, %12 : vector<32x256xf32>
      %cst_15 = arith.constant dense<0.000000e+00> : vector<256xf32>
      %18 = vector.multi_reduction <add>, %17, %cst_15 [0] : vector<32x256xf32> to vector<256xf32>
      %19 = vector.shape_cast %18 : vector<256xf32> to vector<1x256xf32>
      %20 = tpu.iota {dimensions = array<i32: 0>} : vector<8x256xi32>
      %c0_i32_16 = arith.constant 0 : i32
      %21 = vector.broadcast %c0_i32_16 : i32 to vector<8x256xi32>
      %22 = arith.cmpi eq, %20, %21 : vector<8x256xi32>
      %cst_17 = arith.constant 0.000000e+00 : f32
      %23 = vector.shape_cast %16 : vector<1x256xf32> to vector<1x256xf32>
      %24 = vector.broadcast %23 : vector<1x256xf32> to vector<8x256xf32>
      %25 = vector.broadcast %cst_17 : f32 to vector<8x256xf32>
      %26 = arith.select %22, %24, %25 : vector<8x256xi1>, vector<8x256xf32>
      %c0_18 = arith.constant 0 : index
      %c0_19 = arith.constant 0 : index
      %27 = vector.load %arg5[%c0_18, %c0_19] : memref<8x256xf32, #tpu.memory_space<vmem>>, vector<8x256xf32>
      tpu.vector_store %arg5[%c0_18, %c0_19], %26 {strides = array<i32>} : memref<8x256xf32, #tpu.memory_space<vmem>>, vector<8x256xf32>,
      %c0_i32_20 = arith.constant 0 : i32
      %28 = vector.broadcast %c0_i32_20 : i32 to vector<8x256xi32>
      %29 = arith.cmpi eq, %20, %28 : vector<8x256xi32>
      %cst_21 = arith.constant 0.000000e+00 : f32
      %30 = vector.shape_cast %19 : vector<1x256xf32> to vector<1x256xf32>
      %31 = vector.broadcast %30 : vector<1x256xf32> to vector<8x256xf32>
      %32 = vector.broadcast %cst_21 : f32 to vector<8x256xf32>
      %33 = arith.select %29, %31, %32 : vector<8x256xi1>, vector<8x256xf32>
      %c0_22 = arith.constant 0 : index
      %c0_23 = arith.constant 0 : index
      %34 = vector.load %arg6[%c0_22, %c0_23] : memref<8x256xf32, #tpu.memory_space<vmem>>, vector<8x256xf32>
      tpu.vector_store %arg6[%c0_22, %c0_23], %33 {strides = array<i32>} : memref<8x256xf32, #tpu.memory_space<vmem>>, vector<8x256xf32>,
    } else {
    }
    return
  }
  func.func @transform_0(%arg0: i32, %arg1: i32) -> (i32, i32) {
    %c0_i32 = arith.constant 0 : i32
    return %arg0, %arg1 : i32, i32
  }
  func.func @transform_1(%arg0: i32, %arg1: i32) -> (i32, i32) {
    %c0_i32 = arith.constant 0 : i32
    %c0_i32_0 = arith.constant 0 : i32
    return %arg1, %c0_i32 : i32, i32
  }
  func.func @transform_2(%arg0: i32, %arg1: i32) -> (i32, i32) {
    %c0_i32 = arith.constant 0 : i32
    %c0_i32_0 = arith.constant 0 : i32
    return %arg0, %c0_i32 : i32, i32
  }
  func.func @transform_3(%arg0: i32, %arg1: i32) -> (i32, i32) {
    %c0_i32 = arith.constant 0 : i32
    %c0_i32_0 = arith.constant 0 : i32
    return %arg0, %c0_i32 : i32, i32
  }
  func.func @transform_4(%arg0: i32, %arg1: i32) -> (i32, i32) {
    %c0_i32 = arith.constant 0 : i32
    %c0_i32_0 = arith.constant 0 : i32
    return %arg0, %c0_i32 : i32, i32
  }
}

module attributes {stable_mosaic.version = 11 : i64} {
  func.func @_affine_lrelu_kernel(%arg0: i32, %arg1: memref<32x256xbf16, #tpu.memory_space<vmem>>, %arg2: memref<1x256xf32, #tpu.memory_space<vmem>>, %arg3: memref<1x256xf32, #tpu.memory_space<vmem>>, %arg4: memref<32x256xbf16, #tpu.memory_space<vmem>>) attributes {dimension_semantics = [#tpu.dimension_semantics<parallel>], iteration_bounds = array<i64: 1>, scalar_prefetch = 0 : i64, scratch_operands = 0 : i64, tpu.core_type = #tpu.core_type<tc>, window_params = [{transform_indices = @transform_0, window_bounds = array<i64: 32, 256>}, {pipeline_mode = #tpu.pipeline_mode<synchronous>, transform_indices = @transform_1, window_bounds = array<i64: 1, 256>}, {pipeline_mode = #tpu.pipeline_mode<synchronous>, transform_indices = @transform_2, window_bounds = array<i64: 1, 256>}, {transform_indices = @transform_3, window_bounds = array<i64: 32, 256>}]} {
    %c0 = arith.constant 0 : index
    %c0_0 = arith.constant 0 : index
    %0 = vector.load %arg1[%c0, %c0_0] : memref<32x256xbf16, #tpu.memory_space<vmem>>, vector<32x256xbf16>
    %1 = arith.extf %0 : vector<32x256xbf16> to vector<32x256xf32>
    %c0_1 = arith.constant 0 : index
    %c0_2 = arith.constant 0 : index
    %2 = vector.load %arg2[%c0_1, %c0_2] : memref<1x256xf32, #tpu.memory_space<vmem>>, vector<1x256xf32>
    %3 = vector.broadcast %2 : vector<1x256xf32> to vector<32x256xf32>
    %4 = arith.mulf %1, %3 : vector<32x256xf32>
    %c0_3 = arith.constant 0 : index
    %c0_4 = arith.constant 0 : index
    %5 = vector.load %arg3[%c0_3, %c0_4] : memref<1x256xf32, #tpu.memory_space<vmem>>, vector<1x256xf32>
    %6 = vector.broadcast %5 : vector<1x256xf32> to vector<32x256xf32>
    %7 = arith.addf %4, %6 : vector<32x256xf32>
    %cst = arith.constant 0.000000e+00 : f32
    %8 = vector.broadcast %cst : f32 to vector<32x256xf32>
    %9 = arith.cmpf ogt, %7, %8 : vector<32x256xf32>
    %cst_5 = arith.constant 2.000000e-01 : f32
    %10 = vector.broadcast %cst_5 : f32 to vector<32x256xf32>
    %11 = arith.mulf %10, %7 : vector<32x256xf32>
    %12 = arith.select %9, %7, %11 : vector<32x256xi1>, vector<32x256xf32>
    %13 = arith.truncf %12 : vector<32x256xf32> to vector<32x256xbf16>
    %c0_6 = arith.constant 0 : index
    %c0_7 = arith.constant 0 : index
    %14 = vector.load %arg4[%c0_6, %c0_7] : memref<32x256xbf16, #tpu.memory_space<vmem>>, vector<32x256xbf16>
    tpu.vector_store %arg4[%c0_6, %c0_7], %13 {strides = array<i32>} : memref<32x256xbf16, #tpu.memory_space<vmem>>, vector<32x256xbf16>,
    return
  }
  func.func @transform_0(%arg0: i32) -> (i32, i32) {
    %c0_i32 = arith.constant 0 : i32
    %c0_i32_0 = arith.constant 0 : i32
    return %arg0, %c0_i32 : i32, i32
  }
  func.func @transform_1(%arg0: i32) -> (i32, i32) {
    %c0_i32 = arith.constant 0 : i32
    %c0_i32_0 = arith.constant 0 : i32
    %c0_i32_1 = arith.constant 0 : i32
    return %c0_i32, %c0_i32_0 : i32, i32
  }
  func.func @transform_2(%arg0: i32) -> (i32, i32) {
    %c0_i32 = arith.constant 0 : i32
    %c0_i32_0 = arith.constant 0 : i32
    %c0_i32_1 = arith.constant 0 : i32
    return %c0_i32, %c0_i32_0 : i32, i32
  }
  func.func @transform_3(%arg0: i32) -> (i32, i32) {
    %c0_i32 = arith.constant 0 : i32
    %c0_i32_0 = arith.constant 0 : i32
    return %arg0, %c0_i32 : i32, i32
  }
}

module attributes {stable_mosaic.version = 11 : i64} {
  func.func @_gemm_act_kernel(%arg0: i32, %arg1: i32, %arg2: memref<2x4096xbf16, #tpu.memory_space<vmem>>, %arg3: memref<4096x128xbf16, #tpu.memory_space<vmem>>, %arg4: memref<2x128xf32, #tpu.memory_space<vmem>>, %arg5: memref<2x128xf32, #tpu.memory_space<vmem>>) attributes {dimension_semantics = [#tpu.dimension_semantics<parallel>, #tpu.dimension_semantics<arbitrary>], iteration_bounds = array<i64: 1, 1>, scalar_prefetch = 0 : i64, scratch_operands = 1 : i64, tpu.core_type = #tpu.core_type<tc>, window_params = [{transform_indices = @transform_0, window_bounds = array<i64: 2, 4096>}, {transform_indices = @transform_1, window_bounds = array<i64: 4096, 128>}, {transform_indices = @transform_2, window_bounds = array<i64: 2, 128>}]} {
    %c0_i32 = arith.constant 0 : i32
    %0 = arith.cmpi eq, %arg1, %c0_i32 : i32
    %1 = arith.extui %0 : i1 to i32
    %c0_i32_0 = arith.constant 0 : i32
    %2 = arith.cmpi ne, %1, %c0_i32_0 : i32
    scf.if %2 {
      %cst_10 = arith.constant 0.000000e+00 : f32
      %12 = vector.broadcast %cst_10 : f32 to vector<2x128xf32>
      %c0_11 = arith.constant 0 : index
      %c0_12 = arith.constant 0 : index
      %13 = vector.load %arg5[%c0_11, %c0_12] : memref<2x128xf32, #tpu.memory_space<vmem>>, vector<2x128xf32>
      tpu.vector_store %arg5[%c0_11, %c0_12], %12 {strides = array<i32>} : memref<2x128xf32, #tpu.memory_space<vmem>>, vector<2x128xf32>,
    } else {
    }
    %c0 = arith.constant 0 : index
    %c0_1 = arith.constant 0 : index
    %3 = vector.load %arg5[%c0, %c0_1] : memref<2x128xf32, #tpu.memory_space<vmem>>, vector<2x128xf32>
    %c0_2 = arith.constant 0 : index
    %c0_3 = arith.constant 0 : index
    %4 = vector.load %arg2[%c0_2, %c0_3] : memref<2x4096xbf16, #tpu.memory_space<vmem>>, vector<2x4096xbf16>
    %c0_4 = arith.constant 0 : index
    %c0_5 = arith.constant 0 : index
    %5 = vector.load %arg3[%c0_4, %c0_5] : memref<4096x128xbf16, #tpu.memory_space<vmem>>, vector<4096x128xbf16>
    %cst = arith.constant dense<0.000000e+00> : vector<2x128xf32>
    %6 = tpu.matmul %4, %5, %cst {dimension_numbers = #tpu.dot_dimension_numbers<[1], [0], [0], [1], [0, 0, 1, 1], [], []>} : vector<2x4096xbf16>, vector<4096x128xbf16>, vector<2x128xf32> -> vector<2x128xf32>
    %7 = arith.addf %3, %6 : vector<2x128xf32>
    %c0_6 = arith.constant 0 : index
    %c0_7 = arith.constant 0 : index
    %8 = vector.load %arg5[%c0_6, %c0_7] : memref<2x128xf32, #tpu.memory_space<vmem>>, vector<2x128xf32>
    tpu.vector_store %arg5[%c0_6, %c0_7], %7 {strides = array<i32>} : memref<2x128xf32, #tpu.memory_space<vmem>>, vector<2x128xf32>,
    %c0_i32_8 = arith.constant 0 : i32
    %9 = arith.cmpi eq, %arg1, %c0_i32_8 : i32
    %10 = arith.extui %9 : i1 to i32
    %c0_i32_9 = arith.constant 0 : i32
    %11 = arith.cmpi ne, %10, %c0_i32_9 : i32
    scf.if %11 {
      %c0_10 = arith.constant 0 : index
      %c0_11 = arith.constant 0 : index
      %12 = vector.load %arg5[%c0_10, %c0_11] : memref<2x128xf32, #tpu.memory_space<vmem>>, vector<2x128xf32>
      %c0_12 = arith.constant 0 : index
      %c0_13 = arith.constant 0 : index
      %13 = vector.load %arg4[%c0_12, %c0_13] : memref<2x128xf32, #tpu.memory_space<vmem>>, vector<2x128xf32>
      tpu.vector_store %arg4[%c0_12, %c0_13], %12 {strides = array<i32>} : memref<2x128xf32, #tpu.memory_space<vmem>>, vector<2x128xf32>,
    } else {
    }
    return
  }
  func.func @transform_0(%arg0: i32, %arg1: i32) -> (i32, i32) {
    %c0_i32 = arith.constant 0 : i32
    return %arg0, %arg1 : i32, i32
  }
  func.func @transform_1(%arg0: i32, %arg1: i32) -> (i32, i32) {
    %c0_i32 = arith.constant 0 : i32
    %c0_i32_0 = arith.constant 0 : i32
    return %arg1, %c0_i32 : i32, i32
  }
  func.func @transform_2(%arg0: i32, %arg1: i32) -> (i32, i32) {
    %c0_i32 = arith.constant 0 : i32
    %c0_i32_0 = arith.constant 0 : i32
    return %arg0, %c0_i32 : i32, i32
  }
}

</mosaic_0001>

<llo_original>
// kernel: discriminator_forward.6
$region0: #{discriminator_forward.6}
  #allocation0 [shape = 'u32[]', space=smem, size = 0x4, offset = 0x4, fixed_abs, tag = 'smem constant byte address 0x4 - core index']
  #allocation1 [shape = 'u32[72,128]{1,0:T(1,128)}', space=vmem, size = 0x9000, scoped, tag = 'internal scratch']
  #allocation2 [shape = 'f32[256,128]{1,0:T(8,128)}', space=vmem, size = 0x20000, scoped, tag = 'scratch operand']
  %s0 = inlined_call_operand.vmem [shape: bf16[512,48], index: 0, kind: input, shape index: {}]
  %s1 = inlined_call_operand.vmem [shape: bf16[48,128], index: 1, kind: input, shape index: {}]
  %s2 = inlined_call_operand.vmem [shape: bf16[512,128], index: 2, kind: output, shape index: {}]
  %s3 = sld [smem:[#allocation0]]
  $region49: #{discriminator_forward.6} parent=0
    _
  %s5 = ssub.s32 1, %s3
  %s6 = scalar_select 0, %s5, %s3
  loop: start=0, step=1, limit=4
  $region2: #{discriminator_forward.6} parent=0 // loop_pre_header
    _
  $region3: #{discriminator_forward.6} parent=0 // loop_header
    %s8 = sphi 0, %s12
    %p9 = scmp.ge.s32.totalorder %s8, 4
    %s15 = sphi 0, %s27
    %s16 = sphi 0, %s23
    %s17 = sphi 0, %s15
    %s18 = sphi 0, %s16
    %s19 = sphi 0, %s17
    %s20 = sphi 0, %s18
    %s32 = sphi 0, %s34
    %s35 = sphi 0, %s32
    %s36 = sphi 0, %s35
    %s52 = sphi 0, %s36
    %s58 = sphi 0, %s60
    %s61 = sphi 0, %s58
    %s62 = sphi 0, %s61
    %s78 = sphi 0, %s62
    %s84 = sphi 0, %s86
    %s87 = sphi 0, %s84
    %s88 = sphi 0, %s87
    %s104 = sphi 0, %s88
  $region4: #{discriminator_forward.6} parent=0 // loop_header_branch
    %11 = sbr.rel (%p9) target = $region8
  $region5: #{discriminator_forward.6} parent=0 // loop_body
    %s13 = ssub.s32 %s8, 1
    %s14 = ssub.s32 %s8, 2
    %s21 = sadd.s32 1, %s16
    %p22 = scmp.ge.s32.totalorder %s21, 1
    %s23 = scalar_select %p22, 0, %s21
    %s24 = sadd.s32 1, %s15
    %s25 = scalar_select %p22, %s24, %s15
    %p26 = scmp.ge.s32.totalorder %s25, 2
    %s27 = scalar_select %p26, 0, %s25
    %s28 = ssub.s32 %s15, %s27
    %s29 = ssub.s32 %s16, %s23
    %s30 = sor.u32 %s28, %s29
    %p31 = scmp.eq.s32.totalorder %s30, 0
    %s33 = sadd.s32 %s32, 1
    %s34 = scalar_select %p31, %s32, %s33
    %p37 = pneg %p31
    %p38 = scmp.eq.s32.totalorder %s8, 1
    %p39 = por %p37, %p38
    %p40 = scmp.ne.s32.totalorder %s32, %s35
    %p41 = scmp.eq.s32.totalorder %s8, 0
    %p42 = por %p40, %p41
    %p43 = scmp.ne.s32.totalorder %s32, %s35
    %p44 = scmp.eq.s32.totalorder %s13, 1
    %p45 = por %p43, %p44
    %p46 = scmp.ne.s32.totalorder %s35, %s36
    %p47 = scmp.eq.s32.totalorder %s13, 0
    %p48 = por %p46, %p47
    %p49 = scmp.ne.s32.totalorder %s35, %s36
    %p50 = scmp.eq.s32.totalorder %s14, 1
    %p51 = por %p49, %p50
    %p53 = scmp.ne.s32.totalorder %s36, %s52
    %p54 = scmp.eq.s32.totalorder %s14, 0
    %p55 = por %p53, %p54
    %s56 = ssub.s32 %s16, %s23
    %p57 = scmp.eq.s32.totalorder %s56, 0
    %s59 = sadd.s32 %s58, 1
    %s60 = scalar_select %p57, %s58, %s59
    %p63 = pneg %p57
    %p64 = scmp.eq.s32.totalorder %s8, 1
    %p65 = por %p63, %p64
    %p66 = scmp.ne.s32.totalorder %s58, %s61
    %p67 = scmp.eq.s32.totalorder %s8, 0
    %p68 = por %p66, %p67
    %p69 = scmp.ne.s32.totalorder %s58, %s61
    %p70 = scmp.eq.s32.totalorder %s13, 1
    %p71 = por %p69, %p70
    %p72 = scmp.ne.s32.totalorder %s61, %s62
    %p73 = scmp.eq.s32.totalorder %s13, 0
    %p74 = por %p72, %p73
    %p75 = scmp.ne.s32.totalorder %s61, %s62
    %p76 = scmp.eq.s32.totalorder %s14, 1
    %p77 = por %p75, %p76
    %p79 = scmp.ne.s32.totalorder %s62, %s78
    %p80 = scmp.eq.s32.totalorder %s14, 0
    %p81 = por %p79, %p80
    %s82 = ssub.s32 %s15, %s27
    %p83 = scmp.eq.s32.totalorder %s82, 0
    %s85 = sadd.s32 %s84, 1
    %s86 = scalar_select %p83, %s84, %s85
    %p89 = pneg %p83
    %p90 = scmp.eq.s32.totalorder %s8, 1
    %p91 = por %p89, %p90
    %p92 = scmp.ne.s32.totalorder %s84, %s87
    %p93 = scmp.eq.s32.totalorder %s8, 0
    %p94 = por %p92, %p93
    %p95 = scmp.ne.s32.totalorder %s84, %s87
    %p96 = scmp.eq.s32.totalorder %s13, 1
    %p97 = por %p95, %p96
    %p98 = scmp.ne.s32.totalorder %s87, %s88
    %p99 = scmp.eq.s32.totalorder %s13, 0
    %p100 = por %p98, %p99
    %p101 = scmp.ne.s32.totalorder %s87, %s88
    %p102 = scmp.eq.s32.totalorder %s14, 1
    %p103 = por %p101, %p102
    %p105 = scmp.ne.s32.totalorder %s88, %s104
    %p106 = scmp.eq.s32.totalorder %s14, 0
    %p107 = por %p105, %p106
    %p108 = scmp.le.s32.totalorder 1, %s8
    %p109 = scmp.lt.s32.totalorder %s8, 3
    %p110 = pnand %p108, %p109
    %p111 = pneg %p110
    // Predicated region
    $region9: #{discriminator_forward.6} parent=5 // pred_check
      _
    $region10: #{discriminator_forward.6} parent=5 // pred_check_branch
      %113 = sbr.rel (%p110) target = $region12
    $region11: #{discriminator_forward.6} parent=5 // pred_region
      %s114 = ssub.s32 %s8, 1
      // Predicated region
      $region13: #{discriminator_forward.6} parent=11 // pred_check
        %p115 = pneg %p74
      $region14: #{discriminator_forward.6} parent=11 // pred_check_branch
        %117 = sbr.rel (%p115) target = $region16
      $region15: #{discriminator_forward.6} parent=11 // pred_region
        %s118 = smul.u32 6, %s18
        %p119 = scmp.lt.s32.totalorder %s118, 5
        %s120 = scalar_select %p119, %s118, 5
        %s121 = smul.addr %s120, 4
        %s122 = scalar_lea.vmem %s1, %s121
        %s123 = smul.u32 6, %s18
      $region16: #{discriminator_forward.6} parent=11 // pred_fallthru
        _
    $region12: #{discriminator_forward.6} parent=5 // pred_fallthru
      _
    %p124 = scmp.lt.s32.totalorder %s8, 2
    // Predicated region
    $region17: #{discriminator_forward.6} parent=5 // pred_check
      %p125 = pneg %p124
    $region18: #{discriminator_forward.6} parent=5 // pred_check_branch
      %127 = sbr.rel (%p125) target = $region20
    $region19: #{discriminator_forward.6} parent=5 // pred_region
      // Predicated region
      $region21: #{discriminator_forward.6} parent=19 // pred_check
        %p128 = pneg %p42
      $region22: #{discriminator_forward.6} parent=19 // pred_check_branch
        %130 = sbr.rel (%p128) target = $region24
      $region23: #{discriminator_forward.6} parent=19 // pred_region
        %s131 = smul.u32 32, %s15
        %p132 = scmp.lt.s32.totalorder %s131, 63
        %s133 = scalar_select %p132, %s131, 63
        %p134 = scmp.lt.s32.totalorder %s16, 0
        %s135 = scalar_select %p134, %s16, 0
        %s136 = sadd.s32 %s135, %s133
        %s137 = smul.addr %s136, 4
        %s138 = scalar_lea.vmem %s0, %s137
        %s139 = smul.u32 32, %s15
      $region24: #{discriminator_forward.6} parent=19 // pred_fallthru
        _
    $region20: #{discriminator_forward.6} parent=5 // pred_fallthru
      _
    %p140 = scmp.le.s32.totalorder 1, %s8
    %p141 = scmp.lt.s32.totalorder %s8, 3
    %p142 = pnand %p140, %p141
    %p143 = pneg %p142
    // Predicated region
    $region25: #{discriminator_forward.6} parent=5 // pred_check
      _
    $region26: #{discriminator_forward.6} parent=5 // pred_check_branch
      %145 = sbr.rel (%p142) target = $region28
    $region27: #{discriminator_forward.6} parent=5 // pred_region
      %s146 = ssub.s32 %s8, 1
      %s147 = smul.u32 32, %s17
      %p148 = scmp.lt.s32.totalorder %s147, 63
      %s149 = scalar_select %p148, %s147, 63
      %p150 = scmp.lt.s32.totalorder %s18, 0
      %s151 = scalar_select %p150, %s18, 0
      %s152 = sadd.s32 %s151, %s149
      %s153 = smul.addr %s152, 4
      %s154 = scalar_lea.vmem %s0, %s153
      %p155 = pneg %p48
      %p156 = pneg %p45
      %s157 = smul.u32 6, %s18
      %p158 = scmp.lt.s32.totalorder %s157, 5
      %s159 = scalar_select %p158, %s157, 5
      %s160 = smul.addr %s159, 4
      %s161 = scalar_lea.vmem %s1, %s160
      %p162 = pneg %p74
      %p163 = pneg %p71
      %p164 = pneg %p100
      %p165 = pneg %p97
      %s166 = smul.u32 32, %s17
      %p167 = scmp.lt.s32.totalorder %s166, 63
      %s168 = scalar_select %p167, %s166, 63
      %s169 = smul.addr %s168, 4
      %s170 = scalar_lea.vmem %s2, %s169
      %s171 = smul.u32 32, %s17
      %p172 = scmp.lt.s32.totalorder %s171, 63
      %s173 = scalar_select %p172, %s171, 63
      %p174 = scmp.lt.s32.totalorder %s18, 0
      %s175 = scalar_select %p174, %s18, 0
      %s176 = sadd.s32 %s175, %s173
      %s177 = smul.addr %s176, 4
      %s178 = scalar_lea.vmem %s0, %s177
      %s179 = smul.u32 32, %s17
      %s180 = smul.u32 6, %s18
      %p181 = scmp.lt.s32.totalorder %s180, 5
      %s182 = scalar_select %p181, %s180, 5
      %s183 = smul.addr %s182, 4
      %s184 = scalar_lea.vmem %s1, %s183
      %s185 = smul.u32 6, %s18
      %s186 = smul.u32 32, %s17
      %p187 = scmp.lt.s32.totalorder %s186, 63
      %s188 = scalar_select %p187, %s186, 63
      %s189 = smul.addr %s188, 4
      %s190 = scalar_lea.vmem %s2, %s189
      %s191 = smul.u32 32, %s17
      %p193 = scmp.eq.s32.totalorder %s18, 0
      // Predicated region
      $region29: #{discriminator_forward.6} parent=27 // pred_check
        %p194 = pneg %p193
      $region30: #{discriminator_forward.6} parent=27 // pred_check_branch
        %196 = sbr.rel (%p194) target = $region32
      $region31: #{discriminator_forward.6} parent=27 // pred_region
        %197 = vst [vmem:[#allocation2] sm:$0xff] 0.0
        %198 = vst [vmem:[#allocation2 + $0x8] sm:$0xff] 0.0
        %199 = vst [vmem:[#allocation2 + $0x10] sm:$0xff] 0.0
        %200 = vst [vmem:[#allocation2 + $0x18] sm:$0xff] 0.0
        %201 = vst [vmem:[#allocation2 + $0x20] sm:$0xff] 0.0
        %202 = vst [vmem:[#allocation2 + $0x28] sm:$0xff] 0.0
        %203 = vst [vmem:[#allocation2 + $0x30] sm:$0xff] 0.0
        %204 = vst [vmem:[#allocation2 + $0x38] sm:$0xff] 0.0
        %205 = vst [vmem:[#allocation2 + $0x40] sm:$0xff] 0.0
        %206 = vst [vmem:[#allocation2 + $0x48] sm:$0xff] 0.0
        %207 = vst [vmem:[#allocation2 + $0x50] sm:$0xff] 0.0
        %208 = vst [vmem:[#allocation2 + $0x58] sm:$0xff] 0.0
        %209 = vst [vmem:[#allocation2 + $0x60] sm:$0xff] 0.0
        %210 = vst [vmem:[#allocation2 + $0x68] sm:$0xff] 0.0
        %211 = vst [vmem:[#allocation2 + $0x70] sm:$0xff] 0.0
        %212 = vst [vmem:[#allocation2 + $0x78] sm:$0xff] 0.0
        %213 = vst [vmem:[#allocation2 + $0x80] sm:$0xff] 0.0
        %214 = vst [vmem:[#allocation2 + $0x88] sm:$0xff] 0.0
        %215 = vst [vmem:[#allocation2 + $0x90] sm:$0xff] 0.0
        %216 = vst [vmem:[#allocation2 + $0x98] sm:$0xff] 0.0
        %217 = vst [vmem:[#allocation2 + $0xa0] sm:$0xff] 0.0
        %218 = vst [vmem:[#allocation2 + $0xa8] sm:$0xff] 0.0
        %219 = vst [vmem:[#allocation2 + $0xb0] sm:$0xff] 0.0
        %220 = vst [vmem:[#allocation2 + $0xb8] sm:$0xff] 0.0
        %221 = vst [vmem:[#allocation2 + $0xc0] sm:$0xff] 0.0
        %222 = vst [vmem:[#allocation2 + $0xc8] sm:$0xff] 0.0
        %223 = vst [vmem:[#allocation2 + $0xd0] sm:$0xff] 0.0
        %224 = vst [vmem:[#allocation2 + $0xd8] sm:$0xff] 0.0
        %225 = vst [vmem:[#allocation2 + $0xe0] sm:$0xff] 0.0
        %226 = vst [vmem:[#allocation2 + $0xe8] sm:$0xff] 0.0
        %227 = vst [vmem:[#allocation2 + $0xf0] sm:$0xff] 0.0
        %228 = vst [vmem:[#allocation2 + $0xf8] sm:$0xff] 0.0
      $region32: #{discriminator_forward.6} parent=27 // pred_fallthru
        _
      %v229 = vld [vmem:[#allocation2] sm:$0xff]
      %v230 = vld [vmem:[#allocation2 + $0x8] sm:$0xff]
      %v231 = vld [vmem:[#allocation2 + $0x10] sm:$0xff]
      %v232 = vld [vmem:[#allocation2 + $0x18] sm:$0xff]
      %v233 = vld [vmem:[#allocation2 + $0x20] sm:$0xff]
      %v234 = vld [vmem:[#allocation2 + $0x28] sm:$0xff]
      %v235 = vld [vmem:[#allocation2 + $0x30] sm:$0xff]
      %v236 = vld [vmem:[#allocation2 + $0x38] sm:$0xff]
      %v237 = vld [vmem:[#allocation2 + $0x40] sm:$0xff]
      %v238 = vld [vmem:[#allocation2 + $0x48] sm:$0xff]
      %v239 = vld [vmem:[#allocation2 + $0x50] sm:$0xff]
      %v240 = vld [vmem:[#allocation2 + $0x58] sm:$0xff]
      %v241 = vld [vmem:[#allocation2 + $0x60] sm:$0xff]
      %v242 = vld [vmem:[#allocation2 + $0x68] sm:$0xff]
      %v243 = vld [vmem:[#allocation2 + $0x70] sm:$0xff]
      %v244 = vld [vmem:[#allocation2 + $0x78] sm:$0xff]
      %v245 = vld [vmem:[#allocation2 + $0x80] sm:$0xff]
      %v246 = vld [vmem:[#allocation2 + $0x88] sm:$0xff]
      %v247 = vld [vmem:[#allocation2 + $0x90] sm:$0xff]
      %v248 = vld [vmem:[#allocation2 + $0x98] sm:$0xff]
      %v249 = vld [vmem:[#allocation2 + $0xa0] sm:$0xff]
      %v250 = vld [vmem:[#allocation2 + $0xa8] sm:$0xff]
      %v251 = vld [vmem:[#allocation2 + $0xb0] sm:$0xff]
      %v252 = vld [vmem:[#allocation2 + $0xb8] sm:$0xff]
      %v253 = vld [vmem:[#allocation2 + $0xc0] sm:$0xff]
      %v254 = vld [vmem:[#allocation2 + $0xc8] sm:$0xff]
      %v255 = vld [vmem:[#allocation2 + $0xd0] sm:$0xff]
      %v256 = vld [vmem:[#allocation2 + $0xd8] sm:$0xff]
      %v257 = vld [vmem:[#allocation2 + $0xe0] sm:$0xff]
      %v258 = vld [vmem:[#allocation2 + $0xe8] sm:$0xff]
      %v259 = vld [vmem:[#allocation2 + $0xf0] sm:$0xff]
      %v260 = vld [vmem:[#allocation2 + $0xf8] sm:$0xff]
      %v261 = vld [vmem:[%s178] sm:$0xf]
      %v262 = vld [vmem:[%s178 + $0x4] sm:$0xf]
      %v263 = vld [vmem:[%s178 + $0x8] sm:$0xf]
      %v264 = vld [vmem:[%s178 + $0xc] sm:$0xf]
      %v265 = vld [vmem:[%s178 + $0x10] sm:$0xf]
      %v266 = vld [vmem:[%s178 + $0x14] sm:$0xf]
      %v267 = vld [vmem:[%s178 + $0x18] sm:$0xf]
      %v268 = vld [vmem:[%s178 + $0x1c] sm:$0xf]
      %v269 = vld [vmem:[%s178 + $0x20] sm:$0xf]
      %v270 = vld [vmem:[%s178 + $0x24] sm:$0xf]
      %v271 = vld [vmem:[%s178 + $0x28] sm:$0xf]
      %v272 = vld [vmem:[%s178 + $0x2c] sm:$0xf]
      %v273 = vld [vmem:[%s178 + $0x30] sm:$0xf]
      %v274 = vld [vmem:[%s178 + $0x34] sm:$0xf]
      %v275 = vld [vmem:[%s178 + $0x38] sm:$0xf]
      %v276 = vld [vmem:[%s178 + $0x3c] sm:$0xf]
      %v277 = vld [vmem:[%s178 + $0x40] sm:$0xf]
      %v278 = vld [vmem:[%s178 + $0x44] sm:$0xf]
      %v279 = vld [vmem:[%s178 + $0x48] sm:$0xf]
      %v280 = vld [vmem:[%s178 + $0x4c] sm:$0xf]
      %v281 = vld [vmem:[%s178 + $0x50] sm:$0xf]
      %v282 = vld [vmem:[%s178 + $0x54] sm:$0xf]
      %v283 = vld [vmem:[%s178 + $0x58] sm:$0xf]
      %v284 = vld [vmem:[%s178 + $0x5c] sm:$0xf]
      %v285 = vld [vmem:[%s178 + $0x60] sm:$0xf]
      %v286 = vld [vmem:[%s178 + $0x64] sm:$0xf]
      %v287 = vld [vmem:[%s178 + $0x68] sm:$0xf]
      %v288 = vld [vmem:[%s178 + $0x6c] sm:$0xf]
      %v289 = vld [vmem:[%s178 + $0x70] sm:$0xf]
      %v290 = vld [vmem:[%s178 + $0x74] sm:$0xf]
      %v291 = vld [vmem:[%s178 + $0x78] sm:$0xf]
      %v292 = vld [vmem:[%s178 + $0x7c] sm:$0xf]
      %v293 = vld [vmem:[%s184] sm:$0xf]
      %v294 = vld [vmem:[%s184 + $0x4] sm:$0xf]
      %v295 = vld [vmem:[%s184 + $0x8] sm:$0xf]
      %v296 = vld [vmem:[%s184 + $0xc] sm:$0xf]
      %v297 = vld [vmem:[%s184 + $0x10] sm:$0xf]
      %v298 = vld [vmem:[%s184 + $0x14] sm:$0xf]
      %v331 = vunpack.c.l.b16 %v261
      %v332 = vunpack.c.l.b16 %v262
      %v333 = vunpack.c.l.b16 %v263
      %v334 = vunpack.c.l.b16 %v264
      %v335 = vunpack.c.l.b16 %v265
      %v336 = vunpack.c.l.b16 %v266
      %v337 = vunpack.c.l.b16 %v267
      %v338 = vunpack.c.l.b16 %v268
      %v339 = vunpack.c.l.b16 %v269
      %v340 = vunpack.c.l.b16 %v270
      %v341 = vunpack.c.l.b16 %v271
      %v342 = vunpack.c.l.b16 %v272
      %v343 = vunpack.c.l.b16 %v273
      %v344 = vunpack.c.l.b16 %v274
      %v345 = vunpack.c.l.b16 %v275
      %v346 = vunpack.c.l.b16 %v276
      %v347 = vunpack.c.l.b16 %v277
      %v348 = vunpack.c.l.b16 %v278
      %v349 = vunpack.c.l.b16 %v279
      %v350 = vunpack.c.l.b16 %v280
      %v351 = vunpack.c.l.b16 %v281
      %v352 = vunpack.c.l.b16 %v282
      %v353 = vunpack.c.l.b16 %v283
      %v354 = vunpack.c.l.b16 %v284
      %v355 = vunpack.c.l.b16 %v285
      %v356 = vunpack.c.l.b16 %v286
      %v357 = vunpack.c.l.b16 %v287
      %v358 = vunpack.c.l.b16 %v288
      %v359 = vunpack.c.l.b16 %v289
      %v360 = vunpack.c.l.b16 %v290
      %v361 = vunpack.c.l.b16 %v291
      %v362 = vunpack.c.l.b16 %v292
      %v363 = vpack.c.b16 %v332, %v331
      %v364 = vpack.c.b16 %v334, %v333
      %v365 = vpack.c.b16 %v336, %v335
      %v366 = vpack.c.b16 %v338, %v337
      %v367 = vpack.c.b16 %v340, %v339
      %v368 = vpack.c.b16 %v342, %v341
      %v369 = vpack.c.b16 %v344, %v343
      %v370 = vpack.c.b16 %v346, %v345
      %v371 = vpack.c.b16 %v348, %v347
      %v372 = vpack.c.b16 %v350, %v349
      %v373 = vpack.c.b16 %v352, %v351
      %v374 = vpack.c.b16 %v354, %v353
      %v375 = vpack.c.b16 %v356, %v355
      %v376 = vpack.c.b16 %v358, %v357
      %v377 = vpack.c.b16 %v360, %v359
      %v378 = vpack.c.b16 %v362, %v361
      %v385 = vunpack.c.l.b16 %v293
      %v386 = vunpack.c.l.b16 %v294
      %v387 = vunpack.c.l.b16 %v295
      %v388 = vunpack.c.l.b16 %v296
      %v389 = vunpack.c.l.b16 %v297
      %v390 = vunpack.c.l.b16 %v298
      %v391 = vpack.c.b16 %v386, %v385
      %v392 = vpack.c.b16 %v388, %v387
      %v393 = vpack.c.b16 %v390, %v389
      %vm397 = vcmask 392192
      %v399 = vsel %vm397, %v363, 0
      %v402 = vsel %vm397, %v364, 0
      %v405 = vsel %vm397, %v365, 0
      %v408 = vsel %vm397, %v366, 0
      %v411 = vsel %vm397, %v367, 0
      %v414 = vsel %vm397, %v368, 0
      %v417 = vsel %vm397, %v369, 0
      %v420 = vsel %vm397, %v370, 0
      %v423 = vsel %vm397, %v371, 0
      %v426 = vsel %vm397, %v372, 0
      %v429 = vsel %vm397, %v373, 0
      %v432 = vsel %vm397, %v374, 0
      %v435 = vsel %vm397, %v375, 0
      %v438 = vsel %vm397, %v376, 0
      %v441 = vsel %vm397, %v377, 0
      %v444 = vsel %vm397, %v378, 0
      %446 = vmatpush.bf16.msra.mxu0 0
      %447 = vmatpush.bf16.msra.mxu0 0
      %448 = vmatpush.bf16.msra.mxu0 0
      %449 = vmatpush.bf16.msra.mxu0 0
      %450 = vmatpush.bf16.msra.mxu0 0
      %451 = vmatpush.bf16.msra.mxu0 %v393
      %452 = vmatpush.bf16.msra.mxu0 %v392
      %453 = vmatpush.bf16.msra.mxu0 %v391
      %454 = vmatmul.bf16.gmra.mxu0 %v399
      %v455 = vpop.f32.mrf.mxu0
      %v456 = vadd.f32 0.0, %v455
      %v457 = vpop.f32.mrf.mxu0
      %v458 = vadd.f32 0.0, %v457
      %459 = vmatmul.bf16.gmra.mxu0 %v402
      %v460 = vpop.f32.mrf.mxu0
      %v461 = vadd.f32 0.0, %v460
      %v462 = vpop.f32.mrf.mxu0
      %v463 = vadd.f32 0.0, %v462
      %464 = vmatmul.bf16.gmra.mxu0 %v405
      %v465 = vpop.f32.mrf.mxu0
      %v466 = vadd.f32 0.0, %v465
      %v467 = vpop.f32.mrf.mxu0
      %v468 = vadd.f32 0.0, %v467
      %469 = vmatmul.bf16.gmra.mxu0 %v408
      %v470 = vpop.f32.mrf.mxu0
      %v471 = vadd.f32 0.0, %v470
      %v472 = vpop.f32.mrf.mxu0
      %v473 = vadd.f32 0.0, %v472
      %474 = vmatmul.bf16.gmra.mxu0 %v411
      %v475 = vpop.f32.mrf.mxu0
      %v476 = vadd.f32 0.0, %v475
      %v477 = vpop.f32.mrf.mxu0
      %v478 = vadd.f32 0.0, %v477
      %479 = vmatmul.bf16.gmra.mxu0 %v414
      %v480 = vpop.f32.mrf.mxu0
      %v481 = vadd.f32 0.0, %v480
      %v482 = vpop.f32.mrf.mxu0
      %v483 = vadd.f32 0.0, %v482
      %484 = vmatmul.bf16.gmra.mxu0 %v417
      %v485 = vpop.f32.mrf.mxu0
      %v486 = vadd.f32 0.0, %v485
      %v487 = vpop.f32.mrf.mxu0
      %v488 = vadd.f32 0.0, %v487
      %489 = vmatmul.bf16.gmra.mxu0 %v420
      %v490 = vpop.f32.mrf.mxu0
      %v491 = vadd.f32 0.0, %v490
      %v492 = vpop.f32.mrf.mxu0
      %v493 = vadd.f32 0.0, %v492
      %494 = vmatmul.bf16.gmra.mxu0 %v423
      %v495 = vpop.f32.mrf.mxu0
      %v496 = vadd.f32 0.0, %v495
      %v497 = vpop.f32.mrf.mxu0
      %v498 = vadd.f32 0.0, %v497
      %499 = vmatmul.bf16.gmra.mxu0 %v426
      %v500 = vpop.f32.mrf.mxu0
      %v501 = vadd.f32 0.0, %v500
      %v502 = vpop.f32.mrf.mxu0
      %v503 = vadd.f32 0.0, %v502
      %504 = vmatmul.bf16.gmra.mxu0 %v429
      %v505 = vpop.f32.mrf.mxu0
      %v506 = vadd.f32 0.0, %v505
      %v507 = vpop.f32.mrf.mxu0
      %v508 = vadd.f32 0.0, %v507
      %509 = vmatmul.bf16.gmra.mxu0 %v432
      %v510 = vpop.f32.mrf.mxu0
      %v511 = vadd.f32 0.0, %v510
      %v512 = vpop.f32.mrf.mxu0
      %v513 = vadd.f32 0.0, %v512
      %514 = vmatmul.bf16.gmra.mxu0 %v435
      %v515 = vpop.f32.mrf.mxu0
      %v516 = vadd.f32 0.0, %v515
      %v517 = vpop.f32.mrf.mxu0
      %v518 = vadd.f32 0.0, %v517
      %519 = vmatmul.bf16.gmra.mxu0 %v438
      %v520 = vpop.f32.mrf.mxu0
      %v521 = vadd.f32 0.0, %v520
      %v522 = vpop.f32.mrf.mxu0
      %v523 = vadd.f32 0.0, %v522
      %524 = vmatmul.bf16.gmra.mxu0 %v441
      %v525 = vpop.f32.mrf.mxu0
      %v526 = vadd.f32 0.0, %v525
      %v527 = vpop.f32.mrf.mxu0
      %v528 = vadd.f32 0.0, %v527
      %529 = vmatmul.bf16.gmra.mxu0 %v444
      %v530 = vpop.f32.mrf.mxu0
      %v531 = vadd.f32 0.0, %v530
      %v532 = vpop.f32.mrf.mxu0
      %v533 = vadd.f32 0.0, %v532
      %534 = vdwg.mxu0
      %v535 = vadd.f32 %v229, %v456
      %v536 = vadd.f32 %v230, %v458
      %v537 = vadd.f32 %v231, %v461
      %v538 = vadd.f32 %v232, %v463
      %v539 = vadd.f32 %v233, %v466
      %v540 = vadd.f32 %v234, %v468
      %v541 = vadd.f32 %v235, %v471
      %v542 = vadd.f32 %v236, %v473
      %v543 = vadd.f32 %v237, %v476
      %v544 = vadd.f32 %v238, %v478
      %v545 = vadd.f32 %v239, %v481
      %v546 = vadd.f32 %v240, %v483
      %v547 = vadd.f32 %v241, %v486
      %v548 = vadd.f32 %v242, %v488
      %v549 = vadd.f32 %v243, %v491
      %v550 = vadd.f32 %v244, %v493
      %v551 = vadd.f32 %v245, %v496
      %v552 = vadd.f32 %v246, %v498
      %v553 = vadd.f32 %v247, %v501
      %v554 = vadd.f32 %v248, %v503
      %v555 = vadd.f32 %v249, %v506
      %v556 = vadd.f32 %v250, %v508
      %v557 = vadd.f32 %v251, %v511
      %v558 = vadd.f32 %v252, %v513
      %v559 = vadd.f32 %v253, %v516
      %v560 = vadd.f32 %v254, %v518
      %v561 = vadd.f32 %v255, %v521
      %v562 = vadd.f32 %v256, %v523
      %v563 = vadd.f32 %v257, %v526
      %v564 = vadd.f32 %v258, %v528
      %v565 = vadd.f32 %v259, %v531
      %v566 = vadd.f32 %v260, %v533
      %567 = vst [vmem:[#allocation2] sm:$0xff] %v535
      %568 = vst [vmem:[#allocation2 + $0x8] sm:$0xff] %v536
      %569 = vst [vmem:[#allocation2 + $0x10] sm:$0xff] %v537
      %570 = vst [vmem:[#allocation2 + $0x18] sm:$0xff] %v538
      %571 = vst [vmem:[#allocation2 + $0x20] sm:$0xff] %v539
      %572 = vst [vmem:[#allocation2 + $0x28] sm:$0xff] %v540
      %573 = vst [vmem:[#allocation2 + $0x30] sm:$0xff] %v541
      %574 = vst [vmem:[#allocation2 + $0x38] sm:$0xff] %v542
      %575 = vst [vmem:[#allocation2 + $0x40] sm:$0xff] %v543
      %576 = vst [vmem:[#allocation2 + $0x48] sm:$0xff] %v544
      %577 = vst [vmem:[#allocation2 + $0x50] sm:$0xff] %v545
      %578 = vst [vmem:[#allocation2 + $0x58] sm:$0xff] %v546
      %579 = vst [vmem:[#allocation2 + $0x60] sm:$0xff] %v547
      %580 = vst [vmem:[#allocation2 + $0x68] sm:$0xff] %v548
      %581 = vst [vmem:[#allocation2 + $0x70] sm:$0xff] %v549
      %582 = vst [vmem:[#allocation2 + $0x78] sm:$0xff] %v550
      %583 = vst [vmem:[#allocation2 + $0x80] sm:$0xff] %v551
      %584 = vst [vmem:[#allocation2 + $0x88] sm:$0xff] %v552
      %585 = vst [vmem:[#allocation2 + $0x90] sm:$0xff] %v553
      %586 = vst [vmem:[#allocation2 + $0x98] sm:$0xff] %v554
      %587 = vst [vmem:[#allocation2 + $0xa0] sm:$0xff] %v555
      %588 = vst [vmem:[#allocation2 + $0xa8] sm:$0xff] %v556
      %589 = vst [vmem:[#allocation2 + $0xb0] sm:$0xff] %v557
      %590 = vst [vmem:[#allocation2 + $0xb8] sm:$0xff] %v558
      %591 = vst [vmem:[#allocation2 + $0xc0] sm:$0xff] %v559
      %592 = vst [vmem:[#allocation2 + $0xc8] sm:$0xff] %v560
      %593 = vst [vmem:[#allocation2 + $0xd0] sm:$0xff] %v561
      %594 = vst [vmem:[#allocation2 + $0xd8] sm:$0xff] %v562
      %595 = vst [vmem:[#allocation2 + $0xe0] sm:$0xff] %v563
      %596 = vst [vmem:[#allocation2 + $0xe8] sm:$0xff] %v564
      %597 = vst [vmem:[#allocation2 + $0xf0] sm:$0xff] %v565
      %598 = vst [vmem:[#allocation2 + $0xf8] sm:$0xff] %v566
      // Predicated region
      $region33: #{discriminator_forward.6} parent=27 // pred_check
        %p599 = pneg %p193
      $region34: #{discriminator_forward.6} parent=27 // pred_check_branch
        %601 = sbr.rel (%p599) target = $region36
      $region35: #{discriminator_forward.6} parent=27 // pred_region
        %v602 = vld [vmem:[#allocation2] sm:$0xff]
        %v603 = vld [vmem:[#allocation2 + $0x8] sm:$0xff]
        %v604 = vld [vmem:[#allocation2 + $0x10] sm:$0xff]
        %v605 = vld [vmem:[#allocation2 + $0x18] sm:$0xff]
        %v606 = vld [vmem:[#allocation2 + $0x20] sm:$0xff]
        %v607 = vld [vmem:[#allocation2 + $0x28] sm:$0xff]
        %v608 = vld [vmem:[#allocation2 + $0x30] sm:$0xff]
        %v609 = vld [vmem:[#allocation2 + $0x38] sm:$0xff]
        %v610 = vld [vmem:[#allocation2 + $0x40] sm:$0xff]
        %v611 = vld [vmem:[#allocation2 + $0x48] sm:$0xff]
        %v612 = vld [vmem:[#allocation2 + $0x50] sm:$0xff]
        %v613 = vld [vmem:[#allocation2 + $0x58] sm:$0xff]
        %v614 = vld [vmem:[#allocation2 + $0x60] sm:$0xff]
        %v615 = vld [vmem:[#allocation2 + $0x68] sm:$0xff]
        %v616 = vld [vmem:[#allocation2 + $0x70] sm:$0xff]
        %v617 = vld [vmem:[#allocation2 + $0x78] sm:$0xff]
        %v618 = vld [vmem:[#allocation2 + $0x80] sm:$0xff]
        %v619 = vld [vmem:[#allocation2 + $0x88] sm:$0xff]
        %v620 = vld [vmem:[#allocation2 + $0x90] sm:$0xff]
        %v621 = vld [vmem:[#allocation2 + $0x98] sm:$0xff]
        %v622 = vld [vmem:[#allocation2 + $0xa0] sm:$0xff]
        %v623 = vld [vmem:[#allocation2 + $0xa8] sm:$0xff]
        %v624 = vld [vmem:[#allocation2 + $0xb0] sm:$0xff]
        %v625 = vld [vmem:[#allocation2 + $0xb8] sm:$0xff]
        %v626 = vld [vmem:[#allocation2 + $0xc0] sm:$0xff]
        %v627 = vld [vmem:[#allocation2 + $0xc8] sm:$0xff]
        %v628 = vld [vmem:[#allocation2 + $0xd0] sm:$0xff]
        %v629 = vld [vmem:[#allocation2 + $0xd8] sm:$0xff]
        %v630 = vld [vmem:[#allocation2 + $0xe0] sm:$0xff]
        %v631 = vld [vmem:[#allocation2 + $0xe8] sm:$0xff]
        %v632 = vld [vmem:[#allocation2 + $0xf0] sm:$0xff]
        %v633 = vld [vmem:[#allocation2 + $0xf8] sm:$0xff]
        %vm634 = vcmp.gt.f32.partialorder %v602, 0.0
        %vm635 = vcmp.gt.f32.partialorder %v603, 0.0
        %vm636 = vcmp.gt.f32.partialorder %v604, 0.0
        %vm637 = vcmp.gt.f32.partialorder %v605, 0.0
        %vm638 = vcmp.gt.f32.partialorder %v606, 0.0
        %vm639 = vcmp.gt.f32.partialorder %v607, 0.0
        %vm640 = vcmp.gt.f32.partialorder %v608, 0.0
        %vm641 = vcmp.gt.f32.partialorder %v609, 0.0
        %vm642 = vcmp.gt.f32.partialorder %v610, 0.0
        %vm643 = vcmp.gt.f32.partialorder %v611, 0.0
        %vm644 = vcmp.gt.f32.partialorder %v612, 0.0
        %vm645 = vcmp.gt.f32.partialorder %v613, 0.0
        %vm646 = vcmp.gt.f32.partialorder %v614, 0.0
        %vm647 = vcmp.gt.f32.partialorder %v615, 0.0
        %vm648 = vcmp.gt.f32.partialorder %v616, 0.0
        %vm649 = vcmp.gt.f32.partialorder %v617, 0.0
        %vm650 = vcmp.gt.f32.partialorder %v618, 0.0
        %vm651 = vcmp.gt.f32.partialorder %v619, 0.0
        %vm652 = vcmp.gt.f32.partialorder %v620, 0.0
        %vm653 = vcmp.gt.f32.partialorder %v621, 0.0
        %vm654 = vcmp.gt.f32.partialorder %v622, 0.0
        %vm655 = vcmp.gt.f32.partialorder %v623, 0.0
        %vm656 = vcmp.gt.f32.partialorder %v624, 0.0
        %vm657 = vcmp.gt.f32.partialorder %v625, 0.0
        %vm658 = vcmp.gt.f32.partialorder %v626, 0.0
        %vm659 = vcmp.gt.f32.partialorder %v627, 0.0
        %vm660 = vcmp.gt.f32.partialorder %v628, 0.0
        %vm661 = vcmp.gt.f32.partialorder %v629, 0.0
        %vm662 = vcmp.gt.f32.partialorder %v630, 0.0
        %vm663 = vcmp.gt.f32.partialorder %v631, 0.0
        %vm664 = vcmp.gt.f32.partialorder %v632, 0.0
        %vm665 = vcmp.gt.f32.partialorder %v633, 0.0
        %v666 = vmul.f32 %v602, 0.2
        %v667 = vmul.f32 %v603, 0.2
        %v668 = vmul.f32 %v604, 0.2
        %v669 = vmul.f32 %v605, 0.2
        %v670 = vmul.f32 %v606, 0.2
        %v671 = vmul.f32 %v607, 0.2
        %v672 = vmul.f32 %v608, 0.2
        %v673 = vmul.f32 %v609, 0.2
        %v674 = vmul.f32 %v610, 0.2
        %v675 = vmul.f32 %v611, 0.2
        %v676 = vmul.f32 %v612, 0.2
        %v677 = vmul.f32 %v613, 0.2
        %v678 = vmul.f32 %v614, 0.2
        %v679 = vmul.f32 %v615, 0.2
        %v680 = vmul.f32 %v616, 0.2
        %v681 = vmul.f32 %v617, 0.2
        %v682 = vmul.f32 %v618, 0.2
        %v683 = vmul.f32 %v619, 0.2
        %v684 = vmul.f32 %v620, 0.2
        %v685 = vmul.f32 %v621, 0.2
        %v686 = vmul.f32 %v622, 0.2
        %v687 = vmul.f32 %v623, 0.2
        %v688 = vmul.f32 %v624, 0.2
        %v689 = vmul.f32 %v625, 0.2
        %v690 = vmul.f32 %v626, 0.2
        %v691 = vmul.f32 %v627, 0.2
        %v692 = vmul.f32 %v628, 0.2
        %v693 = vmul.f32 %v629, 0.2
        %v694 = vmul.f32 %v630, 0.2
        %v695 = vmul.f32 %v631, 0.2
        %v696 = vmul.f32 %v632, 0.2
        %v697 = vmul.f32 %v633, 0.2
        %v698 = vsel %vm634, %v602, %v666
        %v699 = vsel %vm635, %v603, %v667
        %v700 = vsel %vm636, %v604, %v668
        %v701 = vsel %vm637, %v605, %v669
        %v702 = vsel %vm638, %v606, %v670
        %v703 = vsel %vm639, %v607, %v671
        %v704 = vsel %vm640, %v608, %v672
        %v705 = vsel %vm641, %v609, %v673
        %v706 = vsel %vm642, %v610, %v674
        %v707 = vsel %vm643, %v611, %v675
        %v708 = vsel %vm644, %v612, %v676
        %v709 = vsel %vm645, %v613, %v677
        %v710 = vsel %vm646, %v614, %v678
        %v711 = vsel %vm647, %v615, %v679
        %v712 = vsel %vm648, %v616, %v680
        %v713 = vsel %vm649, %v617, %v681
        %v714 = vsel %vm650, %v618, %v682
        %v715 = vsel %vm651, %v619, %v683
        %v716 = vsel %vm652, %v620, %v684
        %v717 = vsel %vm653, %v621, %v685
        %v718 = vsel %vm654, %v622, %v686
        %v719 = vsel %vm655, %v623, %v687
        %v720 = vsel %vm656, %v624, %v688
        %v721 = vsel %vm657, %v625, %v689
        %v722 = vsel %vm658, %v626, %v690
        %v723 = vsel %vm659, %v627, %v691
        %v724 = vsel %vm660, %v628, %v692
        %v725 = vsel %vm661, %v629, %v693
        %v726 = vsel %vm662, %v630, %v694
        %v727 = vsel %vm663, %v631, %v695
        %v728 = vsel %vm664, %v632, %v696
        %v729 = vsel %vm665, %v633, %v697
        %v730 = vpack.c.bf16 %v698, %v698
        %v731 = vpack.c.bf16 %v699, %v699
        %v732 = vpack.c.bf16 %v700, %v700
        %v733 = vpack.c.bf16 %v701, %v701
        %v734 = vpack.c.bf16 %v702, %v702
        %v735 = vpack.c.bf16 %v703, %v703
        %v736 = vpack.c.bf16 %v704, %v704
        %v737 = vpack.c.bf16 %v705, %v705
        %v738 = vpack.c.bf16 %v706, %v706
        %v739 = vpack.c.bf16 %v707, %v707
        %v740 = vpack.c.bf16 %v708, %v708
        %v741 = vpack.c.bf16 %v709, %v709
        %v742 = vpack.c.bf16 %v710, %v710
        %v743 = vpack.c.bf16 %v711, %v711
        %v744 = vpack.c.bf16 %v712, %v712
        %v745 = vpack.c.bf16 %v713, %v713
        %v746 = vpack.c.bf16 %v714, %v714
        %v747 = vpack.c.bf16 %v715, %v715
        %v748 = vpack.c.bf16 %v716, %v716
        %v749 = vpack.c.bf16 %v717, %v717
        %v750 = vpack.c.bf16 %v718, %v718
        %v751 = vpack.c.bf16 %v719, %v719
        %v752 = vpack.c.bf16 %v720, %v720
        %v753 = vpack.c.bf16 %v721, %v721
        %v754 = vpack.c.bf16 %v722, %v722
        %v755 = vpack.c.bf16 %v723, %v723
        %v756 = vpack.c.bf16 %v724, %v724
        %v757 = vpack.c.bf16 %v725, %v725
        %v758 = vpack.c.bf16 %v726, %v726
        %v759 = vpack.c.bf16 %v727, %v727
        %v760 = vpack.c.bf16 %v728, %v728
        %v761 = vpack.c.bf16 %v729, %v729
        %762 = vst [vmem:[%s190] sm:$0xf] %v730
        %763 = vst [vmem:[%s190 + $0x4] sm:$0xf] %v731
        %764 = vst [vmem:[%s190 + $0x8] sm:$0xf] %v732
        %765 = vst [vmem:[%s190 + $0xc] sm:$0xf] %v733
        %766 = vst [vmem:[%s190 + $0x10] sm:$0xf] %v734
        %767 = vst [vmem:[%s190 + $0x14] sm:$0xf] %v735
        %768 = vst [vmem:[%s190 + $0x18] sm:$0xf] %v736
        %769 = vst [vmem:[%s190 + $0x1c] sm:$0xf] %v737
        %770 = vst [vmem:[%s190 + $0x20] sm:$0xf] %v738
        %771 = vst [vmem:[%s190 + $0x24] sm:$0xf] %v739
        %772 = vst [vmem:[%s190 + $0x28] sm:$0xf] %v740
        %773 = vst [vmem:[%s190 + $0x2c] sm:$0xf] %v741
        %774 = vst [vmem:[%s190 + $0x30] sm:$0xf] %v742
        %775 = vst [vmem:[%s190 + $0x34] sm:$0xf] %v743
        %776 = vst [vmem:[%s190 + $0x38] sm:$0xf] %v744
        %777 = vst [vmem:[%s190 + $0x3c] sm:$0xf] %v745
        %778 = vst [vmem:[%s190 + $0x40] sm:$0xf] %v746
        %779 = vst [vmem:[%s190 + $0x44] sm:$0xf] %v747
        %780 = vst [vmem:[%s190 + $0x48] sm:$0xf] %v748
        %781 = vst [vmem:[%s190 + $0x4c] sm:$0xf] %v749
        %782 = vst [vmem:[%s190 + $0x50] sm:$0xf] %v750
        %783 = vst [vmem:[%s190 + $0x54] sm:$0xf] %v751
        %784 = vst [vmem:[%s190 + $0x58] sm:$0xf] %v752
        %785 = vst [vmem:[%s190 + $0x5c] sm:$0xf] %v753
        %786 = vst [vmem:[%s190 + $0x60] sm:$0xf] %v754
        %787 = vst [vmem:[%s190 + $0x64] sm:$0xf] %v755
        %788 = vst [vmem:[%s190 + $0x68] sm:$0xf] %v756
        %789 = vst [vmem:[%s190 + $0x6c] sm:$0xf] %v757
        %790 = vst [vmem:[%s190 + $0x70] sm:$0xf] %v758
        %791 = vst [vmem:[%s190 + $0x74] sm:$0xf] %v759
        %792 = vst [vmem:[%s190 + $0x78] sm:$0xf] %v760
        %793 = vst [vmem:[%s190 + $0x7c] sm:$0xf] %v761
      $region36: #{discriminator_forward.6} parent=27 // pred_fallthru
        _
      %s794 = smul.u32 32, %s17
      %p795 = scmp.lt.s32.totalorder %s794, 63
      %s796 = scalar_select %p795, %s794, 63
      %s797 = smul.addr %s796, 4
      %s798 = scalar_lea.vmem %s2, %s797
      // Predicated region
      $region37: #{discriminator_forward.6} parent=27 // pred_check
        %p799 = pneg %p97
      $region38: #{discriminator_forward.6} parent=27 // pred_check_branch
        %801 = sbr.rel (%p799) target = $region40
      $region39: #{discriminator_forward.6} parent=27 // pred_region
        %s802 = smul.u32 32, %s17
      $region40: #{discriminator_forward.6} parent=27 // pred_fallthru
        _
    $region28: #{discriminator_forward.6} parent=5 // pred_fallthru
      _
    %p803 = scmp.le.s32.totalorder 2, %s8
    // Predicated region
    $region41: #{discriminator_forward.6} parent=5 // pred_check
      %p804 = pneg %p803
    $region42: #{discriminator_forward.6} parent=5 // pred_check_branch
      %806 = sbr.rel (%p804) target = $region44
    $region43: #{discriminator_forward.6} parent=5 // pred_region
      %s807 = ssub.s32 %s8, 2
      // Predicated region
      $region45: #{discriminator_forward.6} parent=43 // pred_check
        %p808 = pneg %p103
      $region46: #{discriminator_forward.6} parent=43 // pred_check_branch
        %810 = sbr.rel (%p808) target = $region48
      $region47: #{discriminator_forward.6} parent=43 // pred_region
        %s811 = smul.u32 32, %s19
        %p812 = scmp.lt.s32.totalorder %s811, 63
        %s813 = scalar_select %p812, %s811, 63
        %s814 = smul.addr %s813, 4
        %s815 = scalar_lea.vmem %s2, %s814
      $region48: #{discriminator_forward.6} parent=43 // pred_fallthru
        _
    $region44: #{discriminator_forward.6} parent=5 // pred_fallthru
      _
  $region6: #{discriminator_forward.6} parent=0 // loop_footer
    %s12 = sadd.s32 1, %s8
  $region7: #{discriminator_forward.6} parent=0 // loop_footer_branch
    %7 = sbr.rel target = $region3
  $region8: #{discriminator_forward.6} parent=0 // loop_exit
    _

// kernel: discriminator_forward.8
$region0: #{discriminator_forward.8}
  #allocation0 [shape = 'u32[]', space=smem, size = 0x4, offset = 0x4, fixed_abs, tag = 'smem constant byte address 0x4 - core index']
  #allocation1 [shape = 'u32[72,128]{1,0:T(1,128)}', space=vmem, size = 0x9000, scoped, tag = 'internal scratch']
  %s0 = inlined_call_operand.vmem [shape: bf16[128,128], index: 0, kind: input, shape index: {}, may-alias: {0,3}]
  %s1 = inlined_call_operand.vmem [shape: f32[1,128], index: 1, kind: input, shape index: {}]
  %s2 = inlined_call_operand.vmem [shape: f32[1,128], index: 2, kind: input, shape index: {}]
  %s3 = inlined_call_operand.vmem [shape: bf16[128,128], index: 3, kind: output, shape index: {}, may-alias: {0,3}]
  %s4 = sld [smem:[#allocation0]]
  $region22: #{discriminator_forward.8} parent=0
    _
  %s6 = ssub.s32 1, %s4
  %s7 = scalar_select 0, %s6, %s4
  // Predicated region
  $region2: #{discriminator_forward.8} parent=0 // pred_check
    _
  $region3: #{discriminator_forward.8} parent=0 // pred_check_branch
    %9 = sbr.rel (0) target = $region5
  $region4: #{discriminator_forward.8} parent=0 // pred_region
    _
  $region5: #{discriminator_forward.8} parent=0 // pred_fallthru
    _
  // Predicated region
  $region6: #{discriminator_forward.8} parent=0 // pred_check
    _
  $region7: #{discriminator_forward.8} parent=0 // pred_check_branch
    %11 = sbr.rel (0) target = $region9
  $region8: #{discriminator_forward.8} parent=0 // pred_region
    _
  $region9: #{discriminator_forward.8} parent=0 // pred_fallthru
    _
  // Predicated region
  $region10: #{discriminator_forward.8} parent=0 // pred_check
    _
  $region11: #{discriminator_forward.8} parent=0 // pred_check_branch
    %13 = sbr.rel (0) target = $region13
  $region12: #{discriminator_forward.8} parent=0 // pred_region
    _
  $region13: #{discriminator_forward.8} parent=0 // pred_fallthru
    _
  %v14 = vld [vmem:[%s0] sm:$0xf]
  %v15 = vld [vmem:[%s0 + $0x4] sm:$0xf]
  %v16 = vld [vmem:[%s0 + $0x8] sm:$0xf]
  %v17 = vld [vmem:[%s0 + $0xc] sm:$0xf]
  %v18 = vld [vmem:[%s0 + $0x10] sm:$0xf]
  %v19 = vld [vmem:[%s0 + $0x14] sm:$0xf]
  %v20 = vld [vmem:[%s0 + $0x18] sm:$0xf]
  %v21 = vld [vmem:[%s0 + $0x1c] sm:$0xf]
  %v22 = vld [vmem:[%s0 + $0x20] sm:$0xf]
  %v23 = vld [vmem:[%s0 + $0x24] sm:$0xf]
  %v24 = vld [vmem:[%s0 + $0x28] sm:$0xf]
  %v25 = vld [vmem:[%s0 + $0x2c] sm:$0xf]
  %v26 = vld [vmem:[%s0 + $0x30] sm:$0xf]
  %v27 = vld [vmem:[%s0 + $0x34] sm:$0xf]
  %v28 = vld [vmem:[%s0 + $0x38] sm:$0xf]
  %v29 = vld [vmem:[%s0 + $0x3c] sm:$0xf]
  %v30 = vunpack.c.l.bf16 %v14
  %v31 = vunpack.c.l.bf16 %v15
  %v32 = vunpack.c.l.bf16 %v16
  %v33 = vunpack.c.l.bf16 %v17
  %v34 = vunpack.c.l.bf16 %v18
  %v35 = vunpack.c.l.bf16 %v19
  %v36 = vunpack.c.l.bf16 %v20
  %v37 = vunpack.c.l.bf16 %v21
  %v38 = vunpack.c.l.bf16 %v22
  %v39 = vunpack.c.l.bf16 %v23
  %v40 = vunpack.c.l.bf16 %v24
  %v41 = vunpack.c.l.bf16 %v25
  %v42 = vunpack.c.l.bf16 %v26
  %v43 = vunpack.c.l.bf16 %v27
  %v44 = vunpack.c.l.bf16 %v28
  %v45 = vunpack.c.l.bf16 %v29
  %v46 = vld [vmem:[%s1] sm:$0x1]
  %v48 = vperm.slane %v46, 0
  %v50 = vmul.f32 %v30, %v48
  %v51 = vmul.f32 %v31, %v48
  %v52 = vmul.f32 %v32, %v48
  %v53 = vmul.f32 %v33, %v48
  %v54 = vmul.f32 %v34, %v48
  %v55 = vmul.f32 %v35, %v48
  %v56 = vmul.f32 %v36, %v48
  %v57 = vmul.f32 %v37, %v48
  %v58 = vmul.f32 %v38, %v48
  %v59 = vmul.f32 %v39, %v48
  %v60 = vmul.f32 %v40, %v48
  %v61 = vmul.f32 %v41, %v48
  %v62 = vmul.f32 %v42, %v48
  %v63 = vmul.f32 %v43, %v48
  %v64 = vmul.f32 %v44, %v48
  %v65 = vmul.f32 %v45, %v48
  %v66 = vld [vmem:[%s2] sm:$0x1]
  %v68 = vperm.slane %v66, 0
  %v70 = vadd.f32 %v50, %v68
  %v71 = vadd.f32 %v51, %v68
  %v72 = vadd.f32 %v52, %v68
  %v73 = vadd.f32 %v53, %v68
  %v74 = vadd.f32 %v54, %v68
  %v75 = vadd.f32 %v55, %v68
  %v76 = vadd.f32 %v56, %v68
  %v77 = vadd.f32 %v57, %v68
  %v78 = vadd.f32 %v58, %v68
  %v79 = vadd.f32 %v59, %v68
  %v80 = vadd.f32 %v60, %v68
  %v81 = vadd.f32 %v61, %v68
  %v82 = vadd.f32 %v62, %v68
  %v83 = vadd.f32 %v63, %v68
  %v84 = vadd.f32 %v64, %v68
  %v85 = vadd.f32 %v65, %v68
  %vm86 = vcmp.gt.f32.partialorder %v70, 0.0
  %vm87 = vcmp.gt.f32.partialorder %v71, 0.0
  %vm88 = vcmp.gt.f32.partialorder %v72, 0.0
  %vm89 = vcmp.gt.f32.partialorder %v73, 0.0
  %vm90 = vcmp.gt.f32.partialorder %v74, 0.0
  %vm91 = vcmp.gt.f32.partialorder %v75, 0.0
  %vm92 = vcmp.gt.f32.partialorder %v76, 0.0
  %vm93 = vcmp.gt.f32.partialorder %v77, 0.0
  %vm94 = vcmp.gt.f32.partialorder %v78, 0.0
  %vm95 = vcmp.gt.f32.partialorder %v79, 0.0
  %vm96 = vcmp.gt.f32.partialorder %v80, 0.0
  %vm97 = vcmp.gt.f32.partialorder %v81, 0.0
  %vm98 = vcmp.gt.f32.partialorder %v82, 0.0
  %vm99 = vcmp.gt.f32.partialorder %v83, 0.0
  %vm100 = vcmp.gt.f32.partialorder %v84, 0.0
  %vm101 = vcmp.gt.f32.partialorder %v85, 0.0
  %v102 = vmul.f32 %v70, 0.2
  %v103 = vmul.f32 %v71, 0.2
  %v104 = vmul.f32 %v72, 0.2
  %v105 = vmul.f32 %v73, 0.2
  %v106 = vmul.f32 %v74, 0.2
  %v107 = vmul.f32 %v75, 0.2
  %v108 = vmul.f32 %v76, 0.2
  %v109 = vmul.f32 %v77, 0.2
  %v110 = vmul.f32 %v78, 0.2
  %v111 = vmul.f32 %v79, 0.2
  %v112 = vmul.f32 %v80, 0.2
  %v113 = vmul.f32 %v81, 0.2
  %v114 = vmul.f32 %v82, 0.2
  %v115 = vmul.f32 %v83, 0.2
  %v116 = vmul.f32 %v84, 0.2
  %v117 = vmul.f32 %v85, 0.2
  %v118 = vsel %vm86, %v70, %v102
  %v119 = vsel %vm87, %v71, %v103
  %v120 = vsel %vm88, %v72, %v104
  %v121 = vsel %vm89, %v73, %v105
  %v122 = vsel %vm90, %v74, %v106
  %v123 = vsel %vm91, %v75, %v107
  %v124 = vsel %vm92, %v76, %v108
  %v125 = vsel %vm93, %v77, %v109
  %v126 = vsel %vm94, %v78, %v110
  %v127 = vsel %vm95, %v79, %v111
  %v128 = vsel %vm96, %v80, %v112
  %v129 = vsel %vm97, %v81, %v113
  %v130 = vsel %vm98, %v82, %v114
  %v131 = vsel %vm99, %v83, %v115
  %v132 = vsel %vm100, %v84, %v116
  %v133 = vsel %vm101, %v85, %v117
  %v134 = vpack.c.bf16 %v118, %v118
  %v135 = vpack.c.bf16 %v119, %v119
  %v136 = vpack.c.bf16 %v120, %v120
  %v137 = vpack.c.bf16 %v121, %v121
  %v138 = vpack.c.bf16 %v122, %v122
  %v139 = vpack.c.bf16 %v123, %v123
  %v140 = vpack.c.bf16 %v124, %v124
  %v141 = vpack.c.bf16 %v125, %v125
  %v142 = vpack.c.bf16 %v126, %v126
  %v143 = vpack.c.bf16 %v127, %v127
  %v144 = vpack.c.bf16 %v128, %v128
  %v145 = vpack.c.bf16 %v129, %v129
  %v146 = vpack.c.bf16 %v130, %v130
  %v147 = vpack.c.bf16 %v131, %v131
  %v148 = vpack.c.bf16 %v132, %v132
  %v149 = vpack.c.bf16 %v133, %v133
  %150 = vst [vmem:[%s3] sm:$0xf] %v134
  %151 = vst [vmem:[%s3 + $0x4] sm:$0xf] %v135
  %152 = vst [vmem:[%s3 + $0x8] sm:$0xf] %v136
  %153 = vst [vmem:[%s3 + $0xc] sm:$0xf] %v137
  %154 = vst [vmem:[%s3 + $0x10] sm:$0xf] %v138
  %155 = vst [vmem:[%s3 + $0x14] sm:$0xf] %v139
  %156 = vst [vmem:[%s3 + $0x18] sm:$0xf] %v140
  %157 = vst [vmem:[%s3 + $0x1c] sm:$0xf] %v141
  %158 = vst [vmem:[%s3 + $0x20] sm:$0xf] %v142
  %159 = vst [vmem:[%s3 + $0x24] sm:$0xf] %v143
  %160 = vst [vmem:[%s3 + $0x28] sm:$0xf] %v144
  %161 = vst [vmem:[%s3 + $0x2c] sm:$0xf] %v145
  %162 = vst [vmem:[%s3 + $0x30] sm:$0xf] %v146
  %163 = vst [vmem:[%s3 + $0x34] sm:$0xf] %v147
  %164 = vst [vmem:[%s3 + $0x38] sm:$0xf] %v148
  %165 = vst [vmem:[%s3 + $0x3c] sm:$0xf] %v149
  // Predicated region
  $region14: #{discriminator_forward.8} parent=0 // pred_check
    _
  $region15: #{discriminator_forward.8} parent=0 // pred_check_branch
    %167 = sbr.rel (0) target = $region17
  $region16: #{discriminator_forward.8} parent=0 // pred_region
    _
  $region17: #{discriminator_forward.8} parent=0 // pred_fallthru
    _
  // Predicated region
  $region18: #{discriminator_forward.8} parent=0 // pred_check
    _
  $region19: #{discriminator_forward.8} parent=0 // pred_check_branch
    %169 = sbr.rel (0) target = $region21
  $region20: #{discriminator_forward.8} parent=0 // pred_region
    _
  $region21: #{discriminator_forward.8} parent=0 // pred_fallthru
    _

// kernel: discriminator_forward.7
$region0: #{discriminator_forward.7}
  #allocation0 [shape = 'u32[]', space=smem, size = 0x4, offset = 0x4, fixed_abs, tag = 'smem constant byte address 0x4 - core index']
  #allocation1 [shape = 'u32[72,128]{1,0:T(1,128)}', space=vmem, size = 0x9000, scoped, tag = 'internal scratch']
  #allocation2 [shape = 'f32[128,128]{1,0:T(8,128)}', space=vmem, size = 0x10000, scoped, tag = 'scratch operand']
  %s0 = inlined_call_operand.vmem [shape: bf16[128,1024], index: 0, kind: input, shape index: {}]
  %s1 = inlined_call_operand.vmem [shape: bf16[1024,128], index: 1, kind: input, shape index: {}]
  %s2 = inlined_call_operand.vmem [shape: bf16[128,128], index: 2, kind: output, shape index: {0}]
  %s3 = inlined_call_operand.vmem [shape: f32[8,128], index: 3, kind: output, shape index: {1}]
  %s4 = inlined_call_operand.vmem [shape: f32[8,128], index: 4, kind: output, shape index: {2}]
  %5 = xla_tuple %s2, %s3, %s4
  %s6 = sld [smem:[#allocation0]]
  $region42: #{discriminator_forward.7} parent=0
    _
  %s8 = ssub.s32 1, %s6
  %s9 = scalar_select 0, %s8, %s6
  // Predicated region
  $region2: #{discriminator_forward.7} parent=0 // pred_check
    _
  $region3: #{discriminator_forward.7} parent=0 // pred_check_branch
    %11 = sbr.rel (0) target = $region5
  $region4: #{discriminator_forward.7} parent=0 // pred_region
    _
  $region5: #{discriminator_forward.7} parent=0 // pred_fallthru
    _
  // Predicated region
  $region6: #{discriminator_forward.7} parent=0 // pred_check
    _
  $region7: #{discriminator_forward.7} parent=0 // pred_check_branch
    %13 = sbr.rel (0) target = $region9
  $region8: #{discriminator_forward.7} parent=0 // pred_region
    _
  $region9: #{discriminator_forward.7} parent=0 // pred_fallthru
    _
  %p14 = scmp.eq.s32.totalorder 0, 0
  // Predicated region
  $region10: #{discriminator_forward.7} parent=0 // pred_check
    %p15 = pneg %p14
  $region11: #{discriminator_forward.7} parent=0 // pred_check_branch
    %17 = sbr.rel (%p15) target = $region13
  $region12: #{discriminator_forward.7} parent=0 // pred_region
    %18 = vst [vmem:[#allocation2] sm:$0xff] 0.0
    %19 = vst [vmem:[#allocation2 + $0x8] sm:$0xff] 0.0
    %20 = vst [vmem:[#allocation2 + $0x10] sm:$0xff] 0.0
    %21 = vst [vmem:[#allocation2 + $0x18] sm:$0xff] 0.0
    %22 = vst [vmem:[#allocation2 + $0x20] sm:$0xff] 0.0
    %23 = vst [vmem:[#allocation2 + $0x28] sm:$0xff] 0.0
    %24 = vst [vmem:[#allocation2 + $0x30] sm:$0xff] 0.0
    %25 = vst [vmem:[#allocation2 + $0x38] sm:$0xff] 0.0
    %26 = vst [vmem:[#allocation2 + $0x40] sm:$0xff] 0.0
    %27 = vst [vmem:[#allocation2 + $0x48] sm:$0xff] 0.0
    %28 = vst [vmem:[#allocation2 + $0x50] sm:$0xff] 0.0
    %29 = vst [vmem:[#allocation2 + $0x58] sm:$0xff] 0.0
    %30 = vst [vmem:[#allocation2 + $0x60] sm:$0xff] 0.0
    %31 = vst [vmem:[#allocation2 + $0x68] sm:$0xff] 0.0
    %32 = vst [vmem:[#allocation2 + $0x70] sm:$0xff] 0.0
    %33 = vst [vmem:[#allocation2 + $0x78] sm:$0xff] 0.0
  $region13: #{discriminator_forward.7} parent=0 // pred_fallthru
    _
  %v34 = vld [vmem:[#allocation2] sm:$0xff]
  %v35 = vld [vmem:[#allocation2 + $0x8] sm:$0xff]
  %v36 = vld [vmem:[#allocation2 + $0x10] sm:$0xff]
  %v37 = vld [vmem:[#allocation2 + $0x18] sm:$0xff]
  %v38 = vld [vmem:[#allocation2 + $0x20] sm:$0xff]
  %v39 = vld [vmem:[#allocation2 + $0x28] sm:$0xff]
  %v40 = vld [vmem:[#allocation2 + $0x30] sm:$0xff]
  %v41 = vld [vmem:[#allocation2 + $0x38] sm:$0xff]
  %v42 = vld [vmem:[#allocation2 + $0x40] sm:$0xff]
  %v43 = vld [vmem:[#allocation2 + $0x48] sm:$0xff]
  %v44 = vld [vmem:[#allocation2 + $0x50] sm:$0xff]
  %v45 = vld [vmem:[#allocation2 + $0x58] sm:$0xff]
  %v46 = vld [vmem:[#allocation2 + $0x60] sm:$0xff]
  %v47 = vld [vmem:[#allocation2 + $0x68] sm:$0xff]
  %v48 = vld [vmem:[#allocation2 + $0x70] sm:$0xff]
  %v49 = vld [vmem:[#allocation2 + $0x78] sm:$0xff]
  %v50 = vld [vmem:[%s0] sm:$0xff]
  %v51 = vld [vmem:[%s0 + $0x8] sm:$0xff]
  %v52 = vld [vmem:[%s0 + $0x10] sm:$0xff]
  %v53 = vld [vmem:[%s0 + $0x18] sm:$0xff]
  %v54 = vld [vmem:[%s0 + $0x20] sm:$0xff]
  %v55 = vld [vmem:[%s0 + $0x28] sm:$0xff]
  %v56 = vld [vmem:[%s0 + $0x30] sm:$0xff]
  %v57 = vld [vmem:[%s0 + $0x38] sm:$0xff]
  %v58 = vld [vmem:[%s0 + $0x40] sm:$0xff]
  %v59 = vld [vmem:[%s0 + $0x48] sm:$0xff]
  %v60 = vld [vmem:[%s0 + $0x50] sm:$0xff]
  %v61 = vld [vmem:[%s0 + $0x58] sm:$0xff]
  %v62 = vld [vmem:[%s0 + $0x60] sm:$0xff]
  %v63 = vld [vmem:[%s0 + $0x68] sm:$0xff]
  %v64 = vld [vmem:[%s0 + $0x70] sm:$0xff]
  %v65 = vld [vmem:[%s0 + $0x78] sm:$0xff]
  %v66 = vld [vmem:[%s0 + $0x80] sm:$0xff]
  %v67 = vld [vmem:[%s0 + $0x88] sm:$0xff]
  %v68 = vld [vmem:[%s0 + $0x90] sm:$0xff]
  %v69 = vld [vmem:[%s0 + $0x98] sm:$0xff]
  %v70 = vld [vmem:[%s0 + $0xa0] sm:$0xff]
  %v71 = vld [vmem:[%s0 + $0xa8] sm:$0xff]
  %v72 = vld [vmem:[%s0 + $0xb0] sm:$0xff]
  %v73 = vld [vmem:[%s0 + $0xb8] sm:$0xff]
  %v74 = vld [vmem:[%s0 + $0xc0] sm:$0xff]
  %v75 = vld [vmem:[%s0 + $0xc8] sm:$0xff]
  %v76 = vld [vmem:[%s0 + $0xd0] sm:$0xff]
  %v77 = vld [vmem:[%s0 + $0xd8] sm:$0xff]
  %v78 = vld [vmem:[%s0 + $0xe0] sm:$0xff]
  %v79 = vld [vmem:[%s0 + $0xe8] sm:$0xff]
  %v80 = vld [vmem:[%s0 + $0xf0] sm:$0xff]
  %v81 = vld [vmem:[%s0 + $0xf8] sm:$0xff]
  %v82 = vld [vmem:[%s0 + $0x100] sm:$0xff]
  %v83 = vld [vmem:[%s0 + $0x108] sm:$0xff]
  %v84 = vld [vmem:[%s0 + $0x110] sm:$0xff]
  %v85 = vld [vmem:[%s0 + $0x118] sm:$0xff]
  %v86 = vld [vmem:[%s0 + $0x120] sm:$0xff]
  %v87 = vld [vmem:[%s0 + $0x128] sm:$0xff]
  %v88 = vld [vmem:[%s0 + $0x130] sm:$0xff]
  %v89 = vld [vmem:[%s0 + $0x138] sm:$0xff]
  %v90 = vld [vmem:[%s0 + $0x140] sm:$0xff]
  %v91 = vld [vmem:[%s0 + $0x148] sm:$0xff]
  %v92 = vld [vmem:[%s0 + $0x150] sm:$0xff]
  %v93 = vld [vmem:[%s0 + $0x158] sm:$0xff]
  %v94 = vld [vmem:[%s0 + $0x160] sm:$0xff]
  %v95 = vld [vmem:[%s0 + $0x168] sm:$0xff]
  %v96 = vld [vmem:[%s0 + $0x170] sm:$0xff]
  %v97 = vld [vmem:[%s0 + $0x178] sm:$0xff]
  %v98 = vld [vmem:[%s0 + $0x180] sm:$0xff]
  %v99 = vld [vmem:[%s0 + $0x188] sm:$0xff]
  %v100 = vld [vmem:[%s0 + $0x190] sm:$0xff]
  %v101 = vld [vmem:[%s0 + $0x198] sm:$0xff]
  %v102 = vld [vmem:[%s0 + $0x1a0] sm:$0xff]
  %v103 = vld [vmem:[%s0 + $0x1a8] sm:$0xff]
  %v104 = vld [vmem:[%s0 + $0x1b0] sm:$0xff]
  %v105 = vld [vmem:[%s0 + $0x1b8] sm:$0xff]
  %v106 = vld [vmem:[%s0 + $0x1c0] sm:$0xff]
  %v107 = vld [vmem:[%s0 + $0x1c8] sm:$0xff]
  %v108 = vld [vmem:[%s0 + $0x1d0] sm:$0xff]
  %v109 = vld [vmem:[%s0 + $0x1d8] sm:$0xff]
  %v110 = vld [vmem:[%s0 + $0x1e0] sm:$0xff]
  %v111 = vld [vmem:[%s0 + $0x1e8] sm:$0xff]
  %v112 = vld [vmem:[%s0 + $0x1f0] sm:$0xff]
  %v113 = vld [vmem:[%s0 + $0x1f8] sm:$0xff]
  %v114 = vld [vmem:[%s1] sm:$0xf]
  %v115 = vld [vmem:[%s1 + $0x4] sm:$0xf]
  %v116 = vld [vmem:[%s1 + $0x8] sm:$0xf]
  %v117 = vld [vmem:[%s1 + $0xc] sm:$0xf]
  %v118 = vld [vmem:[%s1 + $0x10] sm:$0xf]
  %v119 = vld [vmem:[%s1 + $0x14] sm:$0xf]
  %v120 = vld [vmem:[%s1 + $0x18] sm:$0xf]
  %v121 = vld [vmem:[%s1 + $0x1c] sm:$0xf]
  %v122 = vld [vmem:[%s1 + $0x20] sm:$0xf]
  %v123 = vld [vmem:[%s1 + $0x24] sm:$0xf]
  %v124 = vld [vmem:[%s1 + $0x28] sm:$0xf]
  %v125 = vld [vmem:[%s1 + $0x2c] sm:$0xf]
  %v126 = vld [vmem:[%s1 + $0x30] sm:$0xf]
  %v127 = vld [vmem:[%s1 + $0x34] sm:$0xf]
  %v128 = vld [vmem:[%s1 + $0x38] sm:$0xf]
  %v129 = vld [vmem:[%s1 + $0x3c] sm:$0xf]
  %v130 = vld [vmem:[%s1 + $0x40] sm:$0xf]
  %v131 = vld [vmem:[%s1 + $0x44] sm:$0xf]
  %v132 = vld [vmem:[%s1 + $0x48] sm:$0xf]
  %v133 = vld [vmem:[%s1 + $0x4c] sm:$0xf]
  %v134 = vld [vmem:[%s1 + $0x50] sm:$0xf]
  %v135 = vld [vmem:[%s1 + $0x54] sm:$0xf]
  %v136 = vld [vmem:[%s1 + $0x58] sm:$0xf]
  %v137 = vld [vmem:[%s1 + $0x5c] sm:$0xf]
  %v138 = vld [vmem:[%s1 + $0x60] sm:$0xf]
  %v139 = vld [vmem:[%s1 + $0x64] sm:$0xf]
  %v140 = vld [vmem:[%s1 + $0x68] sm:$0xf]
  %v141 = vld [vmem:[%s1 + $0x6c] sm:$0xf]
  %v142 = vld [vmem:[%s1 + $0x70] sm:$0xf]
  %v143 = vld [vmem:[%s1 + $0x74] sm:$0xf]
  %v144 = vld [vmem:[%s1 + $0x78] sm:$0xf]
  %v145 = vld [vmem:[%s1 + $0x7c] sm:$0xf]
  %v146 = vld [vmem:[%s1 + $0x80] sm:$0xf]
  %v147 = vld [vmem:[%s1 + $0x84] sm:$0xf]
  %v148 = vld [vmem:[%s1 + $0x88] sm:$0xf]
  %v149 = vld [vmem:[%s1 + $0x8c] sm:$0xf]
  %v150 = vld [vmem:[%s1 + $0x90] sm:$0xf]
  %v151 = vld [vmem:[%s1 + $0x94] sm:$0xf]
  %v152 = vld [vmem:[%s1 + $0x98] sm:$0xf]
  %v153 = vld [vmem:[%s1 + $0x9c] sm:$0xf]
  %v154 = vld [vmem:[%s1 + $0xa0] sm:$0xf]
  %v155 = vld [vmem:[%s1 + $0xa4] sm:$0xf]
  %v156 = vld [vmem:[%s1 + $0xa8] sm:$0xf]
  %v157 = vld [vmem:[%s1 + $0xac] sm:$0xf]
  %v158 = vld [vmem:[%s1 + $0xb0] sm:$0xf]
  %v159 = vld [vmem:[%s1 + $0xb4] sm:$0xf]
  %v160 = vld [vmem:[%s1 + $0xb8] sm:$0xf]
  %v161 = vld [vmem:[%s1 + $0xbc] sm:$0xf]
  %v162 = vld [vmem:[%s1 + $0xc0] sm:$0xf]
  %v163 = vld [vmem:[%s1 + $0xc4] sm:$0xf]
  %v164 = vld [vmem:[%s1 + $0xc8] sm:$0xf]
  %v165 = vld [vmem:[%s1 + $0xcc] sm:$0xf]
  %v166 = vld [vmem:[%s1 + $0xd0] sm:$0xf]
  %v167 = vld [vmem:[%s1 + $0xd4] sm:$0xf]
  %v168 = vld [vmem:[%s1 + $0xd8] sm:$0xf]
  %v169 = vld [vmem:[%s1 + $0xdc] sm:$0xf]
  %v170 = vld [vmem:[%s1 + $0xe0] sm:$0xf]
  %v171 = vld [vmem:[%s1 + $0xe4] sm:$0xf]
  %v172 = vld [vmem:[%s1 + $0xe8] sm:$0xf]
  %v173 = vld [vmem:[%s1 + $0xec] sm:$0xf]
  %v174 = vld [vmem:[%s1 + $0xf0] sm:$0xf]
  %v175 = vld [vmem:[%s1 + $0xf4] sm:$0xf]
  %v176 = vld [vmem:[%s1 + $0xf8] sm:$0xf]
  %v177 = vld [vmem:[%s1 + $0xfc] sm:$0xf]
  %v178 = vld [vmem:[%s1 + $0x100] sm:$0xf]
  %v179 = vld [vmem:[%s1 + $0x104] sm:$0xf]
  %v180 = vld [vmem:[%s1 + $0x108] sm:$0xf]
  %v181 = vld [vmem:[%s1 + $0x10c] sm:$0xf]
  %v182 = vld [vmem:[%s1 + $0x110] sm:$0xf]
  %v183 = vld [vmem:[%s1 + $0x114] sm:$0xf]
  %v184 = vld [vmem:[%s1 + $0x118] sm:$0xf]
  %v185 = vld [vmem:[%s1 + $0x11c] sm:$0xf]
  %v186 = vld [vmem:[%s1 + $0x120] sm:$0xf]
  %v187 = vld [vmem:[%s1 + $0x124] sm:$0xf]
  %v188 = vld [vmem:[%s1 + $0x128] sm:$0xf]
  %v189 = vld [vmem:[%s1 + $0x12c] sm:$0xf]
  %v190 = vld [vmem:[%s1 + $0x130] sm:$0xf]
  %v191 = vld [vmem:[%s1 + $0x134] sm:$0xf]
  %v192 = vld [vmem:[%s1 + $0x138] sm:$0xf]
  %v193 = vld [vmem:[%s1 + $0x13c] sm:$0xf]
  %v194 = vld [vmem:[%s1 + $0x140] sm:$0xf]
  %v195 = vld [vmem:[%s1 + $0x144] sm:$0xf]
  %v196 = vld [vmem:[%s1 + $0x148] sm:$0xf]
  %v197 = vld [vmem:[%s1 + $0x14c] sm:$0xf]
  %v198 = vld [vmem:[%s1 + $0x150] sm:$0xf]
  %v199 = vld [vmem:[%s1 + $0x154] sm:$0xf]
  %v200 = vld [vmem:[%s1 + $0x158] sm:$0xf]
  %v201 = vld [vmem:[%s1 + $0x15c] sm:$0xf]
  %v202 = vld [vmem:[%s1 + $0x160] sm:$0xf]
  %v203 = vld [vmem:[%s1 + $0x164] sm:$0xf]
  %v204 = vld [vmem:[%s1 + $0x168] sm:$0xf]
  %v205 = vld [vmem:[%s1 + $0x16c] sm:$0xf]
  %v206 = vld [vmem:[%s1 + $0x170] sm:$0xf]
  %v207 = vld [vmem:[%s1 + $0x174] sm:$0xf]
  %v208 = vld [vmem:[%s1 + $0x178] sm:$0xf]
  %v209 = vld [vmem:[%s1 + $0x17c] sm:$0xf]
  %v210 = vld [vmem:[%s1 + $0x180] sm:$0xf]
  %v211 = vld [vmem:[%s1 + $0x184] sm:$0xf]
  %v212 = vld [vmem:[%s1 + $0x188] sm:$0xf]
  %v213 = vld [vmem:[%s1 + $0x18c] sm:$0xf]
  %v214 = vld [vmem:[%s1 + $0x190] sm:$0xf]
  %v215 = vld [vmem:[%s1 + $0x194] sm:$0xf]
  %v216 = vld [vmem:[%s1 + $0x198] sm:$0xf]
  %v217 = vld [vmem:[%s1 + $0x19c] sm:$0xf]
  %v218 = vld [vmem:[%s1 + $0x1a0] sm:$0xf]
  %v219 = vld [vmem:[%s1 + $0x1a4] sm:$0xf]
  %v220 = vld [vmem:[%s1 + $0x1a8] sm:$0xf]
  %v221 = vld [vmem:[%s1 + $0x1ac] sm:$0xf]
  %v222 = vld [vmem:[%s1 + $0x1b0] sm:$0xf]
  %v223 = vld [vmem:[%s1 + $0x1b4] sm:$0xf]
  %v224 = vld [vmem:[%s1 + $0x1b8] sm:$0xf]
  %v225 = vld [vmem:[%s1 + $0x1bc] sm:$0xf]
  %v226 = vld [vmem:[%s1 + $0x1c0] sm:$0xf]
  %v227 = vld [vmem:[%s1 + $0x1c4] sm:$0xf]
  %v228 = vld [vmem:[%s1 + $0x1c8] sm:$0xf]
  %v229 = vld [vmem:[%s1 + $0x1cc] sm:$0xf]
  %v230 = vld [vmem:[%s1 + $0x1d0] sm:$0xf]
  %v231 = vld [vmem:[%s1 + $0x1d4] sm:$0xf]
  %v232 = vld [vmem:[%s1 + $0x1d8] sm:$0xf]
  %v233 = vld [vmem:[%s1 + $0x1dc] sm:$0xf]
  %v234 = vld [vmem:[%s1 + $0x1e0] sm:$0xf]
  %v235 = vld [vmem:[%s1 + $0x1e4] sm:$0xf]
  %v236 = vld [vmem:[%s1 + $0x1e8] sm:$0xf]
  %v237 = vld [vmem:[%s1 + $0x1ec] sm:$0xf]
  %v238 = vld [vmem:[%s1 + $0x1f0] sm:$0xf]
  %v239 = vld [vmem:[%s1 + $0x1f4] sm:$0xf]
  %v240 = vld [vmem:[%s1 + $0x1f8] sm:$0xf]
  %v241 = vld [vmem:[%s1 + $0x1fc] sm:$0xf]
  %v306 = vunpack.c.l.b16 %v50
  %v307 = vunpack.c.h.b16 %v50
  %v308 = vunpack.c.l.b16 %v51
  %v309 = vunpack.c.h.b16 %v51
  %v310 = vunpack.c.l.b16 %v52
  %v311 = vunpack.c.h.b16 %v52
  %v312 = vunpack.c.l.b16 %v53
  %v313 = vunpack.c.h.b16 %v53
  %v314 = vunpack.c.l.b16 %v54
  %v315 = vunpack.c.h.b16 %v54
  %v316 = vunpack.c.l.b16 %v55
  %v317 = vunpack.c.h.b16 %v55
  %v318 = vunpack.c.l.b16 %v56
  %v319 = vunpack.c.h.b16 %v56
  %v320 = vunpack.c.l.b16 %v57
  %v321 = vunpack.c.h.b16 %v57
  %v322 = vunpack.c.l.b16 %v58
  %v323 = vunpack.c.h.b16 %v58
  %v324 = vunpack.c.l.b16 %v59
  %v325 = vunpack.c.h.b16 %v59
  %v326 = vunpack.c.l.b16 %v60
  %v327 = vunpack.c.h.b16 %v60
  %v328 = vunpack.c.l.b16 %v61
  %v329 = vunpack.c.h.b16 %v61
  %v330 = vunpack.c.l.b16 %v62
  %v331 = vunpack.c.h.b16 %v62
  %v332 = vunpack.c.l.b16 %v63
  %v333 = vunpack.c.h.b16 %v63
  %v334 = vunpack.c.l.b16 %v64
  %v335 = vunpack.c.h.b16 %v64
  %v336 = vunpack.c.l.b16 %v65
  %v337 = vunpack.c.h.b16 %v65
  %v338 = vunpack.c.l.b16 %v66
  %v339 = vunpack.c.h.b16 %v66
  %v340 = vunpack.c.l.b16 %v67
  %v341 = vunpack.c.h.b16 %v67
  %v342 = vunpack.c.l.b16 %v68
  %v343 = vunpack.c.h.b16 %v68
  %v344 = vunpack.c.l.b16 %v69
  %v345 = vunpack.c.h.b16 %v69
  %v346 = vunpack.c.l.b16 %v70
  %v347 = vunpack.c.h.b16 %v70
  %v348 = vunpack.c.l.b16 %v71
  %v349 = vunpack.c.h.b16 %v71
  %v350 = vunpack.c.l.b16 %v72
  %v351 = vunpack.c.h.b16 %v72
  %v352 = vunpack.c.l.b16 %v73
  %v353 = vunpack.c.h.b16 %v73
  %v354 = vunpack.c.l.b16 %v74
  %v355 = vunpack.c.h.b16 %v74
  %v356 = vunpack.c.l.b16 %v75
  %v357 = vunpack.c.h.b16 %v75
  %v358 = vunpack.c.l.b16 %v76
  %v359 = vunpack.c.h.b16 %v76
  %v360 = vunpack.c.l.b16 %v77
  %v361 = vunpack.c.h.b16 %v77
  %v362 = vunpack.c.l.b16 %v78
  %v363 = vunpack.c.h.b16 %v78
  %v364 = vunpack.c.l.b16 %v79
  %v365 = vunpack.c.h.b16 %v79
  %v366 = vunpack.c.l.b16 %v80
  %v367 = vunpack.c.h.b16 %v80
  %v368 = vunpack.c.l.b16 %v81
  %v369 = vunpack.c.h.b16 %v81
  %v370 = vunpack.c.l.b16 %v82
  %v371 = vunpack.c.h.b16 %v82
  %v372 = vunpack.c.l.b16 %v83
  %v373 = vunpack.c.h.b16 %v83
  %v374 = vunpack.c.l.b16 %v84
  %v375 = vunpack.c.h.b16 %v84
  %v376 = vunpack.c.l.b16 %v85
  %v377 = vunpack.c.h.b16 %v85
  %v378 = vunpack.c.l.b16 %v86
  %v379 = vunpack.c.h.b16 %v86
  %v380 = vunpack.c.l.b16 %v87
  %v381 = vunpack.c.h.b16 %v87
  %v382 = vunpack.c.l.b16 %v88
  %v383 = vunpack.c.h.b16 %v88
  %v384 = vunpack.c.l.b16 %v89
  %v385 = vunpack.c.h.b16 %v89
  %v386 = vunpack.c.l.b16 %v90
  %v387 = vunpack.c.h.b16 %v90
  %v388 = vunpack.c.l.b16 %v91
  %v389 = vunpack.c.h.b16 %v91
  %v390 = vunpack.c.l.b16 %v92
  %v391 = vunpack.c.h.b16 %v92
  %v392 = vunpack.c.l.b16 %v93
  %v393 = vunpack.c.h.b16 %v93
  %v394 = vunpack.c.l.b16 %v94
  %v395 = vunpack.c.h.b16 %v94
  %v396 = vunpack.c.l.b16 %v95
  %v397 = vunpack.c.h.b16 %v95
  %v398 = vunpack.c.l.b16 %v96
  %v399 = vunpack.c.h.b16 %v96
  %v400 = vunpack.c.l.b16 %v97
  %v401 = vunpack.c.h.b16 %v97
  %v402 = vunpack.c.l.b16 %v98
  %v403 = vunpack.c.h.b16 %v98
  %v404 = vunpack.c.l.b16 %v99
  %v405 = vunpack.c.h.b16 %v99
  %v406 = vunpack.c.l.b16 %v100
  %v407 = vunpack.c.h.b16 %v100
  %v408 = vunpack.c.l.b16 %v101
  %v409 = vunpack.c.h.b16 %v101
  %v410 = vunpack.c.l.b16 %v102
  %v411 = vunpack.c.h.b16 %v102
  %v412 = vunpack.c.l.b16 %v103
  %v413 = vunpack.c.h.b16 %v103
  %v414 = vunpack.c.l.b16 %v104
  %v415 = vunpack.c.h.b16 %v104
  %v416 = vunpack.c.l.b16 %v105
  %v417 = vunpack.c.h.b16 %v105
  %v418 = vunpack.c.l.b16 %v106
  %v419 = vunpack.c.h.b16 %v106
  %v420 = vunpack.c.l.b16 %v107
  %v421 = vunpack.c.h.b16 %v107
  %v422 = vunpack.c.l.b16 %v108
  %v423 = vunpack.c.h.b16 %v108
  %v424 = vunpack.c.l.b16 %v109
  %v425 = vunpack.c.h.b16 %v109
  %v426 = vunpack.c.l.b16 %v110
  %v427 = vunpack.c.h.b16 %v110
  %v428 = vunpack.c.l.b16 %v111
  %v429 = vunpack.c.h.b16 %v111
  %v430 = vunpack.c.l.b16 %v112
  %v431 = vunpack.c.h.b16 %v112
  %v432 = vunpack.c.l.b16 %v113
  %v433 = vunpack.c.h.b16 %v113
  %v434 = vpack.c.b16 %v314, %v306
  %v435 = vpack.c.b16 %v315, %v307
  %v436 = vpack.c.b16 %v316, %v308
  %v437 = vpack.c.b16 %v317, %v309
  %v438 = vpack.c.b16 %v318, %v310
  %v439 = vpack.c.b16 %v319, %v311
  %v440 = vpack.c.b16 %v320, %v312
  %v441 = vpack.c.b16 %v321, %v313
  %v442 = vpack.c.b16 %v330, %v322
  %v443 = vpack.c.b16 %v331, %v323
  %v444 = vpack.c.b16 %v332, %v324
  %v445 = vpack.c.b16 %v333, %v325
  %v446 = vpack.c.b16 %v334, %v326
  %v447 = vpack.c.b16 %v335, %v327
  %v448 = vpack.c.b16 %v336, %v328
  %v449 = vpack.c.b16 %v337, %v329
  %v450 = vpack.c.b16 %v346, %v338
  %v451 = vpack.c.b16 %v347, %v339
  %v452 = vpack.c.b16 %v348, %v340
  %v453 = vpack.c.b16 %v349, %v341
  %v454 = vpack.c.b16 %v350, %v342
  %v455 = vpack.c.b16 %v351, %v343
  %v456 = vpack.c.b16 %v352, %v344
  %v457 = vpack.c.b16 %v353, %v345
  %v458 = vpack.c.b16 %v362, %v354
  %v459 = vpack.c.b16 %v363, %v355
  %v460 = vpack.c.b16 %v364, %v356
  %v461 = vpack.c.b16 %v365, %v357
  %v462 = vpack.c.b16 %v366, %v358
  %v463 = vpack.c.b16 %v367, %v359
  %v464 = vpack.c.b16 %v368, %v360
  %v465 = vpack.c.b16 %v369, %v361
  %v466 = vpack.c.b16 %v378, %v370
  %v467 = vpack.c.b16 %v379, %v371
  %v468 = vpack.c.b16 %v380, %v372
  %v469 = vpack.c.b16 %v381, %v373
  %v470 = vpack.c.b16 %v382, %v374
  %v471 = vpack.c.b16 %v383, %v375
  %v472 = vpack.c.b16 %v384, %v376
  %v473 = vpack.c.b16 %v385, %v377
  %v474 = vpack.c.b16 %v394, %v386
  %v475 = vpack.c.b16 %v395, %v387
  %v476 = vpack.c.b16 %v396, %v388
  %v477 = vpack.c.b16 %v397, %v389
  %v478 = vpack.c.b16 %v398, %v390
  %v479 = vpack.c.b16 %v399, %v391
  %v480 = vpack.c.b16 %v400, %v392
  %v481 = vpack.c.b16 %v401, %v393
  %v482 = vpack.c.b16 %v410, %v402
  %v483 = vpack.c.b16 %v411, %v403
  %v484 = vpack.c.b16 %v412, %v404
  %v485 = vpack.c.b16 %v413, %v405
  %v486 = vpack.c.b16 %v414, %v406
  %v487 = vpack.c.b16 %v415, %v407
  %v488 = vpack.c.b16 %v416, %v408
  %v489 = vpack.c.b16 %v417, %v409
  %v490 = vpack.c.b16 %v426, %v418
  %v491 = vpack.c.b16 %v427, %v419
  %v492 = vpack.c.b16 %v428, %v420
  %v493 = vpack.c.b16 %v429, %v421
  %v494 = vpack.c.b16 %v430, %v422
  %v495 = vpack.c.b16 %v431, %v423
  %v496 = vpack.c.b16 %v432, %v424
  %v497 = vpack.c.b16 %v433, %v425
  %v690 = vunpack.c.l.b16 %v114
  %v691 = vunpack.c.l.b16 %v115
  %v692 = vunpack.c.l.b16 %v116
  %v693 = vunpack.c.l.b16 %v117
  %v694 = vunpack.c.l.b16 %v118
  %v695 = vunpack.c.l.b16 %v119
  %v696 = vunpack.c.l.b16 %v120
  %v697 = vunpack.c.l.b16 %v121
  %v698 = vunpack.c.l.b16 %v122
  %v699 = vunpack.c.l.b16 %v123
  %v700 = vunpack.c.l.b16 %v124
  %v701 = vunpack.c.l.b16 %v125
  %v702 = vunpack.c.l.b16 %v126
  %v703 = vunpack.c.l.b16 %v127
  %v704 = vunpack.c.l.b16 %v128
  %v705 = vunpack.c.l.b16 %v129
  %v706 = vunpack.c.l.b16 %v130
  %v707 = vunpack.c.l.b16 %v131
  %v708 = vunpack.c.l.b16 %v132
  %v709 = vunpack.c.l.b16 %v133
  %v710 = vunpack.c.l.b16 %v134
  %v711 = vunpack.c.l.b16 %v135
  %v712 = vunpack.c.l.b16 %v136
  %v713 = vunpack.c.l.b16 %v137
  %v714 = vunpack.c.l.b16 %v138
  %v715 = vunpack.c.l.b16 %v139
  %v716 = vunpack.c.l.b16 %v140
  %v717 = vunpack.c.l.b16 %v141
  %v718 = vunpack.c.l.b16 %v142
  %v719 = vunpack.c.l.b16 %v143
  %v720 = vunpack.c.l.b16 %v144
  %v721 = vunpack.c.l.b16 %v145
  %v722 = vunpack.c.l.b16 %v146
  %v723 = vunpack.c.l.b16 %v147
  %v724 = vunpack.c.l.b16 %v148
  %v725 = vunpack.c.l.b16 %v149
  %v726 = vunpack.c.l.b16 %v150
  %v727 = vunpack.c.l.b16 %v151
  %v728 = vunpack.c.l.b16 %v152
  %v729 = vunpack.c.l.b16 %v153
  %v730 = vunpack.c.l.b16 %v154
  %v731 = vunpack.c.l.b16 %v155
  %v732 = vunpack.c.l.b16 %v156
  %v733 = vunpack.c.l.b16 %v157
  %v734 = vunpack.c.l.b16 %v158
  %v735 = vunpack.c.l.b16 %v159
  %v736 = vunpack.c.l.b16 %v160
  %v737 = vunpack.c.l.b16 %v161
  %v738 = vunpack.c.l.b16 %v162
  %v739 = vunpack.c.l.b16 %v163
  %v740 = vunpack.c.l.b16 %v164
  %v741 = vunpack.c.l.b16 %v165
  %v742 = vunpack.c.l.b16 %v166
  %v743 = vunpack.c.l.b16 %v167
  %v744 = vunpack.c.l.b16 %v168
  %v745 = vunpack.c.l.b16 %v169
  %v746 = vunpack.c.l.b16 %v170
  %v747 = vunpack.c.l.b16 %v171
  %v748 = vunpack.c.l.b16 %v172
  %v749 = vunpack.c.l.b16 %v173
  %v750 = vunpack.c.l.b16 %v174
  %v751 = vunpack.c.l.b16 %v175
  %v752 = vunpack.c.l.b16 %v176
  %v753 = vunpack.c.l.b16 %v177
  %v754 = vunpack.c.l.b16 %v178
  %v755 = vunpack.c.l.b16 %v179
  %v756 = vunpack.c.l.b16 %v180
  %v757 = vunpack.c.l.b16 %v181
  %v758 = vunpack.c.l.b16 %v182
  %v759 = vunpack.c.l.b16 %v183
  %v760 = vunpack.c.l.b16 %v184
  %v761 = vunpack.c.l.b16 %v185
  %v762 = vunpack.c.l.b16 %v186
  %v763 = vunpack.c.l.b16 %v187
  %v764 = vunpack.c.l.b16 %v188
  %v765 = vunpack.c.l.b16 %v189
  %v766 = vunpack.c.l.b16 %v190
  %v767 = vunpack.c.l.b16 %v191
  %v768 = vunpack.c.l.b16 %v192
  %v769 = vunpack.c.l.b16 %v193
  %v770 = vunpack.c.l.b16 %v194
  %v771 = vunpack.c.l.b16 %v195
  %v772 = vunpack.c.l.b16 %v196
  %v773 = vunpack.c.l.b16 %v197
  %v774 = vunpack.c.l.b16 %v198
  %v775 = vunpack.c.l.b16 %v199
  %v776 = vunpack.c.l.b16 %v200
  %v777 = vunpack.c.l.b16 %v201
  %v778 = vunpack.c.l.b16 %v202
  %v779 = vunpack.c.l.b16 %v203
  %v780 = vunpack.c.l.b16 %v204
  %v781 = vunpack.c.l.b16 %v205
  %v782 = vunpack.c.l.b16 %v206
  %v783 = vunpack.c.l.b16 %v207
  %v784 = vunpack.c.l.b16 %v208
  %v785 = vunpack.c.l.b16 %v209
  %v786 = vunpack.c.l.b16 %v210
  %v787 = vunpack.c.l.b16 %v211
  %v788 = vunpack.c.l.b16 %v212
  %v789 = vunpack.c.l.b16 %v213
  %v790 = vunpack.c.l.b16 %v214
  %v791 = vunpack.c.l.b16 %v215
  %v792 = vunpack.c.l.b16 %v216
  %v793 = vunpack.c.l.b16 %v217
  %v794 = vunpack.c.l.b16 %v218
  %v795 = vunpack.c.l.b16 %v219
  %v796 = vunpack.c.l.b16 %v220
  %v797 = vunpack.c.l.b16 %v221
  %v798 = vunpack.c.l.b16 %v222
  %v799 = vunpack.c.l.b16 %v223
  %v800 = vunpack.c.l.b16 %v224
  %v801 = vunpack.c.l.b16 %v225
  %v802 = vunpack.c.l.b16 %v226
  %v803 = vunpack.c.l.b16 %v227
  %v804 = vunpack.c.l.b16 %v228
  %v805 = vunpack.c.l.b16 %v229
  %v806 = vunpack.c.l.b16 %v230
  %v807 = vunpack.c.l.b16 %v231
  %v808 = vunpack.c.l.b16 %v232
  %v809 = vunpack.c.l.b16 %v233
  %v810 = vunpack.c.l.b16 %v234
  %v811 = vunpack.c.l.b16 %v235
  %v812 = vunpack.c.l.b16 %v236
  %v813 = vunpack.c.l.b16 %v237
  %v814 = vunpack.c.l.b16 %v238
  %v815 = vunpack.c.l.b16 %v239
  %v816 = vunpack.c.l.b16 %v240
  %v817 = vunpack.c.l.b16 %v241
  %v818 = vpack.c.b16 %v691, %v690
  %v819 = vpack.c.b16 %v693, %v692
  %v820 = vpack.c.b16 %v695, %v694
  %v821 = vpack.c.b16 %v697, %v696
  %v822 = vpack.c.b16 %v699, %v698
  %v823 = vpack.c.b16 %v701, %v700
  %v824 = vpack.c.b16 %v703, %v702
  %v825 = vpack.c.b16 %v705, %v704
  %v826 = vpack.c.b16 %v707, %v706
  %v827 = vpack.c.b16 %v709, %v708
  %v828 = vpack.c.b16 %v711, %v710
  %v829 = vpack.c.b16 %v713, %v712
  %v830 = vpack.c.b16 %v715, %v714
  %v831 = vpack.c.b16 %v717, %v716
  %v832 = vpack.c.b16 %v719, %v718
  %v833 = vpack.c.b16 %v721, %v720
  %v834 = vpack.c.b16 %v723, %v722
  %v835 = vpack.c.b16 %v725, %v724
  %v836 = vpack.c.b16 %v727, %v726
  %v837 = vpack.c.b16 %v729, %v728
  %v838 = vpack.c.b16 %v731, %v730
  %v839 = vpack.c.b16 %v733, %v732
  %v840 = vpack.c.b16 %v735, %v734
  %v841 = vpack.c.b16 %v737, %v736
  %v842 = vpack.c.b16 %v739, %v738
  %v843 = vpack.c.b16 %v741, %v740
  %v844 = vpack.c.b16 %v743, %v742
  %v845 = vpack.c.b16 %v745, %v744
  %v846 = vpack.c.b16 %v747, %v746
  %v847 = vpack.c.b16 %v749, %v748
  %v848 = vpack.c.b16 %v751, %v750
  %v849 = vpack.c.b16 %v753, %v752
  %v850 = vpack.c.b16 %v755, %v754
  %v851 = vpack.c.b16 %v757, %v756
  %v852 = vpack.c.b16 %v759, %v758
  %v853 = vpack.c.b16 %v761, %v760
  %v854 = vpack.c.b16 %v763, %v762
  %v855 = vpack.c.b16 %v765, %v764
  %v856 = vpack.c.b16 %v767, %v766
  %v857 = vpack.c.b16 %v769, %v768
  %v858 = vpack.c.b16 %v771, %v770
  %v859 = vpack.c.b16 %v773, %v772
  %v860 = vpack.c.b16 %v775, %v774
  %v861 = vpack.c.b16 %v777, %v776
  %v862 = vpack.c.b16 %v779, %v778
  %v863 = vpack.c.b16 %v781, %v780
  %v864 = vpack.c.b16 %v783, %v782
  %v865 = vpack.c.b16 %v785, %v784
  %v866 = vpack.c.b16 %v787, %v786
  %v867 = vpack.c.b16 %v789, %v788
  %v868 = vpack.c.b16 %v791, %v790
  %v869 = vpack.c.b16 %v793, %v792
  %v870 = vpack.c.b16 %v795, %v794
  %v871 = vpack.c.b16 %v797, %v796
  %v872 = vpack.c.b16 %v799, %v798
  %v873 = vpack.c.b16 %v801, %v800
  %v874 = vpack.c.b16 %v803, %v802
  %v875 = vpack.c.b16 %v805, %v804
  %v876 = vpack.c.b16 %v807, %v806
  %v877 = vpack.c.b16 %v809, %v808
  %v878 = vpack.c.b16 %v811, %v810
  %v879 = vpack.c.b16 %v813, %v812
  %v880 = vpack.c.b16 %v815, %v814
  %v881 = vpack.c.b16 %v817, %v816
  %946 = vmatpush.bf16.msra.mxu0 %v825
  %947 = vmatpush.bf16.msra.mxu0 %v824
  %948 = vmatpush.bf16.msra.mxu0 %v823
  %949 = vmatpush.bf16.msra.mxu0 %v822
  %950 = vmatpush.bf16.msra.mxu0 %v821
  %951 = vmatpush.bf16.msra.mxu0 %v820
  %952 = vmatpush.bf16.msra.mxu0 %v819
  %953 = vmatpush.bf16.msra.mxu0 %v818
  %954 = vmatmul.bf16.gmra.mxu0 %v434
  %v955 = vpop.f32.mrf.mxu0
  %v956 = vadd.f32 0.0, %v955
  %v957 = vpop.f32.mrf.mxu0
  %v958 = vadd.f32 0.0, %v957
  %959 = vmatmul.bf16.gmra.mxu0 %v442
  %v960 = vpop.f32.mrf.mxu0
  %v961 = vadd.f32 0.0, %v960
  %v962 = vpop.f32.mrf.mxu0
  %v963 = vadd.f32 0.0, %v962
  %964 = vmatmul.bf16.gmra.mxu0 %v450
  %v965 = vpop.f32.mrf.mxu0
  %v966 = vadd.f32 0.0, %v965
  %v967 = vpop.f32.mrf.mxu0
  %v968 = vadd.f32 0.0, %v967
  %969 = vmatmul.bf16.gmra.mxu0 %v458
  %v970 = vpop.f32.mrf.mxu0
  %v971 = vadd.f32 0.0, %v970
  %v972 = vpop.f32.mrf.mxu0
  %v973 = vadd.f32 0.0, %v972
  %974 = vmatmul.bf16.gmra.mxu0 %v466
  %v975 = vpop.f32.mrf.mxu0
  %v976 = vadd.f32 0.0, %v975
  %v977 = vpop.f32.mrf.mxu0
  %v978 = vadd.f32 0.0, %v977
  %979 = vmatmul.bf16.gmra.mxu0 %v474
  %v980 = vpop.f32.mrf.mxu0
  %v981 = vadd.f32 0.0, %v980
  %v982 = vpop.f32.mrf.mxu0
  %v983 = vadd.f32 0.0, %v982
  %984 = vmatmul.bf16.gmra.mxu0 %v482
  %v985 = vpop.f32.mrf.mxu0
  %v986 = vadd.f32 0.0, %v985
  %v987 = vpop.f32.mrf.mxu0
  %v988 = vadd.f32 0.0, %v987
  %989 = vmatmul.bf16.gmra.mxu0 %v490
  %v990 = vpop.f32.mrf.mxu0
  %v991 = vadd.f32 0.0, %v990
  %v992 = vpop.f32.mrf.mxu0
  %v993 = vadd.f32 0.0, %v992
  %994 = vdwg.mxu0
  %995 = vmatpush.bf16.msra.mxu0 %v833
  %996 = vmatpush.bf16.msra.mxu0 %v832
  %997 = vmatpush.bf16.msra.mxu0 %v831
  %998 = vmatpush.bf16.msra.mxu0 %v830
  %999 = vmatpush.bf16.msra.mxu0 %v829
  %1000 = vmatpush.bf16.msra.mxu0 %v828
  %1001 = vmatpush.bf16.msra.mxu0 %v827
  %1002 = vmatpush.bf16.msra.mxu0 %v826
  %1003 = vmatmul.bf16.gmra.mxu0 %v435
  %v1004 = vpop.f32.mrf.mxu0
  %v1005 = vadd.f32 %v956, %v1004
  %v1006 = vpop.f32.mrf.mxu0
  %v1007 = vadd.f32 %v958, %v1006
  %1008 = vmatmul.bf16.gmra.mxu0 %v443
  %v1009 = vpop.f32.mrf.mxu0
  %v1010 = vadd.f32 %v961, %v1009
  %v1011 = vpop.f32.mrf.mxu0
  %v1012 = vadd.f32 %v963, %v1011
  %1013 = vmatmul.bf16.gmra.mxu0 %v451
  %v1014 = vpop.f32.mrf.mxu0
  %v1015 = vadd.f32 %v966, %v1014
  %v1016 = vpop.f32.mrf.mxu0
  %v1017 = vadd.f32 %v968, %v1016
  %1018 = vmatmul.bf16.gmra.mxu0 %v459
  %v1019 = vpop.f32.mrf.mxu0
  %v1020 = vadd.f32 %v971, %v1019
  %v1021 = vpop.f32.mrf.mxu0
  %v1022 = vadd.f32 %v973, %v1021
  %1023 = vmatmul.bf16.gmra.mxu0 %v467
  %v1024 = vpop.f32.mrf.mxu0
  %v1025 = vadd.f32 %v976, %v1024
  %v1026 = vpop.f32.mrf.mxu0
  %v1027 = vadd.f32 %v978, %v1026
  %1028 = vmatmul.bf16.gmra.mxu0 %v475
  %v1029 = vpop.f32.mrf.mxu0
  %v1030 = vadd.f32 %v981, %v1029
  %v1031 = vpop.f32.mrf.mxu0
  %v1032 = vadd.f32 %v983, %v1031
  %1033 = vmatmul.bf16.gmra.mxu0 %v483
  %v1034 = vpop.f32.mrf.mxu0
  %v1035 = vadd.f32 %v986, %v1034
  %v1036 = vpop.f32.mrf.mxu0
  %v1037 = vadd.f32 %v988, %v1036
  %1038 = vmatmul.bf16.gmra.mxu0 %v491
  %v1039 = vpop.f32.mrf.mxu0
  %v1040 = vadd.f32 %v991, %v1039
  %v1041 = vpop.f32.mrf.mxu0
  %v1042 = vadd.f32 %v993, %v1041
  %1043 = vdwg.mxu0
  %1044 = vmatpush.bf16.msra.mxu0 %v841
  %1045 = vmatpush.bf16.msra.mxu0 %v840
  %1046 = vmatpush.bf16.msra.mxu0 %v839
  %1047 = vmatpush.bf16.msra.mxu0 %v838
  %1048 = vmatpush.bf16.msra.mxu0 %v837
  %1049 = vmatpush.bf16.msra.mxu0 %v836
  %1050 = vmatpush.bf16.msra.mxu0 %v835
  %1051 = vmatpush.bf16.msra.mxu0 %v834
  %1052 = vmatmul.bf16.gmra.mxu0 %v436
  %v1053 = vpop.f32.mrf.mxu0
  %v1054 = vadd.f32 %v1005, %v1053
  %v1055 = vpop.f32.mrf.mxu0
  %v1056 = vadd.f32 %v1007, %v1055
  %1057 = vmatmul.bf16.gmra.mxu0 %v444
  %v1058 = vpop.f32.mrf.mxu0
  %v1059 = vadd.f32 %v1010, %v1058
  %v1060 = vpop.f32.mrf.mxu0
  %v1061 = vadd.f32 %v1012, %v1060
  %1062 = vmatmul.bf16.gmra.mxu0 %v452
  %v1063 = vpop.f32.mrf.mxu0
  %v1064 = vadd.f32 %v1015, %v1063
  %v1065 = vpop.f32.mrf.mxu0
  %v1066 = vadd.f32 %v1017, %v1065
  %1067 = vmatmul.bf16.gmra.mxu0 %v460
  %v1068 = vpop.f32.mrf.mxu0
  %v1069 = vadd.f32 %v1020, %v1068
  %v1070 = vpop.f32.mrf.mxu0
  %v1071 = vadd.f32 %v1022, %v1070
  %1072 = vmatmul.bf16.gmra.mxu0 %v468
  %v1073 = vpop.f32.mrf.mxu0
  %v1074 = vadd.f32 %v1025, %v1073
  %v1075 = vpop.f32.mrf.mxu0
  %v1076 = vadd.f32 %v1027, %v1075
  %1077 = vmatmul.bf16.gmra.mxu0 %v476
  %v1078 = vpop.f32.mrf.mxu0
  %v1079 = vadd.f32 %v1030, %v1078
  %v1080 = vpop.f32.mrf.mxu0
  %v1081 = vadd.f32 %v1032, %v1080
  %1082 = vmatmul.bf16.gmra.mxu0 %v484
  %v1083 = vpop.f32.mrf.mxu0
  %v1084 = vadd.f32 %v1035, %v1083
  %v1085 = vpop.f32.mrf.mxu0
  %v1086 = vadd.f32 %v1037, %v1085
  %1087 = vmatmul.bf16.gmra.mxu0 %v492
  %v1088 = vpop.f32.mrf.mxu0
  %v1089 = vadd.f32 %v1040, %v1088
  %v1090 = vpop.f32.mrf.mxu0
  %v1091 = vadd.f32 %v1042, %v1090
  %1092 = vdwg.mxu0
  %1093 = vmatpush.bf16.msra.mxu0 %v849
  %1094 = vmatpush.bf16.msra.mxu0 %v848
  %1095 = vmatpush.bf16.msra.mxu0 %v847
  %1096 = vmatpush.bf16.msra.mxu0 %v846
  %1097 = vmatpush.bf16.msra.mxu0 %v845
  %1098 = vmatpush.bf16.msra.mxu0 %v844
  %1099 = vmatpush.bf16.msra.mxu0 %v843
  %1100 = vmatpush.bf16.msra.mxu0 %v842
  %1101 = vmatmul.bf16.gmra.mxu0 %v437
  %v1102 = vpop.f32.mrf.mxu0
  %v1103 = vadd.f32 %v1054, %v1102
  %v1104 = vpop.f32.mrf.mxu0
  %v1105 = vadd.f32 %v1056, %v1104
  %1106 = vmatmul.bf16.gmra.mxu0 %v445
  %v1107 = vpop.f32.mrf.mxu0
  %v1108 = vadd.f32 %v1059, %v1107
  %v1109 = vpop.f32.mrf.mxu0
  %v1110 = vadd.f32 %v1061, %v1109
  %1111 = vmatmul.bf16.gmra.mxu0 %v453
  %v1112 = vpop.f32.mrf.mxu0
  %v1113 = vadd.f32 %v1064, %v1112
  %v1114 = vpop.f32.mrf.mxu0
  %v1115 = vadd.f32 %v1066, %v1114
  %1116 = vmatmul.bf16.gmra.mxu0 %v461
  %v1117 = vpop.f32.mrf.mxu0
  %v1118 = vadd.f32 %v1069, %v1117
  %v1119 = vpop.f32.mrf.mxu0
  %v1120 = vadd.f32 %v1071, %v1119
  %1121 = vmatmul.bf16.gmra.mxu0 %v469
  %v1122 = vpop.f32.mrf.mxu0
  %v1123 = vadd.f32 %v1074, %v1122
  %v1124 = vpop.f32.mrf.mxu0
  %v1125 = vadd.f32 %v1076, %v1124
  %1126 = vmatmul.bf16.gmra.mxu0 %v477
  %v1127 = vpop.f32.mrf.mxu0
  %v1128 = vadd.f32 %v1079, %v1127
  %v1129 = vpop.f32.mrf.mxu0
  %v1130 = vadd.f32 %v1081, %v1129
  %1131 = vmatmul.bf16.gmra.mxu0 %v485
  %v1132 = vpop.f32.mrf.mxu0
  %v1133 = vadd.f32 %v1084, %v1132
  %v1134 = vpop.f32.mrf.mxu0
  %v1135 = vadd.f32 %v1086, %v1134
  %1136 = vmatmul.bf16.gmra.mxu0 %v493
  %v1137 = vpop.f32.mrf.mxu0
  %v1138 = vadd.f32 %v1089, %v1137
  %v1139 = vpop.f32.mrf.mxu0
  %v1140 = vadd.f32 %v1091, %v1139
  %1141 = vdwg.mxu0
  %1142 = vmatpush.bf16.msra.mxu0 %v857
  %1143 = vmatpush.bf16.msra.mxu0 %v856
  %1144 = vmatpush.bf16.msra.mxu0 %v855
  %1145 = vmatpush.bf16.msra.mxu0 %v854
  %1146 = vmatpush.bf16.msra.mxu0 %v853
  %1147 = vmatpush.bf16.msra.mxu0 %v852
  %1148 = vmatpush.bf16.msra.mxu0 %v851
  %1149 = vmatpush.bf16.msra.mxu0 %v850
  %1150 = vmatmul.bf16.gmra.mxu0 %v438
  %v1151 = vpop.f32.mrf.mxu0
  %v1152 = vadd.f32 %v1103, %v1151
  %v1153 = vpop.f32.mrf.mxu0
  %v1154 = vadd.f32 %v1105, %v1153
  %1155 = vmatmul.bf16.gmra.mxu0 %v446
  %v1156 = vpop.f32.mrf.mxu0
  %v1157 = vadd.f32 %v1108, %v1156
  %v1158 = vpop.f32.mrf.mxu0
  %v1159 = vadd.f32 %v1110, %v1158
  %1160 = vmatmul.bf16.gmra.mxu0 %v454
  %v1161 = vpop.f32.mrf.mxu0
  %v1162 = vadd.f32 %v1113, %v1161
  %v1163 = vpop.f32.mrf.mxu0
  %v1164 = vadd.f32 %v1115, %v1163
  %1165 = vmatmul.bf16.gmra.mxu0 %v462
  %v1166 = vpop.f32.mrf.mxu0
  %v1167 = vadd.f32 %v1118, %v1166
  %v1168 = vpop.f32.mrf.mxu0
  %v1169 = vadd.f32 %v1120, %v1168
  %1170 = vmatmul.bf16.gmra.mxu0 %v470
  %v1171 = vpop.f32.mrf.mxu0
  %v1172 = vadd.f32 %v1123, %v1171
  %v1173 = vpop.f32.mrf.mxu0
  %v1174 = vadd.f32 %v1125, %v1173
  %1175 = vmatmul.bf16.gmra.mxu0 %v478
  %v1176 = vpop.f32.mrf.mxu0
  %v1177 = vadd.f32 %v1128, %v1176
  %v1178 = vpop.f32.mrf.mxu0
  %v1179 = vadd.f32 %v1130, %v1178
  %1180 = vmatmul.bf16.gmra.mxu0 %v486
  %v1181 = vpop.f32.mrf.mxu0
  %v1182 = vadd.f32 %v1133, %v1181
  %v1183 = vpop.f32.mrf.mxu0
  %v1184 = vadd.f32 %v1135, %v1183
  %1185 = vmatmul.bf16.gmra.mxu0 %v494
  %v1186 = vpop.f32.mrf.mxu0
  %v1187 = vadd.f32 %v1138, %v1186
  %v1188 = vpop.f32.mrf.mxu0
  %v1189 = vadd.f32 %v1140, %v1188
  %1190 = vdwg.mxu0
  %1191 = vmatpush.bf16.msra.mxu0 %v865
  %1192 = vmatpush.bf16.msra.mxu0 %v864
  %1193 = vmatpush.bf16.msra.mxu0 %v863
  %1194 = vmatpush.bf16.msra.mxu0 %v862
  %1195 = vmatpush.bf16.msra.mxu0 %v861
  %1196 = vmatpush.bf16.msra.mxu0 %v860
  %1197 = vmatpush.bf16.msra.mxu0 %v859
  %1198 = vmatpush.bf16.msra.mxu0 %v858
  %1199 = vmatmul.bf16.gmra.mxu0 %v439
  %v1200 = vpop.f32.mrf.mxu0
  %v1201 = vadd.f32 %v1152, %v1200
  %v1202 = vpop.f32.mrf.mxu0
  %v1203 = vadd.f32 %v1154, %v1202
  %1204 = vmatmul.bf16.gmra.mxu0 %v447
  %v1205 = vpop.f32.mrf.mxu0
  %v1206 = vadd.f32 %v1157, %v1205
  %v1207 = vpop.f32.mrf.mxu0
  %v1208 = vadd.f32 %v1159, %v1207
  %1209 = vmatmul.bf16.gmra.mxu0 %v455
  %v1210 = vpop.f32.mrf.mxu0
  %v1211 = vadd.f32 %v1162, %v1210
  %v1212 = vpop.f32.mrf.mxu0
  %v1213 = vadd.f32 %v1164, %v1212
  %1214 = vmatmul.bf16.gmra.mxu0 %v463
  %v1215 = vpop.f32.mrf.mxu0
  %v1216 = vadd.f32 %v1167, %v1215
  %v1217 = vpop.f32.mrf.mxu0
  %v1218 = vadd.f32 %v1169, %v1217
  %1219 = vmatmul.bf16.gmra.mxu0 %v471
  %v1220 = vpop.f32.mrf.mxu0
  %v1221 = vadd.f32 %v1172, %v1220
  %v1222 = vpop.f32.mrf.mxu0
  %v1223 = vadd.f32 %v1174, %v1222
  %1224 = vmatmul.bf16.gmra.mxu0 %v479
  %v1225 = vpop.f32.mrf.mxu0
  %v1226 = vadd.f32 %v1177, %v1225
  %v1227 = vpop.f32.mrf.mxu0
  %v1228 = vadd.f32 %v1179, %v1227
  %1229 = vmatmul.bf16.gmra.mxu0 %v487
  %v1230 = vpop.f32.mrf.mxu0
  %v1231 = vadd.f32 %v1182, %v1230
  %v1232 = vpop.f32.mrf.mxu0
  %v1233 = vadd.f32 %v1184, %v1232
  %1234 = vmatmul.bf16.gmra.mxu0 %v495
  %v1235 = vpop.f32.mrf.mxu0
  %v1236 = vadd.f32 %v1187, %v1235
  %v1237 = vpop.f32.mrf.mxu0
  %v1238 = vadd.f32 %v1189, %v1237
  %1239 = vdwg.mxu0
  %1240 = vmatpush.bf16.msra.mxu0 %v873
  %1241 = vmatpush.bf16.msra.mxu0 %v872
  %1242 = vmatpush.bf16.msra.mxu0 %v871
  %1243 = vmatpush.bf16.msra.mxu0 %v870
  %1244 = vmatpush.bf16.msra.mxu0 %v869
  %1245 = vmatpush.bf16.msra.mxu0 %v868
  %1246 = vmatpush.bf16.msra.mxu0 %v867
  %1247 = vmatpush.bf16.msra.mxu0 %v866
  %1248 = vmatmul.bf16.gmra.mxu0 %v440
  %v1249 = vpop.f32.mrf.mxu0
  %v1250 = vadd.f32 %v1201, %v1249
  %v1251 = vpop.f32.mrf.mxu0
  %v1252 = vadd.f32 %v1203, %v1251
  %1253 = vmatmul.bf16.gmra.mxu0 %v448
  %v1254 = vpop.f32.mrf.mxu0
  %v1255 = vadd.f32 %v1206, %v1254
  %v1256 = vpop.f32.mrf.mxu0
  %v1257 = vadd.f32 %v1208, %v1256
  %1258 = vmatmul.bf16.gmra.mxu0 %v456
  %v1259 = vpop.f32.mrf.mxu0
  %v1260 = vadd.f32 %v1211, %v1259
  %v1261 = vpop.f32.mrf.mxu0
  %v1262 = vadd.f32 %v1213, %v1261
  %1263 = vmatmul.bf16.gmra.mxu0 %v464
  %v1264 = vpop.f32.mrf.mxu0
  %v1265 = vadd.f32 %v1216, %v1264
  %v1266 = vpop.f32.mrf.mxu0
  %v1267 = vadd.f32 %v1218, %v1266
  %1268 = vmatmul.bf16.gmra.mxu0 %v472
  %v1269 = vpop.f32.mrf.mxu0
  %v1270 = vadd.f32 %v1221, %v1269
  %v1271 = vpop.f32.mrf.mxu0
  %v1272 = vadd.f32 %v1223, %v1271
  %1273 = vmatmul.bf16.gmra.mxu0 %v480
  %v1274 = vpop.f32.mrf.mxu0
  %v1275 = vadd.f32 %v1226, %v1274
  %v1276 = vpop.f32.mrf.mxu0
  %v1277 = vadd.f32 %v1228, %v1276
  %1278 = vmatmul.bf16.gmra.mxu0 %v488
  %v1279 = vpop.f32.mrf.mxu0
  %v1280 = vadd.f32 %v1231, %v1279
  %v1281 = vpop.f32.mrf.mxu0
  %v1282 = vadd.f32 %v1233, %v1281
  %1283 = vmatmul.bf16.gmra.mxu0 %v496
  %v1284 = vpop.f32.mrf.mxu0
  %v1285 = vadd.f32 %v1236, %v1284
  %v1286 = vpop.f32.mrf.mxu0
  %v1287 = vadd.f32 %v1238, %v1286
  %1288 = vdwg.mxu0
  %1289 = vmatpush.bf16.msra.mxu0 %v881
  %1290 = vmatpush.bf16.msra.mxu0 %v880
  %1291 = vmatpush.bf16.msra.mxu0 %v879
  %1292 = vmatpush.bf16.msra.mxu0 %v878
  %1293 = vmatpush.bf16.msra.mxu0 %v877
  %1294 = vmatpush.bf16.msra.mxu0 %v876
  %1295 = vmatpush.bf16.msra.mxu0 %v875
  %1296 = vmatpush.bf16.msra.mxu0 %v874
  %1297 = vmatmul.bf16.gmra.mxu0 %v441
  %v1298 = vpop.f32.mrf.mxu0
  %v1299 = vadd.f32 %v1250, %v1298
  %v1300 = vpop.f32.mrf.mxu0
  %v1301 = vadd.f32 %v1252, %v1300
  %1302 = vmatmul.bf16.gmra.mxu0 %v449
  %v1303 = vpop.f32.mrf.mxu0
  %v1304 = vadd.f32 %v1255, %v1303
  %v1305 = vpop.f32.mrf.mxu0
  %v1306 = vadd.f32 %v1257, %v1305
  %1307 = vmatmul.bf16.gmra.mxu0 %v457
  %v1308 = vpop.f32.mrf.mxu0
  %v1309 = vadd.f32 %v1260, %v1308
  %v1310 = vpop.f32.mrf.mxu0
  %v1311 = vadd.f32 %v1262, %v1310
  %1312 = vmatmul.bf16.gmra.mxu0 %v465
  %v1313 = vpop.f32.mrf.mxu0
  %v1314 = vadd.f32 %v1265, %v1313
  %v1315 = vpop.f32.mrf.mxu0
  %v1316 = vadd.f32 %v1267, %v1315
  %1317 = vmatmul.bf16.gmra.mxu0 %v473
  %v1318 = vpop.f32.mrf.mxu0
  %v1319 = vadd.f32 %v1270, %v1318
  %v1320 = vpop.f32.mrf.mxu0
  %v1321 = vadd.f32 %v1272, %v1320
  %1322 = vmatmul.bf16.gmra.mxu0 %v481
  %v1323 = vpop.f32.mrf.mxu0
  %v1324 = vadd.f32 %v1275, %v1323
  %v1325 = vpop.f32.mrf.mxu0
  %v1326 = vadd.f32 %v1277, %v1325
  %1327 = vmatmul.bf16.gmra.mxu0 %v489
  %v1328 = vpop.f32.mrf.mxu0
  %v1329 = vadd.f32 %v1280, %v1328
  %v1330 = vpop.f32.mrf.mxu0
  %v1331 = vadd.f32 %v1282, %v1330
  %1332 = vmatmul.bf16.gmra.mxu0 %v497
  %v1333 = vpop.f32.mrf.mxu0
  %v1334 = vadd.f32 %v1285, %v1333
  %v1335 = vpop.f32.mrf.mxu0
  %v1336 = vadd.f32 %v1287, %v1335
  %1337 = vdwg.mxu0
  %v1338 = vadd.f32 %v34, %v1299
  %v1339 = vadd.f32 %v35, %v1301
  %v1340 = vadd.f32 %v36, %v1304
  %v1341 = vadd.f32 %v37, %v1306
  %v1342 = vadd.f32 %v38, %v1309
  %v1343 = vadd.f32 %v39, %v1311
  %v1344 = vadd.f32 %v40, %v1314
  %v1345 = vadd.f32 %v41, %v1316
  %v1346 = vadd.f32 %v42, %v1319
  %v1347 = vadd.f32 %v43, %v1321
  %v1348 = vadd.f32 %v44, %v1324
  %v1349 = vadd.f32 %v45, %v1326
  %v1350 = vadd.f32 %v46, %v1329
  %v1351 = vadd.f32 %v47, %v1331
  %v1352 = vadd.f32 %v48, %v1334
  %v1353 = vadd.f32 %v49, %v1336
  %1354 = vst [vmem:[#allocation2] sm:$0xff] %v1338
  %1355 = vst [vmem:[#allocation2 + $0x8] sm:$0xff] %v1339
  %1356 = vst [vmem:[#allocation2 + $0x10] sm:$0xff] %v1340
  %1357 = vst [vmem:[#allocation2 + $0x18] sm:$0xff] %v1341
  %1358 = vst [vmem:[#allocation2 + $0x20] sm:$0xff] %v1342
  %1359 = vst [vmem:[#allocation2 + $0x28] sm:$0xff] %v1343
  %1360 = vst [vmem:[#allocation2 + $0x30] sm:$0xff] %v1344
  %1361 = vst [vmem:[#allocation2 + $0x38] sm:$0xff] %v1345
  %1362 = vst [vmem:[#allocation2 + $0x40] sm:$0xff] %v1346
  %1363 = vst [vmem:[#allocation2 + $0x48] sm:$0xff] %v1347
  %1364 = vst [vmem:[#allocation2 + $0x50] sm:$0xff] %v1348
  %1365 = vst [vmem:[#allocation2 + $0x58] sm:$0xff] %v1349
  %1366 = vst [vmem:[#allocation2 + $0x60] sm:$0xff] %v1350
  %1367 = vst [vmem:[#allocation2 + $0x68] sm:$0xff] %v1351
  %1368 = vst [vmem:[#allocation2 + $0x70] sm:$0xff] %v1352
  %1369 = vst [vmem:[#allocation2 + $0x78] sm:$0xff] %v1353
  // Predicated region
  $region14: #{discriminator_forward.7} parent=0 // pred_check
    %p1370 = pneg %p14
  $region15: #{discriminator_forward.7} parent=0 // pred_check_branch
    %1372 = sbr.rel (%p1370) target = $region17
  $region16: #{discriminator_forward.7} parent=0 // pred_region
    %v1373 = vld [vmem:[#allocation2] sm:$0xff]
    %v1374 = vld [vmem:[#allocation2 + $0x8] sm:$0xff]
    %v1375 = vld [vmem:[#allocation2 + $0x10] sm:$0xff]
    %v1376 = vld [vmem:[#allocation2 + $0x18] sm:$0xff]
    %v1377 = vld [vmem:[#allocation2 + $0x20] sm:$0xff]
    %v1378 = vld [vmem:[#allocation2 + $0x28] sm:$0xff]
    %v1379 = vld [vmem:[#allocation2 + $0x30] sm:$0xff]
    %v1380 = vld [vmem:[#allocation2 + $0x38] sm:$0xff]
    %v1381 = vld [vmem:[#allocation2 + $0x40] sm:$0xff]
    %v1382 = vld [vmem:[#allocation2 + $0x48] sm:$0xff]
    %v1383 = vld [vmem:[#allocation2 + $0x50] sm:$0xff]
    %v1384 = vld [vmem:[#allocation2 + $0x58] sm:$0xff]
    %v1385 = vld [vmem:[#allocation2 + $0x60] sm:$0xff]
    %v1386 = vld [vmem:[#allocation2 + $0x68] sm:$0xff]
    %v1387 = vld [vmem:[#allocation2 + $0x70] sm:$0xff]
    %v1388 = vld [vmem:[#allocation2 + $0x78] sm:$0xff]
    %v1389 = vpack.c.bf16 %v1373, %v1373
    %v1390 = vpack.c.bf16 %v1374, %v1374
    %v1391 = vpack.c.bf16 %v1375, %v1375
    %v1392 = vpack.c.bf16 %v1376, %v1376
    %v1393 = vpack.c.bf16 %v1377, %v1377
    %v1394 = vpack.c.bf16 %v1378, %v1378
    %v1395 = vpack.c.bf16 %v1379, %v1379
    %v1396 = vpack.c.bf16 %v1380, %v1380
    %v1397 = vpack.c.bf16 %v1381, %v1381
    %v1398 = vpack.c.bf16 %v1382, %v1382
    %v1399 = vpack.c.bf16 %v1383, %v1383
    %v1400 = vpack.c.bf16 %v1384, %v1384
    %v1401 = vpack.c.bf16 %v1385, %v1385
    %v1402 = vpack.c.bf16 %v1386, %v1386
    %v1403 = vpack.c.bf16 %v1387, %v1387
    %v1404 = vpack.c.bf16 %v1388, %v1388
    %1405 = vst [vmem:[%s2] sm:$0xf] %v1389
    %1406 = vst [vmem:[%s2 + $0x4] sm:$0xf] %v1390
    %1407 = vst [vmem:[%s2 + $0x8] sm:$0xf] %v1391
    %1408 = vst [vmem:[%s2 + $0xc] sm:$0xf] %v1392
    %1409 = vst [vmem:[%s2 + $0x10] sm:$0xf] %v1393
    %1410 = vst [vmem:[%s2 + $0x14] sm:$0xf] %v1394
    %1411 = vst [vmem:[%s2 + $0x18] sm:$0xf] %v1395
    %1412 = vst [vmem:[%s2 + $0x1c] sm:$0xf] %v1396
    %1413 = vst [vmem:[%s2 + $0x20] sm:$0xf] %v1397
    %1414 = vst [vmem:[%s2 + $0x24] sm:$0xf] %v1398
    %1415 = vst [vmem:[%s2 + $0x28] sm:$0xf] %v1399
    %1416 = vst [vmem:[%s2 + $0x2c] sm:$0xf] %v1400
    %1417 = vst [vmem:[%s2 + $0x30] sm:$0xf] %v1401
    %1418 = vst [vmem:[%s2 + $0x34] sm:$0xf] %v1402
    %1419 = vst [vmem:[%s2 + $0x38] sm:$0xf] %v1403
    %1420 = vst [vmem:[%s2 + $0x3c] sm:$0xf] %v1404
    %v1421 = vadd.f32 %v1373, %v1374
    %v1422 = vadd.f32 %v1421, %v1375
    %v1423 = vadd.f32 %v1422, %v1376
    %v1424 = vadd.f32 %v1423, %v1377
    %v1425 = vadd.f32 %v1424, %v1378
    %v1426 = vadd.f32 %v1425, %v1379
    %v1427 = vadd.f32 %v1426, %v1380
    %v1428 = vadd.f32 %v1427, %v1381
    %v1429 = vadd.f32 %v1428, %v1382
    %v1430 = vadd.f32 %v1429, %v1383
    %v1431 = vadd.f32 %v1430, %v1384
    %v1432 = vadd.f32 %v1431, %v1385
    %v1433 = vadd.f32 %v1432, %v1386
    %v1434 = vadd.f32 %v1433, %v1387
    %v1435 = vadd.f32 %v1434, %v1388
    %v1436 = vrot.slane %v1435, 4
    %v1437 = vadd.f32 %v1435, %v1436
    %v1438 = vrot.slane %v1437, 2
    %v1439 = vadd.f32 %v1437, %v1438
    %v1440 = vrot.slane %v1439, 1
    %v1441 = vadd.f32 %v1439, %v1440
    %v1442 = vmul.f32 %v1373, %v1373
    %v1443 = vmul.f32 %v1374, %v1374
    %v1444 = vmul.f32 %v1375, %v1375
    %v1445 = vmul.f32 %v1376, %v1376
    %v1446 = vmul.f32 %v1377, %v1377
    %v1447 = vmul.f32 %v1378, %v1378
    %v1448 = vmul.f32 %v1379, %v1379
    %v1449 = vmul.f32 %v1380, %v1380
    %v1450 = vmul.f32 %v1381, %v1381
    %v1451 = vmul.f32 %v1382, %v1382
    %v1452 = vmul.f32 %v1383, %v1383
    %v1453 = vmul.f32 %v1384, %v1384
    %v1454 = vmul.f32 %v1385, %v1385
    %v1455 = vmul.f32 %v1386, %v1386
    %v1456 = vmul.f32 %v1387, %v1387
    %v1457 = vmul.f32 %v1388, %v1388
    %v1458 = vadd.f32 %v1442, %v1443
    %v1459 = vadd.f32 %v1458, %v1444
    %v1460 = vadd.f32 %v1459, %v1445
    %v1461 = vadd.f32 %v1460, %v1446
    %v1462 = vadd.f32 %v1461, %v1447
    %v1463 = vadd.f32 %v1462, %v1448
    %v1464 = vadd.f32 %v1463, %v1449
    %v1465 = vadd.f32 %v1464, %v1450
    %v1466 = vadd.f32 %v1465, %v1451
    %v1467 = vadd.f32 %v1466, %v1452
    %v1468 = vadd.f32 %v1467, %v1453
    %v1469 = vadd.f32 %v1468, %v1454
    %v1470 = vadd.f32 %v1469, %v1455
    %v1471 = vadd.f32 %v1470, %v1456
    %v1472 = vadd.f32 %v1471, %v1457
    %v1473 = vrot.slane %v1472, 4
    %v1474 = vadd.f32 %v1472, %v1473
    %v1475 = vrot.slane %v1474, 2
    %v1476 = vadd.f32 %v1474, %v1475
    %v1477 = vrot.slane %v1476, 1
    %v1478 = vadd.f32 %v1476, %v1477
    %v1479 = vlaneseq
    %v1480 = vshrl.u32 %v1479, 7
    %vm1481 = vcmp.eq.s32.totalorder %v1480, 0
    %v1482 = vsel %vm1481, %v1441, 0.0
    %1483 = vst [vmem:[%s3] sm:$0xff] %v1482
    %v1484 = vsel %vm1481, %v1478, 0.0
    %1485 = vst [vmem:[%s4] sm:$0xff] %v1484
  $region17: #{discriminator_forward.7} parent=0 // pred_fallthru
    _
  // Predicated region
  $region18: #{discriminator_forward.7} parent=0 // pred_check
    _
  $region19: #{discriminator_forward.7} parent=0 // pred_check_branch
    %1487 = sbr.rel (0) target = $region21
  $region20: #{discriminator_forward.7} parent=0 // pred_region
    _
  $region21: #{discriminator_forward.7} parent=0 // pred_fallthru
    _
  // Predicated region
  $region22: #{discriminator_forward.7} parent=0 // pred_check
    _
  $region23: #{discriminator_forward.7} parent=0 // pred_check_branch
    %1489 = sbr.rel (0) target = $region25
  $region24: #{discriminator_forward.7} parent=0 // pred_region
    _
  $region25: #{discriminator_forward.7} parent=0 // pred_fallthru
    _
  // Predicated region
  $region26: #{discriminator_forward.7} parent=0 // pred_check
    _
  $region27: #{discriminator_forward.7} parent=0 // pred_check_branch
    %1491 = sbr.rel (0) target = $region29
  $region28: #{discriminator_forward.7} parent=0 // pred_region
    _
  $region29: #{discriminator_forward.7} parent=0 // pred_fallthru
    _
  // Predicated region
  $region30: #{discriminator_forward.7} parent=0 // pred_check
    _
  $region31: #{discriminator_forward.7} parent=0 // pred_check_branch
    %1493 = sbr.rel (0) target = $region33
  $region32: #{discriminator_forward.7} parent=0 // pred_region
    _
  $region33: #{discriminator_forward.7} parent=0 // pred_fallthru
    _
  // Predicated region
  $region34: #{discriminator_forward.7} parent=0 // pred_check
    _
  $region35: #{discriminator_forward.7} parent=0 // pred_check_branch
    %1495 = sbr.rel (0) target = $region37
  $region36: #{discriminator_forward.7} parent=0 // pred_region
    _
  $region37: #{discriminator_forward.7} parent=0 // pred_fallthru
    _
  // Predicated region
  $region38: #{discriminator_forward.7} parent=0 // pred_check
    _
  $region39: #{discriminator_forward.7} parent=0 // pred_check_branch
    %1497 = sbr.rel (0) target = $region41
  $region40: #{discriminator_forward.7} parent=0 // pred_region
    _
  $region41: #{discriminator_forward.7} parent=0 // pred_fallthru
    _

// kernel: discriminator_forward.9
$region0: #{discriminator_forward.9}
  #allocation0 [shape = 'u32[]', space=smem, size = 0x4, offset = 0x4, fixed_abs, tag = 'smem constant byte address 0x4 - core index']
  #allocation1 [shape = 'u32[72,128]{1,0:T(1,128)}', space=vmem, size = 0x9000, scoped, tag = 'internal scratch']
  #allocation2 [shape = 'f32[32,256]{1,0:T(8,128)}', space=vmem, size = 0x8000, scoped, tag = 'scratch operand']
  %s0 = inlined_call_operand.vmem [shape: bf16[32,2048], index: 0, kind: input, shape index: {}]
  %s1 = inlined_call_operand.vmem [shape: bf16[2048,256], index: 1, kind: input, shape index: {}]
  %s2 = inlined_call_operand.vmem [shape: bf16[32,256], index: 2, kind: output, shape index: {0}]
  %s3 = inlined_call_operand.vmem [shape: f32[8,256], index: 3, kind: output, shape index: {1}]
  %s4 = inlined_call_operand.vmem [shape: f32[8,256], index: 4, kind: output, shape index: {2}]
  %5 = xla_tuple %s2, %s3, %s4
  %s6 = sld [smem:[#allocation0]]
  $region42: #{discriminator_forward.9} parent=0
    _
  %s8 = ssub.s32 1, %s6
  %s9 = scalar_select 0, %s8, %s6
  // Predicated region
  $region2: #{discriminator_forward.9} parent=0 // pred_check
    _
  $region3: #{discriminator_forward.9} parent=0 // pred_check_branch
    %11 = sbr.rel (0) target = $region5
  $region4: #{discriminator_forward.9} parent=0 // pred_region
    _
  $region5: #{discriminator_forward.9} parent=0 // pred_fallthru
    _
  // Predicated region
  $region6: #{discriminator_forward.9} parent=0 // pred_check
    _
  $region7: #{discriminator_forward.9} parent=0 // pred_check_branch
    %13 = sbr.rel (0) target = $region9
  $region8: #{discriminator_forward.9} parent=0 // pred_region
    _
  $region9: #{discriminator_forward.9} parent=0 // pred_fallthru
    _
  %p14 = scmp.eq.s32.totalorder 0, 0
  // Predicated region
  $region10: #{discriminator_forward.9} parent=0 // pred_check
    %p15 = pneg %p14
  $region11: #{discriminator_forward.9} parent=0 // pred_check_branch
    %17 = sbr.rel (%p15) target = $region13
  $region12: #{discriminator_forward.9} parent=0 // pred_region
    %18 = vst [vmem:[#allocation2] sm:$0xff] 0.0
    %19 = vst [vmem:[#allocation2 + $0x8] sm:$0xff] 0.0
    %20 = vst [vmem:[#allocation2 + $0x10] sm:$0xff] 0.0
    %21 = vst [vmem:[#allocation2 + $0x18] sm:$0xff] 0.0
    %22 = vst [vmem:[#allocation2 + $0x20] sm:$0xff] 0.0
    %23 = vst [vmem:[#allocation2 + $0x28] sm:$0xff] 0.0
    %24 = vst [vmem:[#allocation2 + $0x30] sm:$0xff] 0.0
    %25 = vst [vmem:[#allocation2 + $0x38] sm:$0xff] 0.0
  $region13: #{discriminator_forward.9} parent=0 // pred_fallthru
    _
  %v26 = vld [vmem:[#allocation2] sm:$0xff]
  %v27 = vld [vmem:[#allocation2 + $0x8] sm:$0xff]
  %v28 = vld [vmem:[#allocation2 + $0x10] sm:$0xff]
  %v29 = vld [vmem:[#allocation2 + $0x18] sm:$0xff]
  %v30 = vld [vmem:[#allocation2 + $0x20] sm:$0xff]
  %v31 = vld [vmem:[#allocation2 + $0x28] sm:$0xff]
  %v32 = vld [vmem:[#allocation2 + $0x30] sm:$0xff]
  %v33 = vld [vmem:[#allocation2 + $0x38] sm:$0xff]
  %v34 = vld [vmem:[%s0] sm:$0xff]
  %v35 = vld [vmem:[%s0 + $0x8] sm:$0xff]
  %v36 = vld [vmem:[%s0 + $0x10] sm:$0xff]
  %v37 = vld [vmem:[%s0 + $0x18] sm:$0xff]
  %v38 = vld [vmem:[%s0 + $0x20] sm:$0xff]
  %v39 = vld [vmem:[%s0 + $0x28] sm:$0xff]
  %v40 = vld [vmem:[%s0 + $0x30] sm:$0xff]
  %v41 = vld [vmem:[%s0 + $0x38] sm:$0xff]
  %v42 = vld [vmem:[%s0 + $0x40] sm:$0xff]
  %v43 = vld [vmem:[%s0 + $0x48] sm:$0xff]
  %v44 = vld [vmem:[%s0 + $0x50] sm:$0xff]
  %v45 = vld [vmem:[%s0 + $0x58] sm:$0xff]
  %v46 = vld [vmem:[%s0 + $0x60] sm:$0xff]
  %v47 = vld [vmem:[%s0 + $0x68] sm:$0xff]
  %v48 = vld [vmem:[%s0 + $0x70] sm:$0xff]
  %v49 = vld [vmem:[%s0 + $0x78] sm:$0xff]
  %v50 = vld [vmem:[%s0 + $0x80] sm:$0xff]
  %v51 = vld [vmem:[%s0 + $0x88] sm:$0xff]
  %v52 = vld [vmem:[%s0 + $0x90] sm:$0xff]
  %v53 = vld [vmem:[%s0 + $0x98] sm:$0xff]
  %v54 = vld [vmem:[%s0 + $0xa0] sm:$0xff]
  %v55 = vld [vmem:[%s0 + $0xa8] sm:$0xff]
  %v56 = vld [vmem:[%s0 + $0xb0] sm:$0xff]
  %v57 = vld [vmem:[%s0 + $0xb8] sm:$0xff]
  %v58 = vld [vmem:[%s0 + $0xc0] sm:$0xff]
  %v59 = vld [vmem:[%s0 + $0xc8] sm:$0xff]
  %v60 = vld [vmem:[%s0 + $0xd0] sm:$0xff]
  %v61 = vld [vmem:[%s0 + $0xd8] sm:$0xff]
  %v62 = vld [vmem:[%s0 + $0xe0] sm:$0xff]
  %v63 = vld [vmem:[%s0 + $0xe8] sm:$0xff]
  %v64 = vld [vmem:[%s0 + $0xf0] sm:$0xff]
  %v65 = vld [vmem:[%s0 + $0xf8] sm:$0xff]
  %v66 = vld [vmem:[%s1] sm:$0xff]
  %v67 = vld [vmem:[%s1 + $0x8] sm:$0xff]
  %v68 = vld [vmem:[%s1 + $0x10] sm:$0xff]
  %v69 = vld [vmem:[%s1 + $0x18] sm:$0xff]
  %v70 = vld [vmem:[%s1 + $0x20] sm:$0xff]
  %v71 = vld [vmem:[%s1 + $0x28] sm:$0xff]
  %v72 = vld [vmem:[%s1 + $0x30] sm:$0xff]
  %v73 = vld [vmem:[%s1 + $0x38] sm:$0xff]
  %v74 = vld [vmem:[%s1 + $0x40] sm:$0xff]
  %v75 = vld [vmem:[%s1 + $0x48] sm:$0xff]
  %v76 = vld [vmem:[%s1 + $0x50] sm:$0xff]
  %v77 = vld [vmem:[%s1 + $0x58] sm:$0xff]
  %v78 = vld [vmem:[%s1 + $0x60] sm:$0xff]
  %v79 = vld [vmem:[%s1 + $0x68] sm:$0xff]
  %v80 = vld [vmem:[%s1 + $0x70] sm:$0xff]
  %v81 = vld [vmem:[%s1 + $0x78] sm:$0xff]
  %v82 = vld [vmem:[%s1 + $0x80] sm:$0xff]
  %v83 = vld [vmem:[%s1 + $0x88] sm:$0xff]
  %v84 = vld [vmem:[%s1 + $0x90] sm:$0xff]
  %v85 = vld [vmem:[%s1 + $0x98] sm:$0xff]
  %v86 = vld [vmem:[%s1 + $0xa0] sm:$0xff]
  %v87 = vld [vmem:[%s1 + $0xa8] sm:$0xff]
  %v88 = vld [vmem:[%s1 + $0xb0] sm:$0xff]
  %v89 = vld [vmem:[%s1 + $0xb8] sm:$0xff]
  %v90 = vld [vmem:[%s1 + $0xc0] sm:$0xff]
  %v91 = vld [vmem:[%s1 + $0xc8] sm:$0xff]
  %v92 = vld [vmem:[%s1 + $0xd0] sm:$0xff]
  %v93 = vld [vmem:[%s1 + $0xd8] sm:$0xff]
  %v94 = vld [vmem:[%s1 + $0xe0] sm:$0xff]
  %v95 = vld [vmem:[%s1 + $0xe8] sm:$0xff]
  %v96 = vld [vmem:[%s1 + $0xf0] sm:$0xff]
  %v97 = vld [vmem:[%s1 + $0xf8] sm:$0xff]
  %v98 = vld [vmem:[%s1 + $0x100] sm:$0xff]
  %v99 = vld [vmem:[%s1 + $0x108] sm:$0xff]
  %v100 = vld [vmem:[%s1 + $0x110] sm:$0xff]
  %v101 = vld [vmem:[%s1 + $0x118] sm:$0xff]
  %v102 = vld [vmem:[%s1 + $0x120] sm:$0xff]
  %v103 = vld [vmem:[%s1 + $0x128] sm:$0xff]
  %v104 = vld [vmem:[%s1 + $0x130] sm:$0xff]
  %v105 = vld [vmem:[%s1 + $0x138] sm:$0xff]
  %v106 = vld [vmem:[%s1 + $0x140] sm:$0xff]
  %v107 = vld [vmem:[%s1 + $0x148] sm:$0xff]
  %v108 = vld [vmem:[%s1 + $0x150] sm:$0xff]
  %v109 = vld [vmem:[%s1 + $0x158] sm:$0xff]
  %v110 = vld [vmem:[%s1 + $0x160] sm:$0xff]
  %v111 = vld [vmem:[%s1 + $0x168] sm:$0xff]
  %v112 = vld [vmem:[%s1 + $0x170] sm:$0xff]
  %v113 = vld [vmem:[%s1 + $0x178] sm:$0xff]
  %v114 = vld [vmem:[%s1 + $0x180] sm:$0xff]
  %v115 = vld [vmem:[%s1 + $0x188] sm:$0xff]
  %v116 = vld [vmem:[%s1 + $0x190] sm:$0xff]
  %v117 = vld [vmem:[%s1 + $0x198] sm:$0xff]
  %v118 = vld [vmem:[%s1 + $0x1a0] sm:$0xff]
  %v119 = vld [vmem:[%s1 + $0x1a8] sm:$0xff]
  %v120 = vld [vmem:[%s1 + $0x1b0] sm:$0xff]
  %v121 = vld [vmem:[%s1 + $0x1b8] sm:$0xff]
  %v122 = vld [vmem:[%s1 + $0x1c0] sm:$0xff]
  %v123 = vld [vmem:[%s1 + $0x1c8] sm:$0xff]
  %v124 = vld [vmem:[%s1 + $0x1d0] sm:$0xff]
  %v125 = vld [vmem:[%s1 + $0x1d8] sm:$0xff]
  %v126 = vld [vmem:[%s1 + $0x1e0] sm:$0xff]
  %v127 = vld [vmem:[%s1 + $0x1e8] sm:$0xff]
  %v128 = vld [vmem:[%s1 + $0x1f0] sm:$0xff]
  %v129 = vld [vmem:[%s1 + $0x1f8] sm:$0xff]
  %v130 = vld [vmem:[%s1 + $0x200] sm:$0xff]
  %v131 = vld [vmem:[%s1 + $0x208] sm:$0xff]
  %v132 = vld [vmem:[%s1 + $0x210] sm:$0xff]
  %v133 = vld [vmem:[%s1 + $0x218] sm:$0xff]
  %v134 = vld [vmem:[%s1 + $0x220] sm:$0xff]
  %v135 = vld [vmem:[%s1 + $0x228] sm:$0xff]
  %v136 = vld [vmem:[%s1 + $0x230] sm:$0xff]
  %v137 = vld [vmem:[%s1 + $0x238] sm:$0xff]
  %v138 = vld [vmem:[%s1 + $0x240] sm:$0xff]
  %v139 = vld [vmem:[%s1 + $0x248] sm:$0xff]
  %v140 = vld [vmem:[%s1 + $0x250] sm:$0xff]
  %v141 = vld [vmem:[%s1 + $0x258] sm:$0xff]
  %v142 = vld [vmem:[%s1 + $0x260] sm:$0xff]
  %v143 = vld [vmem:[%s1 + $0x268] sm:$0xff]
  %v144 = vld [vmem:[%s1 + $0x270] sm:$0xff]
  %v145 = vld [vmem:[%s1 + $0x278] sm:$0xff]
  %v146 = vld [vmem:[%s1 + $0x280] sm:$0xff]
  %v147 = vld [vmem:[%s1 + $0x288] sm:$0xff]
  %v148 = vld [vmem:[%s1 + $0x290] sm:$0xff]
  %v149 = vld [vmem:[%s1 + $0x298] sm:$0xff]
  %v150 = vld [vmem:[%s1 + $0x2a0] sm:$0xff]
  %v151 = vld [vmem:[%s1 + $0x2a8] sm:$0xff]
  %v152 = vld [vmem:[%s1 + $0x2b0] sm:$0xff]
  %v153 = vld [vmem:[%s1 + $0x2b8] sm:$0xff]
  %v154 = vld [vmem:[%s1 + $0x2c0] sm:$0xff]
  %v155 = vld [vmem:[%s1 + $0x2c8] sm:$0xff]
  %v156 = vld [vmem:[%s1 + $0x2d0] sm:$0xff]
  %v157 = vld [vmem:[%s1 + $0x2d8] sm:$0xff]
  %v158 = vld [vmem:[%s1 + $0x2e0] sm:$0xff]
  %v159 = vld [vmem:[%s1 + $0x2e8] sm:$0xff]
  %v160 = vld [vmem:[%s1 + $0x2f0] sm:$0xff]
  %v161 = vld [vmem:[%s1 + $0x2f8] sm:$0xff]
  %v162 = vld [vmem:[%s1 + $0x300] sm:$0xff]
  %v163 = vld [vmem:[%s1 + $0x308] sm:$0xff]
  %v164 = vld [vmem:[%s1 + $0x310] sm:$0xff]
  %v165 = vld [vmem:[%s1 + $0x318] sm:$0xff]
  %v166 = vld [vmem:[%s1 + $0x320] sm:$0xff]
  %v167 = vld [vmem:[%s1 + $0x328] sm:$0xff]
  %v168 = vld [vmem:[%s1 + $0x330] sm:$0xff]
  %v169 = vld [vmem:[%s1 + $0x338] sm:$0xff]
  %v170 = vld [vmem:[%s1 + $0x340] sm:$0xff]
  %v171 = vld [vmem:[%s1 + $0x348] sm:$0xff]
  %v172 = vld [vmem:[%s1 + $0x350] sm:$0xff]
  %v173 = vld [vmem:[%s1 + $0x358] sm:$0xff]
  %v174 = vld [vmem:[%s1 + $0x360] sm:$0xff]
  %v175 = vld [vmem:[%s1 + $0x368] sm:$0xff]
  %v176 = vld [vmem:[%s1 + $0x370] sm:$0xff]
  %v177 = vld [vmem:[%s1 + $0x378] sm:$0xff]
  %v178 = vld [vmem:[%s1 + $0x380] sm:$0xff]
  %v179 = vld [vmem:[%s1 + $0x388] sm:$0xff]
  %v180 = vld [vmem:[%s1 + $0x390] sm:$0xff]
  %v181 = vld [vmem:[%s1 + $0x398] sm:$0xff]
  %v182 = vld [vmem:[%s1 + $0x3a0] sm:$0xff]
  %v183 = vld [vmem:[%s1 + $0x3a8] sm:$0xff]
  %v184 = vld [vmem:[%s1 + $0x3b0] sm:$0xff]
  %v185 = vld [vmem:[%s1 + $0x3b8] sm:$0xff]
  %v186 = vld [vmem:[%s1 + $0x3c0] sm:$0xff]
  %v187 = vld [vmem:[%s1 + $0x3c8] sm:$0xff]
  %v188 = vld [vmem:[%s1 + $0x3d0] sm:$0xff]
  %v189 = vld [vmem:[%s1 + $0x3d8] sm:$0xff]
  %v190 = vld [vmem:[%s1 + $0x3e0] sm:$0xff]
  %v191 = vld [vmem:[%s1 + $0x3e8] sm:$0xff]
  %v192 = vld [vmem:[%s1 + $0x3f0] sm:$0xff]
  %v193 = vld [vmem:[%s1 + $0x3f8] sm:$0xff]
  %v194 = vld [vmem:[%s1 + $0x400] sm:$0xff]
  %v195 = vld [vmem:[%s1 + $0x408] sm:$0xff]
  %v196 = vld [vmem:[%s1 + $0x410] sm:$0xff]
  %v197 = vld [vmem:[%s1 + $0x418] sm:$0xff]
  %v198 = vld [vmem:[%s1 + $0x420] sm:$0xff]
  %v199 = vld [vmem:[%s1 + $0x428] sm:$0xff]
  %v200 = vld [vmem:[%s1 + $0x430] sm:$0xff]
  %v201 = vld [vmem:[%s1 + $0x438] sm:$0xff]
  %v202 = vld [vmem:[%s1 + $0x440] sm:$0xff]
  %v203 = vld [vmem:[%s1 + $0x448] sm:$0xff]
  %v204 = vld [vmem:[%s1 + $0x450] sm:$0xff]
  %v205 = vld [vmem:[%s1 + $0x458] sm:$0xff]
  %v206 = vld [vmem:[%s1 + $0x460] sm:$0xff]
  %v207 = vld [vmem:[%s1 + $0x468] sm:$0xff]
  %v208 = vld [vmem:[%s1 + $0x470] sm:$0xff]
  %v209 = vld [vmem:[%s1 + $0x478] sm:$0xff]
  %v210 = vld [vmem:[%s1 + $0x480] sm:$0xff]
  %v211 = vld [vmem:[%s1 + $0x488] sm:$0xff]
  %v212 = vld [vmem:[%s1 + $0x490] sm:$0xff]
  %v213 = vld [vmem:[%s1 + $0x498] sm:$0xff]
  %v214 = vld [vmem:[%s1 + $0x4a0] sm:$0xff]
  %v215 = vld [vmem:[%s1 + $0x4a8] sm:$0xff]
  %v216 = vld [vmem:[%s1 + $0x4b0] sm:$0xff]
  %v217 = vld [vmem:[%s1 + $0x4b8] sm:$0xff]
  %v218 = vld [vmem:[%s1 + $0x4c0] sm:$0xff]
  %v219 = vld [vmem:[%s1 + $0x4c8] sm:$0xff]
  %v220 = vld [vmem:[%s1 + $0x4d0] sm:$0xff]
  %v221 = vld [vmem:[%s1 + $0x4d8] sm:$0xff]
  %v222 = vld [vmem:[%s1 + $0x4e0] sm:$0xff]
  %v223 = vld [vmem:[%s1 + $0x4e8] sm:$0xff]
  %v224 = vld [vmem:[%s1 + $0x4f0] sm:$0xff]
  %v225 = vld [vmem:[%s1 + $0x4f8] sm:$0xff]
  %v226 = vld [vmem:[%s1 + $0x500] sm:$0xff]
  %v227 = vld [vmem:[%s1 + $0x508] sm:$0xff]
  %v228 = vld [vmem:[%s1 + $0x510] sm:$0xff]
  %v229 = vld [vmem:[%s1 + $0x518] sm:$0xff]
  %v230 = vld [vmem:[%s1 + $0x520] sm:$0xff]
  %v231 = vld [vmem:[%s1 + $0x528] sm:$0xff]
  %v232 = vld [vmem:[%s1 + $0x530] sm:$0xff]
  %v233 = vld [vmem:[%s1 + $0x538] sm:$0xff]
  %v234 = vld [vmem:[%s1 + $0x540] sm:$0xff]
  %v235 = vld [vmem:[%s1 + $0x548] sm:$0xff]
  %v236 = vld [vmem:[%s1 + $0x550] sm:$0xff]
  %v237 = vld [vmem:[%s1 + $0x558] sm:$0xff]
  %v238 = vld [vmem:[%s1 + $0x560] sm:$0xff]
  %v239 = vld [vmem:[%s1 + $0x568] sm:$0xff]
  %v240 = vld [vmem:[%s1 + $0x570] sm:$0xff]
  %v241 = vld [vmem:[%s1 + $0x578] sm:$0xff]
  %v242 = vld [vmem:[%s1 + $0x580] sm:$0xff]
  %v243 = vld [vmem:[%s1 + $0x588] sm:$0xff]
  %v244 = vld [vmem:[%s1 + $0x590] sm:$0xff]
  %v245 = vld [vmem:[%s1 + $0x598] sm:$0xff]
  %v246 = vld [vmem:[%s1 + $0x5a0] sm:$0xff]
  %v247 = vld [vmem:[%s1 + $0x5a8] sm:$0xff]
  %v248 = vld [vmem:[%s1 + $0x5b0] sm:$0xff]
  %v249 = vld [vmem:[%s1 + $0x5b8] sm:$0xff]
  %v250 = vld [vmem:[%s1 + $0x5c0] sm:$0xff]
  %v251 = vld [vmem:[%s1 + $0x5c8] sm:$0xff]
  %v252 = vld [vmem:[%s1 + $0x5d0] sm:$0xff]
  %v253 = vld [vmem:[%s1 + $0x5d8] sm:$0xff]
  %v254 = vld [vmem:[%s1 + $0x5e0] sm:$0xff]
  %v255 = vld [vmem:[%s1 + $0x5e8] sm:$0xff]
  %v256 = vld [vmem:[%s1 + $0x5f0] sm:$0xff]
  %v257 = vld [vmem:[%s1 + $0x5f8] sm:$0xff]
  %v258 = vld [vmem:[%s1 + $0x600] sm:$0xff]
  %v259 = vld [vmem:[%s1 + $0x608] sm:$0xff]
  %v260 = vld [vmem:[%s1 + $0x610] sm:$0xff]
  %v261 = vld [vmem:[%s1 + $0x618] sm:$0xff]
  %v262 = vld [vmem:[%s1 + $0x620] sm:$0xff]
  %v263 = vld [vmem:[%s1 + $0x628] sm:$0xff]
  %v264 = vld [vmem:[%s1 + $0x630] sm:$0xff]
  %v265 = vld [vmem:[%s1 + $0x638] sm:$0xff]
  %v266 = vld [vmem:[%s1 + $0x640] sm:$0xff]
  %v267 = vld [vmem:[%s1 + $0x648] sm:$0xff]
  %v268 = vld [vmem:[%s1 + $0x650] sm:$0xff]
  %v269 = vld [vmem:[%s1 + $0x658] sm:$0xff]
  %v270 = vld [vmem:[%s1 + $0x660] sm:$0xff]
  %v271 = vld [vmem:[%s1 + $0x668] sm:$0xff]
  %v272 = vld [vmem:[%s1 + $0x670] sm:$0xff]
  %v273 = vld [vmem:[%s1 + $0x678] sm:$0xff]
  %v274 = vld [vmem:[%s1 + $0x680] sm:$0xff]
  %v275 = vld [vmem:[%s1 + $0x688] sm:$0xff]
  %v276 = vld [vmem:[%s1 + $0x690] sm:$0xff]
  %v277 = vld [vmem:[%s1 + $0x698] sm:$0xff]
  %v278 = vld [vmem:[%s1 + $0x6a0] sm:$0xff]
  %v279 = vld [vmem:[%s1 + $0x6a8] sm:$0xff]
  %v280 = vld [vmem:[%s1 + $0x6b0] sm:$0xff]
  %v281 = vld [vmem:[%s1 + $0x6b8] sm:$0xff]
  %v282 = vld [vmem:[%s1 + $0x6c0] sm:$0xff]
  %v283 = vld [vmem:[%s1 + $0x6c8] sm:$0xff]
  %v284 = vld [vmem:[%s1 + $0x6d0] sm:$0xff]
  %v285 = vld [vmem:[%s1 + $0x6d8] sm:$0xff]
  %v286 = vld [vmem:[%s1 + $0x6e0] sm:$0xff]
  %v287 = vld [vmem:[%s1 + $0x6e8] sm:$0xff]
  %v288 = vld [vmem:[%s1 + $0x6f0] sm:$0xff]
  %v289 = vld [vmem:[%s1 + $0x6f8] sm:$0xff]
  %v290 = vld [vmem:[%s1 + $0x700] sm:$0xff]
  %v291 = vld [vmem:[%s1 + $0x708] sm:$0xff]
  %v292 = vld [vmem:[%s1 + $0x710] sm:$0xff]
  %v293 = vld [vmem:[%s1 + $0x718] sm:$0xff]
  %v294 = vld [vmem:[%s1 + $0x720] sm:$0xff]
  %v295 = vld [vmem:[%s1 + $0x728] sm:$0xff]
  %v296 = vld [vmem:[%s1 + $0x730] sm:$0xff]
  %v297 = vld [vmem:[%s1 + $0x738] sm:$0xff]
  %v298 = vld [vmem:[%s1 + $0x740] sm:$0xff]
  %v299 = vld [vmem:[%s1 + $0x748] sm:$0xff]
  %v300 = vld [vmem:[%s1 + $0x750] sm:$0xff]
  %v301 = vld [vmem:[%s1 + $0x758] sm:$0xff]
  %v302 = vld [vmem:[%s1 + $0x760] sm:$0xff]
  %v303 = vld [vmem:[%s1 + $0x768] sm:$0xff]
  %v304 = vld [vmem:[%s1 + $0x770] sm:$0xff]
  %v305 = vld [vmem:[%s1 + $0x778] sm:$0xff]
  %v306 = vld [vmem:[%s1 + $0x780] sm:$0xff]
  %v307 = vld [vmem:[%s1 + $0x788] sm:$0xff]
  %v308 = vld [vmem:[%s1 + $0x790] sm:$0xff]
  %v309 = vld [vmem:[%s1 + $0x798] sm:$0xff]
  %v310 = vld [vmem:[%s1 + $0x7a0] sm:$0xff]
  %v311 = vld [vmem:[%s1 + $0x7a8] sm:$0xff]
  %v312 = vld [vmem:[%s1 + $0x7b0] sm:$0xff]
  %v313 = vld [vmem:[%s1 + $0x7b8] sm:$0xff]
  %v314 = vld [vmem:[%s1 + $0x7c0] sm:$0xff]
  %v315 = vld [vmem:[%s1 + $0x7c8] sm:$0xff]
  %v316 = vld [vmem:[%s1 + $0x7d0] sm:$0xff]
  %v317 = vld [vmem:[%s1 + $0x7d8] sm:$0xff]
  %v318 = vld [vmem:[%s1 + $0x7e0] sm:$0xff]
  %v319 = vld [vmem:[%s1 + $0x7e8] sm:$0xff]
  %v320 = vld [vmem:[%s1 + $0x7f0] sm:$0xff]
  %v321 = vld [vmem:[%s1 + $0x7f8] sm:$0xff]
  %v354 = vunpack.c.l.b16 %v34
  %v355 = vunpack.c.h.b16 %v34
  %v356 = vunpack.c.l.b16 %v35
  %v357 = vunpack.c.h.b16 %v35
  %v358 = vunpack.c.l.b16 %v36
  %v359 = vunpack.c.h.b16 %v36
  %v360 = vunpack.c.l.b16 %v37
  %v361 = vunpack.c.h.b16 %v37
  %v362 = vunpack.c.l.b16 %v38
  %v363 = vunpack.c.h.b16 %v38
  %v364 = vunpack.c.l.b16 %v39
  %v365 = vunpack.c.h.b16 %v39
  %v366 = vunpack.c.l.b16 %v40
  %v367 = vunpack.c.h.b16 %v40
  %v368 = vunpack.c.l.b16 %v41
  %v369 = vunpack.c.h.b16 %v41
  %v370 = vunpack.c.l.b16 %v42
  %v371 = vunpack.c.h.b16 %v42
  %v372 = vunpack.c.l.b16 %v43
  %v373 = vunpack.c.h.b16 %v43
  %v374 = vunpack.c.l.b16 %v44
  %v375 = vunpack.c.h.b16 %v44
  %v376 = vunpack.c.l.b16 %v45
  %v377 = vunpack.c.h.b16 %v45
  %v378 = vunpack.c.l.b16 %v46
  %v379 = vunpack.c.h.b16 %v46
  %v380 = vunpack.c.l.b16 %v47
  %v381 = vunpack.c.h.b16 %v47
  %v382 = vunpack.c.l.b16 %v48
  %v383 = vunpack.c.h.b16 %v48
  %v384 = vunpack.c.l.b16 %v49
  %v385 = vunpack.c.h.b16 %v49
  %v386 = vunpack.c.l.b16 %v50
  %v387 = vunpack.c.h.b16 %v50
  %v388 = vunpack.c.l.b16 %v51
  %v389 = vunpack.c.h.b16 %v51
  %v390 = vunpack.c.l.b16 %v52
  %v391 = vunpack.c.h.b16 %v52
  %v392 = vunpack.c.l.b16 %v53
  %v393 = vunpack.c.h.b16 %v53
  %v394 = vunpack.c.l.b16 %v54
  %v395 = vunpack.c.h.b16 %v54
  %v396 = vunpack.c.l.b16 %v55
  %v397 = vunpack.c.h.b16 %v55
  %v398 = vunpack.c.l.b16 %v56
  %v399 = vunpack.c.h.b16 %v56
  %v400 = vunpack.c.l.b16 %v57
  %v401 = vunpack.c.h.b16 %v57
  %v402 = vunpack.c.l.b16 %v58
  %v403 = vunpack.c.h.b16 %v58
  %v404 = vunpack.c.l.b16 %v59
  %v405 = vunpack.c.h.b16 %v59
  %v406 = vunpack.c.l.b16 %v60
  %v407 = vunpack.c.h.b16 %v60
  %v408 = vunpack.c.l.b16 %v61
  %v409 = vunpack.c.h.b16 %v61
  %v410 = vunpack.c.l.b16 %v62
  %v411 = vunpack.c.h.b16 %v62
  %v412 = vunpack.c.l.b16 %v63
  %v413 = vunpack.c.h.b16 %v63
  %v414 = vunpack.c.l.b16 %v64
  %v415 = vunpack.c.h.b16 %v64
  %v416 = vunpack.c.l.b16 %v65
  %v417 = vunpack.c.h.b16 %v65
  %v418 = vpack.c.b16 %v370, %v354
  %v419 = vpack.c.b16 %v371, %v355
  %v420 = vpack.c.b16 %v372, %v356
  %v421 = vpack.c.b16 %v373, %v357
  %v422 = vpack.c.b16 %v374, %v358
  %v423 = vpack.c.b16 %v375, %v359
  %v424 = vpack.c.b16 %v376, %v360
  %v425 = vpack.c.b16 %v377, %v361
  %v426 = vpack.c.b16 %v378, %v362
  %v427 = vpack.c.b16 %v379, %v363
  %v428 = vpack.c.b16 %v380, %v364
  %v429 = vpack.c.b16 %v381, %v365
  %v430 = vpack.c.b16 %v382, %v366
  %v431 = vpack.c.b16 %v383, %v367
  %v432 = vpack.c.b16 %v384, %v368
  %v433 = vpack.c.b16 %v385, %v369
  %v434 = vpack.c.b16 %v402, %v386
  %v435 = vpack.c.b16 %v403, %v387
  %v436 = vpack.c.b16 %v404, %v388
  %v437 = vpack.c.b16 %v405, %v389
  %v438 = vpack.c.b16 %v406, %v390
  %v439 = vpack.c.b16 %v407, %v391
  %v440 = vpack.c.b16 %v408, %v392
  %v441 = vpack.c.b16 %v409, %v393
  %v442 = vpack.c.b16 %v410, %v394
  %v443 = vpack.c.b16 %v411, %v395
  %v444 = vpack.c.b16 %v412, %v396
  %v445 = vpack.c.b16 %v413, %v397
  %v446 = vpack.c.b16 %v414, %v398
  %v447 = vpack.c.b16 %v415, %v399
  %v448 = vpack.c.b16 %v416, %v400
  %v449 = vpack.c.b16 %v417, %v401
  %v738 = vunpack.c.l.b16 %v66
  %v739 = vunpack.c.h.b16 %v66
  %v740 = vunpack.c.l.b16 %v67
  %v741 = vunpack.c.h.b16 %v67
  %v742 = vunpack.c.l.b16 %v68
  %v743 = vunpack.c.h.b16 %v68
  %v744 = vunpack.c.l.b16 %v69
  %v745 = vunpack.c.h.b16 %v69
  %v746 = vunpack.c.l.b16 %v70
  %v747 = vunpack.c.h.b16 %v70
  %v748 = vunpack.c.l.b16 %v71
  %v749 = vunpack.c.h.b16 %v71
  %v750 = vunpack.c.l.b16 %v72
  %v751 = vunpack.c.h.b16 %v72
  %v752 = vunpack.c.l.b16 %v73
  %v753 = vunpack.c.h.b16 %v73
  %v754 = vunpack.c.l.b16 %v74
  %v755 = vunpack.c.h.b16 %v74
  %v756 = vunpack.c.l.b16 %v75
  %v757 = vunpack.c.h.b16 %v75
  %v758 = vunpack.c.l.b16 %v76
  %v759 = vunpack.c.h.b16 %v76
  %v760 = vunpack.c.l.b16 %v77
  %v761 = vunpack.c.h.b16 %v77
  %v762 = vunpack.c.l.b16 %v78
  %v763 = vunpack.c.h.b16 %v78
  %v764 = vunpack.c.l.b16 %v79
  %v765 = vunpack.c.h.b16 %v79
  %v766 = vunpack.c.l.b16 %v80
  %v767 = vunpack.c.h.b16 %v80
  %v768 = vunpack.c.l.b16 %v81
  %v769 = vunpack.c.h.b16 %v81
  %v770 = vunpack.c.l.b16 %v82
  %v771 = vunpack.c.h.b16 %v82
  %v772 = vunpack.c.l.b16 %v83
  %v773 = vunpack.c.h.b16 %v83
  %v774 = vunpack.c.l.b16 %v84
  %v775 = vunpack.c.h.b16 %v84
  %v776 = vunpack.c.l.b16 %v85
  %v777 = vunpack.c.h.b16 %v85
  %v778 = vunpack.c.l.b16 %v86
  %v779 = vunpack.c.h.b16 %v86
  %v780 = vunpack.c.l.b16 %v87
  %v781 = vunpack.c.h.b16 %v87
  %v782 = vunpack.c.l.b16 %v88
  %v783 = vunpack.c.h.b16 %v88
  %v784 = vunpack.c.l.b16 %v89
  %v785 = vunpack.c.h.b16 %v89
  %v786 = vunpack.c.l.b16 %v90
  %v787 = vunpack.c.h.b16 %v90
  %v788 = vunpack.c.l.b16 %v91
  %v789 = vunpack.c.h.b16 %v91
  %v790 = vunpack.c.l.b16 %v92
  %v791 = vunpack.c.h.b16 %v92
  %v792 = vunpack.c.l.b16 %v93
  %v793 = vunpack.c.h.b16 %v93
  %v794 = vunpack.c.l.b16 %v94
  %v795 = vunpack.c.h.b16 %v94
  %v796 = vunpack.c.l.b16 %v95
  %v797 = vunpack.c.h.b16 %v95
  %v798 = vunpack.c.l.b16 %v96
  %v799 = vunpack.c.h.b16 %v96
  %v800 = vunpack.c.l.b16 %v97
  %v801 = vunpack.c.h.b16 %v97
  %v802 = vunpack.c.l.b16 %v98
  %v803 = vunpack.c.h.b16 %v98
  %v804 = vunpack.c.l.b16 %v99
  %v805 = vunpack.c.h.b16 %v99
  %v806 = vunpack.c.l.b16 %v100
  %v807 = vunpack.c.h.b16 %v100
  %v808 = vunpack.c.l.b16 %v101
  %v809 = vunpack.c.h.b16 %v101
  %v810 = vunpack.c.l.b16 %v102
  %v811 = vunpack.c.h.b16 %v102
  %v812 = vunpack.c.l.b16 %v103
  %v813 = vunpack.c.h.b16 %v103
  %v814 = vunpack.c.l.b16 %v104
  %v815 = vunpack.c.h.b16 %v104
  %v816 = vunpack.c.l.b16 %v105
  %v817 = vunpack.c.h.b16 %v105
  %v818 = vunpack.c.l.b16 %v106
  %v819 = vunpack.c.h.b16 %v106
  %v820 = vunpack.c.l.b16 %v107
  %v821 = vunpack.c.h.b16 %v107
  %v822 = vunpack.c.l.b16 %v108
  %v823 = vunpack.c.h.b16 %v108
  %v824 = vunpack.c.l.b16 %v109
  %v825 = vunpack.c.h.b16 %v109
  %v826 = vunpack.c.l.b16 %v110
  %v827 = vunpack.c.h.b16 %v110
  %v828 = vunpack.c.l.b16 %v111
  %v829 = vunpack.c.h.b16 %v111
  %v830 = vunpack.c.l.b16 %v112
  %v831 = vunpack.c.h.b16 %v112
  %v832 = vunpack.c.l.b16 %v113
  %v833 = vunpack.c.h.b16 %v113
  %v834 = vunpack.c.l.b16 %v114
  %v835 = vunpack.c.h.b16 %v114
  %v836 = vunpack.c.l.b16 %v115
  %v837 = vunpack.c.h.b16 %v115
  %v838 = vunpack.c.l.b16 %v116
  %v839 = vunpack.c.h.b16 %v116
  %v840 = vunpack.c.l.b16 %v117
  %v841 = vunpack.c.h.b16 %v117
  %v842 = vunpack.c.l.b16 %v118
  %v843 = vunpack.c.h.b16 %v118
  %v844 = vunpack.c.l.b16 %v119
  %v845 = vunpack.c.h.b16 %v119
  %v846 = vunpack.c.l.b16 %v120
  %v847 = vunpack.c.h.b16 %v120
  %v848 = vunpack.c.l.b16 %v121
  %v849 = vunpack.c.h.b16 %v121
  %v850 = vunpack.c.l.b16 %v122
  %v851 = vunpack.c.h.b16 %v122
  %v852 = vunpack.c.l.b16 %v123
  %v853 = vunpack.c.h.b16 %v123
  %v854 = vunpack.c.l.b16 %v124
  %v855 = vunpack.c.h.b16 %v124
  %v856 = vunpack.c.l.b16 %v125
  %v857 = vunpack.c.h.b16 %v125
  %v858 = vunpack.c.l.b16 %v126
  %v859 = vunpack.c.h.b16 %v126
  %v860 = vunpack.c.l.b16 %v127
  %v861 = vunpack.c.h.b16 %v127
  %v862 = vunpack.c.l.b16 %v128
  %v863 = vunpack.c.h.b16 %v128
  %v864 = vunpack.c.l.b16 %v129
  %v865 = vunpack.c.h.b16 %v129
  %v866 = vunpack.c.l.b16 %v130
  %v867 = vunpack.c.h.b16 %v130
  %v868 = vunpack.c.l.b16 %v131
  %v869 = vunpack.c.h.b16 %v131
  %v870 = vunpack.c.l.b16 %v132
  %v871 = vunpack.c.h.b16 %v132
  %v872 = vunpack.c.l.b16 %v133
  %v873 = vunpack.c.h.b16 %v133
  %v874 = vunpack.c.l.b16 %v134
  %v875 = vunpack.c.h.b16 %v134
  %v876 = vunpack.c.l.b16 %v135
  %v877 = vunpack.c.h.b16 %v135
  %v878 = vunpack.c.l.b16 %v136
  %v879 = vunpack.c.h.b16 %v136
  %v880 = vunpack.c.l.b16 %v137
  %v881 = vunpack.c.h.b16 %v137
  %v882 = vunpack.c.l.b16 %v138
  %v883 = vunpack.c.h.b16 %v138
  %v884 = vunpack.c.l.b16 %v139
  %v885 = vunpack.c.h.b16 %v139
  %v886 = vunpack.c.l.b16 %v140
  %v887 = vunpack.c.h.b16 %v140
  %v888 = vunpack.c.l.b16 %v141
  %v889 = vunpack.c.h.b16 %v141
  %v890 = vunpack.c.l.b16 %v142
  %v891 = vunpack.c.h.b16 %v142
  %v892 = vunpack.c.l.b16 %v143
  %v893 = vunpack.c.h.b16 %v143
  %v894 = vunpack.c.l.b16 %v144
  %v895 = vunpack.c.h.b16 %v144
  %v896 = vunpack.c.l.b16 %v145
  %v897 = vunpack.c.h.b16 %v145
  %v898 = vunpack.c.l.b16 %v146
  %v899 = vunpack.c.h.b16 %v146
  %v900 = vunpack.c.l.b16 %v147
  %v901 = vunpack.c.h.b16 %v147
  %v902 = vunpack.c.l.b16 %v148
  %v903 = vunpack.c.h.b16 %v148
  %v904 = vunpack.c.l.b16 %v149
  %v905 = vunpack.c.h.b16 %v149
  %v906 = vunpack.c.l.b16 %v150
  %v907 = vunpack.c.h.b16 %v150
  %v908 = vunpack.c.l.b16 %v151
  %v909 = vunpack.c.h.b16 %v151
  %v910 = vunpack.c.l.b16 %v152
  %v911 = vunpack.c.h.b16 %v152
  %v912 = vunpack.c.l.b16 %v153
  %v913 = vunpack.c.h.b16 %v153
  %v914 = vunpack.c.l.b16 %v154
  %v915 = vunpack.c.h.b16 %v154
  %v916 = vunpack.c.l.b16 %v155
  %v917 = vunpack.c.h.b16 %v155
  %v918 = vunpack.c.l.b16 %v156
  %v919 = vunpack.c.h.b16 %v156
  %v920 = vunpack.c.l.b16 %v157
  %v921 = vunpack.c.h.b16 %v157
  %v922 = vunpack.c.l.b16 %v158
  %v923 = vunpack.c.h.b16 %v158
  %v924 = vunpack.c.l.b16 %v159
  %v925 = vunpack.c.h.b16 %v159
  %v926 = vunpack.c.l.b16 %v160
  %v927 = vunpack.c.h.b16 %v160
  %v928 = vunpack.c.l.b16 %v161
  %v929 = vunpack.c.h.b16 %v161
  %v930 = vunpack.c.l.b16 %v162
  %v931 = vunpack.c.h.b16 %v162
  %v932 = vunpack.c.l.b16 %v163
  %v933 = vunpack.c.h.b16 %v163
  %v934 = vunpack.c.l.b16 %v164
  %v935 = vunpack.c.h.b16 %v164
  %v936 = vunpack.c.l.b16 %v165
  %v937 = vunpack.c.h.b16 %v165
  %v938 = vunpack.c.l.b16 %v166
  %v939 = vunpack.c.h.b16 %v166
  %v940 = vunpack.c.l.b16 %v167
  %v941 = vunpack.c.h.b16 %v167
  %v942 = vunpack.c.l.b16 %v168
  %v943 = vunpack.c.h.b16 %v168
  %v944 = vunpack.c.l.b16 %v169
  %v945 = vunpack.c.h.b16 %v169
  %v946 = vunpack.c.l.b16 %v170
  %v947 = vunpack.c.h.b16 %v170
  %v948 = vunpack.c.l.b16 %v171
  %v949 = vunpack.c.h.b16 %v171
  %v950 = vunpack.c.l.b16 %v172
  %v951 = vunpack.c.h.b16 %v172
  %v952 = vunpack.c.l.b16 %v173
  %v953 = vunpack.c.h.b16 %v173
  %v954 = vunpack.c.l.b16 %v174
  %v955 = vunpack.c.h.b16 %v174
  %v956 = vunpack.c.l.b16 %v175
  %v957 = vunpack.c.h.b16 %v175
  %v958 = vunpack.c.l.b16 %v176
  %v959 = vunpack.c.h.b16 %v176
  %v960 = vunpack.c.l.b16 %v177
  %v961 = vunpack.c.h.b16 %v177
  %v962 = vunpack.c.l.b16 %v178
  %v963 = vunpack.c.h.b16 %v178
  %v964 = vunpack.c.l.b16 %v179
  %v965 = vunpack.c.h.b16 %v179
  %v966 = vunpack.c.l.b16 %v180
  %v967 = vunpack.c.h.b16 %v180
  %v968 = vunpack.c.l.b16 %v181
  %v969 = vunpack.c.h.b16 %v181
  %v970 = vunpack.c.l.b16 %v182
  %v971 = vunpack.c.h.b16 %v182
  %v972 = vunpack.c.l.b16 %v183
  %v973 = vunpack.c.h.b16 %v183
  %v974 = vunpack.c.l.b16 %v184
  %v975 = vunpack.c.h.b16 %v184
  %v976 = vunpack.c.l.b16 %v185
  %v977 = vunpack.c.h.b16 %v185
  %v978 = vunpack.c.l.b16 %v186
  %v979 = vunpack.c.h.b16 %v186
  %v980 = vunpack.c.l.b16 %v187
  %v981 = vunpack.c.h.b16 %v187
  %v982 = vunpack.c.l.b16 %v188
  %v983 = vunpack.c.h.b16 %v188
  %v984 = vunpack.c.l.b16 %v189
  %v985 = vunpack.c.h.b16 %v189
  %v986 = vunpack.c.l.b16 %v190
  %v987 = vunpack.c.h.b16 %v190
  %v988 = vunpack.c.l.b16 %v191
  %v989 = vunpack.c.h.b16 %v191
  %v990 = vunpack.c.l.b16 %v192
  %v991 = vunpack.c.h.b16 %v192
  %v992 = vunpack.c.l.b16 %v193
  %v993 = vunpack.c.h.b16 %v193
  %v994 = vunpack.c.l.b16 %v194
  %v995 = vunpack.c.h.b16 %v194
  %v996 = vunpack.c.l.b16 %v195
  %v997 = vunpack.c.h.b16 %v195
  %v998 = vunpack.c.l.b16 %v196
  %v999 = vunpack.c.h.b16 %v196
  %v1000 = vunpack.c.l.b16 %v197
  %v1001 = vunpack.c.h.b16 %v197
  %v1002 = vunpack.c.l.b16 %v198
  %v1003 = vunpack.c.h.b16 %v198
  %v1004 = vunpack.c.l.b16 %v199
  %v1005 = vunpack.c.h.b16 %v199
  %v1006 = vunpack.c.l.b16 %v200
  %v1007 = vunpack.c.h.b16 %v200
  %v1008 = vunpack.c.l.b16 %v201
  %v1009 = vunpack.c.h.b16 %v201
  %v1010 = vunpack.c.l.b16 %v202
  %v1011 = vunpack.c.h.b16 %v202
  %v1012 = vunpack.c.l.b16 %v203
  %v1013 = vunpack.c.h.b16 %v203
  %v1014 = vunpack.c.l.b16 %v204
  %v1015 = vunpack.c.h.b16 %v204
  %v1016 = vunpack.c.l.b16 %v205
  %v1017 = vunpack.c.h.b16 %v205
  %v1018 = vunpack.c.l.b16 %v206
  %v1019 = vunpack.c.h.b16 %v206
  %v1020 = vunpack.c.l.b16 %v207
  %v1021 = vunpack.c.h.b16 %v207
  %v1022 = vunpack.c.l.b16 %v208
  %v1023 = vunpack.c.h.b16 %v208
  %v1024 = vunpack.c.l.b16 %v209
  %v1025 = vunpack.c.h.b16 %v209
  %v1026 = vunpack.c.l.b16 %v210
  %v1027 = vunpack.c.h.b16 %v210
  %v1028 = vunpack.c.l.b16 %v211
  %v1029 = vunpack.c.h.b16 %v211
  %v1030 = vunpack.c.l.b16 %v212
  %v1031 = vunpack.c.h.b16 %v212
  %v1032 = vunpack.c.l.b16 %v213
  %v1033 = vunpack.c.h.b16 %v213
  %v1034 = vunpack.c.l.b16 %v214
  %v1035 = vunpack.c.h.b16 %v214
  %v1036 = vunpack.c.l.b16 %v215
  %v1037 = vunpack.c.h.b16 %v215
  %v1038 = vunpack.c.l.b16 %v216
  %v1039 = vunpack.c.h.b16 %v216
  %v1040 = vunpack.c.l.b16 %v217
  %v1041 = vunpack.c.h.b16 %v217
  %v1042 = vunpack.c.l.b16 %v218
  %v1043 = vunpack.c.h.b16 %v218
  %v1044 = vunpack.c.l.b16 %v219
  %v1045 = vunpack.c.h.b16 %v219
  %v1046 = vunpack.c.l.b16 %v220
  %v1047 = vunpack.c.h.b16 %v220
  %v1048 = vunpack.c.l.b16 %v221
  %v1049 = vunpack.c.h.b16 %v221
  %v1050 = vunpack.c.l.b16 %v222
  %v1051 = vunpack.c.h.b16 %v222
  %v1052 = vunpack.c.l.b16 %v223
  %v1053 = vunpack.c.h.b16 %v223
  %v1054 = vunpack.c.l.b16 %v224
  %v1055 = vunpack.c.h.b16 %v224
  %v1056 = vunpack.c.l.b16 %v225
  %v1057 = vunpack.c.h.b16 %v225
  %v1058 = vunpack.c.l.b16 %v226
  %v1059 = vunpack.c.h.b16 %v226
  %v1060 = vunpack.c.l.b16 %v227
  %v1061 = vunpack.c.h.b16 %v227
  %v1062 = vunpack.c.l.b16 %v228
  %v1063 = vunpack.c.h.b16 %v228
  %v1064 = vunpack.c.l.b16 %v229
  %v1065 = vunpack.c.h.b16 %v229
  %v1066 = vunpack.c.l.b16 %v230
  %v1067 = vunpack.c.h.b16 %v230
  %v1068 = vunpack.c.l.b16 %v231
  %v1069 = vunpack.c.h.b16 %v231
  %v1070 = vunpack.c.l.b16 %v232
  %v1071 = vunpack.c.h.b16 %v232
  %v1072 = vunpack.c.l.b16 %v233
  %v1073 = vunpack.c.h.b16 %v233
  %v1074 = vunpack.c.l.b16 %v234
  %v1075 = vunpack.c.h.b16 %v234
  %v1076 = vunpack.c.l.b16 %v235
  %v1077 = vunpack.c.h.b16 %v235
  %v1078 = vunpack.c.l.b16 %v236
  %v1079 = vunpack.c.h.b16 %v236
  %v1080 = vunpack.c.l.b16 %v237
  %v1081 = vunpack.c.h.b16 %v237
  %v1082 = vunpack.c.l.b16 %v238
  %v1083 = vunpack.c.h.b16 %v238
  %v1084 = vunpack.c.l.b16 %v239
  %v1085 = vunpack.c.h.b16 %v239
  %v1086 = vunpack.c.l.b16 %v240
  %v1087 = vunpack.c.h.b16 %v240
  %v1088 = vunpack.c.l.b16 %v241
  %v1089 = vunpack.c.h.b16 %v241
  %v1090 = vunpack.c.l.b16 %v242
  %v1091 = vunpack.c.h.b16 %v242
  %v1092 = vunpack.c.l.b16 %v243
  %v1093 = vunpack.c.h.b16 %v243
  %v1094 = vunpack.c.l.b16 %v244
  %v1095 = vunpack.c.h.b16 %v244
  %v1096 = vunpack.c.l.b16 %v245
  %v1097 = vunpack.c.h.b16 %v245
  %v1098 = vunpack.c.l.b16 %v246
  %v1099 = vunpack.c.h.b16 %v246
  %v1100 = vunpack.c.l.b16 %v247
  %v1101 = vunpack.c.h.b16 %v247
  %v1102 = vunpack.c.l.b16 %v248
  %v1103 = vunpack.c.h.b16 %v248
  %v1104 = vunpack.c.l.b16 %v249
  %v1105 = vunpack.c.h.b16 %v249
  %v1106 = vunpack.c.l.b16 %v250
  %v1107 = vunpack.c.h.b16 %v250
  %v1108 = vunpack.c.l.b16 %v251
  %v1109 = vunpack.c.h.b16 %v251
  %v1110 = vunpack.c.l.b16 %v252
  %v1111 = vunpack.c.h.b16 %v252
  %v1112 = vunpack.c.l.b16 %v253
  %v1113 = vunpack.c.h.b16 %v253
  %v1114 = vunpack.c.l.b16 %v254
  %v1115 = vunpack.c.h.b16 %v254
  %v1116 = vunpack.c.l.b16 %v255
  %v1117 = vunpack.c.h.b16 %v255
  %v1118 = vunpack.c.l.b16 %v256
  %v1119 = vunpack.c.h.b16 %v256
  %v1120 = vunpack.c.l.b16 %v257
  %v1121 = vunpack.c.h.b16 %v257
  %v1122 = vunpack.c.l.b16 %v258
  %v1123 = vunpack.c.h.b16 %v258
  %v1124 = vunpack.c.l.b16 %v259
  %v1125 = vunpack.c.h.b16 %v259
  %v1126 = vunpack.c.l.b16 %v260
  %v1127 = vunpack.c.h.b16 %v260
  %v1128 = vunpack.c.l.b16 %v261
  %v1129 = vunpack.c.h.b16 %v261
  %v1130 = vunpack.c.l.b16 %v262
  %v1131 = vunpack.c.h.b16 %v262
  %v1132 = vunpack.c.l.b16 %v263
  %v1133 = vunpack.c.h.b16 %v263
  %v1134 = vunpack.c.l.b16 %v264
  %v1135 = vunpack.c.h.b16 %v264
  %v1136 = vunpack.c.l.b16 %v265
  %v1137 = vunpack.c.h.b16 %v265
  %v1138 = vunpack.c.l.b16 %v266
  %v1139 = vunpack.c.h.b16 %v266
  %v1140 = vunpack.c.l.b16 %v267
  %v1141 = vunpack.c.h.b16 %v267
  %v1142 = vunpack.c.l.b16 %v268
  %v1143 = vunpack.c.h.b16 %v268
  %v1144 = vunpack.c.l.b16 %v269
  %v1145 = vunpack.c.h.b16 %v269
  %v1146 = vunpack.c.l.b16 %v270
  %v1147 = vunpack.c.h.b16 %v270
  %v1148 = vunpack.c.l.b16 %v271
  %v1149 = vunpack.c.h.b16 %v271
  %v1150 = vunpack.c.l.b16 %v272
  %v1151 = vunpack.c.h.b16 %v272
  %v1152 = vunpack.c.l.b16 %v273
  %v1153 = vunpack.c.h.b16 %v273
  %v1154 = vunpack.c.l.b16 %v274
  %v1155 = vunpack.c.h.b16 %v274
  %v1156 = vunpack.c.l.b16 %v275
  %v1157 = vunpack.c.h.b16 %v275
  %v1158 = vunpack.c.l.b16 %v276
  %v1159 = vunpack.c.h.b16 %v276
  %v1160 = vunpack.c.l.b16 %v277
  %v1161 = vunpack.c.h.b16 %v277
  %v1162 = vunpack.c.l.b16 %v278
  %v1163 = vunpack.c.h.b16 %v278
  %v1164 = vunpack.c.l.b16 %v279
  %v1165 = vunpack.c.h.b16 %v279
  %v1166 = vunpack.c.l.b16 %v280
  %v1167 = vunpack.c.h.b16 %v280
  %v1168 = vunpack.c.l.b16 %v281
  %v1169 = vunpack.c.h.b16 %v281
  %v1170 = vunpack.c.l.b16 %v282
  %v1171 = vunpack.c.h.b16 %v282
  %v1172 = vunpack.c.l.b16 %v283
  %v1173 = vunpack.c.h.b16 %v283
  %v1174 = vunpack.c.l.b16 %v284
  %v1175 = vunpack.c.h.b16 %v284
  %v1176 = vunpack.c.l.b16 %v285
  %v1177 = vunpack.c.h.b16 %v285
  %v1178 = vunpack.c.l.b16 %v286
  %v1179 = vunpack.c.h.b16 %v286
  %v1180 = vunpack.c.l.b16 %v287
  %v1181 = vunpack.c.h.b16 %v287
  %v1182 = vunpack.c.l.b16 %v288
  %v1183 = vunpack.c.h.b16 %v288
  %v1184 = vunpack.c.l.b16 %v289
  %v1185 = vunpack.c.h.b16 %v289
  %v1186 = vunpack.c.l.b16 %v290
  %v1187 = vunpack.c.h.b16 %v290
  %v1188 = vunpack.c.l.b16 %v291
  %v1189 = vunpack.c.h.b16 %v291
  %v1190 = vunpack.c.l.b16 %v292
  %v1191 = vunpack.c.h.b16 %v292
  %v1192 = vunpack.c.l.b16 %v293
  %v1193 = vunpack.c.h.b16 %v293
  %v1194 = vunpack.c.l.b16 %v294
  %v1195 = vunpack.c.h.b16 %v294
  %v1196 = vunpack.c.l.b16 %v295
  %v1197 = vunpack.c.h.b16 %v295
  %v1198 = vunpack.c.l.b16 %v296
  %v1199 = vunpack.c.h.b16 %v296
  %v1200 = vunpack.c.l.b16 %v297
  %v1201 = vunpack.c.h.b16 %v297
  %v1202 = vunpack.c.l.b16 %v298
  %v1203 = vunpack.c.h.b16 %v298
  %v1204 = vunpack.c.l.b16 %v299
  %v1205 = vunpack.c.h.b16 %v299
  %v1206 = vunpack.c.l.b16 %v300
  %v1207 = vunpack.c.h.b16 %v300
  %v1208 = vunpack.c.l.b16 %v301
  %v1209 = vunpack.c.h.b16 %v301
  %v1210 = vunpack.c.l.b16 %v302
  %v1211 = vunpack.c.h.b16 %v302
  %v1212 = vunpack.c.l.b16 %v303
  %v1213 = vunpack.c.h.b16 %v303
  %v1214 = vunpack.c.l.b16 %v304
  %v1215 = vunpack.c.h.b16 %v304
  %v1216 = vunpack.c.l.b16 %v305
  %v1217 = vunpack.c.h.b16 %v305
  %v1218 = vunpack.c.l.b16 %v306
  %v1219 = vunpack.c.h.b16 %v306
  %v1220 = vunpack.c.l.b16 %v307
  %v1221 = vunpack.c.h.b16 %v307
  %v1222 = vunpack.c.l.b16 %v308
  %v1223 = vunpack.c.h.b16 %v308
  %v1224 = vunpack.c.l.b16 %v309
  %v1225 = vunpack.c.h.b16 %v309
  %v1226 = vunpack.c.l.b16 %v310
  %v1227 = vunpack.c.h.b16 %v310
  %v1228 = vunpack.c.l.b16 %v311
  %v1229 = vunpack.c.h.b16 %v311
  %v1230 = vunpack.c.l.b16 %v312
  %v1231 = vunpack.c.h.b16 %v312
  %v1232 = vunpack.c.l.b16 %v313
  %v1233 = vunpack.c.h.b16 %v313
  %v1234 = vunpack.c.l.b16 %v314
  %v1235 = vunpack.c.h.b16 %v314
  %v1236 = vunpack.c.l.b16 %v315
  %v1237 = vunpack.c.h.b16 %v315
  %v1238 = vunpack.c.l.b16 %v316
  %v1239 = vunpack.c.h.b16 %v316
  %v1240 = vunpack.c.l.b16 %v317
  %v1241 = vunpack.c.h.b16 %v317
  %v1242 = vunpack.c.l.b16 %v318
  %v1243 = vunpack.c.h.b16 %v318
  %v1244 = vunpack.c.l.b16 %v319
  %v1245 = vunpack.c.h.b16 %v319
  %v1246 = vunpack.c.l.b16 %v320
  %v1247 = vunpack.c.h.b16 %v320
  %v1248 = vunpack.c.l.b16 %v321
  %v1249 = vunpack.c.h.b16 %v321
  %v1250 = vpack.c.b16 %v740, %v738
  %v1251 = vpack.c.b16 %v741, %v739
  %v1252 = vpack.c.b16 %v744, %v742
  %v1253 = vpack.c.b16 %v745, %v743
  %v1254 = vpack.c.b16 %v748, %v746
  %v1255 = vpack.c.b16 %v749, %v747
  %v1256 = vpack.c.b16 %v752, %v750
  %v1257 = vpack.c.b16 %v753, %v751
  %v1258 = vpack.c.b16 %v756, %v754
  %v1259 = vpack.c.b16 %v757, %v755
  %v1260 = vpack.c.b16 %v760, %v758
  %v1261 = vpack.c.b16 %v761, %v759
  %v1262 = vpack.c.b16 %v764, %v762
  %v1263 = vpack.c.b16 %v765, %v763
  %v1264 = vpack.c.b16 %v768, %v766
  %v1265 = vpack.c.b16 %v769, %v767
  %v1266 = vpack.c.b16 %v772, %v770
  %v1267 = vpack.c.b16 %v773, %v771
  %v1268 = vpack.c.b16 %v776, %v774
  %v1269 = vpack.c.b16 %v777, %v775
  %v1270 = vpack.c.b16 %v780, %v778
  %v1271 = vpack.c.b16 %v781, %v779
  %v1272 = vpack.c.b16 %v784, %v782
  %v1273 = vpack.c.b16 %v785, %v783
  %v1274 = vpack.c.b16 %v788, %v786
  %v1275 = vpack.c.b16 %v789, %v787
  %v1276 = vpack.c.b16 %v792, %v790
  %v1277 = vpack.c.b16 %v793, %v791
  %v1278 = vpack.c.b16 %v796, %v794
  %v1279 = vpack.c.b16 %v797, %v795
  %v1280 = vpack.c.b16 %v800, %v798
  %v1281 = vpack.c.b16 %v801, %v799
  %v1282 = vpack.c.b16 %v804, %v802
  %v1283 = vpack.c.b16 %v805, %v803
  %v1284 = vpack.c.b16 %v808, %v806
  %v1285 = vpack.c.b16 %v809, %v807
  %v1286 = vpack.c.b16 %v812, %v810
  %v1287 = vpack.c.b16 %v813, %v811
  %v1288 = vpack.c.b16 %v816, %v814
  %v1289 = vpack.c.b16 %v817, %v815
  %v1290 = vpack.c.b16 %v820, %v818
  %v1291 = vpack.c.b16 %v821, %v819
  %v1292 = vpack.c.b16 %v824, %v822
  %v1293 = vpack.c.b16 %v825, %v823
  %v1294 = vpack.c.b16 %v828, %v826
  %v1295 = vpack.c.b16 %v829, %v827
  %v1296 = vpack.c.b16 %v832, %v830
  %v1297 = vpack.c.b16 %v833, %v831
  %v1298 = vpack.c.b16 %v836, %v834
  %v1299 = vpack.c.b16 %v837, %v835
  %v1300 = vpack.c.b16 %v840, %v838
  %v1301 = vpack.c.b16 %v841, %v839
  %v1302 = vpack.c.b16 %v844, %v842
  %v1303 = vpack.c.b16 %v845, %v843
  %v1304 = vpack.c.b16 %v848, %v846
  %v1305 = vpack.c.b16 %v849, %v847
  %v1306 = vpack.c.b16 %v852, %v850
  %v1307 = vpack.c.b16 %v853, %v851
  %v1308 = vpack.c.b16 %v856, %v854
  %v1309 = vpack.c.b16 %v857, %v855
  %v1310 = vpack.c.b16 %v860, %v858
  %v1311 = vpack.c.b16 %v861, %v859
  %v1312 = vpack.c.b16 %v864, %v862
  %v1313 = vpack.c.b16 %v865, %v863
  %v1314 = vpack.c.b16 %v868, %v866
  %v1315 = vpack.c.b16 %v869, %v867
  %v1316 = vpack.c.b16 %v872, %v870
  %v1317 = vpack.c.b16 %v873, %v871
  %v1318 = vpack.c.b16 %v876, %v874
  %v1319 = vpack.c.b16 %v877, %v875
  %v1320 = vpack.c.b16 %v880, %v878
  %v1321 = vpack.c.b16 %v881, %v879
  %v1322 = vpack.c.b16 %v884, %v882
  %v1323 = vpack.c.b16 %v885, %v883
  %v1324 = vpack.c.b16 %v888, %v886
  %v1325 = vpack.c.b16 %v889, %v887
  %v1326 = vpack.c.b16 %v892, %v890
  %v1327 = vpack.c.b16 %v893, %v891
  %v1328 = vpack.c.b16 %v896, %v894
  %v1329 = vpack.c.b16 %v897, %v895
  %v1330 = vpack.c.b16 %v900, %v898
  %v1331 = vpack.c.b16 %v901, %v899
  %v1332 = vpack.c.b16 %v904, %v902
  %v1333 = vpack.c.b16 %v905, %v903
  %v1334 = vpack.c.b16 %v908, %v906
  %v1335 = vpack.c.b16 %v909, %v907
  %v1336 = vpack.c.b16 %v912, %v910
  %v1337 = vpack.c.b16 %v913, %v911
  %v1338 = vpack.c.b16 %v916, %v914
  %v1339 = vpack.c.b16 %v917, %v915
  %v1340 = vpack.c.b16 %v920, %v918
  %v1341 = vpack.c.b16 %v921, %v919
  %v1342 = vpack.c.b16 %v924, %v922
  %v1343 = vpack.c.b16 %v925, %v923
  %v1344 = vpack.c.b16 %v928, %v926
  %v1345 = vpack.c.b16 %v929, %v927
  %v1346 = vpack.c.b16 %v932, %v930
  %v1347 = vpack.c.b16 %v933, %v931
  %v1348 = vpack.c.b16 %v936, %v934
  %v1349 = vpack.c.b16 %v937, %v935
  %v1350 = vpack.c.b16 %v940, %v938
  %v1351 = vpack.c.b16 %v941, %v939
  %v1352 = vpack.c.b16 %v944, %v942
  %v1353 = vpack.c.b16 %v945, %v943
  %v1354 = vpack.c.b16 %v948, %v946
  %v1355 = vpack.c.b16 %v949, %v947
  %v1356 = vpack.c.b16 %v952, %v950
  %v1357 = vpack.c.b16 %v953, %v951
  %v1358 = vpack.c.b16 %v956, %v954
  %v1359 = vpack.c.b16 %v957, %v955
  %v1360 = vpack.c.b16 %v960, %v958
  %v1361 = vpack.c.b16 %v961, %v959
  %v1362 = vpack.c.b16 %v964, %v962
  %v1363 = vpack.c.b16 %v965, %v963
  %v1364 = vpack.c.b16 %v968, %v966
  %v1365 = vpack.c.b16 %v969, %v967
  %v1366 = vpack.c.b16 %v972, %v970
  %v1367 = vpack.c.b16 %v973, %v971
  %v1368 = vpack.c.b16 %v976, %v974
  %v1369 = vpack.c.b16 %v977, %v975
  %v1370 = vpack.c.b16 %v980, %v978
  %v1371 = vpack.c.b16 %v981, %v979
  %v1372 = vpack.c.b16 %v984, %v982
  %v1373 = vpack.c.b16 %v985, %v983
  %v1374 = vpack.c.b16 %v988, %v986
  %v1375 = vpack.c.b16 %v989, %v987
  %v1376 = vpack.c.b16 %v992, %v990
  %v1377 = vpack.c.b16 %v993, %v991
  %v1378 = vpack.c.b16 %v996, %v994
  %v1379 = vpack.c.b16 %v997, %v995
  %v1380 = vpack.c.b16 %v1000, %v998
  %v1381 = vpack.c.b16 %v1001, %v999
  %v1382 = vpack.c.b16 %v1004, %v1002
  %v1383 = vpack.c.b16 %v1005, %v1003
  %v1384 = vpack.c.b16 %v1008, %v1006
  %v1385 = vpack.c.b16 %v1009, %v1007
  %v1386 = vpack.c.b16 %v1012, %v1010
  %v1387 = vpack.c.b16 %v1013, %v1011
  %v1388 = vpack.c.b16 %v1016, %v1014
  %v1389 = vpack.c.b16 %v1017, %v1015
  %v1390 = vpack.c.b16 %v1020, %v1018
  %v1391 = vpack.c.b16 %v1021, %v1019
  %v1392 = vpack.c.b16 %v1024, %v1022
  %v1393 = vpack.c.b16 %v1025, %v1023
  %v1394 = vpack.c.b16 %v1028, %v1026
  %v1395 = vpack.c.b16 %v1029, %v1027
  %v1396 = vpack.c.b16 %v1032, %v1030
  %v1397 = vpack.c.b16 %v1033, %v1031
  %v1398 = vpack.c.b16 %v1036, %v1034
  %v1399 = vpack.c.b16 %v1037, %v1035
  %v1400 = vpack.c.b16 %v1040, %v1038
  %v1401 = vpack.c.b16 %v1041, %v1039
  %v1402 = vpack.c.b16 %v1044, %v1042
  %v1403 = vpack.c.b16 %v1045, %v1043
  %v1404 = vpack.c.b16 %v1048, %v1046
  %v1405 = vpack.c.b16 %v1049, %v1047
  %v1406 = vpack.c.b16 %v1052, %v1050
  %v1407 = vpack.c.b16 %v1053, %v1051
  %v1408 = vpack.c.b16 %v1056, %v1054
  %v1409 = vpack.c.b16 %v1057, %v1055
  %v1410 = vpack.c.b16 %v1060, %v1058
  %v1411 = vpack.c.b16 %v1061, %v1059
  %v1412 = vpack.c.b16 %v1064, %v1062
  %v1413 = vpack.c.b16 %v1065, %v1063
  %v1414 = vpack.c.b16 %v1068, %v1066
  %v1415 = vpack.c.b16 %v1069, %v1067
  %v1416 = vpack.c.b16 %v1072, %v1070
  %v1417 = vpack.c.b16 %v1073, %v1071
  %v1418 = vpack.c.b16 %v1076, %v1074
  %v1419 = vpack.c.b16 %v1077, %v1075
  %v1420 = vpack.c.b16 %v1080, %v1078
  %v1421 = vpack.c.b16 %v1081, %v1079
  %v1422 = vpack.c.b16 %v1084, %v1082
  %v1423 = vpack.c.b16 %v1085, %v1083
  %v1424 = vpack.c.b16 %v1088, %v1086
  %v1425 = vpack.c.b16 %v1089, %v1087
  %v1426 = vpack.c.b16 %v1092, %v1090
  %v1427 = vpack.c.b16 %v1093, %v1091
  %v1428 = vpack.c.b16 %v1096, %v1094
  %v1429 = vpack.c.b16 %v1097, %v1095
  %v1430 = vpack.c.b16 %v1100, %v1098
  %v1431 = vpack.c.b16 %v1101, %v1099
  %v1432 = vpack.c.b16 %v1104, %v1102
  %v1433 = vpack.c.b16 %v1105, %v1103
  %v1434 = vpack.c.b16 %v1108, %v1106
  %v1435 = vpack.c.b16 %v1109, %v1107
  %v1436 = vpack.c.b16 %v1112, %v1110
  %v1437 = vpack.c.b16 %v1113, %v1111
  %v1438 = vpack.c.b16 %v1116, %v1114
  %v1439 = vpack.c.b16 %v1117, %v1115
  %v1440 = vpack.c.b16 %v1120, %v1118
  %v1441 = vpack.c.b16 %v1121, %v1119
  %v1442 = vpack.c.b16 %v1124, %v1122
  %v1443 = vpack.c.b16 %v1125, %v1123
  %v1444 = vpack.c.b16 %v1128, %v1126
  %v1445 = vpack.c.b16 %v1129, %v1127
  %v1446 = vpack.c.b16 %v1132, %v1130
  %v1447 = vpack.c.b16 %v1133, %v1131
  %v1448 = vpack.c.b16 %v1136, %v1134
  %v1449 = vpack.c.b16 %v1137, %v1135
  %v1450 = vpack.c.b16 %v1140, %v1138
  %v1451 = vpack.c.b16 %v1141, %v1139
  %v1452 = vpack.c.b16 %v1144, %v1142
  %v1453 = vpack.c.b16 %v1145, %v1143
  %v1454 = vpack.c.b16 %v1148, %v1146
  %v1455 = vpack.c.b16 %v1149, %v1147
  %v1456 = vpack.c.b16 %v1152, %v1150
  %v1457 = vpack.c.b16 %v1153, %v1151
  %v1458 = vpack.c.b16 %v1156, %v1154
  %v1459 = vpack.c.b16 %v1157, %v1155
  %v1460 = vpack.c.b16 %v1160, %v1158
  %v1461 = vpack.c.b16 %v1161, %v1159
  %v1462 = vpack.c.b16 %v1164, %v1162
  %v1463 = vpack.c.b16 %v1165, %v1163
  %v1464 = vpack.c.b16 %v1168, %v1166
  %v1465 = vpack.c.b16 %v1169, %v1167
  %v1466 = vpack.c.b16 %v1172, %v1170
  %v1467 = vpack.c.b16 %v1173, %v1171
  %v1468 = vpack.c.b16 %v1176, %v1174
  %v1469 = vpack.c.b16 %v1177, %v1175
  %v1470 = vpack.c.b16 %v1180, %v1178
  %v1471 = vpack.c.b16 %v1181, %v1179
  %v1472 = vpack.c.b16 %v1184, %v1182
  %v1473 = vpack.c.b16 %v1185, %v1183
  %v1474 = vpack.c.b16 %v1188, %v1186
  %v1475 = vpack.c.b16 %v1189, %v1187
  %v1476 = vpack.c.b16 %v1192, %v1190
  %v1477 = vpack.c.b16 %v1193, %v1191
  %v1478 = vpack.c.b16 %v1196, %v1194
  %v1479 = vpack.c.b16 %v1197, %v1195
  %v1480 = vpack.c.b16 %v1200, %v1198
  %v1481 = vpack.c.b16 %v1201, %v1199
  %v1482 = vpack.c.b16 %v1204, %v1202
  %v1483 = vpack.c.b16 %v1205, %v1203
  %v1484 = vpack.c.b16 %v1208, %v1206
  %v1485 = vpack.c.b16 %v1209, %v1207
  %v1486 = vpack.c.b16 %v1212, %v1210
  %v1487 = vpack.c.b16 %v1213, %v1211
  %v1488 = vpack.c.b16 %v1216, %v1214
  %v1489 = vpack.c.b16 %v1217, %v1215
  %v1490 = vpack.c.b16 %v1220, %v1218
  %v1491 = vpack.c.b16 %v1221, %v1219
  %v1492 = vpack.c.b16 %v1224, %v1222
  %v1493 = vpack.c.b16 %v1225, %v1223
  %v1494 = vpack.c.b16 %v1228, %v1226
  %v1495 = vpack.c.b16 %v1229, %v1227
  %v1496 = vpack.c.b16 %v1232, %v1230
  %v1497 = vpack.c.b16 %v1233, %v1231
  %v1498 = vpack.c.b16 %v1236, %v1234
  %v1499 = vpack.c.b16 %v1237, %v1235
  %v1500 = vpack.c.b16 %v1240, %v1238
  %v1501 = vpack.c.b16 %v1241, %v1239
  %v1502 = vpack.c.b16 %v1244, %v1242
  %v1503 = vpack.c.b16 %v1245, %v1243
  %v1504 = vpack.c.b16 %v1248, %v1246
  %v1505 = vpack.c.b16 %v1249, %v1247
  %1762 = vmatpush.bf16.msra.mxu0 %v1264
  %1763 = vmatpush.bf16.msra.mxu0 %v1262
  %1764 = vmatpush.bf16.msra.mxu0 %v1260
  %1765 = vmatpush.bf16.msra.mxu0 %v1258
  %1766 = vmatpush.bf16.msra.mxu0 %v1256
  %1767 = vmatpush.bf16.msra.mxu0 %v1254
  %1768 = vmatpush.bf16.msra.mxu0 %v1252
  %1769 = vmatpush.bf16.msra.mxu0 %v1250
  %1770 = vmatmul.bf16.gmra.mxu0 %v418
  %v1771 = vpop.f32.mrf.mxu0
  %v1772 = vadd.f32 0.0, %v1771
  %v1773 = vpop.f32.mrf.mxu0
  %v1774 = vadd.f32 0.0, %v1773
  %1775 = vmatmul.bf16.gmra.mxu0 %v434
  %v1776 = vpop.f32.mrf.mxu0
  %v1777 = vadd.f32 0.0, %v1776
  %v1778 = vpop.f32.mrf.mxu0
  %v1779 = vadd.f32 0.0, %v1778
  %1780 = vdwg.mxu0
  %1781 = vmatpush.bf16.msra.mxu0 %v1280
  %1782 = vmatpush.bf16.msra.mxu0 %v1278
  %1783 = vmatpush.bf16.msra.mxu0 %v1276
  %1784 = vmatpush.bf16.msra.mxu0 %v1274
  %1785 = vmatpush.bf16.msra.mxu0 %v1272
  %1786 = vmatpush.bf16.msra.mxu0 %v1270
  %1787 = vmatpush.bf16.msra.mxu0 %v1268
  %1788 = vmatpush.bf16.msra.mxu0 %v1266
  %1789 = vmatmul.bf16.gmra.mxu0 %v419
  %v1790 = vpop.f32.mrf.mxu0
  %v1791 = vadd.f32 %v1772, %v1790
  %v1792 = vpop.f32.mrf.mxu0
  %v1793 = vadd.f32 %v1774, %v1792
  %1794 = vmatmul.bf16.gmra.mxu0 %v435
  %v1795 = vpop.f32.mrf.mxu0
  %v1796 = vadd.f32 %v1777, %v1795
  %v1797 = vpop.f32.mrf.mxu0
  %v1798 = vadd.f32 %v1779, %v1797
  %1799 = vdwg.mxu0
  %1800 = vmatpush.bf16.msra.mxu0 %v1296
  %1801 = vmatpush.bf16.msra.mxu0 %v1294
  %1802 = vmatpush.bf16.msra.mxu0 %v1292
  %1803 = vmatpush.bf16.msra.mxu0 %v1290
  %1804 = vmatpush.bf16.msra.mxu0 %v1288
  %1805 = vmatpush.bf16.msra.mxu0 %v1286
  %1806 = vmatpush.bf16.msra.mxu0 %v1284
  %1807 = vmatpush.bf16.msra.mxu0 %v1282
  %1808 = vmatmul.bf16.gmra.mxu0 %v420
  %v1809 = vpop.f32.mrf.mxu0
  %v1810 = vadd.f32 %v1791, %v1809
  %v1811 = vpop.f32.mrf.mxu0
  %v1812 = vadd.f32 %v1793, %v1811
  %1813 = vmatmul.bf16.gmra.mxu0 %v436
  %v1814 = vpop.f32.mrf.mxu0
  %v1815 = vadd.f32 %v1796, %v1814
  %v1816 = vpop.f32.mrf.mxu0
  %v1817 = vadd.f32 %v1798, %v1816
  %1818 = vdwg.mxu0
  %1819 = vmatpush.bf16.msra.mxu0 %v1312
  %1820 = vmatpush.bf16.msra.mxu0 %v1310
  %1821 = vmatpush.bf16.msra.mxu0 %v1308
  %1822 = vmatpush.bf16.msra.mxu0 %v1306
  %1823 = vmatpush.bf16.msra.mxu0 %v1304
  %1824 = vmatpush.bf16.msra.mxu0 %v1302
  %1825 = vmatpush.bf16.msra.mxu0 %v1300
  %1826 = vmatpush.bf16.msra.mxu0 %v1298
  %1827 = vmatmul.bf16.gmra.mxu0 %v421
  %v1828 = vpop.f32.mrf.mxu0
  %v1829 = vadd.f32 %v1810, %v1828
  %v1830 = vpop.f32.mrf.mxu0
  %v1831 = vadd.f32 %v1812, %v1830
  %1832 = vmatmul.bf16.gmra.mxu0 %v437
  %v1833 = vpop.f32.mrf.mxu0
  %v1834 = vadd.f32 %v1815, %v1833
  %v1835 = vpop.f32.mrf.mxu0
  %v1836 = vadd.f32 %v1817, %v1835
  %1837 = vdwg.mxu0
  %1838 = vmatpush.bf16.msra.mxu0 %v1328
  %1839 = vmatpush.bf16.msra.mxu0 %v1326
  %1840 = vmatpush.bf16.msra.mxu0 %v1324
  %1841 = vmatpush.bf16.msra.mxu0 %v1322
  %1842 = vmatpush.bf16.msra.mxu0 %v1320
  %1843 = vmatpush.bf16.msra.mxu0 %v1318
  %1844 = vmatpush.bf16.msra.mxu0 %v1316
  %1845 = vmatpush.bf16.msra.mxu0 %v1314
  %1846 = vmatmul.bf16.gmra.mxu0 %v422
  %v1847 = vpop.f32.mrf.mxu0
  %v1848 = vadd.f32 %v1829, %v1847
  %v1849 = vpop.f32.mrf.mxu0
  %v1850 = vadd.f32 %v1831, %v1849
  %1851 = vmatmul.bf16.gmra.mxu0 %v438
  %v1852 = vpop.f32.mrf.mxu0
  %v1853 = vadd.f32 %v1834, %v1852
  %v1854 = vpop.f32.mrf.mxu0
  %v1855 = vadd.f32 %v1836, %v1854
  %1856 = vdwg.mxu0
  %1857 = vmatpush.bf16.msra.mxu0 %v1344
  %1858 = vmatpush.bf16.msra.mxu0 %v1342
  %1859 = vmatpush.bf16.msra.mxu0 %v1340
  %1860 = vmatpush.bf16.msra.mxu0 %v1338
  %1861 = vmatpush.bf16.msra.mxu0 %v1336
  %1862 = vmatpush.bf16.msra.mxu0 %v1334
  %1863 = vmatpush.bf16.msra.mxu0 %v1332
  %1864 = vmatpush.bf16.msra.mxu0 %v1330
  %1865 = vmatmul.bf16.gmra.mxu0 %v423
  %v1866 = vpop.f32.mrf.mxu0
  %v1867 = vadd.f32 %v1848, %v1866
  %v1868 = vpop.f32.mrf.mxu0
  %v1869 = vadd.f32 %v1850, %v1868
  %1870 = vmatmul.bf16.gmra.mxu0 %v439
  %v1871 = vpop.f32.mrf.mxu0
  %v1872 = vadd.f32 %v1853, %v1871
  %v1873 = vpop.f32.mrf.mxu0
  %v1874 = vadd.f32 %v1855, %v1873
  %1875 = vdwg.mxu0
  %1876 = vmatpush.bf16.msra.mxu0 %v1360
  %1877 = vmatpush.bf16.msra.mxu0 %v1358
  %1878 = vmatpush.bf16.msra.mxu0 %v1356
  %1879 = vmatpush.bf16.msra.mxu0 %v1354
  %1880 = vmatpush.bf16.msra.mxu0 %v1352
  %1881 = vmatpush.bf16.msra.mxu0 %v1350
  %1882 = vmatpush.bf16.msra.mxu0 %v1348
  %1883 = vmatpush.bf16.msra.mxu0 %v1346
  %1884 = vmatmul.bf16.gmra.mxu0 %v424
  %v1885 = vpop.f32.mrf.mxu0
  %v1886 = vadd.f32 %v1867, %v1885
  %v1887 = vpop.f32.mrf.mxu0
  %v1888 = vadd.f32 %v1869, %v1887
  %1889 = vmatmul.bf16.gmra.mxu0 %v440
  %v1890 = vpop.f32.mrf.mxu0
  %v1891 = vadd.f32 %v1872, %v1890
  %v1892 = vpop.f32.mrf.mxu0
  %v1893 = vadd.f32 %v1874, %v1892
  %1894 = vdwg.mxu0
  %1895 = vmatpush.bf16.msra.mxu0 %v1376
  %1896 = vmatpush.bf16.msra.mxu0 %v1374
  %1897 = vmatpush.bf16.msra.mxu0 %v1372
  %1898 = vmatpush.bf16.msra.mxu0 %v1370
  %1899 = vmatpush.bf16.msra.mxu0 %v1368
  %1900 = vmatpush.bf16.msra.mxu0 %v1366
  %1901 = vmatpush.bf16.msra.mxu0 %v1364
  %1902 = vmatpush.bf16.msra.mxu0 %v1362
  %1903 = vmatmul.bf16.gmra.mxu0 %v425
  %v1904 = vpop.f32.mrf.mxu0
  %v1905 = vadd.f32 %v1886, %v1904
  %v1906 = vpop.f32.mrf.mxu0
  %v1907 = vadd.f32 %v1888, %v1906
  %1908 = vmatmul.bf16.gmra.mxu0 %v441
  %v1909 = vpop.f32.mrf.mxu0
  %v1910 = vadd.f32 %v1891, %v1909
  %v1911 = vpop.f32.mrf.mxu0
  %v1912 = vadd.f32 %v1893, %v1911
  %1913 = vdwg.mxu0
  %1914 = vmatpush.bf16.msra.mxu0 %v1392
  %1915 = vmatpush.bf16.msra.mxu0 %v1390
  %1916 = vmatpush.bf16.msra.mxu0 %v1388
  %1917 = vmatpush.bf16.msra.mxu0 %v1386
  %1918 = vmatpush.bf16.msra.mxu0 %v1384
  %1919 = vmatpush.bf16.msra.mxu0 %v1382
  %1920 = vmatpush.bf16.msra.mxu0 %v1380
  %1921 = vmatpush.bf16.msra.mxu0 %v1378
  %1922 = vmatmul.bf16.gmra.mxu0 %v426
  %v1923 = vpop.f32.mrf.mxu0
  %v1924 = vadd.f32 %v1905, %v1923
  %v1925 = vpop.f32.mrf.mxu0
  %v1926 = vadd.f32 %v1907, %v1925
  %1927 = vmatmul.bf16.gmra.mxu0 %v442
  %v1928 = vpop.f32.mrf.mxu0
  %v1929 = vadd.f32 %v1910, %v1928
  %v1930 = vpop.f32.mrf.mxu0
  %v1931 = vadd.f32 %v1912, %v1930
  %1932 = vdwg.mxu0
  %1933 = vmatpush.bf16.msra.mxu0 %v1408
  %1934 = vmatpush.bf16.msra.mxu0 %v1406
  %1935 = vmatpush.bf16.msra.mxu0 %v1404
  %1936 = vmatpush.bf16.msra.mxu0 %v1402
  %1937 = vmatpush.bf16.msra.mxu0 %v1400
  %1938 = vmatpush.bf16.msra.mxu0 %v1398
  %1939 = vmatpush.bf16.msra.mxu0 %v1396
  %1940 = vmatpush.bf16.msra.mxu0 %v1394
  %1941 = vmatmul.bf16.gmra.mxu0 %v427
  %v1942 = vpop.f32.mrf.mxu0
  %v1943 = vadd.f32 %v1924, %v1942
  %v1944 = vpop.f32.mrf.mxu0
  %v1945 = vadd.f32 %v1926, %v1944
  %1946 = vmatmul.bf16.gmra.mxu0 %v443
  %v1947 = vpop.f32.mrf.mxu0
  %v1948 = vadd.f32 %v1929, %v1947
  %v1949 = vpop.f32.mrf.mxu0
  %v1950 = vadd.f32 %v1931, %v1949
  %1951 = vdwg.mxu0
  %1952 = vmatpush.bf16.msra.mxu0 %v1424
  %1953 = vmatpush.bf16.msra.mxu0 %v1422
  %1954 = vmatpush.bf16.msra.mxu0 %v1420
  %1955 = vmatpush.bf16.msra.mxu0 %v1418
  %1956 = vmatpush.bf16.msra.mxu0 %v1416
  %1957 = vmatpush.bf16.msra.mxu0 %v1414
  %1958 = vmatpush.bf16.msra.mxu0 %v1412
  %1959 = vmatpush.bf16.msra.mxu0 %v1410
  %1960 = vmatmul.bf16.gmra.mxu0 %v428
  %v1961 = vpop.f32.mrf.mxu0
  %v1962 = vadd.f32 %v1943, %v1961
  %v1963 = vpop.f32.mrf.mxu0
  %v1964 = vadd.f32 %v1945, %v1963
  %1965 = vmatmul.bf16.gmra.mxu0 %v444
  %v1966 = vpop.f32.mrf.mxu0
  %v1967 = vadd.f32 %v1948, %v1966
  %v1968 = vpop.f32.mrf.mxu0
  %v1969 = vadd.f32 %v1950, %v1968
  %1970 = vdwg.mxu0
  %1971 = vmatpush.bf16.msra.mxu0 %v1440
  %1972 = vmatpush.bf16.msra.mxu0 %v1438
  %1973 = vmatpush.bf16.msra.mxu0 %v1436
  %1974 = vmatpush.bf16.msra.mxu0 %v1434
  %1975 = vmatpush.bf16.msra.mxu0 %v1432
  %1976 = vmatpush.bf16.msra.mxu0 %v1430
  %1977 = vmatpush.bf16.msra.mxu0 %v1428
  %1978 = vmatpush.bf16.msra.mxu0 %v1426
  %1979 = vmatmul.bf16.gmra.mxu0 %v429
  %v1980 = vpop.f32.mrf.mxu0
  %v1981 = vadd.f32 %v1962, %v1980
  %v1982 = vpop.f32.mrf.mxu0
  %v1983 = vadd.f32 %v1964, %v1982
  %1984 = vmatmul.bf16.gmra.mxu0 %v445
  %v1985 = vpop.f32.mrf.mxu0
  %v1986 = vadd.f32 %v1967, %v1985
  %v1987 = vpop.f32.mrf.mxu0
  %v1988 = vadd.f32 %v1969, %v1987
  %1989 = vdwg.mxu0
  %1990 = vmatpush.bf16.msra.mxu0 %v1456
  %1991 = vmatpush.bf16.msra.mxu0 %v1454
  %1992 = vmatpush.bf16.msra.mxu0 %v1452
  %1993 = vmatpush.bf16.msra.mxu0 %v1450
  %1994 = vmatpush.bf16.msra.mxu0 %v1448
  %1995 = vmatpush.bf16.msra.mxu0 %v1446
  %1996 = vmatpush.bf16.msra.mxu0 %v1444
  %1997 = vmatpush.bf16.msra.mxu0 %v1442
  %1998 = vmatmul.bf16.gmra.mxu0 %v430
  %v1999 = vpop.f32.mrf.mxu0
  %v2000 = vadd.f32 %v1981, %v1999
  %v2001 = vpop.f32.mrf.mxu0
  %v2002 = vadd.f32 %v1983, %v2001
  %2003 = vmatmul.bf16.gmra.mxu0 %v446
  %v2004 = vpop.f32.mrf.mxu0
  %v2005 = vadd.f32 %v1986, %v2004
  %v2006 = vpop.f32.mrf.mxu0
  %v2007 = vadd.f32 %v1988, %v2006
  %2008 = vdwg.mxu0
  %2009 = vmatpush.bf16.msra.mxu0 %v1472
  %2010 = vmatpush.bf16.msra.mxu0 %v1470
  %2011 = vmatpush.bf16.msra.mxu0 %v1468
  %2012 = vmatpush.bf16.msra.mxu0 %v1466
  %2013 = vmatpush.bf16.msra.mxu0 %v1464
  %2014 = vmatpush.bf16.msra.mxu0 %v1462
  %2015 = vmatpush.bf16.msra.mxu0 %v1460
  %2016 = vmatpush.bf16.msra.mxu0 %v1458
  %2017 = vmatmul.bf16.gmra.mxu0 %v431
  %v2018 = vpop.f32.mrf.mxu0
  %v2019 = vadd.f32 %v2000, %v2018
  %v2020 = vpop.f32.mrf.mxu0
  %v2021 = vadd.f32 %v2002, %v2020
  %2022 = vmatmul.bf16.gmra.mxu0 %v447
  %v2023 = vpop.f32.mrf.mxu0
  %v2024 = vadd.f32 %v2005, %v2023
  %v2025 = vpop.f32.mrf.mxu0
  %v2026 = vadd.f32 %v2007, %v2025
  %2027 = vdwg.mxu0
  %2028 = vmatpush.bf16.msra.mxu0 %v1488
  %2029 = vmatpush.bf16.msra.mxu0 %v1486
  %2030 = vmatpush.bf16.msra.mxu0 %v1484
  %2031 = vmatpush.bf16.msra.mxu0 %v1482
  %2032 = vmatpush.bf16.msra.mxu0 %v1480
  %2033 = vmatpush.bf16.msra.mxu0 %v1478
  %2034 = vmatpush.bf16.msra.mxu0 %v1476
  %2035 = vmatpush.bf16.msra.mxu0 %v1474
  %2036 = vmatmul.bf16.gmra.mxu0 %v432
  %v2037 = vpop.f32.mrf.mxu0
  %v2038 = vadd.f32 %v2019, %v2037
  %v2039 = vpop.f32.mrf.mxu0
  %v2040 = vadd.f32 %v2021, %v2039
  %2041 = vmatmul.bf16.gmra.mxu0 %v448
  %v2042 = vpop.f32.mrf.mxu0
  %v2043 = vadd.f32 %v2024, %v2042
  %v2044 = vpop.f32.mrf.mxu0
  %v2045 = vadd.f32 %v2026, %v2044
  %2046 = vdwg.mxu0
  %2047 = vmatpush.bf16.msra.mxu0 %v1504
  %2048 = vmatpush.bf16.msra.mxu0 %v1502
  %2049 = vmatpush.bf16.msra.mxu0 %v1500
  %2050 = vmatpush.bf16.msra.mxu0 %v1498
  %2051 = vmatpush.bf16.msra.mxu0 %v1496
  %2052 = vmatpush.bf16.msra.mxu0 %v1494
  %2053 = vmatpush.bf16.msra.mxu0 %v1492
  %2054 = vmatpush.bf16.msra.mxu0 %v1490
  %2055 = vmatmul.bf16.gmra.mxu0 %v433
  %v2056 = vpop.f32.mrf.mxu0
  %v2057 = vadd.f32 %v2038, %v2056
  %v2058 = vpop.f32.mrf.mxu0
  %v2059 = vadd.f32 %v2040, %v2058
  %2060 = vmatmul.bf16.gmra.mxu0 %v449
  %v2061 = vpop.f32.mrf.mxu0
  %v2062 = vadd.f32 %v2043, %v2061
  %v2063 = vpop.f32.mrf.mxu0
  %v2064 = vadd.f32 %v2045, %v2063
  %2065 = vdwg.mxu0
  %2066 = vmatpush.bf16.msra.mxu0 %v1265
  %2067 = vmatpush.bf16.msra.mxu0 %v1263
  %2068 = vmatpush.bf16.msra.mxu0 %v1261
  %2069 = vmatpush.bf16.msra.mxu0 %v1259
  %2070 = vmatpush.bf16.msra.mxu0 %v1257
  %2071 = vmatpush.bf16.msra.mxu0 %v1255
  %2072 = vmatpush.bf16.msra.mxu0 %v1253
  %2073 = vmatpush.bf16.msra.mxu0 %v1251
  %2074 = vmatmul.bf16.gmra.mxu0 %v418
  %v2075 = vpop.f32.mrf.mxu0
  %v2076 = vadd.f32 0.0, %v2075
  %v2077 = vpop.f32.mrf.mxu0
  %v2078 = vadd.f32 0.0, %v2077
  %2079 = vmatmul.bf16.gmra.mxu0 %v434
  %v2080 = vpop.f32.mrf.mxu0
  %v2081 = vadd.f32 0.0, %v2080
  %v2082 = vpop.f32.mrf.mxu0
  %v2083 = vadd.f32 0.0, %v2082
  %2084 = vdwg.mxu0
  %2085 = vmatpush.bf16.msra.mxu0 %v1281
  %2086 = vmatpush.bf16.msra.mxu0 %v1279
  %2087 = vmatpush.bf16.msra.mxu0 %v1277
  %2088 = vmatpush.bf16.msra.mxu0 %v1275
  %2089 = vmatpush.bf16.msra.mxu0 %v1273
  %2090 = vmatpush.bf16.msra.mxu0 %v1271
  %2091 = vmatpush.bf16.msra.mxu0 %v1269
  %2092 = vmatpush.bf16.msra.mxu0 %v1267
  %2093 = vmatmul.bf16.gmra.mxu0 %v419
  %v2094 = vpop.f32.mrf.mxu0
  %v2095 = vadd.f32 %v2076, %v2094
  %v2096 = vpop.f32.mrf.mxu0
  %v2097 = vadd.f32 %v2078, %v2096
  %2098 = vmatmul.bf16.gmra.mxu0 %v435
  %v2099 = vpop.f32.mrf.mxu0
  %v2100 = vadd.f32 %v2081, %v2099
  %v2101 = vpop.f32.mrf.mxu0
  %v2102 = vadd.f32 %v2083, %v2101
  %2103 = vdwg.mxu0
  %2104 = vmatpush.bf16.msra.mxu0 %v1297
  %2105 = vmatpush.bf16.msra.mxu0 %v1295
  %2106 = vmatpush.bf16.msra.mxu0 %v1293
  %2107 = vmatpush.bf16.msra.mxu0 %v1291
  %2108 = vmatpush.bf16.msra.mxu0 %v1289
  %2109 = vmatpush.bf16.msra.mxu0 %v1287
  %2110 = vmatpush.bf16.msra.mxu0 %v1285
  %2111 = vmatpush.bf16.msra.mxu0 %v1283
  %2112 = vmatmul.bf16.gmra.mxu0 %v420
  %v2113 = vpop.f32.mrf.mxu0
  %v2114 = vadd.f32 %v2095, %v2113
  %v2115 = vpop.f32.mrf.mxu0
  %v2116 = vadd.f32 %v2097, %v2115
  %2117 = vmatmul.bf16.gmra.mxu0 %v436
  %v2118 = vpop.f32.mrf.mxu0
  %v2119 = vadd.f32 %v2100, %v2118
  %v2120 = vpop.f32.mrf.mxu0
  %v2121 = vadd.f32 %v2102, %v2120
  %2122 = vdwg.mxu0
  %2123 = vmatpush.bf16.msra.mxu0 %v1313
  %2124 = vmatpush.bf16.msra.mxu0 %v1311
  %2125 = vmatpush.bf16.msra.mxu0 %v1309
  %2126 = vmatpush.bf16.msra.mxu0 %v1307
  %2127 = vmatpush.bf16.msra.mxu0 %v1305
  %2128 = vmatpush.bf16.msra.mxu0 %v1303
  %2129 = vmatpush.bf16.msra.mxu0 %v1301
  %2130 = vmatpush.bf16.msra.mxu0 %v1299
  %2131 = vmatmul.bf16.gmra.mxu0 %v421
  %v2132 = vpop.f32.mrf.mxu0
  %v2133 = vadd.f32 %v2114, %v2132
  %v2134 = vpop.f32.mrf.mxu0
  %v2135 = vadd.f32 %v2116, %v2134
  %2136 = vmatmul.bf16.gmra.mxu0 %v437
  %v2137 = vpop.f32.mrf.mxu0
  %v2138 = vadd.f32 %v2119, %v2137
  %v2139 = vpop.f32.mrf.mxu0
  %v2140 = vadd.f32 %v2121, %v2139
  %2141 = vdwg.mxu0
  %2142 = vmatpush.bf16.msra.mxu0 %v1329
  %2143 = vmatpush.bf16.msra.mxu0 %v1327
  %2144 = vmatpush.bf16.msra.mxu0 %v1325
  %2145 = vmatpush.bf16.msra.mxu0 %v1323
  %2146 = vmatpush.bf16.msra.mxu0 %v1321
  %2147 = vmatpush.bf16.msra.mxu0 %v1319
  %2148 = vmatpush.bf16.msra.mxu0 %v1317
  %2149 = vmatpush.bf16.msra.mxu0 %v1315
  %2150 = vmatmul.bf16.gmra.mxu0 %v422
  %v2151 = vpop.f32.mrf.mxu0
  %v2152 = vadd.f32 %v2133, %v2151
  %v2153 = vpop.f32.mrf.mxu0
  %v2154 = vadd.f32 %v2135, %v2153
  %2155 = vmatmul.bf16.gmra.mxu0 %v438
  %v2156 = vpop.f32.mrf.mxu0
  %v2157 = vadd.f32 %v2138, %v2156
  %v2158 = vpop.f32.mrf.mxu0
  %v2159 = vadd.f32 %v2140, %v2158
  %2160 = vdwg.mxu0
  %2161 = vmatpush.bf16.msra.mxu0 %v1345
  %2162 = vmatpush.bf16.msra.mxu0 %v1343
  %2163 = vmatpush.bf16.msra.mxu0 %v1341
  %2164 = vmatpush.bf16.msra.mxu0 %v1339
  %2165 = vmatpush.bf16.msra.mxu0 %v1337
  %2166 = vmatpush.bf16.msra.mxu0 %v1335
  %2167 = vmatpush.bf16.msra.mxu0 %v1333
  %2168 = vmatpush.bf16.msra.mxu0 %v1331
  %2169 = vmatmul.bf16.gmra.mxu0 %v423
  %v2170 = vpop.f32.mrf.mxu0
  %v2171 = vadd.f32 %v2152, %v2170
  %v2172 = vpop.f32.mrf.mxu0
  %v2173 = vadd.f32 %v2154, %v2172
  %2174 = vmatmul.bf16.gmra.mxu0 %v439
  %v2175 = vpop.f32.mrf.mxu0
  %v2176 = vadd.f32 %v2157, %v2175
  %v2177 = vpop.f32.mrf.mxu0
  %v2178 = vadd.f32 %v2159, %v2177
  %2179 = vdwg.mxu0
  %2180 = vmatpush.bf16.msra.mxu0 %v1361
  %2181 = vmatpush.bf16.msra.mxu0 %v1359
  %2182 = vmatpush.bf16.msra.mxu0 %v1357
  %2183 = vmatpush.bf16.msra.mxu0 %v1355
  %2184 = vmatpush.bf16.msra.mxu0 %v1353
  %2185 = vmatpush.bf16.msra.mxu0 %v1351
  %2186 = vmatpush.bf16.msra.mxu0 %v1349
  %2187 = vmatpush.bf16.msra.mxu0 %v1347
  %2188 = vmatmul.bf16.gmra.mxu0 %v424
  %v2189 = vpop.f32.mrf.mxu0
  %v2190 = vadd.f32 %v2171, %v2189
  %v2191 = vpop.f32.mrf.mxu0
  %v2192 = vadd.f32 %v2173, %v2191
  %2193 = vmatmul.bf16.gmra.mxu0 %v440
  %v2194 = vpop.f32.mrf.mxu0
  %v2195 = vadd.f32 %v2176, %v2194
  %v2196 = vpop.f32.mrf.mxu0
  %v2197 = vadd.f32 %v2178, %v2196
  %2198 = vdwg.mxu0
  %2199 = vmatpush.bf16.msra.mxu0 %v1377
  %2200 = vmatpush.bf16.msra.mxu0 %v1375
  %2201 = vmatpush.bf16.msra.mxu0 %v1373
  %2202 = vmatpush.bf16.msra.mxu0 %v1371
  %2203 = vmatpush.bf16.msra.mxu0 %v1369
  %2204 = vmatpush.bf16.msra.mxu0 %v1367
  %2205 = vmatpush.bf16.msra.mxu0 %v1365
  %2206 = vmatpush.bf16.msra.mxu0 %v1363
  %2207 = vmatmul.bf16.gmra.mxu0 %v425
  %v2208 = vpop.f32.mrf.mxu0
  %v2209 = vadd.f32 %v2190, %v2208
  %v2210 = vpop.f32.mrf.mxu0
  %v2211 = vadd.f32 %v2192, %v2210
  %2212 = vmatmul.bf16.gmra.mxu0 %v441
  %v2213 = vpop.f32.mrf.mxu0
  %v2214 = vadd.f32 %v2195, %v2213
  %v2215 = vpop.f32.mrf.mxu0
  %v2216 = vadd.f32 %v2197, %v2215
  %2217 = vdwg.mxu0
  %2218 = vmatpush.bf16.msra.mxu0 %v1393
  %2219 = vmatpush.bf16.msra.mxu0 %v1391
  %2220 = vmatpush.bf16.msra.mxu0 %v1389
  %2221 = vmatpush.bf16.msra.mxu0 %v1387
  %2222 = vmatpush.bf16.msra.mxu0 %v1385
  %2223 = vmatpush.bf16.msra.mxu0 %v1383
  %2224 = vmatpush.bf16.msra.mxu0 %v1381
  %2225 = vmatpush.bf16.msra.mxu0 %v1379
  %2226 = vmatmul.bf16.gmra.mxu0 %v426
  %v2227 = vpop.f32.mrf.mxu0
  %v2228 = vadd.f32 %v2209, %v2227
  %v2229 = vpop.f32.mrf.mxu0
  %v2230 = vadd.f32 %v2211, %v2229
  %2231 = vmatmul.bf16.gmra.mxu0 %v442
  %v2232 = vpop.f32.mrf.mxu0
  %v2233 = vadd.f32 %v2214, %v2232
  %v2234 = vpop.f32.mrf.mxu0
  %v2235 = vadd.f32 %v2216, %v2234
  %2236 = vdwg.mxu0
  %2237 = vmatpush.bf16.msra.mxu0 %v1409
  %2238 = vmatpush.bf16.msra.mxu0 %v1407
  %2239 = vmatpush.bf16.msra.mxu0 %v1405
  %2240 = vmatpush.bf16.msra.mxu0 %v1403
  %2241 = vmatpush.bf16.msra.mxu0 %v1401
  %2242 = vmatpush.bf16.msra.mxu0 %v1399
  %2243 = vmatpush.bf16.msra.mxu0 %v1397
  %2244 = vmatpush.bf16.msra.mxu0 %v1395
  %2245 = vmatmul.bf16.gmra.mxu0 %v427
  %v2246 = vpop.f32.mrf.mxu0
  %v2247 = vadd.f32 %v2228, %v2246
  %v2248 = vpop.f32.mrf.mxu0
  %v2249 = vadd.f32 %v2230, %v2248
  %2250 = vmatmul.bf16.gmra.mxu0 %v443
  %v2251 = vpop.f32.mrf.mxu0
  %v2252 = vadd.f32 %v2233, %v2251
  %v2253 = vpop.f32.mrf.mxu0
  %v2254 = vadd.f32 %v2235, %v2253
  %2255 = vdwg.mxu0
  %2256 = vmatpush.bf16.msra.mxu0 %v1425
  %2257 = vmatpush.bf16.msra.mxu0 %v1423
  %2258 = vmatpush.bf16.msra.mxu0 %v1421
  %2259 = vmatpush.bf16.msra.mxu0 %v1419
  %2260 = vmatpush.bf16.msra.mxu0 %v1417
  %2261 = vmatpush.bf16.msra.mxu0 %v1415
  %2262 = vmatpush.bf16.msra.mxu0 %v1413
  %2263 = vmatpush.bf16.msra.mxu0 %v1411
  %2264 = vmatmul.bf16.gmra.mxu0 %v428
  %v2265 = vpop.f32.mrf.mxu0
  %v2266 = vadd.f32 %v2247, %v2265
  %v2267 = vpop.f32.mrf.mxu0
  %v2268 = vadd.f32 %v2249, %v2267
  %2269 = vmatmul.bf16.gmra.mxu0 %v444
  %v2270 = vpop.f32.mrf.mxu0
  %v2271 = vadd.f32 %v2252, %v2270
  %v2272 = vpop.f32.mrf.mxu0
  %v2273 = vadd.f32 %v2254, %v2272
  %2274 = vdwg.mxu0
  %2275 = vmatpush.bf16.msra.mxu0 %v1441
  %2276 = vmatpush.bf16.msra.mxu0 %v1439
  %2277 = vmatpush.bf16.msra.mxu0 %v1437
  %2278 = vmatpush.bf16.msra.mxu0 %v1435
  %2279 = vmatpush.bf16.msra.mxu0 %v1433
  %2280 = vmatpush.bf16.msra.mxu0 %v1431
  %2281 = vmatpush.bf16.msra.mxu0 %v1429
  %2282 = vmatpush.bf16.msra.mxu0 %v1427
  %2283 = vmatmul.bf16.gmra.mxu0 %v429
  %v2284 = vpop.f32.mrf.mxu0
  %v2285 = vadd.f32 %v2266, %v2284
  %v2286 = vpop.f32.mrf.mxu0
  %v2287 = vadd.f32 %v2268, %v2286
  %2288 = vmatmul.bf16.gmra.mxu0 %v445
  %v2289 = vpop.f32.mrf.mxu0
  %v2290 = vadd.f32 %v2271, %v2289
  %v2291 = vpop.f32.mrf.mxu0
  %v2292 = vadd.f32 %v2273, %v2291
  %2293 = vdwg.mxu0
  %2294 = vmatpush.bf16.msra.mxu0 %v1457
  %2295 = vmatpush.bf16.msra.mxu0 %v1455
  %2296 = vmatpush.bf16.msra.mxu0 %v1453
  %2297 = vmatpush.bf16.msra.mxu0 %v1451
  %2298 = vmatpush.bf16.msra.mxu0 %v1449
  %2299 = vmatpush.bf16.msra.mxu0 %v1447
  %2300 = vmatpush.bf16.msra.mxu0 %v1445
  %2301 = vmatpush.bf16.msra.mxu0 %v1443
  %2302 = vmatmul.bf16.gmra.mxu0 %v430
  %v2303 = vpop.f32.mrf.mxu0
  %v2304 = vadd.f32 %v2285, %v2303
  %v2305 = vpop.f32.mrf.mxu0
  %v2306 = vadd.f32 %v2287, %v2305
  %2307 = vmatmul.bf16.gmra.mxu0 %v446
  %v2308 = vpop.f32.mrf.mxu0
  %v2309 = vadd.f32 %v2290, %v2308
  %v2310 = vpop.f32.mrf.mxu0
  %v2311 = vadd.f32 %v2292, %v2310
  %2312 = vdwg.mxu0
  %2313 = vmatpush.bf16.msra.mxu0 %v1473
  %2314 = vmatpush.bf16.msra.mxu0 %v1471
  %2315 = vmatpush.bf16.msra.mxu0 %v1469
  %2316 = vmatpush.bf16.msra.mxu0 %v1467
  %2317 = vmatpush.bf16.msra.mxu0 %v1465
  %2318 = vmatpush.bf16.msra.mxu0 %v1463
  %2319 = vmatpush.bf16.msra.mxu0 %v1461
  %2320 = vmatpush.bf16.msra.mxu0 %v1459
  %2321 = vmatmul.bf16.gmra.mxu0 %v431
  %v2322 = vpop.f32.mrf.mxu0
  %v2323 = vadd.f32 %v2304, %v2322
  %v2324 = vpop.f32.mrf.mxu0
  %v2325 = vadd.f32 %v2306, %v2324
  %2326 = vmatmul.bf16.gmra.mxu0 %v447
  %v2327 = vpop.f32.mrf.mxu0
  %v2328 = vadd.f32 %v2309, %v2327
  %v2329 = vpop.f32.mrf.mxu0
  %v2330 = vadd.f32 %v2311, %v2329
  %2331 = vdwg.mxu0
  %2332 = vmatpush.bf16.msra.mxu0 %v1489
  %2333 = vmatpush.bf16.msra.mxu0 %v1487
  %2334 = vmatpush.bf16.msra.mxu0 %v1485
  %2335 = vmatpush.bf16.msra.mxu0 %v1483
  %2336 = vmatpush.bf16.msra.mxu0 %v1481
  %2337 = vmatpush.bf16.msra.mxu0 %v1479
  %2338 = vmatpush.bf16.msra.mxu0 %v1477
  %2339 = vmatpush.bf16.msra.mxu0 %v1475
  %2340 = vmatmul.bf16.gmra.mxu0 %v432
  %v2341 = vpop.f32.mrf.mxu0
  %v2342 = vadd.f32 %v2323, %v2341
  %v2343 = vpop.f32.mrf.mxu0
  %v2344 = vadd.f32 %v2325, %v2343
  %2345 = vmatmul.bf16.gmra.mxu0 %v448
  %v2346 = vpop.f32.mrf.mxu0
  %v2347 = vadd.f32 %v2328, %v2346
  %v2348 = vpop.f32.mrf.mxu0
  %v2349 = vadd.f32 %v2330, %v2348
  %2350 = vdwg.mxu0
  %2351 = vmatpush.bf16.msra.mxu0 %v1505
  %2352 = vmatpush.bf16.msra.mxu0 %v1503
  %2353 = vmatpush.bf16.msra.mxu0 %v1501
  %2354 = vmatpush.bf16.msra.mxu0 %v1499
  %2355 = vmatpush.bf16.msra.mxu0 %v1497
  %2356 = vmatpush.bf16.msra.mxu0 %v1495
  %2357 = vmatpush.bf16.msra.mxu0 %v1493
  %2358 = vmatpush.bf16.msra.mxu0 %v1491
  %2359 = vmatmul.bf16.gmra.mxu0 %v433
  %v2360 = vpop.f32.mrf.mxu0
  %v2361 = vadd.f32 %v2342, %v2360
  %v2362 = vpop.f32.mrf.mxu0
  %v2363 = vadd.f32 %v2344, %v2362
  %2364 = vmatmul.bf16.gmra.mxu0 %v449
  %v2365 = vpop.f32.mrf.mxu0
  %v2366 = vadd.f32 %v2347, %v2365
  %v2367 = vpop.f32.mrf.mxu0
  %v2368 = vadd.f32 %v2349, %v2367
  %2369 = vdwg.mxu0
  %v2370 = vadd.f32 %v26, %v2057
  %v2371 = vadd.f32 %v27, %v2361
  %v2372 = vadd.f32 %v28, %v2059
  %v2373 = vadd.f32 %v29, %v2363
  %v2374 = vadd.f32 %v30, %v2062
  %v2375 = vadd.f32 %v31, %v2366
  %v2376 = vadd.f32 %v32, %v2064
  %v2377 = vadd.f32 %v33, %v2368
  %2378 = vst [vmem:[#allocation2] sm:$0xff] %v2370
  %2379 = vst [vmem:[#allocation2 + $0x8] sm:$0xff] %v2371
  %2380 = vst [vmem:[#allocation2 + $0x10] sm:$0xff] %v2372
  %2381 = vst [vmem:[#allocation2 + $0x18] sm:$0xff] %v2373
  %2382 = vst [vmem:[#allocation2 + $0x20] sm:$0xff] %v2374
  %2383 = vst [vmem:[#allocation2 + $0x28] sm:$0xff] %v2375
  %2384 = vst [vmem:[#allocation2 + $0x30] sm:$0xff] %v2376
  %2385 = vst [vmem:[#allocation2 + $0x38] sm:$0xff] %v2377
  // Predicated region
  $region14: #{discriminator_forward.9} parent=0 // pred_check
    %p2386 = pneg %p14
  $region15: #{discriminator_forward.9} parent=0 // pred_check_branch
    %2388 = sbr.rel (%p2386) target = $region17
  $region16: #{discriminator_forward.9} parent=0 // pred_region
    %v2389 = vld [vmem:[#allocation2] sm:$0xff]
    %v2390 = vld [vmem:[#allocation2 + $0x8] sm:$0xff]
    %v2391 = vld [vmem:[#allocation2 + $0x10] sm:$0xff]
    %v2392 = vld [vmem:[#allocation2 + $0x18] sm:$0xff]
    %v2393 = vld [vmem:[#allocation2 + $0x20] sm:$0xff]
    %v2394 = vld [vmem:[#allocation2 + $0x28] sm:$0xff]
    %v2395 = vld [vmem:[#allocation2 + $0x30] sm:$0xff]
    %v2396 = vld [vmem:[#allocation2 + $0x38] sm:$0xff]
    %v2397 = vpack.c.bf16 %v2390, %v2389
    %v2398 = vpack.c.bf16 %v2392, %v2391
    %v2399 = vpack.c.bf16 %v2394, %v2393
    %v2400 = vpack.c.bf16 %v2396, %v2395
    %2401 = vst [vmem:[%s2] sm:$0xff] %v2397
    %2402 = vst [vmem:[%s2 + $0x8] sm:$0xff] %v2398
    %2403 = vst [vmem:[%s2 + $0x10] sm:$0xff] %v2399
    %2404 = vst [vmem:[%s2 + $0x18] sm:$0xff] %v2400
    %v2405 = vadd.f32 %v2389, %v2391
    %v2406 = vadd.f32 %v2405, %v2393
    %v2407 = vadd.f32 %v2406, %v2395
    %v2408 = vrot.slane %v2407, 4
    %v2409 = vadd.f32 %v2407, %v2408
    %v2410 = vrot.slane %v2409, 2
    %v2411 = vadd.f32 %v2409, %v2410
    %v2412 = vrot.slane %v2411, 1
    %v2413 = vadd.f32 %v2411, %v2412
    %v2414 = vadd.f32 %v2390, %v2392
    %v2415 = vadd.f32 %v2414, %v2394
    %v2416 = vadd.f32 %v2415, %v2396
    %v2417 = vrot.slane %v2416, 4
    %v2418 = vadd.f32 %v2416, %v2417
    %v2419 = vrot.slane %v2418, 2
    %v2420 = vadd.f32 %v2418, %v2419
    %v2421 = vrot.slane %v2420, 1
    %v2422 = vadd.f32 %v2420, %v2421
    %v2423 = vmul.f32 %v2389, %v2389
    %v2424 = vmul.f32 %v2390, %v2390
    %v2425 = vmul.f32 %v2391, %v2391
    %v2426 = vmul.f32 %v2392, %v2392
    %v2427 = vmul.f32 %v2393, %v2393
    %v2428 = vmul.f32 %v2394, %v2394
    %v2429 = vmul.f32 %v2395, %v2395
    %v2430 = vmul.f32 %v2396, %v2396
    %v2431 = vadd.f32 %v2423, %v2425
    %v2432 = vadd.f32 %v2431, %v2427
    %v2433 = vadd.f32 %v2432, %v2429
    %v2434 = vrot.slane %v2433, 4
    %v2435 = vadd.f32 %v2433, %v2434
    %v2436 = vrot.slane %v2435, 2
    %v2437 = vadd.f32 %v2435, %v2436
    %v2438 = vrot.slane %v2437, 1
    %v2439 = vadd.f32 %v2437, %v2438
    %v2440 = vadd.f32 %v2424, %v2426
    %v2441 = vadd.f32 %v2440, %v2428
    %v2442 = vadd.f32 %v2441, %v2430
    %v2443 = vrot.slane %v2442, 4
    %v2444 = vadd.f32 %v2442, %v2443
    %v2445 = vrot.slane %v2444, 2
    %v2446 = vadd.f32 %v2444, %v2445
    %v2447 = vrot.slane %v2446, 1
    %v2448 = vadd.f32 %v2446, %v2447
    %v2449 = vlaneseq
    %v2450 = vshrl.u32 %v2449, 7
    %vm2451 = vcmp.eq.s32.totalorder %v2450, 0
    %v2452 = vsel %vm2451, %v2413, 0.0
    %v2453 = vsel %vm2451, %v2422, 0.0
    %2454 = vst [vmem:[%s3] sm:$0xff] %v2452
    %2455 = vst [vmem:[%s3 + $0x8] sm:$0xff] %v2453
    %v2456 = vsel %vm2451, %v2439, 0.0
    %v2457 = vsel %vm2451, %v2448, 0.0
    %2458 = vst [vmem:[%s4] sm:$0xff] %v2456
    %2459 = vst [vmem:[%s4 + $0x8] sm:$0xff] %v2457
  $region17: #{discriminator_forward.9} parent=0 // pred_fallthru
    _
  // Predicated region
  $region18: #{discriminator_forward.9} parent=0 // pred_check
    _
  $region19: #{discriminator_forward.9} parent=0 // pred_check_branch
    %2461 = sbr.rel (0) target = $region21
  $region20: #{discriminator_forward.9} parent=0 // pred_region
    _
  $region21: #{discriminator_forward.9} parent=0 // pred_fallthru
    _
  // Predicated region
  $region22: #{discriminator_forward.9} parent=0 // pred_check
    _
  $region23: #{discriminator_forward.9} parent=0 // pred_check_branch
    %2463 = sbr.rel (0) target = $region25
  $region24: #{discriminator_forward.9} parent=0 // pred_region
    _
  $region25: #{discriminator_forward.9} parent=0 // pred_fallthru
    _
  // Predicated region
  $region26: #{discriminator_forward.9} parent=0 // pred_check
    _
  $region27: #{discriminator_forward.9} parent=0 // pred_check_branch
    %2465 = sbr.rel (0) target = $region29
  $region28: #{discriminator_forward.9} parent=0 // pred_region
    _
  $region29: #{discriminator_forward.9} parent=0 // pred_fallthru
    _
  // Predicated region
  $region30: #{discriminator_forward.9} parent=0 // pred_check
    _
  $region31: #{discriminator_forward.9} parent=0 // pred_check_branch
    %2467 = sbr.rel (0) target = $region33
  $region32: #{discriminator_forward.9} parent=0 // pred_region
    _
  $region33: #{discriminator_forward.9} parent=0 // pred_fallthru
    _
  // Predicated region
  $region34: #{discriminator_forward.9} parent=0 // pred_check
    _
  $region35: #{discriminator_forward.9} parent=0 // pred_check_branch
    %2469 = sbr.rel (0) target = $region37
  $region36: #{discriminator_forward.9} parent=0 // pred_region
    _
  $region37: #{discriminator_forward.9} parent=0 // pred_fallthru
    _
  // Predicated region
  $region38: #{discriminator_forward.9} parent=0 // pred_check
    _
  $region39: #{discriminator_forward.9} parent=0 // pred_check_branch
    %2471 = sbr.rel (0) target = $region41
  $region40: #{discriminator_forward.9} parent=0 // pred_region
    _
  $region41: #{discriminator_forward.9} parent=0 // pred_fallthru
    _

// kernel: discriminator_forward.10
$region0: #{discriminator_forward.10}
  #allocation0 [shape = 'u32[]', space=smem, size = 0x4, offset = 0x4, fixed_abs, tag = 'smem constant byte address 0x4 - core index']
  #allocation1 [shape = 'u32[72,128]{1,0:T(1,128)}', space=vmem, size = 0x9000, scoped, tag = 'internal scratch']
  %s0 = inlined_call_operand.vmem [shape: bf16[32,256], index: 0, kind: input, shape index: {}, may-alias: {0,3}]
  %s1 = inlined_call_operand.vmem [shape: f32[1,256], index: 1, kind: input, shape index: {}]
  %s2 = inlined_call_operand.vmem [shape: f32[1,256], index: 2, kind: input, shape index: {}]
  %s3 = inlined_call_operand.vmem [shape: bf16[32,256], index: 3, kind: output, shape index: {}, may-alias: {0,3}]
  %s4 = sld [smem:[#allocation0]]
  $region22: #{discriminator_forward.10} parent=0
    _
  %s6 = ssub.s32 1, %s4
  %s7 = scalar_select 0, %s6, %s4
  // Predicated region
  $region2: #{discriminator_forward.10} parent=0 // pred_check
    _
  $region3: #{discriminator_forward.10} parent=0 // pred_check_branch
    %9 = sbr.rel (0) target = $region5
  $region4: #{discriminator_forward.10} parent=0 // pred_region
    _
  $region5: #{discriminator_forward.10} parent=0 // pred_fallthru
    _
  // Predicated region
  $region6: #{discriminator_forward.10} parent=0 // pred_check
    _
  $region7: #{discriminator_forward.10} parent=0 // pred_check_branch
    %11 = sbr.rel (0) target = $region9
  $region8: #{discriminator_forward.10} parent=0 // pred_region
    _
  $region9: #{discriminator_forward.10} parent=0 // pred_fallthru
    _
  // Predicated region
  $region10: #{discriminator_forward.10} parent=0 // pred_check
    _
  $region11: #{discriminator_forward.10} parent=0 // pred_check_branch
    %13 = sbr.rel (0) target = $region13
  $region12: #{discriminator_forward.10} parent=0 // pred_region
    _
  $region13: #{discriminator_forward.10} parent=0 // pred_fallthru
    _
  %v14 = vld [vmem:[%s0] sm:$0xff]
  %v15 = vld [vmem:[%s0 + $0x8] sm:$0xff]
  %v16 = vld [vmem:[%s0 + $0x10] sm:$0xff]
  %v17 = vld [vmem:[%s0 + $0x18] sm:$0xff]
  %v18 = vunpack.c.l.bf16 %v14
  %v19 = vunpack.c.h.bf16 %v14
  %v20 = vunpack.c.l.bf16 %v15
  %v21 = vunpack.c.h.bf16 %v15
  %v22 = vunpack.c.l.bf16 %v16
  %v23 = vunpack.c.h.bf16 %v16
  %v24 = vunpack.c.l.bf16 %v17
  %v25 = vunpack.c.h.bf16 %v17
  %v26 = vld [vmem:[%s1] sm:$0x3]
  %v28 = vperm.slane %v26, 0
  %v29 = vperm.slane %v26, 1
  %v32 = vmul.f32 %v18, %v28
  %v33 = vmul.f32 %v19, %v29
  %v34 = vmul.f32 %v20, %v28
  %v35 = vmul.f32 %v21, %v29
  %v36 = vmul.f32 %v22, %v28
  %v37 = vmul.f32 %v23, %v29
  %v38 = vmul.f32 %v24, %v28
  %v39 = vmul.f32 %v25, %v29
  %v40 = vld [vmem:[%s2] sm:$0x3]
  %v42 = vperm.slane %v40, 0
  %v43 = vperm.slane %v40, 1
  %v46 = vadd.f32 %v32, %v42
  %v47 = vadd.f32 %v33, %v43
  %v48 = vadd.f32 %v34, %v42
  %v49 = vadd.f32 %v35, %v43
  %v50 = vadd.f32 %v36, %v42
  %v51 = vadd.f32 %v37, %v43
  %v52 = vadd.f32 %v38, %v42
  %v53 = vadd.f32 %v39, %v43
  %vm54 = vcmp.gt.f32.partialorder %v46, 0.0
  %vm55 = vcmp.gt.f32.partialorder %v47, 0.0
  %vm56 = vcmp.gt.f32.partialorder %v48, 0.0
  %vm57 = vcmp.gt.f32.partialorder %v49, 0.0
  %vm58 = vcmp.gt.f32.partialorder %v50, 0.0
  %vm59 = vcmp.gt.f32.partialorder %v51, 0.0
  %vm60 = vcmp.gt.f32.partialorder %v52, 0.0
  %vm61 = vcmp.gt.f32.partialorder %v53, 0.0
  %v62 = vmul.f32 %v46, 0.2
  %v63 = vmul.f32 %v47, 0.2
  %v64 = vmul.f32 %v48, 0.2
  %v65 = vmul.f32 %v49, 0.2
  %v66 = vmul.f32 %v50, 0.2
  %v67 = vmul.f32 %v51, 0.2
  %v68 = vmul.f32 %v52, 0.2
  %v69 = vmul.f32 %v53, 0.2
  %v70 = vsel %vm54, %v46, %v62
  %v71 = vsel %vm55, %v47, %v63
  %v72 = vsel %vm56, %v48, %v64
  %v73 = vsel %vm57, %v49, %v65
  %v74 = vsel %vm58, %v50, %v66
  %v75 = vsel %vm59, %v51, %v67
  %v76 = vsel %vm60, %v52, %v68
  %v77 = vsel %vm61, %v53, %v69
  %v78 = vpack.c.bf16 %v71, %v70
  %v79 = vpack.c.bf16 %v73, %v72
  %v80 = vpack.c.bf16 %v75, %v74
  %v81 = vpack.c.bf16 %v77, %v76
  %82 = vst [vmem:[%s3] sm:$0xff] %v78
  %83 = vst [vmem:[%s3 + $0x8] sm:$0xff] %v79
  %84 = vst [vmem:[%s3 + $0x10] sm:$0xff] %v80
  %85 = vst [vmem:[%s3 + $0x18] sm:$0xff] %v81
  // Predicated region
  $region14: #{discriminator_forward.10} parent=0 // pred_check
    _
  $region15: #{discriminator_forward.10} parent=0 // pred_check_branch
    %87 = sbr.rel (0) target = $region17
  $region16: #{discriminator_forward.10} parent=0 // pred_region
    _
  $region17: #{discriminator_forward.10} parent=0 // pred_fallthru
    _
  // Predicated region
  $region18: #{discriminator_forward.10} parent=0 // pred_check
    _
  $region19: #{discriminator_forward.10} parent=0 // pred_check_branch
    %89 = sbr.rel (0) target = $region21
  $region20: #{discriminator_forward.10} parent=0 // pred_region
    _
  $region21: #{discriminator_forward.10} parent=0 // pred_fallthru
    _

// kernel: discriminator_forward.11
$region0: #{discriminator_forward.11}
  #allocation0 [shape = 'u32[]', space=smem, size = 0x4, offset = 0x4, fixed_abs, tag = 'smem constant byte address 0x4 - core index']
  #allocation1 [shape = 'u32[72,128]{1,0:T(1,128)}', space=vmem, size = 0x9000, scoped, tag = 'internal scratch']
  #allocation2 [shape = 'f32[2,128]{1,0:T(2,128)}', space=vmem, size = 0x400, scoped, tag = 'scratch operand']
  %s0 = inlined_call_operand.vmem [shape: bf16[2,4096], index: 0, kind: input, shape index: {}]
  %s1 = inlined_call_operand.vmem [shape: bf16[4096,128], index: 1, kind: input, shape index: {}]
  %s2 = inlined_call_operand.hbm [shape: f32[2,128], index: 2, kind: output, shape index: {}]
  %s3 = sld [smem:[#allocation0]]
  $region26: #{discriminator_forward.11} parent=0
    _
  %s5 = ssub.s32 1, %s3
  %s6 = scalar_select 0, %s5, %s3
  $region1: #{discriminator_forward.11} parent=0
    #allocation3 [shape = 'u8[1024]{0}', space=vmem, size = 0x400, scoped, tag = 'output window, operand 0, single buffered']
    #allocation4 [shape = 's32[1]{0}', space=sflag, size = 0x4, scoped, tag = 'scoped memory for discriminator_forward.11']
    %7 = vsyncpa [#allocation4], 0
    // Predicated region
    $region2: #{discriminator_forward.11} parent=1 // pred_check
      _
    $region3: #{discriminator_forward.11} parent=1 // pred_check_branch
      %9 = sbr.rel (0) target = $region5
    $region4: #{discriminator_forward.11} parent=1 // pred_region
      _
    $region5: #{discriminator_forward.11} parent=1 // pred_fallthru
      _
    // Predicated region
    $region6: #{discriminator_forward.11} parent=1 // pred_check
      _
    $region7: #{discriminator_forward.11} parent=1 // pred_check_branch
      %11 = sbr.rel (0) target = $region9
    $region8: #{discriminator_forward.11} parent=1 // pred_region
      _
    $region9: #{discriminator_forward.11} parent=1 // pred_fallthru
      _
    %p12 = scmp.eq.s32.totalorder 0, 0
    // Predicated region
    $region10: #{discriminator_forward.11} parent=1 // pred_check
      %p13 = pneg %p12
    $region11: #{discriminator_forward.11} parent=1 // pred_check_branch
      %15 = sbr.rel (%p13) target = $region13
    $region12: #{discriminator_forward.11} parent=1 // pred_region
      %16 = vst [vmem:[#allocation2] sm:$0x3] 0.0
    $region13: #{discriminator_forward.11} parent=1 // pred_fallthru
      _
    %v17 = vld [vmem:[#allocation2] sm:$0x3]
    %v18 = vld [vmem:[%s0] sm:$0xff]
    %v19 = vld [vmem:[%s0 + $0x8] sm:$0xff]
    %v20 = vld [vmem:[%s0 + $0x10] sm:$0xff]
    %v21 = vld [vmem:[%s0 + $0x18] sm:$0xff]
    %v22 = vld [vmem:[%s1] sm:$0xf]
    %v23 = vld [vmem:[%s1 + $0x4] sm:$0xf]
    %v24 = vld [vmem:[%s1 + $0x8] sm:$0xf]
    %v25 = vld [vmem:[%s1 + $0xc] sm:$0xf]
    %v26 = vld [vmem:[%s1 + $0x10] sm:$0xf]
    %v27 = vld [vmem:[%s1 + $0x14] sm:$0xf]
    %v28 = vld [vmem:[%s1 + $0x18] sm:$0xf]
    %v29 = vld [vmem:[%s1 + $0x1c] sm:$0xf]
    %v30 = vld [vmem:[%s1 + $0x20] sm:$0xf]
    %v31 = vld [vmem:[%s1 + $0x24] sm:$0xf]
    %v32 = vld [vmem:[%s1 + $0x28] sm:$0xf]
    %v33 = vld [vmem:[%s1 + $0x2c] sm:$0xf]
    %v34 = vld [vmem:[%s1 + $0x30] sm:$0xf]
    %v35 = vld [vmem:[%s1 + $0x34] sm:$0xf]
    %v36 = vld [vmem:[%s1 + $0x38] sm:$0xf]
    %v37 = vld [vmem:[%s1 + $0x3c] sm:$0xf]
    %v38 = vld [vmem:[%s1 + $0x40] sm:$0xf]
    %v39 = vld [vmem:[%s1 + $0x44] sm:$0xf]
    %v40 = vld [vmem:[%s1 + $0x48] sm:$0xf]
    %v41 = vld [vmem:[%s1 + $0x4c] sm:$0xf]
    %v42 = vld [vmem:[%s1 + $0x50] sm:$0xf]
    %v43 = vld [vmem:[%s1 + $0x54] sm:$0xf]
    %v44 = vld [vmem:[%s1 + $0x58] sm:$0xf]
    %v45 = vld [vmem:[%s1 + $0x5c] sm:$0xf]
    %v46 = vld [vmem:[%s1 + $0x60] sm:$0xf]
    %v47 = vld [vmem:[%s1 + $0x64] sm:$0xf]
    %v48 = vld [vmem:[%s1 + $0x68] sm:$0xf]
    %v49 = vld [vmem:[%s1 + $0x6c] sm:$0xf]
    %v50 = vld [vmem:[%s1 + $0x70] sm:$0xf]
    %v51 = vld [vmem:[%s1 + $0x74] sm:$0xf]
    %v52 = vld [vmem:[%s1 + $0x78] sm:$0xf]
    %v53 = vld [vmem:[%s1 + $0x7c] sm:$0xf]
    %v54 = vld [vmem:[%s1 + $0x80] sm:$0xf]
    %v55 = vld [vmem:[%s1 + $0x84] sm:$0xf]
    %v56 = vld [vmem:[%s1 + $0x88] sm:$0xf]
    %v57 = vld [vmem:[%s1 + $0x8c] sm:$0xf]
    %v58 = vld [vmem:[%s1 + $0x90] sm:$0xf]
    %v59 = vld [vmem:[%s1 + $0x94] sm:$0xf]
    %v60 = vld [vmem:[%s1 + $0x98] sm:$0xf]
    %v61 = vld [vmem:[%s1 + $0x9c] sm:$0xf]
    %v62 = vld [vmem:[%s1 + $0xa0] sm:$0xf]
    %v63 = vld [vmem:[%s1 + $0xa4] sm:$0xf]
    %v64 = vld [vmem:[%s1 + $0xa8] sm:$0xf]
    %v65 = vld [vmem:[%s1 + $0xac] sm:$0xf]
    %v66 = vld [vmem:[%s1 + $0xb0] sm:$0xf]
    %v67 = vld [vmem:[%s1 + $0xb4] sm:$0xf]
    %v68 = vld [vmem:[%s1 + $0xb8] sm:$0xf]
    %v69 = vld [vmem:[%s1 + $0xbc] sm:$0xf]
    %v70 = vld [vmem:[%s1 + $0xc0] sm:$0xf]
    %v71 = vld [vmem:[%s1 + $0xc4] sm:$0xf]
    %v72 = vld [vmem:[%s1 + $0xc8] sm:$0xf]
    %v73 = vld [vmem:[%s1 + $0xcc] sm:$0xf]
    %v74 = vld [vmem:[%s1 + $0xd0] sm:$0xf]
    %v75 = vld [vmem:[%s1 + $0xd4] sm:$0xf]
    %v76 = vld [vmem:[%s1 + $0xd8] sm:$0xf]
    %v77 = vld [vmem:[%s1 + $0xdc] sm:$0xf]
    %v78 = vld [vmem:[%s1 + $0xe0] sm:$0xf]
    %v79 = vld [vmem:[%s1 + $0xe4] sm:$0xf]
    %v80 = vld [vmem:[%s1 + $0xe8] sm:$0xf]
    %v81 = vld [vmem:[%s1 + $0xec] sm:$0xf]
    %v82 = vld [vmem:[%s1 + $0xf0] sm:$0xf]
    %v83 = vld [vmem:[%s1 + $0xf4] sm:$0xf]
    %v84 = vld [vmem:[%s1 + $0xf8] sm:$0xf]
    %v85 = vld [vmem:[%s1 + $0xfc] sm:$0xf]
    %v86 = vld [vmem:[%s1 + $0x100] sm:$0xf]
    %v87 = vld [vmem:[%s1 + $0x104] sm:$0xf]
    %v88 = vld [vmem:[%s1 + $0x108] sm:$0xf]
    %v89 = vld [vmem:[%s1 + $0x10c] sm:$0xf]
    %v90 = vld [vmem:[%s1 + $0x110] sm:$0xf]
    %v91 = vld [vmem:[%s1 + $0x114] sm:$0xf]
    %v92 = vld [vmem:[%s1 + $0x118] sm:$0xf]
    %v93 = vld [vmem:[%s1 + $0x11c] sm:$0xf]
    %v94 = vld [vmem:[%s1 + $0x120] sm:$0xf]
    %v95 = vld [vmem:[%s1 + $0x124] sm:$0xf]
    %v96 = vld [vmem:[%s1 + $0x128] sm:$0xf]
    %v97 = vld [vmem:[%s1 + $0x12c] sm:$0xf]
    %v98 = vld [vmem:[%s1 + $0x130] sm:$0xf]
    %v99 = vld [vmem:[%s1 + $0x134] sm:$0xf]
    %v100 = vld [vmem:[%s1 + $0x138] sm:$0xf]
    %v101 = vld [vmem:[%s1 + $0x13c] sm:$0xf]
    %v102 = vld [vmem:[%s1 + $0x140] sm:$0xf]
    %v103 = vld [vmem:[%s1 + $0x144] sm:$0xf]
    %v104 = vld [vmem:[%s1 + $0x148] sm:$0xf]
    %v105 = vld [vmem:[%s1 + $0x14c] sm:$0xf]
    %v106 = vld [vmem:[%s1 + $0x150] sm:$0xf]
    %v107 = vld [vmem:[%s1 + $0x154] sm:$0xf]
    %v108 = vld [vmem:[%s1 + $0x158] sm:$0xf]
    %v109 = vld [vmem:[%s1 + $0x15c] sm:$0xf]
    %v110 = vld [vmem:[%s1 + $0x160] sm:$0xf]
    %v111 = vld [vmem:[%s1 + $0x164] sm:$0xf]
    %v112 = vld [vmem:[%s1 + $0x168] sm:$0xf]
    %v113 = vld [vmem:[%s1 + $0x16c] sm:$0xf]
    %v114 = vld [vmem:[%s1 + $0x170] sm:$0xf]
    %v115 = vld [vmem:[%s1 + $0x174] sm:$0xf]
    %v116 = vld [vmem:[%s1 + $0x178] sm:$0xf]
    %v117 = vld [vmem:[%s1 + $0x17c] sm:$0xf]
    %v118 = vld [vmem:[%s1 + $0x180] sm:$0xf]
    %v119 = vld [vmem:[%s1 + $0x184] sm:$0xf]
    %v120 = vld [vmem:[%s1 + $0x188] sm:$0xf]
    %v121 = vld [vmem:[%s1 + $0x18c] sm:$0xf]
    %v122 = vld [vmem:[%s1 + $0x190] sm:$0xf]
    %v123 = vld [vmem:[%s1 + $0x194] sm:$0xf]
    %v124 = vld [vmem:[%s1 + $0x198] sm:$0xf]
    %v125 = vld [vmem:[%s1 + $0x19c] sm:$0xf]
    %v126 = vld [vmem:[%s1 + $0x1a0] sm:$0xf]
    %v127 = vld [vmem:[%s1 + $0x1a4] sm:$0xf]
    %v128 = vld [vmem:[%s1 + $0x1a8] sm:$0xf]
    %v129 = vld [vmem:[%s1 + $0x1ac] sm:$0xf]
    %v130 = vld [vmem:[%s1 + $0x1b0] sm:$0xf]
    %v131 = vld [vmem:[%s1 + $0x1b4] sm:$0xf]
    %v132 = vld [vmem:[%s1 + $0x1b8] sm:$0xf]
    %v133 = vld [vmem:[%s1 + $0x1bc] sm:$0xf]
    %v134 = vld [vmem:[%s1 + $0x1c0] sm:$0xf]
    %v135 = vld [vmem:[%s1 + $0x1c4] sm:$0xf]
    %v136 = vld [vmem:[%s1 + $0x1c8] sm:$0xf]
    %v137 = vld [vmem:[%s1 + $0x1cc] sm:$0xf]
    %v138 = vld [vmem:[%s1 + $0x1d0] sm:$0xf]
    %v139 = vld [vmem:[%s1 + $0x1d4] sm:$0xf]
    %v140 = vld [vmem:[%s1 + $0x1d8] sm:$0xf]
    %v141 = vld [vmem:[%s1 + $0x1dc] sm:$0xf]
    %v142 = vld [vmem:[%s1 + $0x1e0] sm:$0xf]
    %v143 = vld [vmem:[%s1 + $0x1e4] sm:$0xf]
    %v144 = vld [vmem:[%s1 + $0x1e8] sm:$0xf]
    %v145 = vld [vmem:[%s1 + $0x1ec] sm:$0xf]
    %v146 = vld [vmem:[%s1 + $0x1f0] sm:$0xf]
    %v147 = vld [vmem:[%s1 + $0x1f4] sm:$0xf]
    %v148 = vld [vmem:[%s1 + $0x1f8] sm:$0xf]
    %v149 = vld [vmem:[%s1 + $0x1fc] sm:$0xf]
    %v150 = vld [vmem:[%s1 + $0x200] sm:$0xf]
    %v151 = vld [vmem:[%s1 + $0x204] sm:$0xf]
    %v152 = vld [vmem:[%s1 + $0x208] sm:$0xf]
    %v153 = vld [vmem:[%s1 + $0x20c] sm:$0xf]
    %v154 = vld [vmem:[%s1 + $0x210] sm:$0xf]
    %v155 = vld [vmem:[%s1 + $0x214] sm:$0xf]
    %v156 = vld [vmem:[%s1 + $0x218] sm:$0xf]
    %v157 = vld [vmem:[%s1 + $0x21c] sm:$0xf]
    %v158 = vld [vmem:[%s1 + $0x220] sm:$0xf]
    %v159 = vld [vmem:[%s1 + $0x224] sm:$0xf]
    %v160 = vld [vmem:[%s1 + $0x228] sm:$0xf]
    %v161 = vld [vmem:[%s1 + $0x22c] sm:$0xf]
    %v162 = vld [vmem:[%s1 + $0x230] sm:$0xf]
    %v163 = vld [vmem:[%s1 + $0x234] sm:$0xf]
    %v164 = vld [vmem:[%s1 + $0x238] sm:$0xf]
    %v165 = vld [vmem:[%s1 + $0x23c] sm:$0xf]
    %v166 = vld [vmem:[%s1 + $0x240] sm:$0xf]
    %v167 = vld [vmem:[%s1 + $0x244] sm:$0xf]
    %v168 = vld [vmem:[%s1 + $0x248] sm:$0xf]
    %v169 = vld [vmem:[%s1 + $0x24c] sm:$0xf]
    %v170 = vld [vmem:[%s1 + $0x250] sm:$0xf]
    %v171 = vld [vmem:[%s1 + $0x254] sm:$0xf]
    %v172 = vld [vmem:[%s1 + $0x258] sm:$0xf]
    %v173 = vld [vmem:[%s1 + $0x25c] sm:$0xf]
    %v174 = vld [vmem:[%s1 + $0x260] sm:$0xf]
    %v175 = vld [vmem:[%s1 + $0x264] sm:$0xf]
    %v176 = vld [vmem:[%s1 + $0x268] sm:$0xf]
    %v177 = vld [vmem:[%s1 + $0x26c] sm:$0xf]
    %v178 = vld [vmem:[%s1 + $0x270] sm:$0xf]
    %v179 = vld [vmem:[%s1 + $0x274] sm:$0xf]
    %v180 = vld [vmem:[%s1 + $0x278] sm:$0xf]
    %v181 = vld [vmem:[%s1 + $0x27c] sm:$0xf]
    %v182 = vld [vmem:[%s1 + $0x280] sm:$0xf]
    %v183 = vld [vmem:[%s1 + $0x284] sm:$0xf]
    %v184 = vld [vmem:[%s1 + $0x288] sm:$0xf]
    %v185 = vld [vmem:[%s1 + $0x28c] sm:$0xf]
    %v186 = vld [vmem:[%s1 + $0x290] sm:$0xf]
    %v187 = vld [vmem:[%s1 + $0x294] sm:$0xf]
    %v188 = vld [vmem:[%s1 + $0x298] sm:$0xf]
    %v189 = vld [vmem:[%s1 + $0x29c] sm:$0xf]
    %v190 = vld [vmem:[%s1 + $0x2a0] sm:$0xf]
    %v191 = vld [vmem:[%s1 + $0x2a4] sm:$0xf]
    %v192 = vld [vmem:[%s1 + $0x2a8] sm:$0xf]
    %v193 = vld [vmem:[%s1 + $0x2ac] sm:$0xf]
    %v194 = vld [vmem:[%s1 + $0x2b0] sm:$0xf]
    %v195 = vld [vmem:[%s1 + $0x2b4] sm:$0xf]
    %v196 = vld [vmem:[%s1 + $0x2b8] sm:$0xf]
    %v197 = vld [vmem:[%s1 + $0x2bc] sm:$0xf]
    %v198 = vld [vmem:[%s1 + $0x2c0] sm:$0xf]
    %v199 = vld [vmem:[%s1 + $0x2c4] sm:$0xf]
    %v200 = vld [vmem:[%s1 + $0x2c8] sm:$0xf]
    %v201 = vld [vmem:[%s1 + $0x2cc] sm:$0xf]
    %v202 = vld [vmem:[%s1 + $0x2d0] sm:$0xf]
    %v203 = vld [vmem:[%s1 + $0x2d4] sm:$0xf]
    %v204 = vld [vmem:[%s1 + $0x2d8] sm:$0xf]
    %v205 = vld [vmem:[%s1 + $0x2dc] sm:$0xf]
    %v206 = vld [vmem:[%s1 + $0x2e0] sm:$0xf]
    %v207 = vld [vmem:[%s1 + $0x2e4] sm:$0xf]
    %v208 = vld [vmem:[%s1 + $0x2e8] sm:$0xf]
    %v209 = vld [vmem:[%s1 + $0x2ec] sm:$0xf]
    %v210 = vld [vmem:[%s1 + $0x2f0] sm:$0xf]
    %v211 = vld [vmem:[%s1 + $0x2f4] sm:$0xf]
    %v212 = vld [vmem:[%s1 + $0x2f8] sm:$0xf]
    %v213 = vld [vmem:[%s1 + $0x2fc] sm:$0xf]
    %v214 = vld [vmem:[%s1 + $0x300] sm:$0xf]
    %v215 = vld [vmem:[%s1 + $0x304] sm:$0xf]
    %v216 = vld [vmem:[%s1 + $0x308] sm:$0xf]
    %v217 = vld [vmem:[%s1 + $0x30c] sm:$0xf]
    %v218 = vld [vmem:[%s1 + $0x310] sm:$0xf]
    %v219 = vld [vmem:[%s1 + $0x314] sm:$0xf]
    %v220 = vld [vmem:[%s1 + $0x318] sm:$0xf]
    %v221 = vld [vmem:[%s1 + $0x31c] sm:$0xf]
    %v222 = vld [vmem:[%s1 + $0x320] sm:$0xf]
    %v223 = vld [vmem:[%s1 + $0x324] sm:$0xf]
    %v224 = vld [vmem:[%s1 + $0x328] sm:$0xf]
    %v225 = vld [vmem:[%s1 + $0x32c] sm:$0xf]
    %v226 = vld [vmem:[%s1 + $0x330] sm:$0xf]
    %v227 = vld [vmem:[%s1 + $0x334] sm:$0xf]
    %v228 = vld [vmem:[%s1 + $0x338] sm:$0xf]
    %v229 = vld [vmem:[%s1 + $0x33c] sm:$0xf]
    %v230 = vld [vmem:[%s1 + $0x340] sm:$0xf]
    %v231 = vld [vmem:[%s1 + $0x344] sm:$0xf]
    %v232 = vld [vmem:[%s1 + $0x348] sm:$0xf]
    %v233 = vld [vmem:[%s1 + $0x34c] sm:$0xf]
    %v234 = vld [vmem:[%s1 + $0x350] sm:$0xf]
    %v235 = vld [vmem:[%s1 + $0x354] sm:$0xf]
    %v236 = vld [vmem:[%s1 + $0x358] sm:$0xf]
    %v237 = vld [vmem:[%s1 + $0x35c] sm:$0xf]
    %v238 = vld [vmem:[%s1 + $0x360] sm:$0xf]
    %v239 = vld [vmem:[%s1 + $0x364] sm:$0xf]
    %v240 = vld [vmem:[%s1 + $0x368] sm:$0xf]
    %v241 = vld [vmem:[%s1 + $0x36c] sm:$0xf]
    %v242 = vld [vmem:[%s1 + $0x370] sm:$0xf]
    %v243 = vld [vmem:[%s1 + $0x374] sm:$0xf]
    %v244 = vld [vmem:[%s1 + $0x378] sm:$0xf]
    %v245 = vld [vmem:[%s1 + $0x37c] sm:$0xf]
    %v246 = vld [vmem:[%s1 + $0x380] sm:$0xf]
    %v247 = vld [vmem:[%s1 + $0x384] sm:$0xf]
    %v248 = vld [vmem:[%s1 + $0x388] sm:$0xf]
    %v249 = vld [vmem:[%s1 + $0x38c] sm:$0xf]
    %v250 = vld [vmem:[%s1 + $0x390] sm:$0xf]
    %v251 = vld [vmem:[%s1 + $0x394] sm:$0xf]
    %v252 = vld [vmem:[%s1 + $0x398] sm:$0xf]
    %v253 = vld [vmem:[%s1 + $0x39c] sm:$0xf]
    %v254 = vld [vmem:[%s1 + $0x3a0] sm:$0xf]
    %v255 = vld [vmem:[%s1 + $0x3a4] sm:$0xf]
    %v256 = vld [vmem:[%s1 + $0x3a8] sm:$0xf]
    %v257 = vld [vmem:[%s1 + $0x3ac] sm:$0xf]
    %v258 = vld [vmem:[%s1 + $0x3b0] sm:$0xf]
    %v259 = vld [vmem:[%s1 + $0x3b4] sm:$0xf]
    %v260 = vld [vmem:[%s1 + $0x3b8] sm:$0xf]
    %v261 = vld [vmem:[%s1 + $0x3bc] sm:$0xf]
    %v262 = vld [vmem:[%s1 + $0x3c0] sm:$0xf]
    %v263 = vld [vmem:[%s1 + $0x3c4] sm:$0xf]
    %v264 = vld [vmem:[%s1 + $0x3c8] sm:$0xf]
    %v265 = vld [vmem:[%s1 + $0x3cc] sm:$0xf]
    %v266 = vld [vmem:[%s1 + $0x3d0] sm:$0xf]
    %v267 = vld [vmem:[%s1 + $0x3d4] sm:$0xf]
    %v268 = vld [vmem:[%s1 + $0x3d8] sm:$0xf]
    %v269 = vld [vmem:[%s1 + $0x3dc] sm:$0xf]
    %v270 = vld [vmem:[%s1 + $0x3e0] sm:$0xf]
    %v271 = vld [vmem:[%s1 + $0x3e4] sm:$0xf]
    %v272 = vld [vmem:[%s1 + $0x3e8] sm:$0xf]
    %v273 = vld [vmem:[%s1 + $0x3ec] sm:$0xf]
    %v274 = vld [vmem:[%s1 + $0x3f0] sm:$0xf]
    %v275 = vld [vmem:[%s1 + $0x3f4] sm:$0xf]
    %v276 = vld [vmem:[%s1 + $0x3f8] sm:$0xf]
    %v277 = vld [vmem:[%s1 + $0x3fc] sm:$0xf]
    %v278 = vld [vmem:[%s1 + $0x400] sm:$0xf]
    %v279 = vld [vmem:[%s1 + $0x404] sm:$0xf]
    %v280 = vld [vmem:[%s1 + $0x408] sm:$0xf]
    %v281 = vld [vmem:[%s1 + $0x40c] sm:$0xf]
    %v282 = vld [vmem:[%s1 + $0x410] sm:$0xf]
    %v283 = vld [vmem:[%s1 + $0x414] sm:$0xf]
    %v284 = vld [vmem:[%s1 + $0x418] sm:$0xf]
    %v285 = vld [vmem:[%s1 + $0x41c] sm:$0xf]
    %v286 = vld [vmem:[%s1 + $0x420] sm:$0xf]
    %v287 = vld [vmem:[%s1 + $0x424] sm:$0xf]
    %v288 = vld [vmem:[%s1 + $0x428] sm:$0xf]
    %v289 = vld [vmem:[%s1 + $0x42c] sm:$0xf]
    %v290 = vld [vmem:[%s1 + $0x430] sm:$0xf]
    %v291 = vld [vmem:[%s1 + $0x434] sm:$0xf]
    %v292 = vld [vmem:[%s1 + $0x438] sm:$0xf]
    %v293 = vld [vmem:[%s1 + $0x43c] sm:$0xf]
    %v294 = vld [vmem:[%s1 + $0x440] sm:$0xf]
    %v295 = vld [vmem:[%s1 + $0x444] sm:$0xf]
    %v296 = vld [vmem:[%s1 + $0x448] sm:$0xf]
    %v297 = vld [vmem:[%s1 + $0x44c] sm:$0xf]
    %v298 = vld [vmem:[%s1 + $0x450] sm:$0xf]
    %v299 = vld [vmem:[%s1 + $0x454] sm:$0xf]
    %v300 = vld [vmem:[%s1 + $0x458] sm:$0xf]
    %v301 = vld [vmem:[%s1 + $0x45c] sm:$0xf]
    %v302 = vld [vmem:[%s1 + $0x460] sm:$0xf]
    %v303 = vld [vmem:[%s1 + $0x464] sm:$0xf]
    %v304 = vld [vmem:[%s1 + $0x468] sm:$0xf]
    %v305 = vld [vmem:[%s1 + $0x46c] sm:$0xf]
    %v306 = vld [vmem:[%s1 + $0x470] sm:$0xf]
    %v307 = vld [vmem:[%s1 + $0x474] sm:$0xf]
    %v308 = vld [vmem:[%s1 + $0x478] sm:$0xf]
    %v309 = vld [vmem:[%s1 + $0x47c] sm:$0xf]
    %v310 = vld [vmem:[%s1 + $0x480] sm:$0xf]
    %v311 = vld [vmem:[%s1 + $0x484] sm:$0xf]
    %v312 = vld [vmem:[%s1 + $0x488] sm:$0xf]
    %v313 = vld [vmem:[%s1 + $0x48c] sm:$0xf]
    %v314 = vld [vmem:[%s1 + $0x490] sm:$0xf]
    %v315 = vld [vmem:[%s1 + $0x494] sm:$0xf]
    %v316 = vld [vmem:[%s1 + $0x498] sm:$0xf]
    %v317 = vld [vmem:[%s1 + $0x49c] sm:$0xf]
    %v318 = vld [vmem:[%s1 + $0x4a0] sm:$0xf]
    %v319 = vld [vmem:[%s1 + $0x4a4] sm:$0xf]
    %v320 = vld [vmem:[%s1 + $0x4a8] sm:$0xf]
    %v321 = vld [vmem:[%s1 + $0x4ac] sm:$0xf]
    %v322 = vld [vmem:[%s1 + $0x4b0] sm:$0xf]
    %v323 = vld [vmem:[%s1 + $0x4b4] sm:$0xf]
    %v324 = vld [vmem:[%s1 + $0x4b8] sm:$0xf]
    %v325 = vld [vmem:[%s1 + $0x4bc] sm:$0xf]
    %v326 = vld [vmem:[%s1 + $0x4c0] sm:$0xf]
    %v327 = vld [vmem:[%s1 + $0x4c4] sm:$0xf]
    %v328 = vld [vmem:[%s1 + $0x4c8] sm:$0xf]
    %v329 = vld [vmem:[%s1 + $0x4cc] sm:$0xf]
    %v330 = vld [vmem:[%s1 + $0x4d0] sm:$0xf]
    %v331 = vld [vmem:[%s1 + $0x4d4] sm:$0xf]
    %v332 = vld [vmem:[%s1 + $0x4d8] sm:$0xf]
    %v333 = vld [vmem:[%s1 + $0x4dc] sm:$0xf]
    %v334 = vld [vmem:[%s1 + $0x4e0] sm:$0xf]
    %v335 = vld [vmem:[%s1 + $0x4e4] sm:$0xf]
    %v336 = vld [vmem:[%s1 + $0x4e8] sm:$0xf]
    %v337 = vld [vmem:[%s1 + $0x4ec] sm:$0xf]
    %v338 = vld [vmem:[%s1 + $0x4f0] sm:$0xf]
    %v339 = vld [vmem:[%s1 + $0x4f4] sm:$0xf]
    %v340 = vld [vmem:[%s1 + $0x4f8] sm:$0xf]
    %v341 = vld [vmem:[%s1 + $0x4fc] sm:$0xf]
    %v342 = vld [vmem:[%s1 + $0x500] sm:$0xf]
    %v343 = vld [vmem:[%s1 + $0x504] sm:$0xf]
    %v344 = vld [vmem:[%s1 + $0x508] sm:$0xf]
    %v345 = vld [vmem:[%s1 + $0x50c] sm:$0xf]
    %v346 = vld [vmem:[%s1 + $0x510] sm:$0xf]
    %v347 = vld [vmem:[%s1 + $0x514] sm:$0xf]
    %v348 = vld [vmem:[%s1 + $0x518] sm:$0xf]
    %v349 = vld [vmem:[%s1 + $0x51c] sm:$0xf]
    %v350 = vld [vmem:[%s1 + $0x520] sm:$0xf]
    %v351 = vld [vmem:[%s1 + $0x524] sm:$0xf]
    %v352 = vld [vmem:[%s1 + $0x528] sm:$0xf]
    %v353 = vld [vmem:[%s1 + $0x52c] sm:$0xf]
    %v354 = vld [vmem:[%s1 + $0x530] sm:$0xf]
    %v355 = vld [vmem:[%s1 + $0x534] sm:$0xf]
    %v356 = vld [vmem:[%s1 + $0x538] sm:$0xf]
    %v357 = vld [vmem:[%s1 + $0x53c] sm:$0xf]
    %v358 = vld [vmem:[%s1 + $0x540] sm:$0xf]
    %v359 = vld [vmem:[%s1 + $0x544] sm:$0xf]
    %v360 = vld [vmem:[%s1 + $0x548] sm:$0xf]
    %v361 = vld [vmem:[%s1 + $0x54c] sm:$0xf]
    %v362 = vld [vmem:[%s1 + $0x550] sm:$0xf]
    %v363 = vld [vmem:[%s1 + $0x554] sm:$0xf]
    %v364 = vld [vmem:[%s1 + $0x558] sm:$0xf]
    %v365 = vld [vmem:[%s1 + $0x55c] sm:$0xf]
    %v366 = vld [vmem:[%s1 + $0x560] sm:$0xf]
    %v367 = vld [vmem:[%s1 + $0x564] sm:$0xf]
    %v368 = vld [vmem:[%s1 + $0x568] sm:$0xf]
    %v369 = vld [vmem:[%s1 + $0x56c] sm:$0xf]
    %v370 = vld [vmem:[%s1 + $0x570] sm:$0xf]
    %v371 = vld [vmem:[%s1 + $0x574] sm:$0xf]
    %v372 = vld [vmem:[%s1 + $0x578] sm:$0xf]
    %v373 = vld [vmem:[%s1 + $0x57c] sm:$0xf]
    %v374 = vld [vmem:[%s1 + $0x580] sm:$0xf]
    %v375 = vld [vmem:[%s1 + $0x584] sm:$0xf]
    %v376 = vld [vmem:[%s1 + $0x588] sm:$0xf]
    %v377 = vld [vmem:[%s1 + $0x58c] sm:$0xf]
    %v378 = vld [vmem:[%s1 + $0x590] sm:$0xf]
    %v379 = vld [vmem:[%s1 + $0x594] sm:$0xf]
    %v380 = vld [vmem:[%s1 + $0x598] sm:$0xf]
    %v381 = vld [vmem:[%s1 + $0x59c] sm:$0xf]
    %v382 = vld [vmem:[%s1 + $0x5a0] sm:$0xf]
    %v383 = vld [vmem:[%s1 + $0x5a4] sm:$0xf]
    %v384 = vld [vmem:[%s1 + $0x5a8] sm:$0xf]
    %v385 = vld [vmem:[%s1 + $0x5ac] sm:$0xf]
    %v386 = vld [vmem:[%s1 + $0x5b0] sm:$0xf]
    %v387 = vld [vmem:[%s1 + $0x5b4] sm:$0xf]
    %v388 = vld [vmem:[%s1 + $0x5b8] sm:$0xf]
    %v389 = vld [vmem:[%s1 + $0x5bc] sm:$0xf]
    %v390 = vld [vmem:[%s1 + $0x5c0] sm:$0xf]
    %v391 = vld [vmem:[%s1 + $0x5c4] sm:$0xf]
    %v392 = vld [vmem:[%s1 + $0x5c8] sm:$0xf]
    %v393 = vld [vmem:[%s1 + $0x5cc] sm:$0xf]
    %v394 = vld [vmem:[%s1 + $0x5d0] sm:$0xf]
    %v395 = vld [vmem:[%s1 + $0x5d4] sm:$0xf]
    %v396 = vld [vmem:[%s1 + $0x5d8] sm:$0xf]
    %v397 = vld [vmem:[%s1 + $0x5dc] sm:$0xf]
    %v398 = vld [vmem:[%s1 + $0x5e0] sm:$0xf]
    %v399 = vld [vmem:[%s1 + $0x5e4] sm:$0xf]
    %v400 = vld [vmem:[%s1 + $0x5e8] sm:$0xf]
    %v401 = vld [vmem:[%s1 + $0x5ec] sm:$0xf]
    %v402 = vld [vmem:[%s1 + $0x5f0] sm:$0xf]
    %v403 = vld [vmem:[%s1 + $0x5f4] sm:$0xf]
    %v404 = vld [vmem:[%s1 + $0x5f8] sm:$0xf]
    %v405 = vld [vmem:[%s1 + $0x5fc] sm:$0xf]
    %v406 = vld [vmem:[%s1 + $0x600] sm:$0xf]
    %v407 = vld [vmem:[%s1 + $0x604] sm:$0xf]
    %v408 = vld [vmem:[%s1 + $0x608] sm:$0xf]
    %v409 = vld [vmem:[%s1 + $0x60c] sm:$0xf]
    %v410 = vld [vmem:[%s1 + $0x610] sm:$0xf]
    %v411 = vld [vmem:[%s1 + $0x614] sm:$0xf]
    %v412 = vld [vmem:[%s1 + $0x618] sm:$0xf]
    %v413 = vld [vmem:[%s1 + $0x61c] sm:$0xf]
    %v414 = vld [vmem:[%s1 + $0x620] sm:$0xf]
    %v415 = vld [vmem:[%s1 + $0x624] sm:$0xf]
    %v416 = vld [vmem:[%s1 + $0x628] sm:$0xf]
    %v417 = vld [vmem:[%s1 + $0x62c] sm:$0xf]
    %v418 = vld [vmem:[%s1 + $0x630] sm:$0xf]
    %v419 = vld [vmem:[%s1 + $0x634] sm:$0xf]
    %v420 = vld [vmem:[%s1 + $0x638] sm:$0xf]
    %v421 = vld [vmem:[%s1 + $0x63c] sm:$0xf]
    %v422 = vld [vmem:[%s1 + $0x640] sm:$0xf]
    %v423 = vld [vmem:[%s1 + $0x644] sm:$0xf]
    %v424 = vld [vmem:[%s1 + $0x648] sm:$0xf]
    %v425 = vld [vmem:[%s1 + $0x64c] sm:$0xf]
    %v426 = vld [vmem:[%s1 + $0x650] sm:$0xf]
    %v427 = vld [vmem:[%s1 + $0x654] sm:$0xf]
    %v428 = vld [vmem:[%s1 + $0x658] sm:$0xf]
    %v429 = vld [vmem:[%s1 + $0x65c] sm:$0xf]
    %v430 = vld [vmem:[%s1 + $0x660] sm:$0xf]
    %v431 = vld [vmem:[%s1 + $0x664] sm:$0xf]
    %v432 = vld [vmem:[%s1 + $0x668] sm:$0xf]
    %v433 = vld [vmem:[%s1 + $0x66c] sm:$0xf]
    %v434 = vld [vmem:[%s1 + $0x670] sm:$0xf]
    %v435 = vld [vmem:[%s1 + $0x674] sm:$0xf]
    %v436 = vld [vmem:[%s1 + $0x678] sm:$0xf]
    %v437 = vld [vmem:[%s1 + $0x67c] sm:$0xf]
    %v438 = vld [vmem:[%s1 + $0x680] sm:$0xf]
    %v439 = vld [vmem:[%s1 + $0x684] sm:$0xf]
    %v440 = vld [vmem:[%s1 + $0x688] sm:$0xf]
    %v441 = vld [vmem:[%s1 + $0x68c] sm:$0xf]
    %v442 = vld [vmem:[%s1 + $0x690] sm:$0xf]
    %v443 = vld [vmem:[%s1 + $0x694] sm:$0xf]
    %v444 = vld [vmem:[%s1 + $0x698] sm:$0xf]
    %v445 = vld [vmem:[%s1 + $0x69c] sm:$0xf]
    %v446 = vld [vmem:[%s1 + $0x6a0] sm:$0xf]
    %v447 = vld [vmem:[%s1 + $0x6a4] sm:$0xf]
    %v448 = vld [vmem:[%s1 + $0x6a8] sm:$0xf]
    %v449 = vld [vmem:[%s1 + $0x6ac] sm:$0xf]
    %v450 = vld [vmem:[%s1 + $0x6b0] sm:$0xf]
    %v451 = vld [vmem:[%s1 + $0x6b4] sm:$0xf]
    %v452 = vld [vmem:[%s1 + $0x6b8] sm:$0xf]
    %v453 = vld [vmem:[%s1 + $0x6bc] sm:$0xf]
    %v454 = vld [vmem:[%s1 + $0x6c0] sm:$0xf]
    %v455 = vld [vmem:[%s1 + $0x6c4] sm:$0xf]
    %v456 = vld [vmem:[%s1 + $0x6c8] sm:$0xf]
    %v457 = vld [vmem:[%s1 + $0x6cc] sm:$0xf]
    %v458 = vld [vmem:[%s1 + $0x6d0] sm:$0xf]
    %v459 = vld [vmem:[%s1 + $0x6d4] sm:$0xf]
    %v460 = vld [vmem:[%s1 + $0x6d8] sm:$0xf]
    %v461 = vld [vmem:[%s1 + $0x6dc] sm:$0xf]
    %v462 = vld [vmem:[%s1 + $0x6e0] sm:$0xf]
    %v463 = vld [vmem:[%s1 + $0x6e4] sm:$0xf]
    %v464 = vld [vmem:[%s1 + $0x6e8] sm:$0xf]
    %v465 = vld [vmem:[%s1 + $0x6ec] sm:$0xf]
    %v466 = vld [vmem:[%s1 + $0x6f0] sm:$0xf]
    %v467 = vld [vmem:[%s1 + $0x6f4] sm:$0xf]
    %v468 = vld [vmem:[%s1 + $0x6f8] sm:$0xf]
    %v469 = vld [vmem:[%s1 + $0x6fc] sm:$0xf]
    %v470 = vld [vmem:[%s1 + $0x700] sm:$0xf]
    %v471 = vld [vmem:[%s1 + $0x704] sm:$0xf]
    %v472 = vld [vmem:[%s1 + $0x708] sm:$0xf]
    %v473 = vld [vmem:[%s1 + $0x70c] sm:$0xf]
    %v474 = vld [vmem:[%s1 + $0x710] sm:$0xf]
    %v475 = vld [vmem:[%s1 + $0x714] sm:$0xf]
    %v476 = vld [vmem:[%s1 + $0x718] sm:$0xf]
    %v477 = vld [vmem:[%s1 + $0x71c] sm:$0xf]
    %v478 = vld [vmem:[%s1 + $0x720] sm:$0xf]
    %v479 = vld [vmem:[%s1 + $0x724] sm:$0xf]
    %v480 = vld [vmem:[%s1 + $0x728] sm:$0xf]
    %v481 = vld [vmem:[%s1 + $0x72c] sm:$0xf]
    %v482 = vld [vmem:[%s1 + $0x730] sm:$0xf]
    %v483 = vld [vmem:[%s1 + $0x734] sm:$0xf]
    %v484 = vld [vmem:[%s1 + $0x738] sm:$0xf]
    %v485 = vld [vmem:[%s1 + $0x73c] sm:$0xf]
    %v486 = vld [vmem:[%s1 + $0x740] sm:$0xf]
    %v487 = vld [vmem:[%s1 + $0x744] sm:$0xf]
    %v488 = vld [vmem:[%s1 + $0x748] sm:$0xf]
    %v489 = vld [vmem:[%s1 + $0x74c] sm:$0xf]
    %v490 = vld [vmem:[%s1 + $0x750] sm:$0xf]
    %v491 = vld [vmem:[%s1 + $0x754] sm:$0xf]
    %v492 = vld [vmem:[%s1 + $0x758] sm:$0xf]
    %v493 = vld [vmem:[%s1 + $0x75c] sm:$0xf]
    %v494 = vld [vmem:[%s1 + $0x760] sm:$0xf]
    %v495 = vld [vmem:[%s1 + $0x764] sm:$0xf]
    %v496 = vld [vmem:[%s1 + $0x768] sm:$0xf]
    %v497 = vld [vmem:[%s1 + $0x76c] sm:$0xf]
    %v498 = vld [vmem:[%s1 + $0x770] sm:$0xf]
    %v499 = vld [vmem:[%s1 + $0x774] sm:$0xf]
    %v500 = vld [vmem:[%s1 + $0x778] sm:$0xf]
    %v501 = vld [vmem:[%s1 + $0x77c] sm:$0xf]
    %v502 = vld [vmem:[%s1 + $0x780] sm:$0xf]
    %v503 = vld [vmem:[%s1 + $0x784] sm:$0xf]
    %v504 = vld [vmem:[%s1 + $0x788] sm:$0xf]
    %v505 = vld [vmem:[%s1 + $0x78c] sm:$0xf]
    %v506 = vld [vmem:[%s1 + $0x790] sm:$0xf]
    %v507 = vld [vmem:[%s1 + $0x794] sm:$0xf]
    %v508 = vld [vmem:[%s1 + $0x798] sm:$0xf]
    %v509 = vld [vmem:[%s1 + $0x79c] sm:$0xf]
    %v510 = vld [vmem:[%s1 + $0x7a0] sm:$0xf]
    %v511 = vld [vmem:[%s1 + $0x7a4] sm:$0xf]
    %v512 = vld [vmem:[%s1 + $0x7a8] sm:$0xf]
    %v513 = vld [vmem:[%s1 + $0x7ac] sm:$0xf]
    %v514 = vld [vmem:[%s1 + $0x7b0] sm:$0xf]
    %v515 = vld [vmem:[%s1 + $0x7b4] sm:$0xf]
    %v516 = vld [vmem:[%s1 + $0x7b8] sm:$0xf]
    %v517 = vld [vmem:[%s1 + $0x7bc] sm:$0xf]
    %v518 = vld [vmem:[%s1 + $0x7c0] sm:$0xf]
    %v519 = vld [vmem:[%s1 + $0x7c4] sm:$0xf]
    %v520 = vld [vmem:[%s1 + $0x7c8] sm:$0xf]
    %v521 = vld [vmem:[%s1 + $0x7cc] sm:$0xf]
    %v522 = vld [vmem:[%s1 + $0x7d0] sm:$0xf]
    %v523 = vld [vmem:[%s1 + $0x7d4] sm:$0xf]
    %v524 = vld [vmem:[%s1 + $0x7d8] sm:$0xf]
    %v525 = vld [vmem:[%s1 + $0x7dc] sm:$0xf]
    %v526 = vld [vmem:[%s1 + $0x7e0] sm:$0xf]
    %v527 = vld [vmem:[%s1 + $0x7e4] sm:$0xf]
    %v528 = vld [vmem:[%s1 + $0x7e8] sm:$0xf]
    %v529 = vld [vmem:[%s1 + $0x7ec] sm:$0xf]
    %v530 = vld [vmem:[%s1 + $0x7f0] sm:$0xf]
    %v531 = vld [vmem:[%s1 + $0x7f4] sm:$0xf]
    %v532 = vld [vmem:[%s1 + $0x7f8] sm:$0xf]
    %v533 = vld [vmem:[%s1 + $0x7fc] sm:$0xf]
    %535 = vst [vmem:[#allocation1] ss:$9 sm:$0xff] %v18
    %v536 = vld [vmem:[#allocation1] sm:$0xff]
    %v537 = vld [vmem:[#allocation1 + $0x9] sm:$0xff]
    %v538 = vld [vmem:[#allocation1 + $0x12] sm:$0xff]
    %v539 = vld [vmem:[#allocation1 + $0x1b] sm:$0xff]
    %v540 = vld [vmem:[#allocation1 + $0x24] sm:$0xff]
    %v541 = vld [vmem:[#allocation1 + $0x2d] sm:$0xff]
    %v542 = vld [vmem:[#allocation1 + $0x36] sm:$0xff]
    %v543 = vld [vmem:[#allocation1 + $0x3f] sm:$0xff]
    %545 = vst [vmem:[#allocation1] ss:$9 sm:$0xff] %v19
    %v546 = vld [vmem:[#allocation1] sm:$0xff]
    %v547 = vld [vmem:[#allocation1 + $0x9] sm:$0xff]
    %v548 = vld [vmem:[#allocation1 + $0x12] sm:$0xff]
    %v549 = vld [vmem:[#allocation1 + $0x1b] sm:$0xff]
    %v550 = vld [vmem:[#allocation1 + $0x24] sm:$0xff]
    %v551 = vld [vmem:[#allocation1 + $0x2d] sm:$0xff]
    %v552 = vld [vmem:[#allocation1 + $0x36] sm:$0xff]
    %v553 = vld [vmem:[#allocation1 + $0x3f] sm:$0xff]
    %555 = vst [vmem:[#allocation1] ss:$9 sm:$0xff] %v20
    %v556 = vld [vmem:[#allocation1] sm:$0xff]
    %v557 = vld [vmem:[#allocation1 + $0x9] sm:$0xff]
    %v558 = vld [vmem:[#allocation1 + $0x12] sm:$0xff]
    %v559 = vld [vmem:[#allocation1 + $0x1b] sm:$0xff]
    %v560 = vld [vmem:[#allocation1 + $0x24] sm:$0xff]
    %v561 = vld [vmem:[#allocation1 + $0x2d] sm:$0xff]
    %v562 = vld [vmem:[#allocation1 + $0x36] sm:$0xff]
    %v563 = vld [vmem:[#allocation1 + $0x3f] sm:$0xff]
    %565 = vst [vmem:[#allocation1] ss:$9 sm:$0xff] %v21
    %v566 = vld [vmem:[#allocation1] sm:$0xff]
    %v567 = vld [vmem:[#allocation1 + $0x9] sm:$0xff]
    %v568 = vld [vmem:[#allocation1 + $0x12] sm:$0xff]
    %v569 = vld [vmem:[#allocation1 + $0x1b] sm:$0xff]
    %v570 = vld [vmem:[#allocation1 + $0x24] sm:$0xff]
    %v571 = vld [vmem:[#allocation1 + $0x2d] sm:$0xff]
    %v572 = vld [vmem:[#allocation1 + $0x36] sm:$0xff]
    %v573 = vld [vmem:[#allocation1 + $0x3f] sm:$0xff]
    %v1118 = vunpack.c.l.b16 %v22
    %v1119 = vunpack.c.l.b16 %v23
    %v1120 = vunpack.c.l.b16 %v24
    %v1121 = vunpack.c.l.b16 %v25
    %v1122 = vunpack.c.l.b16 %v26
    %v1123 = vunpack.c.l.b16 %v27
    %v1124 = vunpack.c.l.b16 %v28
    %v1125 = vunpack.c.l.b16 %v29
    %v1126 = vunpack.c.l.b16 %v30
    %v1127 = vunpack.c.l.b16 %v31
    %v1128 = vunpack.c.l.b16 %v32
    %v1129 = vunpack.c.l.b16 %v33
    %v1130 = vunpack.c.l.b16 %v34
    %v1131 = vunpack.c.l.b16 %v35
    %v1132 = vunpack.c.l.b16 %v36
    %v1133 = vunpack.c.l.b16 %v37
    %v1134 = vunpack.c.l.b16 %v38
    %v1135 = vunpack.c.l.b16 %v39
    %v1136 = vunpack.c.l.b16 %v40
    %v1137 = vunpack.c.l.b16 %v41
    %v1138 = vunpack.c.l.b16 %v42
    %v1139 = vunpack.c.l.b16 %v43
    %v1140 = vunpack.c.l.b16 %v44
    %v1141 = vunpack.c.l.b16 %v45
    %v1142 = vunpack.c.l.b16 %v46
    %v1143 = vunpack.c.l.b16 %v47
    %v1144 = vunpack.c.l.b16 %v48
    %v1145 = vunpack.c.l.b16 %v49
    %v1146 = vunpack.c.l.b16 %v50
    %v1147 = vunpack.c.l.b16 %v51
    %v1148 = vunpack.c.l.b16 %v52
    %v1149 = vunpack.c.l.b16 %v53
    %v1150 = vunpack.c.l.b16 %v54
    %v1151 = vunpack.c.l.b16 %v55
    %v1152 = vunpack.c.l.b16 %v56
    %v1153 = vunpack.c.l.b16 %v57
    %v1154 = vunpack.c.l.b16 %v58
    %v1155 = vunpack.c.l.b16 %v59
    %v1156 = vunpack.c.l.b16 %v60
    %v1157 = vunpack.c.l.b16 %v61
    %v1158 = vunpack.c.l.b16 %v62
    %v1159 = vunpack.c.l.b16 %v63
    %v1160 = vunpack.c.l.b16 %v64
    %v1161 = vunpack.c.l.b16 %v65
    %v1162 = vunpack.c.l.b16 %v66
    %v1163 = vunpack.c.l.b16 %v67
    %v1164 = vunpack.c.l.b16 %v68
    %v1165 = vunpack.c.l.b16 %v69
    %v1166 = vunpack.c.l.b16 %v70
    %v1167 = vunpack.c.l.b16 %v71
    %v1168 = vunpack.c.l.b16 %v72
    %v1169 = vunpack.c.l.b16 %v73
    %v1170 = vunpack.c.l.b16 %v74
    %v1171 = vunpack.c.l.b16 %v75
    %v1172 = vunpack.c.l.b16 %v76
    %v1173 = vunpack.c.l.b16 %v77
    %v1174 = vunpack.c.l.b16 %v78
    %v1175 = vunpack.c.l.b16 %v79
    %v1176 = vunpack.c.l.b16 %v80
    %v1177 = vunpack.c.l.b16 %v81
    %v1178 = vunpack.c.l.b16 %v82
    %v1179 = vunpack.c.l.b16 %v83
    %v1180 = vunpack.c.l.b16 %v84
    %v1181 = vunpack.c.l.b16 %v85
    %v1182 = vunpack.c.l.b16 %v86
    %v1183 = vunpack.c.l.b16 %v87
    %v1184 = vunpack.c.l.b16 %v88
    %v1185 = vunpack.c.l.b16 %v89
    %v1186 = vunpack.c.l.b16 %v90
    %v1187 = vunpack.c.l.b16 %v91
    %v1188 = vunpack.c.l.b16 %v92
    %v1189 = vunpack.c.l.b16 %v93
    %v1190 = vunpack.c.l.b16 %v94
    %v1191 = vunpack.c.l.b16 %v95
    %v1192 = vunpack.c.l.b16 %v96
    %v1193 = vunpack.c.l.b16 %v97
    %v1194 = vunpack.c.l.b16 %v98
    %v1195 = vunpack.c.l.b16 %v99
    %v1196 = vunpack.c.l.b16 %v100
    %v1197 = vunpack.c.l.b16 %v101
    %v1198 = vunpack.c.l.b16 %v102
    %v1199 = vunpack.c.l.b16 %v103
    %v1200 = vunpack.c.l.b16 %v104
    %v1201 = vunpack.c.l.b16 %v105
    %v1202 = vunpack.c.l.b16 %v106
    %v1203 = vunpack.c.l.b16 %v107
    %v1204 = vunpack.c.l.b16 %v108
    %v1205 = vunpack.c.l.b16 %v109
    %v1206 = vunpack.c.l.b16 %v110
    %v1207 = vunpack.c.l.b16 %v111
    %v1208 = vunpack.c.l.b16 %v112
    %v1209 = vunpack.c.l.b16 %v113
    %v1210 = vunpack.c.l.b16 %v114
    %v1211 = vunpack.c.l.b16 %v115
    %v1212 = vunpack.c.l.b16 %v116
    %v1213 = vunpack.c.l.b16 %v117
    %v1214 = vunpack.c.l.b16 %v118
    %v1215 = vunpack.c.l.b16 %v119
    %v1216 = vunpack.c.l.b16 %v120
    %v1217 = vunpack.c.l.b16 %v121
    %v1218 = vunpack.c.l.b16 %v122
    %v1219 = vunpack.c.l.b16 %v123
    %v1220 = vunpack.c.l.b16 %v124
    %v1221 = vunpack.c.l.b16 %v125
    %v1222 = vunpack.c.l.b16 %v126
    %v1223 = vunpack.c.l.b16 %v127
    %v1224 = vunpack.c.l.b16 %v128
    %v1225 = vunpack.c.l.b16 %v129
    %v1226 = vunpack.c.l.b16 %v130
    %v1227 = vunpack.c.l.b16 %v131
    %v1228 = vunpack.c.l.b16 %v132
    %v1229 = vunpack.c.l.b16 %v133
    %v1230 = vunpack.c.l.b16 %v134
    %v1231 = vunpack.c.l.b16 %v135
    %v1232 = vunpack.c.l.b16 %v136
    %v1233 = vunpack.c.l.b16 %v137
    %v1234 = vunpack.c.l.b16 %v138
    %v1235 = vunpack.c.l.b16 %v139
    %v1236 = vunpack.c.l.b16 %v140
    %v1237 = vunpack.c.l.b16 %v141
    %v1238 = vunpack.c.l.b16 %v142
    %v1239 = vunpack.c.l.b16 %v143
    %v1240 = vunpack.c.l.b16 %v144
    %v1241 = vunpack.c.l.b16 %v145
    %v1242 = vunpack.c.l.b16 %v146
    %v1243 = vunpack.c.l.b16 %v147
    %v1244 = vunpack.c.l.b16 %v148
    %v1245 = vunpack.c.l.b16 %v149
    %v1246 = vunpack.c.l.b16 %v150
    %v1247 = vunpack.c.l.b16 %v151
    %v1248 = vunpack.c.l.b16 %v152
    %v1249 = vunpack.c.l.b16 %v153
    %v1250 = vunpack.c.l.b16 %v154
    %v1251 = vunpack.c.l.b16 %v155
    %v1252 = vunpack.c.l.b16 %v156
    %v1253 = vunpack.c.l.b16 %v157
    %v1254 = vunpack.c.l.b16 %v158
    %v1255 = vunpack.c.l.b16 %v159
    %v1256 = vunpack.c.l.b16 %v160
    %v1257 = vunpack.c.l.b16 %v161
    %v1258 = vunpack.c.l.b16 %v162
    %v1259 = vunpack.c.l.b16 %v163
    %v1260 = vunpack.c.l.b16 %v164
    %v1261 = vunpack.c.l.b16 %v165
    %v1262 = vunpack.c.l.b16 %v166
    %v1263 = vunpack.c.l.b16 %v167
    %v1264 = vunpack.c.l.b16 %v168
    %v1265 = vunpack.c.l.b16 %v169
    %v1266 = vunpack.c.l.b16 %v170
    %v1267 = vunpack.c.l.b16 %v171
    %v1268 = vunpack.c.l.b16 %v172
    %v1269 = vunpack.c.l.b16 %v173
    %v1270 = vunpack.c.l.b16 %v174
    %v1271 = vunpack.c.l.b16 %v175
    %v1272 = vunpack.c.l.b16 %v176
    %v1273 = vunpack.c.l.b16 %v177
    %v1274 = vunpack.c.l.b16 %v178
    %v1275 = vunpack.c.l.b16 %v179
    %v1276 = vunpack.c.l.b16 %v180
    %v1277 = vunpack.c.l.b16 %v181
    %v1278 = vunpack.c.l.b16 %v182
    %v1279 = vunpack.c.l.b16 %v183
    %v1280 = vunpack.c.l.b16 %v184
    %v1281 = vunpack.c.l.b16 %v185
    %v1282 = vunpack.c.l.b16 %v186
    %v1283 = vunpack.c.l.b16 %v187
    %v1284 = vunpack.c.l.b16 %v188
    %v1285 = vunpack.c.l.b16 %v189
    %v1286 = vunpack.c.l.b16 %v190
    %v1287 = vunpack.c.l.b16 %v191
    %v1288 = vunpack.c.l.b16 %v192
    %v1289 = vunpack.c.l.b16 %v193
    %v1290 = vunpack.c.l.b16 %v194
    %v1291 = vunpack.c.l.b16 %v195
    %v1292 = vunpack.c.l.b16 %v196
    %v1293 = vunpack.c.l.b16 %v197
    %v1294 = vunpack.c.l.b16 %v198
    %v1295 = vunpack.c.l.b16 %v199
    %v1296 = vunpack.c.l.b16 %v200
    %v1297 = vunpack.c.l.b16 %v201
    %v1298 = vunpack.c.l.b16 %v202
    %v1299 = vunpack.c.l.b16 %v203
    %v1300 = vunpack.c.l.b16 %v204
    %v1301 = vunpack.c.l.b16 %v205
    %v1302 = vunpack.c.l.b16 %v206
    %v1303 = vunpack.c.l.b16 %v207
    %v1304 = vunpack.c.l.b16 %v208
    %v1305 = vunpack.c.l.b16 %v209
    %v1306 = vunpack.c.l.b16 %v210
    %v1307 = vunpack.c.l.b16 %v211
    %v1308 = vunpack.c.l.b16 %v212
    %v1309 = vunpack.c.l.b16 %v213
    %v1310 = vunpack.c.l.b16 %v214
    %v1311 = vunpack.c.l.b16 %v215
    %v1312 = vunpack.c.l.b16 %v216
    %v1313 = vunpack.c.l.b16 %v217
    %v1314 = vunpack.c.l.b16 %v218
    %v1315 = vunpack.c.l.b16 %v219
    %v1316 = vunpack.c.l.b16 %v220
    %v1317 = vunpack.c.l.b16 %v221
    %v1318 = vunpack.c.l.b16 %v222
    %v1319 = vunpack.c.l.b16 %v223
    %v1320 = vunpack.c.l.b16 %v224
    %v1321 = vunpack.c.l.b16 %v225
    %v1322 = vunpack.c.l.b16 %v226
    %v1323 = vunpack.c.l.b16 %v227
    %v1324 = vunpack.c.l.b16 %v228
    %v1325 = vunpack.c.l.b16 %v229
    %v1326 = vunpack.c.l.b16 %v230
    %v1327 = vunpack.c.l.b16 %v231
    %v1328 = vunpack.c.l.b16 %v232
    %v1329 = vunpack.c.l.b16 %v233
    %v1330 = vunpack.c.l.b16 %v234
    %v1331 = vunpack.c.l.b16 %v235
    %v1332 = vunpack.c.l.b16 %v236
    %v1333 = vunpack.c.l.b16 %v237
    %v1334 = vunpack.c.l.b16 %v238
    %v1335 = vunpack.c.l.b16 %v239
    %v1336 = vunpack.c.l.b16 %v240
    %v1337 = vunpack.c.l.b16 %v241
    %v1338 = vunpack.c.l.b16 %v242
    %v1339 = vunpack.c.l.b16 %v243
    %v1340 = vunpack.c.l.b16 %v244
    %v1341 = vunpack.c.l.b16 %v245
    %v1342 = vunpack.c.l.b16 %v246
    %v1343 = vunpack.c.l.b16 %v247
    %v1344 = vunpack.c.l.b16 %v248
    %v1345 = vunpack.c.l.b16 %v249
    %v1346 = vunpack.c.l.b16 %v250
    %v1347 = vunpack.c.l.b16 %v251
    %v1348 = vunpack.c.l.b16 %v252
    %v1349 = vunpack.c.l.b16 %v253
    %v1350 = vunpack.c.l.b16 %v254
    %v1351 = vunpack.c.l.b16 %v255
    %v1352 = vunpack.c.l.b16 %v256
    %v1353 = vunpack.c.l.b16 %v257
    %v1354 = vunpack.c.l.b16 %v258
    %v1355 = vunpack.c.l.b16 %v259
    %v1356 = vunpack.c.l.b16 %v260
    %v1357 = vunpack.c.l.b16 %v261
    %v1358 = vunpack.c.l.b16 %v262
    %v1359 = vunpack.c.l.b16 %v263
    %v1360 = vunpack.c.l.b16 %v264
    %v1361 = vunpack.c.l.b16 %v265
    %v1362 = vunpack.c.l.b16 %v266
    %v1363 = vunpack.c.l.b16 %v267
    %v1364 = vunpack.c.l.b16 %v268
    %v1365 = vunpack.c.l.b16 %v269
    %v1366 = vunpack.c.l.b16 %v270
    %v1367 = vunpack.c.l.b16 %v271
    %v1368 = vunpack.c.l.b16 %v272
    %v1369 = vunpack.c.l.b16 %v273
    %v1370 = vunpack.c.l.b16 %v274
    %v1371 = vunpack.c.l.b16 %v275
    %v1372 = vunpack.c.l.b16 %v276
    %v1373 = vunpack.c.l.b16 %v277
    %v1374 = vunpack.c.l.b16 %v278
    %v1375 = vunpack.c.l.b16 %v279
    %v1376 = vunpack.c.l.b16 %v280
    %v1377 = vunpack.c.l.b16 %v281
    %v1378 = vunpack.c.l.b16 %v282
    %v1379 = vunpack.c.l.b16 %v283
    %v1380 = vunpack.c.l.b16 %v284
    %v1381 = vunpack.c.l.b16 %v285
    %v1382 = vunpack.c.l.b16 %v286
    %v1383 = vunpack.c.l.b16 %v287
    %v1384 = vunpack.c.l.b16 %v288
    %v1385 = vunpack.c.l.b16 %v289
    %v1386 = vunpack.c.l.b16 %v290
    %v1387 = vunpack.c.l.b16 %v291
    %v1388 = vunpack.c.l.b16 %v292
    %v1389 = vunpack.c.l.b16 %v293
    %v1390 = vunpack.c.l.b16 %v294
    %v1391 = vunpack.c.l.b16 %v295
    %v1392 = vunpack.c.l.b16 %v296
    %v1393 = vunpack.c.l.b16 %v297
    %v1394 = vunpack.c.l.b16 %v298
    %v1395 = vunpack.c.l.b16 %v299
    %v1396 = vunpack.c.l.b16 %v300
    %v1397 = vunpack.c.l.b16 %v301
    %v1398 = vunpack.c.l.b16 %v302
    %v1399 = vunpack.c.l.b16 %v303
    %v1400 = vunpack.c.l.b16 %v304
    %v1401 = vunpack.c.l.b16 %v305
    %v1402 = vunpack.c.l.b16 %v306
    %v1403 = vunpack.c.l.b16 %v307
    %v1404 = vunpack.c.l.b16 %v308
    %v1405 = vunpack.c.l.b16 %v309
    %v1406 = vunpack.c.l.b16 %v310
    %v1407 = vunpack.c.l.b16 %v311
    %v1408 = vunpack.c.l.b16 %v312
    %v1409 = vunpack.c.l.b16 %v313
    %v1410 = vunpack.c.l.b16 %v314
    %v1411 = vunpack.c.l.b16 %v315
    %v1412 = vunpack.c.l.b16 %v316
    %v1413 = vunpack.c.l.b16 %v317
    %v1414 = vunpack.c.l.b16 %v318
    %v1415 = vunpack.c.l.b16 %v319
    %v1416 = vunpack.c.l.b16 %v320
    %v1417 = vunpack.c.l.b16 %v321
    %v1418 = vunpack.c.l.b16 %v322
    %v1419 = vunpack.c.l.b16 %v323
    %v1420 = vunpack.c.l.b16 %v324
    %v1421 = vunpack.c.l.b16 %v325
    %v1422 = vunpack.c.l.b16 %v326
    %v1423 = vunpack.c.l.b16 %v327
    %v1424 = vunpack.c.l.b16 %v328
    %v1425 = vunpack.c.l.b16 %v329
    %v1426 = vunpack.c.l.b16 %v330
    %v1427 = vunpack.c.l.b16 %v331
    %v1428 = vunpack.c.l.b16 %v332
    %v1429 = vunpack.c.l.b16 %v333
    %v1430 = vunpack.c.l.b16 %v334
    %v1431 = vunpack.c.l.b16 %v335
    %v1432 = vunpack.c.l.b16 %v336
    %v1433 = vunpack.c.l.b16 %v337
    %v1434 = vunpack.c.l.b16 %v338
    %v1435 = vunpack.c.l.b16 %v339
    %v1436 = vunpack.c.l.b16 %v340
    %v1437 = vunpack.c.l.b16 %v341
    %v1438 = vunpack.c.l.b16 %v342
    %v1439 = vunpack.c.l.b16 %v343
    %v1440 = vunpack.c.l.b16 %v344
    %v1441 = vunpack.c.l.b16 %v345
    %v1442 = vunpack.c.l.b16 %v346
    %v1443 = vunpack.c.l.b16 %v347
    %v1444 = vunpack.c.l.b16 %v348
    %v1445 = vunpack.c.l.b16 %v349
    %v1446 = vunpack.c.l.b16 %v350
    %v1447 = vunpack.c.l.b16 %v351
    %v1448 = vunpack.c.l.b16 %v352
    %v1449 = vunpack.c.l.b16 %v353
    %v1450 = vunpack.c.l.b16 %v354
    %v1451 = vunpack.c.l.b16 %v355
    %v1452 = vunpack.c.l.b16 %v356
    %v1453 = vunpack.c.l.b16 %v357
    %v1454 = vunpack.c.l.b16 %v358
    %v1455 = vunpack.c.l.b16 %v359
    %v1456 = vunpack.c.l.b16 %v360
    %v1457 = vunpack.c.l.b16 %v361
    %v1458 = vunpack.c.l.b16 %v362
    %v1459 = vunpack.c.l.b16 %v363
    %v1460 = vunpack.c.l.b16 %v364
    %v1461 = vunpack.c.l.b16 %v365
    %v1462 = vunpack.c.l.b16 %v366
    %v1463 = vunpack.c.l.b16 %v367
    %v1464 = vunpack.c.l.b16 %v368
    %v1465 = vunpack.c.l.b16 %v369
    %v1466 = vunpack.c.l.b16 %v370
    %v1467 = vunpack.c.l.b16 %v371
    %v1468 = vunpack.c.l.b16 %v372
    %v1469 = vunpack.c.l.b16 %v373
    %v1470 = vunpack.c.l.b16 %v374
    %v1471 = vunpack.c.l.b16 %v375
    %v1472 = vunpack.c.l.b16 %v376
    %v1473 = vunpack.c.l.b16 %v377
    %v1474 = vunpack.c.l.b16 %v378
    %v1475 = vunpack.c.l.b16 %v379
    %v1476 = vunpack.c.l.b16 %v380
    %v1477 = vunpack.c.l.b16 %v381
    %v1478 = vunpack.c.l.b16 %v382
    %v1479 = vunpack.c.l.b16 %v383
    %v1480 = vunpack.c.l.b16 %v384
    %v1481 = vunpack.c.l.b16 %v385
    %v1482 = vunpack.c.l.b16 %v386
    %v1483 = vunpack.c.l.b16 %v387
    %v1484 = vunpack.c.l.b16 %v388
    %v1485 = vunpack.c.l.b16 %v389
    %v1486 = vunpack.c.l.b16 %v390
    %v1487 = vunpack.c.l.b16 %v391
    %v1488 = vunpack.c.l.b16 %v392
    %v1489 = vunpack.c.l.b16 %v393
    %v1490 = vunpack.c.l.b16 %v394
    %v1491 = vunpack.c.l.b16 %v395
    %v1492 = vunpack.c.l.b16 %v396
    %v1493 = vunpack.c.l.b16 %v397
    %v1494 = vunpack.c.l.b16 %v398
    %v1495 = vunpack.c.l.b16 %v399
    %v1496 = vunpack.c.l.b16 %v400
    %v1497 = vunpack.c.l.b16 %v401
    %v1498 = vunpack.c.l.b16 %v402
    %v1499 = vunpack.c.l.b16 %v403
    %v1500 = vunpack.c.l.b16 %v404
    %v1501 = vunpack.c.l.b16 %v405
    %v1502 = vunpack.c.l.b16 %v406
    %v1503 = vunpack.c.l.b16 %v407
    %v1504 = vunpack.c.l.b16 %v408
    %v1505 = vunpack.c.l.b16 %v409
    %v1506 = vunpack.c.l.b16 %v410
    %v1507 = vunpack.c.l.b16 %v411
    %v1508 = vunpack.c.l.b16 %v412
    %v1509 = vunpack.c.l.b16 %v413
    %v1510 = vunpack.c.l.b16 %v414
    %v1511 = vunpack.c.l.b16 %v415
    %v1512 = vunpack.c.l.b16 %v416
    %v1513 = vunpack.c.l.b16 %v417
    %v1514 = vunpack.c.l.b16 %v418
    %v1515 = vunpack.c.l.b16 %v419
    %v1516 = vunpack.c.l.b16 %v420
    %v1517 = vunpack.c.l.b16 %v421
    %v1518 = vunpack.c.l.b16 %v422
    %v1519 = vunpack.c.l.b16 %v423
    %v1520 = vunpack.c.l.b16 %v424
    %v1521 = vunpack.c.l.b16 %v425
    %v1522 = vunpack.c.l.b16 %v426
    %v1523 = vunpack.c.l.b16 %v427
    %v1524 = vunpack.c.l.b16 %v428
    %v1525 = vunpack.c.l.b16 %v429
    %v1526 = vunpack.c.l.b16 %v430
    %v1527 = vunpack.c.l.b16 %v431
    %v1528 = vunpack.c.l.b16 %v432
    %v1529 = vunpack.c.l.b16 %v433
    %v1530 = vunpack.c.l.b16 %v434
    %v1531 = vunpack.c.l.b16 %v435
    %v1532 = vunpack.c.l.b16 %v436
    %v1533 = vunpack.c.l.b16 %v437
    %v1534 = vunpack.c.l.b16 %v438
    %v1535 = vunpack.c.l.b16 %v439
    %v1536 = vunpack.c.l.b16 %v440
    %v1537 = vunpack.c.l.b16 %v441
    %v1538 = vunpack.c.l.b16 %v442
    %v1539 = vunpack.c.l.b16 %v443
    %v1540 = vunpack.c.l.b16 %v444
    %v1541 = vunpack.c.l.b16 %v445
    %v1542 = vunpack.c.l.b16 %v446
    %v1543 = vunpack.c.l.b16 %v447
    %v1544 = vunpack.c.l.b16 %v448
    %v1545 = vunpack.c.l.b16 %v449
    %v1546 = vunpack.c.l.b16 %v450
    %v1547 = vunpack.c.l.b16 %v451
    %v1548 = vunpack.c.l.b16 %v452
    %v1549 = vunpack.c.l.b16 %v453
    %v1550 = vunpack.c.l.b16 %v454
    %v1551 = vunpack.c.l.b16 %v455
    %v1552 = vunpack.c.l.b16 %v456
    %v1553 = vunpack.c.l.b16 %v457
    %v1554 = vunpack.c.l.b16 %v458
    %v1555 = vunpack.c.l.b16 %v459
    %v1556 = vunpack.c.l.b16 %v460
    %v1557 = vunpack.c.l.b16 %v461
    %v1558 = vunpack.c.l.b16 %v462
    %v1559 = vunpack.c.l.b16 %v463
    %v1560 = vunpack.c.l.b16 %v464
    %v1561 = vunpack.c.l.b16 %v465
    %v1562 = vunpack.c.l.b16 %v466
    %v1563 = vunpack.c.l.b16 %v467
    %v1564 = vunpack.c.l.b16 %v468
    %v1565 = vunpack.c.l.b16 %v469
    %v1566 = vunpack.c.l.b16 %v470
    %v1567 = vunpack.c.l.b16 %v471
    %v1568 = vunpack.c.l.b16 %v472
    %v1569 = vunpack.c.l.b16 %v473
    %v1570 = vunpack.c.l.b16 %v474
    %v1571 = vunpack.c.l.b16 %v475
    %v1572 = vunpack.c.l.b16 %v476
    %v1573 = vunpack.c.l.b16 %v477
    %v1574 = vunpack.c.l.b16 %v478
    %v1575 = vunpack.c.l.b16 %v479
    %v1576 = vunpack.c.l.b16 %v480
    %v1577 = vunpack.c.l.b16 %v481
    %v1578 = vunpack.c.l.b16 %v482
    %v1579 = vunpack.c.l.b16 %v483
    %v1580 = vunpack.c.l.b16 %v484
    %v1581 = vunpack.c.l.b16 %v485
    %v1582 = vunpack.c.l.b16 %v486
    %v1583 = vunpack.c.l.b16 %v487
    %v1584 = vunpack.c.l.b16 %v488
    %v1585 = vunpack.c.l.b16 %v489
    %v1586 = vunpack.c.l.b16 %v490
    %v1587 = vunpack.c.l.b16 %v491
    %v1588 = vunpack.c.l.b16 %v492
    %v1589 = vunpack.c.l.b16 %v493
    %v1590 = vunpack.c.l.b16 %v494
    %v1591 = vunpack.c.l.b16 %v495
    %v1592 = vunpack.c.l.b16 %v496
    %v1593 = vunpack.c.l.b16 %v497
    %v1594 = vunpack.c.l.b16 %v498
    %v1595 = vunpack.c.l.b16 %v499
    %v1596 = vunpack.c.l.b16 %v500
    %v1597 = vunpack.c.l.b16 %v501
    %v1598 = vunpack.c.l.b16 %v502
    %v1599 = vunpack.c.l.b16 %v503
    %v1600 = vunpack.c.l.b16 %v504
    %v1601 = vunpack.c.l.b16 %v505
    %v1602 = vunpack.c.l.b16 %v506
    %v1603 = vunpack.c.l.b16 %v507
    %v1604 = vunpack.c.l.b16 %v508
    %v1605 = vunpack.c.l.b16 %v509
    %v1606 = vunpack.c.l.b16 %v510
    %v1607 = vunpack.c.l.b16 %v511
    %v1608 = vunpack.c.l.b16 %v512
    %v1609 = vunpack.c.l.b16 %v513
    %v1610 = vunpack.c.l.b16 %v514
    %v1611 = vunpack.c.l.b16 %v515
    %v1612 = vunpack.c.l.b16 %v516
    %v1613 = vunpack.c.l.b16 %v517
    %v1614 = vunpack.c.l.b16 %v518
    %v1615 = vunpack.c.l.b16 %v519
    %v1616 = vunpack.c.l.b16 %v520
    %v1617 = vunpack.c.l.b16 %v521
    %v1618 = vunpack.c.l.b16 %v522
    %v1619 = vunpack.c.l.b16 %v523
    %v1620 = vunpack.c.l.b16 %v524
    %v1621 = vunpack.c.l.b16 %v525
    %v1622 = vunpack.c.l.b16 %v526
    %v1623 = vunpack.c.l.b16 %v527
    %v1624 = vunpack.c.l.b16 %v528
    %v1625 = vunpack.c.l.b16 %v529
    %v1626 = vunpack.c.l.b16 %v530
    %v1627 = vunpack.c.l.b16 %v531
    %v1628 = vunpack.c.l.b16 %v532
    %v1629 = vunpack.c.l.b16 %v533
    %v1630 = vpack.c.b16 %v1119, %v1118
    %v1631 = vpack.c.b16 %v1121, %v1120
    %v1632 = vpack.c.b16 %v1123, %v1122
    %v1633 = vpack.c.b16 %v1125, %v1124
    %v1634 = vpack.c.b16 %v1127, %v1126
    %v1635 = vpack.c.b16 %v1129, %v1128
    %v1636 = vpack.c.b16 %v1131, %v1130
    %v1637 = vpack.c.b16 %v1133, %v1132
    %v1638 = vpack.c.b16 %v1135, %v1134
    %v1639 = vpack.c.b16 %v1137, %v1136
    %v1640 = vpack.c.b16 %v1139, %v1138
    %v1641 = vpack.c.b16 %v1141, %v1140
    %v1642 = vpack.c.b16 %v1143, %v1142
    %v1643 = vpack.c.b16 %v1145, %v1144
    %v1644 = vpack.c.b16 %v1147, %v1146
    %v1645 = vpack.c.b16 %v1149, %v1148
    %v1646 = vpack.c.b16 %v1151, %v1150
    %v1647 = vpack.c.b16 %v1153, %v1152
    %v1648 = vpack.c.b16 %v1155, %v1154
    %v1649 = vpack.c.b16 %v1157, %v1156
    %v1650 = vpack.c.b16 %v1159, %v1158
    %v1651 = vpack.c.b16 %v1161, %v1160
    %v1652 = vpack.c.b16 %v1163, %v1162
    %v1653 = vpack.c.b16 %v1165, %v1164
    %v1654 = vpack.c.b16 %v1167, %v1166
    %v1655 = vpack.c.b16 %v1169, %v1168
    %v1656 = vpack.c.b16 %v1171, %v1170
    %v1657 = vpack.c.b16 %v1173, %v1172
    %v1658 = vpack.c.b16 %v1175, %v1174
    %v1659 = vpack.c.b16 %v1177, %v1176
    %v1660 = vpack.c.b16 %v1179, %v1178
    %v1661 = vpack.c.b16 %v1181, %v1180
    %v1662 = vpack.c.b16 %v1183, %v1182
    %v1663 = vpack.c.b16 %v1185, %v1184
    %v1664 = vpack.c.b16 %v1187, %v1186
    %v1665 = vpack.c.b16 %v1189, %v1188
    %v1666 = vpack.c.b16 %v1191, %v1190
    %v1667 = vpack.c.b16 %v1193, %v1192
    %v1668 = vpack.c.b16 %v1195, %v1194
    %v1669 = vpack.c.b16 %v1197, %v1196
    %v1670 = vpack.c.b16 %v1199, %v1198
    %v1671 = vpack.c.b16 %v1201, %v1200
    %v1672 = vpack.c.b16 %v1203, %v1202
    %v1673 = vpack.c.b16 %v1205, %v1204
    %v1674 = vpack.c.b16 %v1207, %v1206
    %v1675 = vpack.c.b16 %v1209, %v1208
    %v1676 = vpack.c.b16 %v1211, %v1210
    %v1677 = vpack.c.b16 %v1213, %v1212
    %v1678 = vpack.c.b16 %v1215, %v1214
    %v1679 = vpack.c.b16 %v1217, %v1216
    %v1680 = vpack.c.b16 %v1219, %v1218
    %v1681 = vpack.c.b16 %v1221, %v1220
    %v1682 = vpack.c.b16 %v1223, %v1222
    %v1683 = vpack.c.b16 %v1225, %v1224
    %v1684 = vpack.c.b16 %v1227, %v1226
    %v1685 = vpack.c.b16 %v1229, %v1228
    %v1686 = vpack.c.b16 %v1231, %v1230
    %v1687 = vpack.c.b16 %v1233, %v1232
    %v1688 = vpack.c.b16 %v1235, %v1234
    %v1689 = vpack.c.b16 %v1237, %v1236
    %v1690 = vpack.c.b16 %v1239, %v1238
    %v1691 = vpack.c.b16 %v1241, %v1240
    %v1692 = vpack.c.b16 %v1243, %v1242
    %v1693 = vpack.c.b16 %v1245, %v1244
    %v1694 = vpack.c.b16 %v1247, %v1246
    %v1695 = vpack.c.b16 %v1249, %v1248
    %v1696 = vpack.c.b16 %v1251, %v1250
    %v1697 = vpack.c.b16 %v1253, %v1252
    %v1698 = vpack.c.b16 %v1255, %v1254
    %v1699 = vpack.c.b16 %v1257, %v1256
    %v1700 = vpack.c.b16 %v1259, %v1258
    %v1701 = vpack.c.b16 %v1261, %v1260
    %v1702 = vpack.c.b16 %v1263, %v1262
    %v1703 = vpack.c.b16 %v1265, %v1264
    %v1704 = vpack.c.b16 %v1267, %v1266
    %v1705 = vpack.c.b16 %v1269, %v1268
    %v1706 = vpack.c.b16 %v1271, %v1270
    %v1707 = vpack.c.b16 %v1273, %v1272
    %v1708 = vpack.c.b16 %v1275, %v1274
    %v1709 = vpack.c.b16 %v1277, %v1276
    %v1710 = vpack.c.b16 %v1279, %v1278
    %v1711 = vpack.c.b16 %v1281, %v1280
    %v1712 = vpack.c.b16 %v1283, %v1282
    %v1713 = vpack.c.b16 %v1285, %v1284
    %v1714 = vpack.c.b16 %v1287, %v1286
    %v1715 = vpack.c.b16 %v1289, %v1288
    %v1716 = vpack.c.b16 %v1291, %v1290
    %v1717 = vpack.c.b16 %v1293, %v1292
    %v1718 = vpack.c.b16 %v1295, %v1294
    %v1719 = vpack.c.b16 %v1297, %v1296
    %v1720 = vpack.c.b16 %v1299, %v1298
    %v1721 = vpack.c.b16 %v1301, %v1300
    %v1722 = vpack.c.b16 %v1303, %v1302
    %v1723 = vpack.c.b16 %v1305, %v1304
    %v1724 = vpack.c.b16 %v1307, %v1306
    %v1725 = vpack.c.b16 %v1309, %v1308
    %v1726 = vpack.c.b16 %v1311, %v1310
    %v1727 = vpack.c.b16 %v1313, %v1312
    %v1728 = vpack.c.b16 %v1315, %v1314
    %v1729 = vpack.c.b16 %v1317, %v1316
    %v1730 = vpack.c.b16 %v1319, %v1318
    %v1731 = vpack.c.b16 %v1321, %v1320
    %v1732 = vpack.c.b16 %v1323, %v1322
    %v1733 = vpack.c.b16 %v1325, %v1324
    %v1734 = vpack.c.b16 %v1327, %v1326
    %v1735 = vpack.c.b16 %v1329, %v1328
    %v1736 = vpack.c.b16 %v1331, %v1330
    %v1737 = vpack.c.b16 %v1333, %v1332
    %v1738 = vpack.c.b16 %v1335, %v1334
    %v1739 = vpack.c.b16 %v1337, %v1336
    %v1740 = vpack.c.b16 %v1339, %v1338
    %v1741 = vpack.c.b16 %v1341, %v1340
    %v1742 = vpack.c.b16 %v1343, %v1342
    %v1743 = vpack.c.b16 %v1345, %v1344
    %v1744 = vpack.c.b16 %v1347, %v1346
    %v1745 = vpack.c.b16 %v1349, %v1348
    %v1746 = vpack.c.b16 %v1351, %v1350
    %v1747 = vpack.c.b16 %v1353, %v1352
    %v1748 = vpack.c.b16 %v1355, %v1354
    %v1749 = vpack.c.b16 %v1357, %v1356
    %v1750 = vpack.c.b16 %v1359, %v1358
    %v1751 = vpack.c.b16 %v1361, %v1360
    %v1752 = vpack.c.b16 %v1363, %v1362
    %v1753 = vpack.c.b16 %v1365, %v1364
    %v1754 = vpack.c.b16 %v1367, %v1366
    %v1755 = vpack.c.b16 %v1369, %v1368
    %v1756 = vpack.c.b16 %v1371, %v1370
    %v1757 = vpack.c.b16 %v1373, %v1372
    %v1758 = vpack.c.b16 %v1375, %v1374
    %v1759 = vpack.c.b16 %v1377, %v1376
    %v1760 = vpack.c.b16 %v1379, %v1378
    %v1761 = vpack.c.b16 %v1381, %v1380
    %v1762 = vpack.c.b16 %v1383, %v1382
    %v1763 = vpack.c.b16 %v1385, %v1384
    %v1764 = vpack.c.b16 %v1387, %v1386
    %v1765 = vpack.c.b16 %v1389, %v1388
    %v1766 = vpack.c.b16 %v1391, %v1390
    %v1767 = vpack.c.b16 %v1393, %v1392
    %v1768 = vpack.c.b16 %v1395, %v1394
    %v1769 = vpack.c.b16 %v1397, %v1396
    %v1770 = vpack.c.b16 %v1399, %v1398
    %v1771 = vpack.c.b16 %v1401, %v1400
    %v1772 = vpack.c.b16 %v1403, %v1402
    %v1773 = vpack.c.b16 %v1405, %v1404
    %v1774 = vpack.c.b16 %v1407, %v1406
    %v1775 = vpack.c.b16 %v1409, %v1408
    %v1776 = vpack.c.b16 %v1411, %v1410
    %v1777 = vpack.c.b16 %v1413, %v1412
    %v1778 = vpack.c.b16 %v1415, %v1414
    %v1779 = vpack.c.b16 %v1417, %v1416
    %v1780 = vpack.c.b16 %v1419, %v1418
    %v1781 = vpack.c.b16 %v1421, %v1420
    %v1782 = vpack.c.b16 %v1423, %v1422
    %v1783 = vpack.c.b16 %v1425, %v1424
    %v1784 = vpack.c.b16 %v1427, %v1426
    %v1785 = vpack.c.b16 %v1429, %v1428
    %v1786 = vpack.c.b16 %v1431, %v1430
    %v1787 = vpack.c.b16 %v1433, %v1432
    %v1788 = vpack.c.b16 %v1435, %v1434
    %v1789 = vpack.c.b16 %v1437, %v1436
    %v1790 = vpack.c.b16 %v1439, %v1438
    %v1791 = vpack.c.b16 %v1441, %v1440
    %v1792 = vpack.c.b16 %v1443, %v1442
    %v1793 = vpack.c.b16 %v1445, %v1444
    %v1794 = vpack.c.b16 %v1447, %v1446
    %v1795 = vpack.c.b16 %v1449, %v1448
    %v1796 = vpack.c.b16 %v1451, %v1450
    %v1797 = vpack.c.b16 %v1453, %v1452
    %v1798 = vpack.c.b16 %v1455, %v1454
    %v1799 = vpack.c.b16 %v1457, %v1456
    %v1800 = vpack.c.b16 %v1459, %v1458
    %v1801 = vpack.c.b16 %v1461, %v1460
    %v1802 = vpack.c.b16 %v1463, %v1462
    %v1803 = vpack.c.b16 %v1465, %v1464
    %v1804 = vpack.c.b16 %v1467, %v1466
    %v1805 = vpack.c.b16 %v1469, %v1468
    %v1806 = vpack.c.b16 %v1471, %v1470
    %v1807 = vpack.c.b16 %v1473, %v1472
    %v1808 = vpack.c.b16 %v1475, %v1474
    %v1809 = vpack.c.b16 %v1477, %v1476
    %v1810 = vpack.c.b16 %v1479, %v1478
    %v1811 = vpack.c.b16 %v1481, %v1480
    %v1812 = vpack.c.b16 %v1483, %v1482
    %v1813 = vpack.c.b16 %v1485, %v1484
    %v1814 = vpack.c.b16 %v1487, %v1486
    %v1815 = vpack.c.b16 %v1489, %v1488
    %v1816 = vpack.c.b16 %v1491, %v1490
    %v1817 = vpack.c.b16 %v1493, %v1492
    %v1818 = vpack.c.b16 %v1495, %v1494
    %v1819 = vpack.c.b16 %v1497, %v1496
    %v1820 = vpack.c.b16 %v1499, %v1498
    %v1821 = vpack.c.b16 %v1501, %v1500
    %v1822 = vpack.c.b16 %v1503, %v1502
    %v1823 = vpack.c.b16 %v1505, %v1504
    %v1824 = vpack.c.b16 %v1507, %v1506
    %v1825 = vpack.c.b16 %v1509, %v1508
    %v1826 = vpack.c.b16 %v1511, %v1510
    %v1827 = vpack.c.b16 %v1513, %v1512
    %v1828 = vpack.c.b16 %v1515, %v1514
    %v1829 = vpack.c.b16 %v1517, %v1516
    %v1830 = vpack.c.b16 %v1519, %v1518
    %v1831 = vpack.c.b16 %v1521, %v1520
    %v1832 = vpack.c.b16 %v1523, %v1522
    %v1833 = vpack.c.b16 %v1525, %v1524
    %v1834 = vpack.c.b16 %v1527, %v1526
    %v1835 = vpack.c.b16 %v1529, %v1528
    %v1836 = vpack.c.b16 %v1531, %v1530
    %v1837 = vpack.c.b16 %v1533, %v1532
    %v1838 = vpack.c.b16 %v1535, %v1534
    %v1839 = vpack.c.b16 %v1537, %v1536
    %v1840 = vpack.c.b16 %v1539, %v1538
    %v1841 = vpack.c.b16 %v1541, %v1540
    %v1842 = vpack.c.b16 %v1543, %v1542
    %v1843 = vpack.c.b16 %v1545, %v1544
    %v1844 = vpack.c.b16 %v1547, %v1546
    %v1845 = vpack.c.b16 %v1549, %v1548
    %v1846 = vpack.c.b16 %v1551, %v1550
    %v1847 = vpack.c.b16 %v1553, %v1552
    %v1848 = vpack.c.b16 %v1555, %v1554
    %v1849 = vpack.c.b16 %v1557, %v1556
    %v1850 = vpack.c.b16 %v1559, %v1558
    %v1851 = vpack.c.b16 %v1561, %v1560
    %v1852 = vpack.c.b16 %v1563, %v1562
    %v1853 = vpack.c.b16 %v1565, %v1564
    %v1854 = vpack.c.b16 %v1567, %v1566
    %v1855 = vpack.c.b16 %v1569, %v1568
    %v1856 = vpack.c.b16 %v1571, %v1570
    %v1857 = vpack.c.b16 %v1573, %v1572
    %v1858 = vpack.c.b16 %v1575, %v1574
    %v1859 = vpack.c.b16 %v1577, %v1576
    %v1860 = vpack.c.b16 %v1579, %v1578
    %v1861 = vpack.c.b16 %v1581, %v1580
    %v1862 = vpack.c.b16 %v1583, %v1582
    %v1863 = vpack.c.b16 %v1585, %v1584
    %v1864 = vpack.c.b16 %v1587, %v1586
    %v1865 = vpack.c.b16 %v1589, %v1588
    %v1866 = vpack.c.b16 %v1591, %v1590
    %v1867 = vpack.c.b16 %v1593, %v1592
    %v1868 = vpack.c.b16 %v1595, %v1594
    %v1869 = vpack.c.b16 %v1597, %v1596
    %v1870 = vpack.c.b16 %v1599, %v1598
    %v1871 = vpack.c.b16 %v1601, %v1600
    %v1872 = vpack.c.b16 %v1603, %v1602
    %v1873 = vpack.c.b16 %v1605, %v1604
    %v1874 = vpack.c.b16 %v1607, %v1606
    %v1875 = vpack.c.b16 %v1609, %v1608
    %v1876 = vpack.c.b16 %v1611, %v1610
    %v1877 = vpack.c.b16 %v1613, %v1612
    %v1878 = vpack.c.b16 %v1615, %v1614
    %v1879 = vpack.c.b16 %v1617, %v1616
    %v1880 = vpack.c.b16 %v1619, %v1618
    %v1881 = vpack.c.b16 %v1621, %v1620
    %v1882 = vpack.c.b16 %v1623, %v1622
    %v1883 = vpack.c.b16 %v1625, %v1624
    %v1884 = vpack.c.b16 %v1627, %v1626
    %v1885 = vpack.c.b16 %v1629, %v1628
    %2142 = vmatpush.bf16.msra.mxu0 %v1637
    %2143 = vmatpush.bf16.msra.mxu0 %v1636
    %2144 = vmatpush.bf16.msra.mxu0 %v1635
    %2145 = vmatpush.bf16.msra.mxu0 %v1634
    %2146 = vmatpush.bf16.msra.mxu0 %v1633
    %2147 = vmatpush.bf16.msra.mxu0 %v1632
    %2148 = vmatpush.bf16.msra.mxu0 %v1631
    %2149 = vmatpush.bf16.msra.mxu0 %v1630
    %2150 = vmatmul.bf16.gmra.mxu0 %v536
    %v2151 = vpop.f32.mrf.mxu0
    %v2152 = vadd.f32 0.0, %v2151
    %v2153 = vpop.f32.mrf.mxu0
    %2154 = vdwg.mxu0
    %2155 = vmatpush.bf16.msra.mxu0 %v1645
    %2156 = vmatpush.bf16.msra.mxu0 %v1644
    %2157 = vmatpush.bf16.msra.mxu0 %v1643
    %2158 = vmatpush.bf16.msra.mxu0 %v1642
    %2159 = vmatpush.bf16.msra.mxu0 %v1641
    %2160 = vmatpush.bf16.msra.mxu0 %v1640
    %2161 = vmatpush.bf16.msra.mxu0 %v1639
    %2162 = vmatpush.bf16.msra.mxu0 %v1638
    %2163 = vmatmul.bf16.gmra.mxu0 %v537
    %v2164 = vpop.f32.mrf.mxu0
    %v2165 = vadd.f32 %v2152, %v2164
    %v2166 = vpop.f32.mrf.mxu0
    %2167 = vdwg.mxu0
    %2168 = vmatpush.bf16.msra.mxu0 %v1653
    %2169 = vmatpush.bf16.msra.mxu0 %v1652
    %2170 = vmatpush.bf16.msra.mxu0 %v1651
    %2171 = vmatpush.bf16.msra.mxu0 %v1650
    %2172 = vmatpush.bf16.msra.mxu0 %v1649
    %2173 = vmatpush.bf16.msra.mxu0 %v1648
    %2174 = vmatpush.bf16.msra.mxu0 %v1647
    %2175 = vmatpush.bf16.msra.mxu0 %v1646
    %2176 = vmatmul.bf16.gmra.mxu0 %v538
    %v2177 = vpop.f32.mrf.mxu0
    %v2178 = vadd.f32 %v2165, %v2177
    %v2179 = vpop.f32.mrf.mxu0
    %2180 = vdwg.mxu0
    %2181 = vmatpush.bf16.msra.mxu0 %v1661
    %2182 = vmatpush.bf16.msra.mxu0 %v1660
    %2183 = vmatpush.bf16.msra.mxu0 %v1659
    %2184 = vmatpush.bf16.msra.mxu0 %v1658
    %2185 = vmatpush.bf16.msra.mxu0 %v1657
    %2186 = vmatpush.bf16.msra.mxu0 %v1656
    %2187 = vmatpush.bf16.msra.mxu0 %v1655
    %2188 = vmatpush.bf16.msra.mxu0 %v1654
    %2189 = vmatmul.bf16.gmra.mxu0 %v539
    %v2190 = vpop.f32.mrf.mxu0
    %v2191 = vadd.f32 %v2178, %v2190
    %v2192 = vpop.f32.mrf.mxu0
    %2193 = vdwg.mxu0
    %2194 = vmatpush.bf16.msra.mxu0 %v1669
    %2195 = vmatpush.bf16.msra.mxu0 %v1668
    %2196 = vmatpush.bf16.msra.mxu0 %v1667
    %2197 = vmatpush.bf16.msra.mxu0 %v1666
    %2198 = vmatpush.bf16.msra.mxu0 %v1665
    %2199 = vmatpush.bf16.msra.mxu0 %v1664
    %2200 = vmatpush.bf16.msra.mxu0 %v1663
    %2201 = vmatpush.bf16.msra.mxu0 %v1662
    %2202 = vmatmul.bf16.gmra.mxu0 %v540
    %v2203 = vpop.f32.mrf.mxu0
    %v2204 = vadd.f32 %v2191, %v2203
    %v2205 = vpop.f32.mrf.mxu0
    %2206 = vdwg.mxu0
    %2207 = vmatpush.bf16.msra.mxu0 %v1677
    %2208 = vmatpush.bf16.msra.mxu0 %v1676
    %2209 = vmatpush.bf16.msra.mxu0 %v1675
    %2210 = vmatpush.bf16.msra.mxu0 %v1674
    %2211 = vmatpush.bf16.msra.mxu0 %v1673
    %2212 = vmatpush.bf16.msra.mxu0 %v1672
    %2213 = vmatpush.bf16.msra.mxu0 %v1671
    %2214 = vmatpush.bf16.msra.mxu0 %v1670
    %2215 = vmatmul.bf16.gmra.mxu0 %v541
    %v2216 = vpop.f32.mrf.mxu0
    %v2217 = vadd.f32 %v2204, %v2216
    %v2218 = vpop.f32.mrf.mxu0
    %2219 = vdwg.mxu0
    %2220 = vmatpush.bf16.msra.mxu0 %v1685
    %2221 = vmatpush.bf16.msra.mxu0 %v1684
    %2222 = vmatpush.bf16.msra.mxu0 %v1683
    %2223 = vmatpush.bf16.msra.mxu0 %v1682
    %2224 = vmatpush.bf16.msra.mxu0 %v1681
    %2225 = vmatpush.bf16.msra.mxu0 %v1680
    %2226 = vmatpush.bf16.msra.mxu0 %v1679
    %2227 = vmatpush.bf16.msra.mxu0 %v1678
    %2228 = vmatmul.bf16.gmra.mxu0 %v542
    %v2229 = vpop.f32.mrf.mxu0
    %v2230 = vadd.f32 %v2217, %v2229
    %v2231 = vpop.f32.mrf.mxu0
    %2232 = vdwg.mxu0
    %2233 = vmatpush.bf16.msra.mxu0 %v1693
    %2234 = vmatpush.bf16.msra.mxu0 %v1692
    %2235 = vmatpush.bf16.msra.mxu0 %v1691
    %2236 = vmatpush.bf16.msra.mxu0 %v1690
    %2237 = vmatpush.bf16.msra.mxu0 %v1689
    %2238 = vmatpush.bf16.msra.mxu0 %v1688
    %2239 = vmatpush.bf16.msra.mxu0 %v1687
    %2240 = vmatpush.bf16.msra.mxu0 %v1686
    %2241 = vmatmul.bf16.gmra.mxu0 %v543
    %v2242 = vpop.f32.mrf.mxu0
    %v2243 = vadd.f32 %v2230, %v2242
    %v2244 = vpop.f32.mrf.mxu0
    %2245 = vdwg.mxu0
    %2246 = vmatpush.bf16.msra.mxu0 %v1701
    %2247 = vmatpush.bf16.msra.mxu0 %v1700
    %2248 = vmatpush.bf16.msra.mxu0 %v1699
    %2249 = vmatpush.bf16.msra.mxu0 %v1698
    %2250 = vmatpush.bf16.msra.mxu0 %v1697
    %2251 = vmatpush.bf16.msra.mxu0 %v1696
    %2252 = vmatpush.bf16.msra.mxu0 %v1695
    %2253 = vmatpush.bf16.msra.mxu0 %v1694
    %2254 = vmatmul.bf16.gmra.mxu0 %v546
    %v2255 = vpop.f32.mrf.mxu0
    %v2256 = vadd.f32 %v2243, %v2255
    %v2257 = vpop.f32.mrf.mxu0
    %2258 = vdwg.mxu0
    %2259 = vmatpush.bf16.msra.mxu0 %v1709
    %2260 = vmatpush.bf16.msra.mxu0 %v1708
    %2261 = vmatpush.bf16.msra.mxu0 %v1707
    %2262 = vmatpush.bf16.msra.mxu0 %v1706
    %2263 = vmatpush.bf16.msra.mxu0 %v1705
    %2264 = vmatpush.bf16.msra.mxu0 %v1704
    %2265 = vmatpush.bf16.msra.mxu0 %v1703
    %2266 = vmatpush.bf16.msra.mxu0 %v1702
    %2267 = vmatmul.bf16.gmra.mxu0 %v547
    %v2268 = vpop.f32.mrf.mxu0
    %v2269 = vadd.f32 %v2256, %v2268
    %v2270 = vpop.f32.mrf.mxu0
    %2271 = vdwg.mxu0
    %2272 = vmatpush.bf16.msra.mxu0 %v1717
    %2273 = vmatpush.bf16.msra.mxu0 %v1716
    %2274 = vmatpush.bf16.msra.mxu0 %v1715
    %2275 = vmatpush.bf16.msra.mxu0 %v1714
    %2276 = vmatpush.bf16.msra.mxu0 %v1713
    %2277 = vmatpush.bf16.msra.mxu0 %v1712
    %2278 = vmatpush.bf16.msra.mxu0 %v1711
    %2279 = vmatpush.bf16.msra.mxu0 %v1710
    %2280 = vmatmul.bf16.gmra.mxu0 %v548
    %v2281 = vpop.f32.mrf.mxu0
    %v2282 = vadd.f32 %v2269, %v2281
    %v2283 = vpop.f32.mrf.mxu0
    %2284 = vdwg.mxu0
    %2285 = vmatpush.bf16.msra.mxu0 %v1725
    %2286 = vmatpush.bf16.msra.mxu0 %v1724
    %2287 = vmatpush.bf16.msra.mxu0 %v1723
    %2288 = vmatpush.bf16.msra.mxu0 %v1722
    %2289 = vmatpush.bf16.msra.mxu0 %v1721
    %2290 = vmatpush.bf16.msra.mxu0 %v1720
    %2291 = vmatpush.bf16.msra.mxu0 %v1719
    %2292 = vmatpush.bf16.msra.mxu0 %v1718
    %2293 = vmatmul.bf16.gmra.mxu0 %v549
    %v2294 = vpop.f32.mrf.mxu0
    %v2295 = vadd.f32 %v2282, %v2294
    %v2296 = vpop.f32.mrf.mxu0
    %2297 = vdwg.mxu0
    %2298 = vmatpush.bf16.msra.mxu0 %v1733
    %2299 = vmatpush.bf16.msra.mxu0 %v1732
    %2300 = vmatpush.bf16.msra.mxu0 %v1731
    %2301 = vmatpush.bf16.msra.mxu0 %v1730
    %2302 = vmatpush.bf16.msra.mxu0 %v1729
    %2303 = vmatpush.bf16.msra.mxu0 %v1728
    %2304 = vmatpush.bf16.msra.mxu0 %v1727
    %2305 = vmatpush.bf16.msra.mxu0 %v1726
    %2306 = vmatmul.bf16.gmra.mxu0 %v550
    %v2307 = vpop.f32.mrf.mxu0
    %v2308 = vadd.f32 %v2295, %v2307
    %v2309 = vpop.f32.mrf.mxu0
    %2310 = vdwg.mxu0
    %2311 = vmatpush.bf16.msra.mxu0 %v1741
    %2312 = vmatpush.bf16.msra.mxu0 %v1740
    %2313 = vmatpush.bf16.msra.mxu0 %v1739
    %2314 = vmatpush.bf16.msra.mxu0 %v1738
    %2315 = vmatpush.bf16.msra.mxu0 %v1737
    %2316 = vmatpush.bf16.msra.mxu0 %v1736
    %2317 = vmatpush.bf16.msra.mxu0 %v1735
    %2318 = vmatpush.bf16.msra.mxu0 %v1734
    %2319 = vmatmul.bf16.gmra.mxu0 %v551
    %v2320 = vpop.f32.mrf.mxu0
    %v2321 = vadd.f32 %v2308, %v2320
    %v2322 = vpop.f32.mrf.mxu0
    %2323 = vdwg.mxu0
    %2324 = vmatpush.bf16.msra.mxu0 %v1749
    %2325 = vmatpush.bf16.msra.mxu0 %v1748
    %2326 = vmatpush.bf16.msra.mxu0 %v1747
    %2327 = vmatpush.bf16.msra.mxu0 %v1746
    %2328 = vmatpush.bf16.msra.mxu0 %v1745
    %2329 = vmatpush.bf16.msra.mxu0 %v1744
    %2330 = vmatpush.bf16.msra.mxu0 %v1743
    %2331 = vmatpush.bf16.msra.mxu0 %v1742
    %2332 = vmatmul.bf16.gmra.mxu0 %v552
    %v2333 = vpop.f32.mrf.mxu0
    %v2334 = vadd.f32 %v2321, %v2333
    %v2335 = vpop.f32.mrf.mxu0
    %2336 = vdwg.mxu0
    %2337 = vmatpush.bf16.msra.mxu0 %v1757
    %2338 = vmatpush.bf16.msra.mxu0 %v1756
    %2339 = vmatpush.bf16.msra.mxu0 %v1755
    %2340 = vmatpush.bf16.msra.mxu0 %v1754
    %2341 = vmatpush.bf16.msra.mxu0 %v1753
    %2342 = vmatpush.bf16.msra.mxu0 %v1752
    %2343 = vmatpush.bf16.msra.mxu0 %v1751
    %2344 = vmatpush.bf16.msra.mxu0 %v1750
    %2345 = vmatmul.bf16.gmra.mxu0 %v553
    %v2346 = vpop.f32.mrf.mxu0
    %v2347 = vadd.f32 %v2334, %v2346
    %v2348 = vpop.f32.mrf.mxu0
    %2349 = vdwg.mxu0
    %2350 = vmatpush.bf16.msra.mxu0 %v1765
    %2351 = vmatpush.bf16.msra.mxu0 %v1764
    %2352 = vmatpush.bf16.msra.mxu0 %v1763
    %2353 = vmatpush.bf16.msra.mxu0 %v1762
    %2354 = vmatpush.bf16.msra.mxu0 %v1761
    %2355 = vmatpush.bf16.msra.mxu0 %v1760
    %2356 = vmatpush.bf16.msra.mxu0 %v1759
    %2357 = vmatpush.bf16.msra.mxu0 %v1758
    %2358 = vmatmul.bf16.gmra.mxu0 %v556
    %v2359 = vpop.f32.mrf.mxu0
    %v2360 = vadd.f32 %v2347, %v2359
    %v2361 = vpop.f32.mrf.mxu0
    %2362 = vdwg.mxu0
    %2363 = vmatpush.bf16.msra.mxu0 %v1773
    %2364 = vmatpush.bf16.msra.mxu0 %v1772
    %2365 = vmatpush.bf16.msra.mxu0 %v1771
    %2366 = vmatpush.bf16.msra.mxu0 %v1770
    %2367 = vmatpush.bf16.msra.mxu0 %v1769
    %2368 = vmatpush.bf16.msra.mxu0 %v1768
    %2369 = vmatpush.bf16.msra.mxu0 %v1767
    %2370 = vmatpush.bf16.msra.mxu0 %v1766
    %2371 = vmatmul.bf16.gmra.mxu0 %v557
    %v2372 = vpop.f32.mrf.mxu0
    %v2373 = vadd.f32 %v2360, %v2372
    %v2374 = vpop.f32.mrf.mxu0
    %2375 = vdwg.mxu0
    %2376 = vmatpush.bf16.msra.mxu0 %v1781
    %2377 = vmatpush.bf16.msra.mxu0 %v1780
    %2378 = vmatpush.bf16.msra.mxu0 %v1779
    %2379 = vmatpush.bf16.msra.mxu0 %v1778
    %2380 = vmatpush.bf16.msra.mxu0 %v1777
    %2381 = vmatpush.bf16.msra.mxu0 %v1776
    %2382 = vmatpush.bf16.msra.mxu0 %v1775
    %2383 = vmatpush.bf16.msra.mxu0 %v1774
    %2384 = vmatmul.bf16.gmra.mxu0 %v558
    %v2385 = vpop.f32.mrf.mxu0
    %v2386 = vadd.f32 %v2373, %v2385
    %v2387 = vpop.f32.mrf.mxu0
    %2388 = vdwg.mxu0
    %2389 = vmatpush.bf16.msra.mxu0 %v1789
    %2390 = vmatpush.bf16.msra.mxu0 %v1788
    %2391 = vmatpush.bf16.msra.mxu0 %v1787
    %2392 = vmatpush.bf16.msra.mxu0 %v1786
    %2393 = vmatpush.bf16.msra.mxu0 %v1785
    %2394 = vmatpush.bf16.msra.mxu0 %v1784
    %2395 = vmatpush.bf16.msra.mxu0 %v1783
    %2396 = vmatpush.bf16.msra.mxu0 %v1782
    %2397 = vmatmul.bf16.gmra.mxu0 %v559
    %v2398 = vpop.f32.mrf.mxu0
    %v2399 = vadd.f32 %v2386, %v2398
    %v2400 = vpop.f32.mrf.mxu0
    %2401 = vdwg.mxu0
    %2402 = vmatpush.bf16.msra.mxu0 %v1797
    %2403 = vmatpush.bf16.msra.mxu0 %v1796
    %2404 = vmatpush.bf16.msra.mxu0 %v1795
    %2405 = vmatpush.bf16.msra.mxu0 %v1794
    %2406 = vmatpush.bf16.msra.mxu0 %v1793
    %2407 = vmatpush.bf16.msra.mxu0 %v1792
    %2408 = vmatpush.bf16.msra.mxu0 %v1791
    %2409 = vmatpush.bf16.msra.mxu0 %v1790
    %2410 = vmatmul.bf16.gmra.mxu0 %v560
    %v2411 = vpop.f32.mrf.mxu0
    %v2412 = vadd.f32 %v2399, %v2411
    %v2413 = vpop.f32.mrf.mxu0
    %2414 = vdwg.mxu0
    %2415 = vmatpush.bf16.msra.mxu0 %v1805
    %2416 = vmatpush.bf16.msra.mxu0 %v1804
    %2417 = vmatpush.bf16.msra.mxu0 %v1803
    %2418 = vmatpush.bf16.msra.mxu0 %v1802
    %2419 = vmatpush.bf16.msra.mxu0 %v1801
    %2420 = vmatpush.bf16.msra.mxu0 %v1800
    %2421 = vmatpush.bf16.msra.mxu0 %v1799
    %2422 = vmatpush.bf16.msra.mxu0 %v1798
    %2423 = vmatmul.bf16.gmra.mxu0 %v561
    %v2424 = vpop.f32.mrf.mxu0
    %v2425 = vadd.f32 %v2412, %v2424
    %v2426 = vpop.f32.mrf.mxu0
    %2427 = vdwg.mxu0
    %2428 = vmatpush.bf16.msra.mxu0 %v1813
    %2429 = vmatpush.bf16.msra.mxu0 %v1812
    %2430 = vmatpush.bf16.msra.mxu0 %v1811
    %2431 = vmatpush.bf16.msra.mxu0 %v1810
    %2432 = vmatpush.bf16.msra.mxu0 %v1809
    %2433 = vmatpush.bf16.msra.mxu0 %v1808
    %2434 = vmatpush.bf16.msra.mxu0 %v1807
    %2435 = vmatpush.bf16.msra.mxu0 %v1806
    %2436 = vmatmul.bf16.gmra.mxu0 %v562
    %v2437 = vpop.f32.mrf.mxu0
    %v2438 = vadd.f32 %v2425, %v2437
    %v2439 = vpop.f32.mrf.mxu0
    %2440 = vdwg.mxu0
    %2441 = vmatpush.bf16.msra.mxu0 %v1821
    %2442 = vmatpush.bf16.msra.mxu0 %v1820
    %2443 = vmatpush.bf16.msra.mxu0 %v1819
    %2444 = vmatpush.bf16.msra.mxu0 %v1818
    %2445 = vmatpush.bf16.msra.mxu0 %v1817
    %2446 = vmatpush.bf16.msra.mxu0 %v1816
    %2447 = vmatpush.bf16.msra.mxu0 %v1815
    %2448 = vmatpush.bf16.msra.mxu0 %v1814
    %2449 = vmatmul.bf16.gmra.mxu0 %v563
    %v2450 = vpop.f32.mrf.mxu0
    %v2451 = vadd.f32 %v2438, %v2450
    %v2452 = vpop.f32.mrf.mxu0
    %2453 = vdwg.mxu0
    %2454 = vmatpush.bf16.msra.mxu0 %v1829
    %2455 = vmatpush.bf16.msra.mxu0 %v1828
    %2456 = vmatpush.bf16.msra.mxu0 %v1827
    %2457 = vmatpush.bf16.msra.mxu0 %v1826
    %2458 = vmatpush.bf16.msra.mxu0 %v1825
    %2459 = vmatpush.bf16.msra.mxu0 %v1824
    %2460 = vmatpush.bf16.msra.mxu0 %v1823
    %2461 = vmatpush.bf16.msra.mxu0 %v1822
    %2462 = vmatmul.bf16.gmra.mxu0 %v566
    %v2463 = vpop.f32.mrf.mxu0
    %v2464 = vadd.f32 %v2451, %v2463
    %v2465 = vpop.f32.mrf.mxu0
    %2466 = vdwg.mxu0
    %2467 = vmatpush.bf16.msra.mxu0 %v1837
    %2468 = vmatpush.bf16.msra.mxu0 %v1836
    %2469 = vmatpush.bf16.msra.mxu0 %v1835
    %2470 = vmatpush.bf16.msra.mxu0 %v1834
    %2471 = vmatpush.bf16.msra.mxu0 %v1833
    %2472 = vmatpush.bf16.msra.mxu0 %v1832
    %2473 = vmatpush.bf16.msra.mxu0 %v1831
    %2474 = vmatpush.bf16.msra.mxu0 %v1830
    %2475 = vmatmul.bf16.gmra.mxu0 %v567
    %v2476 = vpop.f32.mrf.mxu0
    %v2477 = vadd.f32 %v2464, %v2476
    %v2478 = vpop.f32.mrf.mxu0
    %2479 = vdwg.mxu0
    %2480 = vmatpush.bf16.msra.mxu0 %v1845
    %2481 = vmatpush.bf16.msra.mxu0 %v1844
    %2482 = vmatpush.bf16.msra.mxu0 %v1843
    %2483 = vmatpush.bf16.msra.mxu0 %v1842
    %2484 = vmatpush.bf16.msra.mxu0 %v1841
    %2485 = vmatpush.bf16.msra.mxu0 %v1840
    %2486 = vmatpush.bf16.msra.mxu0 %v1839
    %2487 = vmatpush.bf16.msra.mxu0 %v1838
    %2488 = vmatmul.bf16.gmra.mxu0 %v568
    %v2489 = vpop.f32.mrf.mxu0
    %v2490 = vadd.f32 %v2477, %v2489
    %v2491 = vpop.f32.mrf.mxu0
    %2492 = vdwg.mxu0
    %2493 = vmatpush.bf16.msra.mxu0 %v1853
    %2494 = vmatpush.bf16.msra.mxu0 %v1852
    %2495 = vmatpush.bf16.msra.mxu0 %v1851
    %2496 = vmatpush.bf16.msra.mxu0 %v1850
    %2497 = vmatpush.bf16.msra.mxu0 %v1849
    %2498 = vmatpush.bf16.msra.mxu0 %v1848
    %2499 = vmatpush.bf16.msra.mxu0 %v1847
    %2500 = vmatpush.bf16.msra.mxu0 %v1846
    %2501 = vmatmul.bf16.gmra.mxu0 %v569
    %v2502 = vpop.f32.mrf.mxu0
    %v2503 = vadd.f32 %v2490, %v2502
    %v2504 = vpop.f32.mrf.mxu0
    %2505 = vdwg.mxu0
    %2506 = vmatpush.bf16.msra.mxu0 %v1861
    %2507 = vmatpush.bf16.msra.mxu0 %v1860
    %2508 = vmatpush.bf16.msra.mxu0 %v1859
    %2509 = vmatpush.bf16.msra.mxu0 %v1858
    %2510 = vmatpush.bf16.msra.mxu0 %v1857
    %2511 = vmatpush.bf16.msra.mxu0 %v1856
    %2512 = vmatpush.bf16.msra.mxu0 %v1855
    %2513 = vmatpush.bf16.msra.mxu0 %v1854
    %2514 = vmatmul.bf16.gmra.mxu0 %v570
    %v2515 = vpop.f32.mrf.mxu0
    %v2516 = vadd.f32 %v2503, %v2515
    %v2517 = vpop.f32.mrf.mxu0
    %2518 = vdwg.mxu0
    %2519 = vmatpush.bf16.msra.mxu0 %v1869
    %2520 = vmatpush.bf16.msra.mxu0 %v1868
    %2521 = vmatpush.bf16.msra.mxu0 %v1867
    %2522 = vmatpush.bf16.msra.mxu0 %v1866
    %2523 = vmatpush.bf16.msra.mxu0 %v1865
    %2524 = vmatpush.bf16.msra.mxu0 %v1864
    %2525 = vmatpush.bf16.msra.mxu0 %v1863
    %2526 = vmatpush.bf16.msra.mxu0 %v1862
    %2527 = vmatmul.bf16.gmra.mxu0 %v571
    %v2528 = vpop.f32.mrf.mxu0
    %v2529 = vadd.f32 %v2516, %v2528
    %v2530 = vpop.f32.mrf.mxu0
    %2531 = vdwg.mxu0
    %2532 = vmatpush.bf16.msra.mxu0 %v1877
    %2533 = vmatpush.bf16.msra.mxu0 %v1876
    %2534 = vmatpush.bf16.msra.mxu0 %v1875
    %2535 = vmatpush.bf16.msra.mxu0 %v1874
    %2536 = vmatpush.bf16.msra.mxu0 %v1873
    %2537 = vmatpush.bf16.msra.mxu0 %v1872
    %2538 = vmatpush.bf16.msra.mxu0 %v1871
    %2539 = vmatpush.bf16.msra.mxu0 %v1870
    %2540 = vmatmul.bf16.gmra.mxu0 %v572
    %v2541 = vpop.f32.mrf.mxu0
    %v2542 = vadd.f32 %v2529, %v2541
    %v2543 = vpop.f32.mrf.mxu0
    %2544 = vdwg.mxu0
    %2545 = vmatpush.bf16.msra.mxu0 %v1885
    %2546 = vmatpush.bf16.msra.mxu0 %v1884
    %2547 = vmatpush.bf16.msra.mxu0 %v1883
    %2548 = vmatpush.bf16.msra.mxu0 %v1882
    %2549 = vmatpush.bf16.msra.mxu0 %v1881
    %2550 = vmatpush.bf16.msra.mxu0 %v1880
    %2551 = vmatpush.bf16.msra.mxu0 %v1879
    %2552 = vmatpush.bf16.msra.mxu0 %v1878
    %2553 = vmatmul.bf16.gmra.mxu0 %v573
    %v2554 = vpop.f32.mrf.mxu0
    %v2555 = vadd.f32 %v2542, %v2554
    %v2556 = vpop.f32.mrf.mxu0
    %2557 = vdwg.mxu0
    %v2558 = vadd.f32 %v17, %v2555
    %2559 = vst [vmem:[#allocation2] sm:$0x3] %v2558
    // Predicated region
    $region14: #{discriminator_forward.11} parent=1 // pred_check
      %p2560 = pneg %p12
    $region15: #{discriminator_forward.11} parent=1 // pred_check_branch
      %2562 = sbr.rel (%p2560) target = $region17
    $region16: #{discriminator_forward.11} parent=1 // pred_region
      %v2563 = vld [vmem:[#allocation2] sm:$0x3]
      %2564 = vst [vmem:[#allocation3] sm:$0x3] %v2563
    $region17: #{discriminator_forward.11} parent=1 // pred_fallthru
      _
    // Predicated region
    $region18: #{discriminator_forward.11} parent=1 // pred_check
      _
    $region19: #{discriminator_forward.11} parent=1 // pred_check_branch
      %2566 = sbr.rel (0) target = $region21
    $region20: #{discriminator_forward.11} parent=1 // pred_region
      %2568 = vsyncadd [#allocation4], 0
      %s2570 = sshll.u32 [#allocation3], 4
      %s2571 = int_to_ptr.vmem [resolvable:$true] %s2570
      %s2572 = sshll.u32 %s2, 4
      %s2573 = int_to_ptr.hbm [resolvable:$true] %s2572
      %2575 = dma.vmem_to_hbm [thread:$0]  %s2571, 32, %s2573, [#allocation4]
    $region21: #{discriminator_forward.11} parent=1 // pred_fallthru
      _
    // Predicated region
    $region22: #{discriminator_forward.11} parent=1 // pred_check
      _
    $region23: #{discriminator_forward.11} parent=1 // pred_check_branch
      %2577 = sbr.rel (0) target = $region25
    $region24: #{discriminator_forward.11} parent=1 // pred_region
      %2579 = dma.done [#allocation4], 32
    $region25: #{discriminator_forward.11} parent=1 // pred_fallthru
      _
    %2580 = vsyncpa [#allocation4], 1

</llo_original>
